<compile_context>
chip_gen: v6e
topology: v6e:2x2x1
jax: 0.10.0
libtpu: 0.0.40
codegen_flags: <defaults>
</compile_context>

<pallas_src>
import functools

import jax
import jax.numpy as jnp
from jax.experimental import pallas as pl
from jax.experimental.pallas import tpu as pltpu

F32 = jnp.float32
BF16 = jnp.bfloat16


def _round_up(x, m):
    return (x + m - 1) // m * m


# ---------------------------------------------------------------------------
# Host-side operand preparation (weights only, tiny, runs once under jit).
# ---------------------------------------------------------------------------
def _prepare_operands(params, linear):
    w1 = params["conv1_w"].astype(F32).reshape(6, 5, 5)      # [c, ki, kj]
    b1 = params["conv1_b"].astype(F32)
    w2 = params["conv2_w"].astype(F32)                        # [co, ci, ki, kj]
    b2 = params["conv2_b"].astype(F32)
    win = params["in_w"].astype(F32)                          # (120, 256)
    bin_ = params["in_b"].astype(F32)
    wit = params["it_w"].astype(F32)                          # (120, 120)
    bit = params["it_b"].astype(F32)
    wout = params["out_w"].astype(F32)                        # (10, 120)
    bout = params["out_b"].astype(F32)

    # conv1 as 5 banded matmuls: M1[ki, a, j*6+c] = w1[c, ki, a-j] for a-j in 0..4.
    sel1 = (jnp.arange(28)[None, :, None]
            == jnp.arange(24)[None, None, :] + jnp.arange(5)[:, None, None])
    m1 = jnp.einsum("qaj,ckq->kajc", sel1.astype(F32), w1).reshape(5, 28, 144)

    # conv2 as 5 banded matmuls on the pooled (j, c)-interleaved lane layout.
    # Pooled value for (ip, jp, ci) lives at lane (2*jp)*6 + ci; odd-j lanes hold
    # pooling junk and get zero rows here.
    sel2 = (jnp.arange(12)[:, None, None]
            == jnp.arange(8)[None, :, None] + jnp.arange(5)[None, None, :])
    npool = jnp.einsum("pjq,ockq->kpcjo", sel2.astype(F32), w2)     # (5,12,6,8,16)
    n2 = jnp.zeros((5, 24, 6, 8, 16), F32).at[:, ::2].set(npool)
    n2 = n2.reshape(5, 144, 128)

    # Exact 0/1 "shift by one column group" matrices for the 2x2 max-pools
    # (column-pair max is max(m, m @ P); only even column groups matter downstream).
    idx1 = jnp.arange(138)
    ps1 = jnp.zeros((144, 144), F32).at[idx1 + 6, idx1].set(
        ((idx1 // 6) % 2 == 0).astype(F32))
    idx2 = jnp.arange(112)
    ps2 = jnp.zeros((128, 128), F32).at[idx2 + 16, idx2].set(
        ((idx2 // 16) % 2 == 0).astype(F32))

    # Flatten (PyTorch NCHW order, c*16 + i*4 + j) + Linear(256->120) folded into
    # 4 matmuls; pool2 junk lanes (odd j2 groups) get zero rows.
    winr = win.reshape(120, 16, 4, 4)                           # [h, c, i, j]
    wfold = jnp.zeros((4, 8, 16, 120), F32).at[:, ::2].set(
        jnp.transpose(winr, (2, 3, 1, 0)))                      # [i, j2, c, h]
    wfold = wfold.reshape(4, 128, 120)

    # Iterative layer folded into a single effective weight:
    #   linear=True :  x @ (W@W) + x @ W + b  ==  x @ (W@W + W) + b
    #   linear=False:  x @ (W@W) + b
    weff = wit @ wit
    if linear:
        weff = weff + wit

    return (
        m1.astype(BF16),                      # conv1 banded weights
        jnp.tile(b1, 24).reshape(1, 144),     # conv1 bias tiled over j
        ps1,                                  # pool1 column-shift selector
        n2.astype(BF16),                      # conv2 banded weights
        jnp.tile(b2, 8).reshape(1, 128),      # conv2 bias tiled over j2
        ps2,                                  # pool2 column-shift selector
        wfold.astype(BF16),                   # pool2+flatten+Linear(256->120) folded
        bin_.reshape(1, 120),
        weff,                                 # iterative effective weight (f32)
        bit.reshape(1, 120),
        wout.T,                               # (120, 10)
        bout.reshape(1, 10),
    )


# ---------------------------------------------------------------------------
# Fused Pallas kernel (one batch tile per grid step; everything stays in VMEM).
# ---------------------------------------------------------------------------
def _iternet_kernel(x_ref, m1_ref, b1_ref, ps1_ref, n2_ref, b2_ref, ps2_ref,
                    wf_ref, bin_ref, weff_ref, bit_ref, wo_ref, bo_ref,
                    o_ref, y1_scr, p1_scr, y2_scr, *, bt, n_iter):
    # ---- conv1 (1->6, 5x5) + bias + ReLU; lanes hold (j, c_out) interleaved ----
    xs = x_ref[:, pl.ds(0, 24), :].reshape(bt * 24, 28).astype(BF16)
    acc1 = jnp.dot(xs, m1_ref[0], preferred_element_type=F32)
    for ki in range(1, 5):
        xs = x_ref[:, pl.ds(ki, 24), :].reshape(bt * 24, 28).astype(BF16)
        acc1 = acc1 + jnp.dot(xs, m1_ref[ki], preferred_element_type=F32)
    y1_scr[...] = jnp.maximum(acc1 + b1_ref[...], 0.0).reshape(bt, 24, 144)

    # ---- 2x2 max-pool: row pairs via paired reads, column pairs via 0/1 matmul ----
    ps1 = ps1_ref[...]
    for ip in range(12):
        m = jnp.maximum(y1_scr[:, 2 * ip, :], y1_scr[:, 2 * ip + 1, :])
        m = jnp.maximum(m, jnp.dot(m, ps1, preferred_element_type=F32))
        p1_scr[:, ip, :] = m

    # ---- conv2 (6->16, 5x5) + bias + ReLU; lanes hold (j2, c_out) ----
    p = p1_scr[:, pl.ds(0, 8), :].reshape(bt * 8, 144).astype(BF16)
    acc2 = jnp.dot(p, n2_ref[0], preferred_element_type=F32)
    for ki in range(1, 5):
        p = p1_scr[:, pl.ds(ki, 8), :].reshape(bt * 8, 144).astype(BF16)
        acc2 = acc2 + jnp.dot(p, n2_ref[ki], preferred_element_type=F32)
    y2_scr[...] = jnp.maximum(acc2 + b2_ref[...], 0.0).reshape(bt, 8, 128)

    # ---- 2x2 max-pool + NCHW flatten + Linear(256->120), folded into 4 matmuls ----
    ps2 = ps2_ref[...]
    h = jnp.zeros((bt, 120), F32)
    for q in range(4):
        m = jnp.maximum(y2_scr[:, 2 * q, :], y2_scr[:, 2 * q + 1, :])
        m = jnp.maximum(m, jnp.dot(m, ps2, preferred_element_type=F32))
        h = h + jnp.dot(m.astype(BF16), wf_ref[q], preferred_element_type=F32)
    h = jnp.maximum(h + bin_ref[...], 0.0)

    # ---- Iterative layer: h <- h @ Weff + b (n_iter times), then ReLU ----
    weff = weff_ref[...]
    bit = jnp.broadcast_to(bit_ref[...], (bt, 120))   # broadcast hoisted out of loop
    for _ in range(n_iter):
        h = jnp.dot(h, weff, preferred_element_type=F32) + bit
    h = jnp.maximum(h, 0.0)

    # ---- output Linear(120->10) ----
    o_ref[...] = jnp.dot(h, wo_ref[...], preferred_element_type=F32) + bo_ref[...]


def iternet_forward(x_nchw, params, *, linear, n_iter, block_batch=None):
    n = x_nchw.shape[0]
    assert x_nchw.shape[1:] == (1, 28, 28), "IterNet expects (N, 1, 28, 28) inputs"
    x = x_nchw.reshape(n, 28, 28).astype(F32)

    bt = block_batch if block_batch is not None else min(64, _round_up(max(n, 1), 8))
    n_pad = _round_up(n, bt)
    if n_pad != n:
        x = jnp.pad(x, ((0, n_pad - n), (0, 0), (0, 0)))

    ops = _prepare_operands(params, linear)
    kernel = functools.partial(_iternet_kernel, bt=bt, n_iter=n_iter)

    def _const_spec(shape):
        rank = len(shape)

        def idx(b):
            return (0,) * rank

        return pl.BlockSpec(shape, idx)

    grid_spec = pltpu.PrefetchScalarGridSpec(
        num_scalar_prefetch=0,
        grid=(n_pad // bt,),
        in_specs=[pl.BlockSpec((bt, 28, 28), lambda b: (b, 0, 0))]
                 + [_const_spec(a.shape) for a in ops],
        out_specs=pl.BlockSpec((bt, 10), lambda b: (b, 0)),
        scratch_shapes=[
            pltpu.VMEM((bt, 24, 144), F32),   # conv1 + ReLU feature map
            pltpu.VMEM((bt, 12, 144), F32),   # pooled conv1 feature map
            pltpu.VMEM((bt, 8, 128), F32),    # conv2 + ReLU feature map
        ],
    )

    out = pl.pallas_call(
        kernel,
        out_shape=jax.ShapeDtypeStruct((n_pad, 10), F32),
        grid_spec=grid_spec,
        compiler_params=pltpu.CompilerParams(
            dimension_semantics=("parallel",),
            vmem_limit_bytes=32 * 1024 * 1024,
        ),
    )(x, *ops)
    return out[:n]


# ---------------------------------------------------------------------------
# Pure-JAX reference (mirrors the PyTorch module) for a loose numerical check.
# ---------------------------------------------------------------------------
def _reference_forward(x_nchw, params, *, linear, n_iter):
    dn = ("NCHW", "OIHW", "NCHW")
    y = jax.lax.conv_general_dilated(x_nchw, params["conv1_w"], (1, 1), "VALID",
                                     dimension_numbers=dn)
    y = jax.nn.relu(y + params["conv1_b"][None, :, None, None])
    y = jax.lax.reduce_window(y, -jnp.inf, jax.lax.max,
                              (1, 1, 2, 2), (1, 1, 2, 2), "VALID")
    y = jax.lax.conv_general_dilated(y, params["conv2_w"], (1, 1), "VALID",
                                     dimension_numbers=dn)
    y = jax.nn.relu(y + params["conv2_b"][None, :, None, None])
    y = jax.lax.reduce_window(y, -jnp.inf, jax.lax.max,
                              (1, 1, 2, 2), (1, 1, 2, 2), "VALID")
    h = y.reshape(y.shape[0], -1)
    h = jax.nn.relu(h @ params["in_w"].T + params["in_b"])
    w = params["it_w"]
    for _ in range(n_iter):
        if linear:
            h = h @ (w @ w) + h @ w + params["it_b"]
        else:
            h = h @ (w @ w) + params["it_b"]
    h = jax.nn.relu(h)
    return h @ params["out_w"].T + params["out_b"]


# ---------------------------------------------------------------------------
if __name__ == "__main__":
    key = jax.random.PRNGKey(0)
    ks = jax.random.split(key, 11)
    u = lambda k, s: jax.random.uniform(k, s, F32, -0.1, 0.1)

    # Deterministic synthetic parameters (shapes from IterNet.__init__).
    params = {
        "conv1_w": u(ks[0], (6, 1, 5, 5)),
        "conv1_b": u(ks[1], (6,)),
        "conv2_w": u(ks[2], (16, 6, 5, 5)),
        "conv2_b": u(ks[3], (16,)),
        "in_w":    u(ks[4], (120, 256)),   # nn.Linear(256, 120) weight
        "in_b":    u(ks[5], (120,)),
        "it_w":    u(ks[6], (120, 120)),   # Iterative square weight
        "it_b":    u(ks[7], (120,)),
        "out_w":   u(ks[8], (10, 120)),    # nn.Linear(120, 10) weight
        "out_b":   u(ks[9], (10,)),
    }

    # Input must be 28x28 for the 16*4*4 flatten in the reference module.
    x = jax.random.normal(ks[10], (2, 1, 28, 28), F32)

    fwd = jax.jit(functools.partial(iternet_forward, linear=True, n_iter=2))
    out = jax.block_until_ready(fwd(x, params))
    assert out.shape == (2, 10) and out.dtype == jnp.float32

    ref = _reference_forward(x, params, linear=True, n_iter=2)
    max_err = float(jnp.max(jnp.abs(out - ref)))
    assert max_err < 5e-2, f"kernel/reference mismatch: max_err={max_err}"
    print("KERNEL_OK")
</pallas_src>

<mosaic_0001>
module attributes {stable_mosaic.version = 11 : i64} {
  func.func @_iternet_kernel(%arg0: i32, %arg1: memref<8x28x28xf32, #tpu.memory_space<vmem>>, %arg2: memref<5x28x144xbf16, #tpu.memory_space<vmem>>, %arg3: memref<1x144xf32, #tpu.memory_space<vmem>>, %arg4: memref<144x144xf32, #tpu.memory_space<vmem>>, %arg5: memref<5x144x128xbf16, #tpu.memory_space<vmem>>, %arg6: memref<1x128xf32, #tpu.memory_space<vmem>>, %arg7: memref<128x128xf32, #tpu.memory_space<vmem>>, %arg8: memref<4x128x120xbf16, #tpu.memory_space<vmem>>, %arg9: memref<1x120xf32, #tpu.memory_space<vmem>>, %arg10: memref<120x120xf32, #tpu.memory_space<vmem>>, %arg11: memref<1x120xf32, #tpu.memory_space<vmem>>, %arg12: memref<120x10xf32, #tpu.memory_space<vmem>>, %arg13: memref<1x10xf32, #tpu.memory_space<vmem>>, %arg14: memref<8x10xf32, #tpu.memory_space<vmem>>, %arg15: memref<8x24x144xf32, #tpu.memory_space<vmem>>, %arg16: memref<8x12x144xf32, #tpu.memory_space<vmem>>, %arg17: memref<8x8x128xf32, #tpu.memory_space<vmem>>) attributes {dimension_semantics = [#tpu.dimension_semantics<parallel>], iteration_bounds = array<i64: 1>, scalar_prefetch = 0 : i64, scratch_operands = 3 : i64, tpu.core_type = #tpu.core_type<tc>, window_params = [{transform_indices = @transform_0, window_bounds = array<i64: 8, 28, 28>}, {pipeline_mode = #tpu.pipeline_mode<synchronous>, transform_indices = @transform_1, window_bounds = array<i64: 5, 28, 144>}, {pipeline_mode = #tpu.pipeline_mode<synchronous>, transform_indices = @transform_2, window_bounds = array<i64: 1, 144>}, {pipeline_mode = #tpu.pipeline_mode<synchronous>, transform_indices = @transform_3, window_bounds = array<i64: 144, 144>}, {pipeline_mode = #tpu.pipeline_mode<synchronous>, transform_indices = @transform_4, window_bounds = array<i64: 5, 144, 128>}, {pipeline_mode = #tpu.pipeline_mode<synchronous>, transform_indices = @transform_5, window_bounds = array<i64: 1, 128>}, {pipeline_mode = #tpu.pipeline_mode<synchronous>, transform_indices = @transform_6, window_bounds = array<i64: 128, 128>}, {pipeline_mode = #tpu.pipeline_mode<synchronous>, transform_indices = @transform_7, window_bounds = array<i64: 4, 128, 120>}, {pipeline_mode = #tpu.pipeline_mode<synchronous>, transform_indices = @transform_8, window_bounds = array<i64: 1, 120>}, {pipeline_mode = #tpu.pipeline_mode<synchronous>, transform_indices = @transform_9, window_bounds = array<i64: 120, 120>}, {pipeline_mode = #tpu.pipeline_mode<synchronous>, transform_indices = @transform_10, window_bounds = array<i64: 1, 120>}, {pipeline_mode = #tpu.pipeline_mode<synchronous>, transform_indices = @transform_11, window_bounds = array<i64: 120, 10>}, {pipeline_mode = #tpu.pipeline_mode<synchronous>, transform_indices = @transform_12, window_bounds = array<i64: 1, 10>}, {transform_indices = @transform_13, window_bounds = array<i64: 8, 10>}]} {
    %c0 = arith.constant 0 : index
    %c0_0 = arith.constant 0 : index
    %c0_1 = arith.constant 0 : index
    %0 = vector.load %arg1[%c0, %c0_0, %c0_1] : memref<8x28x28xf32, #tpu.memory_space<vmem>>, vector<8x24x28xf32>
    %1 = vector.shape_cast %0 : vector<8x24x28xf32> to vector<192x28xf32>
    %2 = arith.truncf %1 : vector<192x28xf32> to vector<192x28xbf16>
    %c0_2 = arith.constant 0 : index
    %c0_3 = arith.constant 0 : index
    %c0_4 = arith.constant 0 : index
    %3 = vector.load %arg2[%c0_2, %c0_3, %c0_4] : memref<5x28x144xbf16, #tpu.memory_space<vmem>>, vector<1x28x144xbf16>
    %4 = vector.shape_cast %3 : vector<1x28x144xbf16> to vector<28x144xbf16>
    %cst = arith.constant dense<0.000000e+00> : vector<192x144xf32>
    %5 = tpu.matmul %2, %4, %cst {dimension_numbers = #tpu.dot_dimension_numbers<[1], [0], [0], [1], [0, 0, 1, 1], [], []>} : vector<192x28xbf16>, vector<28x144xbf16>, vector<192x144xf32> -> vector<192x144xf32>
    %c0_5 = arith.constant 0 : index
    %c1 = arith.constant 1 : index
    %c0_6 = arith.constant 0 : index
    %6 = vector.load %arg1[%c0_5, %c1, %c0_6] : memref<8x28x28xf32, #tpu.memory_space<vmem>>, vector<8x24x28xf32>
    %7 = vector.shape_cast %6 : vector<8x24x28xf32> to vector<192x28xf32>
    %8 = arith.truncf %7 : vector<192x28xf32> to vector<192x28xbf16>
    %c1_7 = arith.constant 1 : index
    %c0_8 = arith.constant 0 : index
    %c0_9 = arith.constant 0 : index
    %9 = vector.load %arg2[%c1_7, %c0_8, %c0_9] : memref<5x28x144xbf16, #tpu.memory_space<vmem>>, vector<1x28x144xbf16>
    %10 = vector.shape_cast %9 : vector<1x28x144xbf16> to vector<28x144xbf16>
    %cst_10 = arith.constant dense<0.000000e+00> : vector<192x144xf32>
    %11 = tpu.matmul %8, %10, %cst_10 {dimension_numbers = #tpu.dot_dimension_numbers<[1], [0], [0], [1], [0, 0, 1, 1], [], []>} : vector<192x28xbf16>, vector<28x144xbf16>, vector<192x144xf32> -> vector<192x144xf32>
    %12 = arith.addf %5, %11 : vector<192x144xf32>
    %c0_11 = arith.constant 0 : index
    %c2 = arith.constant 2 : index
    %c0_12 = arith.constant 0 : index
    %13 = vector.load %arg1[%c0_11, %c2, %c0_12] : memref<8x28x28xf32, #tpu.memory_space<vmem>>, vector<8x24x28xf32>
    %14 = vector.shape_cast %13 : vector<8x24x28xf32> to vector<192x28xf32>
    %15 = arith.truncf %14 : vector<192x28xf32> to vector<192x28xbf16>
    %c2_13 = arith.constant 2 : index
    %c0_14 = arith.constant 0 : index
    %c0_15 = arith.constant 0 : index
    %16 = vector.load %arg2[%c2_13, %c0_14, %c0_15] : memref<5x28x144xbf16, #tpu.memory_space<vmem>>, vector<1x28x144xbf16>
    %17 = vector.shape_cast %16 : vector<1x28x144xbf16> to vector<28x144xbf16>
    %cst_16 = arith.constant dense<0.000000e+00> : vector<192x144xf32>
    %18 = tpu.matmul %15, %17, %cst_16 {dimension_numbers = #tpu.dot_dimension_numbers<[1], [0], [0], [1], [0, 0, 1, 1], [], []>} : vector<192x28xbf16>, vector<28x144xbf16>, vector<192x144xf32> -> vector<192x144xf32>
    %19 = arith.addf %12, %18 : vector<192x144xf32>
    %c0_17 = arith.constant 0 : index
    %c3 = arith.constant 3 : index
    %c0_18 = arith.constant 0 : index
    %20 = vector.load %arg1[%c0_17, %c3, %c0_18] : memref<8x28x28xf32, #tpu.memory_space<vmem>>, vector<8x24x28xf32>
    %21 = vector.shape_cast %20 : vector<8x24x28xf32> to vector<192x28xf32>
    %22 = arith.truncf %21 : vector<192x28xf32> to vector<192x28xbf16>
    %c3_19 = arith.constant 3 : index
    %c0_20 = arith.constant 0 : index
    %c0_21 = arith.constant 0 : index
    %23 = vector.load %arg2[%c3_19, %c0_20, %c0_21] : memref<5x28x144xbf16, #tpu.memory_space<vmem>>, vector<1x28x144xbf16>
    %24 = vector.shape_cast %23 : vector<1x28x144xbf16> to vector<28x144xbf16>
    %cst_22 = arith.constant dense<0.000000e+00> : vector<192x144xf32>
    %25 = tpu.matmul %22, %24, %cst_22 {dimension_numbers = #tpu.dot_dimension_numbers<[1], [0], [0], [1], [0, 0, 1, 1], [], []>} : vector<192x28xbf16>, vector<28x144xbf16>, vector<192x144xf32> -> vector<192x144xf32>
    %26 = arith.addf %19, %25 : vector<192x144xf32>
    %c0_23 = arith.constant 0 : index
    %c4 = arith.constant 4 : index
    %c0_24 = arith.constant 0 : index
    %27 = vector.load %arg1[%c0_23, %c4, %c0_24] : memref<8x28x28xf32, #tpu.memory_space<vmem>>, vector<8x24x28xf32>
    %28 = vector.shape_cast %27 : vector<8x24x28xf32> to vector<192x28xf32>
    %29 = arith.truncf %28 : vector<192x28xf32> to vector<192x28xbf16>
    %c4_25 = arith.constant 4 : index
    %c0_26 = arith.constant 0 : index
    %c0_27 = arith.constant 0 : index
    %30 = vector.load %arg2[%c4_25, %c0_26, %c0_27] : memref<5x28x144xbf16, #tpu.memory_space<vmem>>, vector<1x28x144xbf16>
    %31 = vector.shape_cast %30 : vector<1x28x144xbf16> to vector<28x144xbf16>
    %cst_28 = arith.constant dense<0.000000e+00> : vector<192x144xf32>
    %32 = tpu.matmul %29, %31, %cst_28 {dimension_numbers = #tpu.dot_dimension_numbers<[1], [0], [0], [1], [0, 0, 1, 1], [], []>} : vector<192x28xbf16>, vector<28x144xbf16>, vector<192x144xf32> -> vector<192x144xf32>
    %33 = arith.addf %26, %32 : vector<192x144xf32>
    %c0_29 = arith.constant 0 : index
    %c0_30 = arith.constant 0 : index
    %34 = vector.load %arg3[%c0_29, %c0_30] : memref<1x144xf32, #tpu.memory_space<vmem>>, vector<1x144xf32>
    %35 = vector.broadcast %34 : vector<1x144xf32> to vector<192x144xf32>
    %36 = arith.addf %33, %35 : vector<192x144xf32>
    %cst_31 = arith.constant 0.000000e+00 : f32
    %37 = vector.broadcast %cst_31 : f32 to vector<192x144xf32>
    %38 = arith.maximumf %36, %37 : vector<192x144xf32>
    %39 = vector.shape_cast %38 : vector<192x144xf32> to vector<8x24x144xf32>
    %c0_32 = arith.constant 0 : index
    %c0_33 = arith.constant 0 : index
    %c0_34 = arith.constant 0 : index
    %40 = vector.load %arg15[%c0_32, %c0_33, %c0_34] : memref<8x24x144xf32, #tpu.memory_space<vmem>>, vector<8x24x144xf32>
    tpu.vector_store %arg15[%c0_32, %c0_33, %c0_34], %39 {strides = array<i32>} : memref<8x24x144xf32, #tpu.memory_space<vmem>>, vector<8x24x144xf32>,
    %c0_35 = arith.constant 0 : index
    %c0_36 = arith.constant 0 : index
    %41 = vector.load %arg4[%c0_35, %c0_36] : memref<144x144xf32, #tpu.memory_space<vmem>>, vector<144x144xf32>
    %c0_37 = arith.constant 0 : index
    %c0_38 = arith.constant 0 : index
    %c0_39 = arith.constant 0 : index
    %42 = vector.load %arg15[%c0_37, %c0_38, %c0_39] : memref<8x24x144xf32, #tpu.memory_space<vmem>>, vector<8x1x144xf32>
    %43 = vector.shape_cast %42 : vector<8x1x144xf32> to vector<8x144xf32>
    %c0_40 = arith.constant 0 : index
    %c1_41 = arith.constant 1 : index
    %c0_42 = arith.constant 0 : index
    %44 = vector.load %arg15[%c0_40, %c1_41, %c0_42] : memref<8x24x144xf32, #tpu.memory_space<vmem>>, vector<8x1x144xf32>
    %45 = vector.shape_cast %44 : vector<8x1x144xf32> to vector<8x144xf32>
    %46 = arith.maximumf %43, %45 : vector<8x144xf32>
    %cst_43 = arith.constant dense<0.000000e+00> : vector<8x144xf32>
    %47 = tpu.matmul %46, %41, %cst_43 {dimension_numbers = #tpu.dot_dimension_numbers<[1], [0], [0], [1], [0, 0, 1, 1], [], []>} : vector<8x144xf32>, vector<144x144xf32>, vector<8x144xf32> -> vector<8x144xf32>
    %48 = arith.maximumf %46, %47 : vector<8x144xf32>
    %c0_44 = arith.constant 0 : index
    %c0_45 = arith.constant 0 : index
    %c0_46 = arith.constant 0 : index
    %49 = vector.load %arg16[%c0_44, %c0_45, %c0_46] : memref<8x12x144xf32, #tpu.memory_space<vmem>>, vector<8x1x144xf32>
    %50 = vector.shape_cast %49 : vector<8x1x144xf32> to vector<8x144xf32>
    %51 = vector.shape_cast %48 : vector<8x144xf32> to vector<8x1x144xf32>
    tpu.vector_store %arg16[%c0_44, %c0_45, %c0_46], %51 {strides = array<i32>} : memref<8x12x144xf32, #tpu.memory_space<vmem>>, vector<8x1x144xf32>,
    %c0_47 = arith.constant 0 : index
    %c2_48 = arith.constant 2 : index
    %c0_49 = arith.constant 0 : index
    %52 = vector.load %arg15[%c0_47, %c2_48, %c0_49] : memref<8x24x144xf32, #tpu.memory_space<vmem>>, vector<8x1x144xf32>
    %53 = vector.shape_cast %52 : vector<8x1x144xf32> to vector<8x144xf32>
    %c0_50 = arith.constant 0 : index
    %c3_51 = arith.constant 3 : index
    %c0_52 = arith.constant 0 : index
    %54 = vector.load %arg15[%c0_50, %c3_51, %c0_52] : memref<8x24x144xf32, #tpu.memory_space<vmem>>, vector<8x1x144xf32>
    %55 = vector.shape_cast %54 : vector<8x1x144xf32> to vector<8x144xf32>
    %56 = arith.maximumf %53, %55 : vector<8x144xf32>
    %cst_53 = arith.constant dense<0.000000e+00> : vector<8x144xf32>
    %57 = tpu.matmul %56, %41, %cst_53 {dimension_numbers = #tpu.dot_dimension_numbers<[1], [0], [0], [1], [0, 0, 1, 1], [], []>} : vector<8x144xf32>, vector<144x144xf32>, vector<8x144xf32> -> vector<8x144xf32>
    %58 = arith.maximumf %56, %57 : vector<8x144xf32>
    %c0_54 = arith.constant 0 : index
    %c1_55 = arith.constant 1 : index
    %c0_56 = arith.constant 0 : index
    %59 = vector.load %arg16[%c0_54, %c1_55, %c0_56] : memref<8x12x144xf32, #tpu.memory_space<vmem>>, vector<8x1x144xf32>
    %60 = vector.shape_cast %59 : vector<8x1x144xf32> to vector<8x144xf32>
    %61 = vector.shape_cast %58 : vector<8x144xf32> to vector<8x1x144xf32>
    tpu.vector_store %arg16[%c0_54, %c1_55, %c0_56], %61 {strides = array<i32>} : memref<8x12x144xf32, #tpu.memory_space<vmem>>, vector<8x1x144xf32>,
    %c0_57 = arith.constant 0 : index
    %c4_58 = arith.constant 4 : index
    %c0_59 = arith.constant 0 : index
    %62 = vector.load %arg15[%c0_57, %c4_58, %c0_59] : memref<8x24x144xf32, #tpu.memory_space<vmem>>, vector<8x1x144xf32>
    %63 = vector.shape_cast %62 : vector<8x1x144xf32> to vector<8x144xf32>
    %c0_60 = arith.constant 0 : index
    %c5 = arith.constant 5 : index
    %c0_61 = arith.constant 0 : index
    %64 = vector.load %arg15[%c0_60, %c5, %c0_61] : memref<8x24x144xf32, #tpu.memory_space<vmem>>, vector<8x1x144xf32>
    %65 = vector.shape_cast %64 : vector<8x1x144xf32> to vector<8x144xf32>
    %66 = arith.maximumf %63, %65 : vector<8x144xf32>
    %cst_62 = arith.constant dense<0.000000e+00> : vector<8x144xf32>
    %67 = tpu.matmul %66, %41, %cst_62 {dimension_numbers = #tpu.dot_dimension_numbers<[1], [0], [0], [1], [0, 0, 1, 1], [], []>} : vector<8x144xf32>, vector<144x144xf32>, vector<8x144xf32> -> vector<8x144xf32>
    %68 = arith.maximumf %66, %67 : vector<8x144xf32>
    %c0_63 = arith.constant 0 : index
    %c2_64 = arith.constant 2 : index
    %c0_65 = arith.constant 0 : index
    %69 = vector.load %arg16[%c0_63, %c2_64, %c0_65] : memref<8x12x144xf32, #tpu.memory_space<vmem>>, vector<8x1x144xf32>
    %70 = vector.shape_cast %69 : vector<8x1x144xf32> to vector<8x144xf32>
    %71 = vector.shape_cast %68 : vector<8x144xf32> to vector<8x1x144xf32>
    tpu.vector_store %arg16[%c0_63, %c2_64, %c0_65], %71 {strides = array<i32>} : memref<8x12x144xf32, #tpu.memory_space<vmem>>, vector<8x1x144xf32>,
    %c0_66 = arith.constant 0 : index
    %c6 = arith.constant 6 : index
    %c0_67 = arith.constant 0 : index
    %72 = vector.load %arg15[%c0_66, %c6, %c0_67] : memref<8x24x144xf32, #tpu.memory_space<vmem>>, vector<8x1x144xf32>
    %73 = vector.shape_cast %72 : vector<8x1x144xf32> to vector<8x144xf32>
    %c0_68 = arith.constant 0 : index
    %c7 = arith.constant 7 : index
    %c0_69 = arith.constant 0 : index
    %74 = vector.load %arg15[%c0_68, %c7, %c0_69] : memref<8x24x144xf32, #tpu.memory_space<vmem>>, vector<8x1x144xf32>
    %75 = vector.shape_cast %74 : vector<8x1x144xf32> to vector<8x144xf32>
    %76 = arith.maximumf %73, %75 : vector<8x144xf32>
    %cst_70 = arith.constant dense<0.000000e+00> : vector<8x144xf32>
    %77 = tpu.matmul %76, %41, %cst_70 {dimension_numbers = #tpu.dot_dimension_numbers<[1], [0], [0], [1], [0, 0, 1, 1], [], []>} : vector<8x144xf32>, vector<144x144xf32>, vector<8x144xf32> -> vector<8x144xf32>
    %78 = arith.maximumf %76, %77 : vector<8x144xf32>
    %c0_71 = arith.constant 0 : index
    %c3_72 = arith.constant 3 : index
    %c0_73 = arith.constant 0 : index
    %79 = vector.load %arg16[%c0_71, %c3_72, %c0_73] : memref<8x12x144xf32, #tpu.memory_space<vmem>>, vector<8x1x144xf32>
    %80 = vector.shape_cast %79 : vector<8x1x144xf32> to vector<8x144xf32>
    %81 = vector.shape_cast %78 : vector<8x144xf32> to vector<8x1x144xf32>
    tpu.vector_store %arg16[%c0_71, %c3_72, %c0_73], %81 {strides = array<i32>} : memref<8x12x144xf32, #tpu.memory_space<vmem>>, vector<8x1x144xf32>,
    %c0_74 = arith.constant 0 : index
    %c8 = arith.constant 8 : index
    %c0_75 = arith.constant 0 : index
    %82 = vector.load %arg15[%c0_74, %c8, %c0_75] : memref<8x24x144xf32, #tpu.memory_space<vmem>>, vector<8x1x144xf32>
    %83 = vector.shape_cast %82 : vector<8x1x144xf32> to vector<8x144xf32>
    %c0_76 = arith.constant 0 : index
    %c9 = arith.constant 9 : index
    %c0_77 = arith.constant 0 : index
    %84 = vector.load %arg15[%c0_76, %c9, %c0_77] : memref<8x24x144xf32, #tpu.memory_space<vmem>>, vector<8x1x144xf32>
    %85 = vector.shape_cast %84 : vector<8x1x144xf32> to vector<8x144xf32>
    %86 = arith.maximumf %83, %85 : vector<8x144xf32>
    %cst_78 = arith.constant dense<0.000000e+00> : vector<8x144xf32>
    %87 = tpu.matmul %86, %41, %cst_78 {dimension_numbers = #tpu.dot_dimension_numbers<[1], [0], [0], [1], [0, 0, 1, 1], [], []>} : vector<8x144xf32>, vector<144x144xf32>, vector<8x144xf32> -> vector<8x144xf32>
    %88 = arith.maximumf %86, %87 : vector<8x144xf32>
    %c0_79 = arith.constant 0 : index
    %c4_80 = arith.constant 4 : index
    %c0_81 = arith.constant 0 : index
    %89 = vector.load %arg16[%c0_79, %c4_80, %c0_81] : memref<8x12x144xf32, #tpu.memory_space<vmem>>, vector<8x1x144xf32>
    %90 = vector.shape_cast %89 : vector<8x1x144xf32> to vector<8x144xf32>
    %91 = vector.shape_cast %88 : vector<8x144xf32> to vector<8x1x144xf32>
    tpu.vector_store %arg16[%c0_79, %c4_80, %c0_81], %91 {strides = array<i32>} : memref<8x12x144xf32, #tpu.memory_space<vmem>>, vector<8x1x144xf32>,
    %c0_82 = arith.constant 0 : index
    %c10 = arith.constant 10 : index
    %c0_83 = arith.constant 0 : index
    %92 = vector.load %arg15[%c0_82, %c10, %c0_83] : memref<8x24x144xf32, #tpu.memory_space<vmem>>, vector<8x1x144xf32>
    %93 = vector.shape_cast %92 : vector<8x1x144xf32> to vector<8x144xf32>
    %c0_84 = arith.constant 0 : index
    %c11 = arith.constant 11 : index
    %c0_85 = arith.constant 0 : index
    %94 = vector.load %arg15[%c0_84, %c11, %c0_85] : memref<8x24x144xf32, #tpu.memory_space<vmem>>, vector<8x1x144xf32>
    %95 = vector.shape_cast %94 : vector<8x1x144xf32> to vector<8x144xf32>
    %96 = arith.maximumf %93, %95 : vector<8x144xf32>
    %cst_86 = arith.constant dense<0.000000e+00> : vector<8x144xf32>
    %97 = tpu.matmul %96, %41, %cst_86 {dimension_numbers = #tpu.dot_dimension_numbers<[1], [0], [0], [1], [0, 0, 1, 1], [], []>} : vector<8x144xf32>, vector<144x144xf32>, vector<8x144xf32> -> vector<8x144xf32>
    %98 = arith.maximumf %96, %97 : vector<8x144xf32>
    %c0_87 = arith.constant 0 : index
    %c5_88 = arith.constant 5 : index
    %c0_89 = arith.constant 0 : index
    %99 = vector.load %arg16[%c0_87, %c5_88, %c0_89] : memref<8x12x144xf32, #tpu.memory_space<vmem>>, vector<8x1x144xf32>
    %100 = vector.shape_cast %99 : vector<8x1x144xf32> to vector<8x144xf32>
    %101 = vector.shape_cast %98 : vector<8x144xf32> to vector<8x1x144xf32>
    tpu.vector_store %arg16[%c0_87, %c5_88, %c0_89], %101 {strides = array<i32>} : memref<8x12x144xf32, #tpu.memory_space<vmem>>, vector<8x1x144xf32>,
    %c0_90 = arith.constant 0 : index
    %c12 = arith.constant 12 : index
    %c0_91 = arith.constant 0 : index
    %102 = vector.load %arg15[%c0_90, %c12, %c0_91] : memref<8x24x144xf32, #tpu.memory_space<vmem>>, vector<8x1x144xf32>
    %103 = vector.shape_cast %102 : vector<8x1x144xf32> to vector<8x144xf32>
    %c0_92 = arith.constant 0 : index
    %c13 = arith.constant 13 : index
    %c0_93 = arith.constant 0 : index
    %104 = vector.load %arg15[%c0_92, %c13, %c0_93] : memref<8x24x144xf32, #tpu.memory_space<vmem>>, vector<8x1x144xf32>
    %105 = vector.shape_cast %104 : vector<8x1x144xf32> to vector<8x144xf32>
    %106 = arith.maximumf %103, %105 : vector<8x144xf32>
    %cst_94 = arith.constant dense<0.000000e+00> : vector<8x144xf32>
    %107 = tpu.matmul %106, %41, %cst_94 {dimension_numbers = #tpu.dot_dimension_numbers<[1], [0], [0], [1], [0, 0, 1, 1], [], []>} : vector<8x144xf32>, vector<144x144xf32>, vector<8x144xf32> -> vector<8x144xf32>
    %108 = arith.maximumf %106, %107 : vector<8x144xf32>
    %c0_95 = arith.constant 0 : index
    %c6_96 = arith.constant 6 : index
    %c0_97 = arith.constant 0 : index
    %109 = vector.load %arg16[%c0_95, %c6_96, %c0_97] : memref<8x12x144xf32, #tpu.memory_space<vmem>>, vector<8x1x144xf32>
    %110 = vector.shape_cast %109 : vector<8x1x144xf32> to vector<8x144xf32>
    %111 = vector.shape_cast %108 : vector<8x144xf32> to vector<8x1x144xf32>
    tpu.vector_store %arg16[%c0_95, %c6_96, %c0_97], %111 {strides = array<i32>} : memref<8x12x144xf32, #tpu.memory_space<vmem>>, vector<8x1x144xf32>,
    %c0_98 = arith.constant 0 : index
    %c14 = arith.constant 14 : index
    %c0_99 = arith.constant 0 : index
    %112 = vector.load %arg15[%c0_98, %c14, %c0_99] : memref<8x24x144xf32, #tpu.memory_space<vmem>>, vector<8x1x144xf32>
    %113 = vector.shape_cast %112 : vector<8x1x144xf32> to vector<8x144xf32>
    %c0_100 = arith.constant 0 : index
    %c15 = arith.constant 15 : index
    %c0_101 = arith.constant 0 : index
    %114 = vector.load %arg15[%c0_100, %c15, %c0_101] : memref<8x24x144xf32, #tpu.memory_space<vmem>>, vector<8x1x144xf32>
    %115 = vector.shape_cast %114 : vector<8x1x144xf32> to vector<8x144xf32>
    %116 = arith.maximumf %113, %115 : vector<8x144xf32>
    %cst_102 = arith.constant dense<0.000000e+00> : vector<8x144xf32>
    %117 = tpu.matmul %116, %41, %cst_102 {dimension_numbers = #tpu.dot_dimension_numbers<[1], [0], [0], [1], [0, 0, 1, 1], [], []>} : vector<8x144xf32>, vector<144x144xf32>, vector<8x144xf32> -> vector<8x144xf32>
    %118 = arith.maximumf %116, %117 : vector<8x144xf32>
    %c0_103 = arith.constant 0 : index
    %c7_104 = arith.constant 7 : index
    %c0_105 = arith.constant 0 : index
    %119 = vector.load %arg16[%c0_103, %c7_104, %c0_105] : memref<8x12x144xf32, #tpu.memory_space<vmem>>, vector<8x1x144xf32>
    %120 = vector.shape_cast %119 : vector<8x1x144xf32> to vector<8x144xf32>
    %121 = vector.shape_cast %118 : vector<8x144xf32> to vector<8x1x144xf32>
    tpu.vector_store %arg16[%c0_103, %c7_104, %c0_105], %121 {strides = array<i32>} : memref<8x12x144xf32, #tpu.memory_space<vmem>>, vector<8x1x144xf32>,
    %c0_106 = arith.constant 0 : index
    %c16 = arith.constant 16 : index
    %c0_107 = arith.constant 0 : index
    %122 = vector.load %arg15[%c0_106, %c16, %c0_107] : memref<8x24x144xf32, #tpu.memory_space<vmem>>, vector<8x1x144xf32>
    %123 = vector.shape_cast %122 : vector<8x1x144xf32> to vector<8x144xf32>
    %c0_108 = arith.constant 0 : index
    %c17 = arith.constant 17 : index
    %c0_109 = arith.constant 0 : index
    %124 = vector.load %arg15[%c0_108, %c17, %c0_109] : memref<8x24x144xf32, #tpu.memory_space<vmem>>, vector<8x1x144xf32>
    %125 = vector.shape_cast %124 : vector<8x1x144xf32> to vector<8x144xf32>
    %126 = arith.maximumf %123, %125 : vector<8x144xf32>
    %cst_110 = arith.constant dense<0.000000e+00> : vector<8x144xf32>
    %127 = tpu.matmul %126, %41, %cst_110 {dimension_numbers = #tpu.dot_dimension_numbers<[1], [0], [0], [1], [0, 0, 1, 1], [], []>} : vector<8x144xf32>, vector<144x144xf32>, vector<8x144xf32> -> vector<8x144xf32>
    %128 = arith.maximumf %126, %127 : vector<8x144xf32>
    %c0_111 = arith.constant 0 : index
    %c8_112 = arith.constant 8 : index
    %c0_113 = arith.constant 0 : index
    %129 = vector.load %arg16[%c0_111, %c8_112, %c0_113] : memref<8x12x144xf32, #tpu.memory_space<vmem>>, vector<8x1x144xf32>
    %130 = vector.shape_cast %129 : vector<8x1x144xf32> to vector<8x144xf32>
    %131 = vector.shape_cast %128 : vector<8x144xf32> to vector<8x1x144xf32>
    tpu.vector_store %arg16[%c0_111, %c8_112, %c0_113], %131 {strides = array<i32>} : memref<8x12x144xf32, #tpu.memory_space<vmem>>, vector<8x1x144xf32>,
    %c0_114 = arith.constant 0 : index
    %c18 = arith.constant 18 : index
    %c0_115 = arith.constant 0 : index
    %132 = vector.load %arg15[%c0_114, %c18, %c0_115] : memref<8x24x144xf32, #tpu.memory_space<vmem>>, vector<8x1x144xf32>
    %133 = vector.shape_cast %132 : vector<8x1x144xf32> to vector<8x144xf32>
    %c0_116 = arith.constant 0 : index
    %c19 = arith.constant 19 : index
    %c0_117 = arith.constant 0 : index
    %134 = vector.load %arg15[%c0_116, %c19, %c0_117] : memref<8x24x144xf32, #tpu.memory_space<vmem>>, vector<8x1x144xf32>
    %135 = vector.shape_cast %134 : vector<8x1x144xf32> to vector<8x144xf32>
    %136 = arith.maximumf %133, %135 : vector<8x144xf32>
    %cst_118 = arith.constant dense<0.000000e+00> : vector<8x144xf32>
    %137 = tpu.matmul %136, %41, %cst_118 {dimension_numbers = #tpu.dot_dimension_numbers<[1], [0], [0], [1], [0, 0, 1, 1], [], []>} : vector<8x144xf32>, vector<144x144xf32>, vector<8x144xf32> -> vector<8x144xf32>
    %138 = arith.maximumf %136, %137 : vector<8x144xf32>
    %c0_119 = arith.constant 0 : index
    %c9_120 = arith.constant 9 : index
    %c0_121 = arith.constant 0 : index
    %139 = vector.load %arg16[%c0_119, %c9_120, %c0_121] : memref<8x12x144xf32, #tpu.memory_space<vmem>>, vector<8x1x144xf32>
    %140 = vector.shape_cast %139 : vector<8x1x144xf32> to vector<8x144xf32>
    %141 = vector.shape_cast %138 : vector<8x144xf32> to vector<8x1x144xf32>
    tpu.vector_store %arg16[%c0_119, %c9_120, %c0_121], %141 {strides = array<i32>} : memref<8x12x144xf32, #tpu.memory_space<vmem>>, vector<8x1x144xf32>,
    %c0_122 = arith.constant 0 : index
    %c20 = arith.constant 20 : index
    %c0_123 = arith.constant 0 : index
    %142 = vector.load %arg15[%c0_122, %c20, %c0_123] : memref<8x24x144xf32, #tpu.memory_space<vmem>>, vector<8x1x144xf32>
    %143 = vector.shape_cast %142 : vector<8x1x144xf32> to vector<8x144xf32>
    %c0_124 = arith.constant 0 : index
    %c21 = arith.constant 21 : index
    %c0_125 = arith.constant 0 : index
    %144 = vector.load %arg15[%c0_124, %c21, %c0_125] : memref<8x24x144xf32, #tpu.memory_space<vmem>>, vector<8x1x144xf32>
    %145 = vector.shape_cast %144 : vector<8x1x144xf32> to vector<8x144xf32>
    %146 = arith.maximumf %143, %145 : vector<8x144xf32>
    %cst_126 = arith.constant dense<0.000000e+00> : vector<8x144xf32>
    %147 = tpu.matmul %146, %41, %cst_126 {dimension_numbers = #tpu.dot_dimension_numbers<[1], [0], [0], [1], [0, 0, 1, 1], [], []>} : vector<8x144xf32>, vector<144x144xf32>, vector<8x144xf32> -> vector<8x144xf32>
    %148 = arith.maximumf %146, %147 : vector<8x144xf32>
    %c0_127 = arith.constant 0 : index
    %c10_128 = arith.constant 10 : index
    %c0_129 = arith.constant 0 : index
    %149 = vector.load %arg16[%c0_127, %c10_128, %c0_129] : memref<8x12x144xf32, #tpu.memory_space<vmem>>, vector<8x1x144xf32>
    %150 = vector.shape_cast %149 : vector<8x1x144xf32> to vector<8x144xf32>
    %151 = vector.shape_cast %148 : vector<8x144xf32> to vector<8x1x144xf32>
    tpu.vector_store %arg16[%c0_127, %c10_128, %c0_129], %151 {strides = array<i32>} : memref<8x12x144xf32, #tpu.memory_space<vmem>>, vector<8x1x144xf32>,
    %c0_130 = arith.constant 0 : index
    %c22 = arith.constant 22 : index
    %c0_131 = arith.constant 0 : index
    %152 = vector.load %arg15[%c0_130, %c22, %c0_131] : memref<8x24x144xf32, #tpu.memory_space<vmem>>, vector<8x1x144xf32>
    %153 = vector.shape_cast %152 : vector<8x1x144xf32> to vector<8x144xf32>
    %c0_132 = arith.constant 0 : index
    %c23 = arith.constant 23 : index
    %c0_133 = arith.constant 0 : index
    %154 = vector.load %arg15[%c0_132, %c23, %c0_133] : memref<8x24x144xf32, #tpu.memory_space<vmem>>, vector<8x1x144xf32>
    %155 = vector.shape_cast %154 : vector<8x1x144xf32> to vector<8x144xf32>
    %156 = arith.maximumf %153, %155 : vector<8x144xf32>
    %cst_134 = arith.constant dense<0.000000e+00> : vector<8x144xf32>
    %157 = tpu.matmul %156, %41, %cst_134 {dimension_numbers = #tpu.dot_dimension_numbers<[1], [0], [0], [1], [0, 0, 1, 1], [], []>} : vector<8x144xf32>, vector<144x144xf32>, vector<8x144xf32> -> vector<8x144xf32>
    %158 = arith.maximumf %156, %157 : vector<8x144xf32>
    %c0_135 = arith.constant 0 : index
    %c11_136 = arith.constant 11 : index
    %c0_137 = arith.constant 0 : index
    %159 = vector.load %arg16[%c0_135, %c11_136, %c0_137] : memref<8x12x144xf32, #tpu.memory_space<vmem>>, vector<8x1x144xf32>
    %160 = vector.shape_cast %159 : vector<8x1x144xf32> to vector<8x144xf32>
    %161 = vector.shape_cast %158 : vector<8x144xf32> to vector<8x1x144xf32>
    tpu.vector_store %arg16[%c0_135, %c11_136, %c0_137], %161 {strides = array<i32>} : memref<8x12x144xf32, #tpu.memory_space<vmem>>, vector<8x1x144xf32>,
    %c0_138 = arith.constant 0 : index
    %c0_139 = arith.constant 0 : index
    %c0_140 = arith.constant 0 : index
    %162 = vector.load %arg16[%c0_138, %c0_139, %c0_140] : memref<8x12x144xf32, #tpu.memory_space<vmem>>, vector<8x8x144xf32>
    %163 = vector.shape_cast %162 : vector<8x8x144xf32> to vector<64x144xf32>
    %164 = arith.truncf %163 : vector<64x144xf32> to vector<64x144xbf16>
    %c0_141 = arith.constant 0 : index
    %c0_142 = arith.constant 0 : index
    %c0_143 = arith.constant 0 : index
    %165 = vector.load %arg5[%c0_141, %c0_142, %c0_143] : memref<5x144x128xbf16, #tpu.memory_space<vmem>>, vector<1x144x128xbf16>
    %166 = vector.shape_cast %165 : vector<1x144x128xbf16> to vector<144x128xbf16>
    %cst_144 = arith.constant dense<0.000000e+00> : vector<64x128xf32>
    %167 = tpu.matmul %164, %166, %cst_144 {dimension_numbers = #tpu.dot_dimension_numbers<[1], [0], [0], [1], [0, 0, 1, 1], [], []>} : vector<64x144xbf16>, vector<144x128xbf16>, vector<64x128xf32> -> vector<64x128xf32>
    %c0_145 = arith.constant 0 : index
    %c1_146 = arith.constant 1 : index
    %c0_147 = arith.constant 0 : index
    %168 = vector.load %arg16[%c0_145, %c1_146, %c0_147] : memref<8x12x144xf32, #tpu.memory_space<vmem>>, vector<8x8x144xf32>
    %169 = vector.shape_cast %168 : vector<8x8x144xf32> to vector<64x144xf32>
    %170 = arith.truncf %169 : vector<64x144xf32> to vector<64x144xbf16>
    %c1_148 = arith.constant 1 : index
    %c0_149 = arith.constant 0 : index
    %c0_150 = arith.constant 0 : index
    %171 = vector.load %arg5[%c1_148, %c0_149, %c0_150] : memref<5x144x128xbf16, #tpu.memory_space<vmem>>, vector<1x144x128xbf16>
    %172 = vector.shape_cast %171 : vector<1x144x128xbf16> to vector<144x128xbf16>
    %cst_151 = arith.constant dense<0.000000e+00> : vector<64x128xf32>
    %173 = tpu.matmul %170, %172, %cst_151 {dimension_numbers = #tpu.dot_dimension_numbers<[1], [0], [0], [1], [0, 0, 1, 1], [], []>} : vector<64x144xbf16>, vector<144x128xbf16>, vector<64x128xf32> -> vector<64x128xf32>
    %174 = arith.addf %167, %173 : vector<64x128xf32>
    %c0_152 = arith.constant 0 : index
    %c2_153 = arith.constant 2 : index
    %c0_154 = arith.constant 0 : index
    %175 = vector.load %arg16[%c0_152, %c2_153, %c0_154] : memref<8x12x144xf32, #tpu.memory_space<vmem>>, vector<8x8x144xf32>
    %176 = vector.shape_cast %175 : vector<8x8x144xf32> to vector<64x144xf32>
    %177 = arith.truncf %176 : vector<64x144xf32> to vector<64x144xbf16>
    %c2_155 = arith.constant 2 : index
    %c0_156 = arith.constant 0 : index
    %c0_157 = arith.constant 0 : index
    %178 = vector.load %arg5[%c2_155, %c0_156, %c0_157] : memref<5x144x128xbf16, #tpu.memory_space<vmem>>, vector<1x144x128xbf16>
    %179 = vector.shape_cast %178 : vector<1x144x128xbf16> to vector<144x128xbf16>
    %cst_158 = arith.constant dense<0.000000e+00> : vector<64x128xf32>
    %180 = tpu.matmul %177, %179, %cst_158 {dimension_numbers = #tpu.dot_dimension_numbers<[1], [0], [0], [1], [0, 0, 1, 1], [], []>} : vector<64x144xbf16>, vector<144x128xbf16>, vector<64x128xf32> -> vector<64x128xf32>
    %181 = arith.addf %174, %180 : vector<64x128xf32>
    %c0_159 = arith.constant 0 : index
    %c3_160 = arith.constant 3 : index
    %c0_161 = arith.constant 0 : index
    %182 = vector.load %arg16[%c0_159, %c3_160, %c0_161] : memref<8x12x144xf32, #tpu.memory_space<vmem>>, vector<8x8x144xf32>
    %183 = vector.shape_cast %182 : vector<8x8x144xf32> to vector<64x144xf32>
    %184 = arith.truncf %183 : vector<64x144xf32> to vector<64x144xbf16>
    %c3_162 = arith.constant 3 : index
    %c0_163 = arith.constant 0 : index
    %c0_164 = arith.constant 0 : index
    %185 = vector.load %arg5[%c3_162, %c0_163, %c0_164] : memref<5x144x128xbf16, #tpu.memory_space<vmem>>, vector<1x144x128xbf16>
    %186 = vector.shape_cast %185 : vector<1x144x128xbf16> to vector<144x128xbf16>
    %cst_165 = arith.constant dense<0.000000e+00> : vector<64x128xf32>
    %187 = tpu.matmul %184, %186, %cst_165 {dimension_numbers = #tpu.dot_dimension_numbers<[1], [0], [0], [1], [0, 0, 1, 1], [], []>} : vector<64x144xbf16>, vector<144x128xbf16>, vector<64x128xf32> -> vector<64x128xf32>
    %188 = arith.addf %181, %187 : vector<64x128xf32>
    %c0_166 = arith.constant 0 : index
    %c4_167 = arith.constant 4 : index
    %c0_168 = arith.constant 0 : index
    %189 = vector.load %arg16[%c0_166, %c4_167, %c0_168] : memref<8x12x144xf32, #tpu.memory_space<vmem>>, vector<8x8x144xf32>
    %190 = vector.shape_cast %189 : vector<8x8x144xf32> to vector<64x144xf32>
    %191 = arith.truncf %190 : vector<64x144xf32> to vector<64x144xbf16>
    %c4_169 = arith.constant 4 : index
    %c0_170 = arith.constant 0 : index
    %c0_171 = arith.constant 0 : index
    %192 = vector.load %arg5[%c4_169, %c0_170, %c0_171] : memref<5x144x128xbf16, #tpu.memory_space<vmem>>, vector<1x144x128xbf16>
    %193 = vector.shape_cast %192 : vector<1x144x128xbf16> to vector<144x128xbf16>
    %cst_172 = arith.constant dense<0.000000e+00> : vector<64x128xf32>
    %194 = tpu.matmul %191, %193, %cst_172 {dimension_numbers = #tpu.dot_dimension_numbers<[1], [0], [0], [1], [0, 0, 1, 1], [], []>} : vector<64x144xbf16>, vector<144x128xbf16>, vector<64x128xf32> -> vector<64x128xf32>
    %195 = arith.addf %188, %194 : vector<64x128xf32>
    %c0_173 = arith.constant 0 : index
    %c0_174 = arith.constant 0 : index
    %196 = vector.load %arg6[%c0_173, %c0_174] : memref<1x128xf32, #tpu.memory_space<vmem>>, vector<1x128xf32>
    %197 = vector.broadcast %196 : vector<1x128xf32> to vector<64x128xf32>
    %198 = arith.addf %195, %197 : vector<64x128xf32>
    %cst_175 = arith.constant 0.000000e+00 : f32
    %199 = vector.broadcast %cst_175 : f32 to vector<64x128xf32>
    %200 = arith.maximumf %198, %199 : vector<64x128xf32>
    %201 = vector.shape_cast %200 : vector<64x128xf32> to vector<8x8x128xf32>
    %c0_176 = arith.constant 0 : index
    %c0_177 = arith.constant 0 : index
    %c0_178 = arith.constant 0 : index
    %202 = vector.load %arg17[%c0_176, %c0_177, %c0_178] : memref<8x8x128xf32, #tpu.memory_space<vmem>>, vector<8x8x128xf32>
    tpu.vector_store %arg17[%c0_176, %c0_177, %c0_178], %201 {strides = array<i32>} : memref<8x8x128xf32, #tpu.memory_space<vmem>>, vector<8x8x128xf32>,
    %c0_179 = arith.constant 0 : index
    %c0_180 = arith.constant 0 : index
    %203 = vector.load %arg7[%c0_179, %c0_180] : memref<128x128xf32, #tpu.memory_space<vmem>>, vector<128x128xf32>
    %cst_181 = arith.constant 0.000000e+00 : f32
    %204 = vector.broadcast %cst_181 : f32 to vector<8x120xf32>
    %c0_182 = arith.constant 0 : index
    %c0_183 = arith.constant 0 : index
    %c0_184 = arith.constant 0 : index
    %205 = vector.load %arg17[%c0_182, %c0_183, %c0_184] : memref<8x8x128xf32, #tpu.memory_space<vmem>>, vector<8x1x128xf32>
    %206 = vector.shape_cast %205 : vector<8x1x128xf32> to vector<8x128xf32>
    %c0_185 = arith.constant 0 : index
    %c1_186 = arith.constant 1 : index
    %c0_187 = arith.constant 0 : index
    %207 = vector.load %arg17[%c0_185, %c1_186, %c0_187] : memref<8x8x128xf32, #tpu.memory_space<vmem>>, vector<8x1x128xf32>
    %208 = vector.shape_cast %207 : vector<8x1x128xf32> to vector<8x128xf32>
    %209 = arith.maximumf %206, %208 : vector<8x128xf32>
    %cst_188 = arith.constant dense<0.000000e+00> : vector<8x128xf32>
    %210 = tpu.matmul %209, %203, %cst_188 {dimension_numbers = #tpu.dot_dimension_numbers<[1], [0], [0], [1], [0, 0, 1, 1], [], []>} : vector<8x128xf32>, vector<128x128xf32>, vector<8x128xf32> -> vector<8x128xf32>
    %211 = arith.maximumf %209, %210 : vector<8x128xf32>
    %212 = arith.truncf %211 : vector<8x128xf32> to vector<8x128xbf16>
    %c0_189 = arith.constant 0 : index
    %c0_190 = arith.constant 0 : index
    %c0_191 = arith.constant 0 : index
    %213 = vector.load %arg8[%c0_189, %c0_190, %c0_191] : memref<4x128x120xbf16, #tpu.memory_space<vmem>>, vector<1x128x120xbf16>
    %214 = vector.shape_cast %213 : vector<1x128x120xbf16> to vector<128x120xbf16>
    %cst_192 = arith.constant dense<0.000000e+00> : vector<8x120xf32>
    %215 = tpu.matmul %212, %214, %cst_192 {dimension_numbers = #tpu.dot_dimension_numbers<[1], [0], [0], [1], [0, 0, 1, 1], [], []>} : vector<8x128xbf16>, vector<128x120xbf16>, vector<8x120xf32> -> vector<8x120xf32>
    %216 = arith.addf %204, %215 : vector<8x120xf32>
    %c0_193 = arith.constant 0 : index
    %c2_194 = arith.constant 2 : index
    %c0_195 = arith.constant 0 : index
    %217 = vector.load %arg17[%c0_193, %c2_194, %c0_195] : memref<8x8x128xf32, #tpu.memory_space<vmem>>, vector<8x1x128xf32>
    %218 = vector.shape_cast %217 : vector<8x1x128xf32> to vector<8x128xf32>
    %c0_196 = arith.constant 0 : index
    %c3_197 = arith.constant 3 : index
    %c0_198 = arith.constant 0 : index
    %219 = vector.load %arg17[%c0_196, %c3_197, %c0_198] : memref<8x8x128xf32, #tpu.memory_space<vmem>>, vector<8x1x128xf32>
    %220 = vector.shape_cast %219 : vector<8x1x128xf32> to vector<8x128xf32>
    %221 = arith.maximumf %218, %220 : vector<8x128xf32>
    %cst_199 = arith.constant dense<0.000000e+00> : vector<8x128xf32>
    %222 = tpu.matmul %221, %203, %cst_199 {dimension_numbers = #tpu.dot_dimension_numbers<[1], [0], [0], [1], [0, 0, 1, 1], [], []>} : vector<8x128xf32>, vector<128x128xf32>, vector<8x128xf32> -> vector<8x128xf32>
    %223 = arith.maximumf %221, %222 : vector<8x128xf32>
    %224 = arith.truncf %223 : vector<8x128xf32> to vector<8x128xbf16>
    %c1_200 = arith.constant 1 : index
    %c0_201 = arith.constant 0 : index
    %c0_202 = arith.constant 0 : index
    %225 = vector.load %arg8[%c1_200, %c0_201, %c0_202] : memref<4x128x120xbf16, #tpu.memory_space<vmem>>, vector<1x128x120xbf16>
    %226 = vector.shape_cast %225 : vector<1x128x120xbf16> to vector<128x120xbf16>
    %cst_203 = arith.constant dense<0.000000e+00> : vector<8x120xf32>
    %227 = tpu.matmul %224, %226, %cst_203 {dimension_numbers = #tpu.dot_dimension_numbers<[1], [0], [0], [1], [0, 0, 1, 1], [], []>} : vector<8x128xbf16>, vector<128x120xbf16>, vector<8x120xf32> -> vector<8x120xf32>
    %228 = arith.addf %216, %227 : vector<8x120xf32>
    %c0_204 = arith.constant 0 : index
    %c4_205 = arith.constant 4 : index
    %c0_206 = arith.constant 0 : index
    %229 = vector.load %arg17[%c0_204, %c4_205, %c0_206] : memref<8x8x128xf32, #tpu.memory_space<vmem>>, vector<8x1x128xf32>
    %230 = vector.shape_cast %229 : vector<8x1x128xf32> to vector<8x128xf32>
    %c0_207 = arith.constant 0 : index
    %c5_208 = arith.constant 5 : index
    %c0_209 = arith.constant 0 : index
    %231 = vector.load %arg17[%c0_207, %c5_208, %c0_209] : memref<8x8x128xf32, #tpu.memory_space<vmem>>, vector<8x1x128xf32>
    %232 = vector.shape_cast %231 : vector<8x1x128xf32> to vector<8x128xf32>
    %233 = arith.maximumf %230, %232 : vector<8x128xf32>
    %cst_210 = arith.constant dense<0.000000e+00> : vector<8x128xf32>
    %234 = tpu.matmul %233, %203, %cst_210 {dimension_numbers = #tpu.dot_dimension_numbers<[1], [0], [0], [1], [0, 0, 1, 1], [], []>} : vector<8x128xf32>, vector<128x128xf32>, vector<8x128xf32> -> vector<8x128xf32>
    %235 = arith.maximumf %233, %234 : vector<8x128xf32>
    %236 = arith.truncf %235 : vector<8x128xf32> to vector<8x128xbf16>
    %c2_211 = arith.constant 2 : index
    %c0_212 = arith.constant 0 : index
    %c0_213 = arith.constant 0 : index
    %237 = vector.load %arg8[%c2_211, %c0_212, %c0_213] : memref<4x128x120xbf16, #tpu.memory_space<vmem>>, vector<1x128x120xbf16>
    %238 = vector.shape_cast %237 : vector<1x128x120xbf16> to vector<128x120xbf16>
    %cst_214 = arith.constant dense<0.000000e+00> : vector<8x120xf32>
    %239 = tpu.matmul %236, %238, %cst_214 {dimension_numbers = #tpu.dot_dimension_numbers<[1], [0], [0], [1], [0, 0, 1, 1], [], []>} : vector<8x128xbf16>, vector<128x120xbf16>, vector<8x120xf32> -> vector<8x120xf32>
    %240 = arith.addf %228, %239 : vector<8x120xf32>
    %c0_215 = arith.constant 0 : index
    %c6_216 = arith.constant 6 : index
    %c0_217 = arith.constant 0 : index
    %241 = vector.load %arg17[%c0_215, %c6_216, %c0_217] : memref<8x8x128xf32, #tpu.memory_space<vmem>>, vector<8x1x128xf32>
    %242 = vector.shape_cast %241 : vector<8x1x128xf32> to vector<8x128xf32>
    %c0_218 = arith.constant 0 : index
    %c7_219 = arith.constant 7 : index
    %c0_220 = arith.constant 0 : index
    %243 = vector.load %arg17[%c0_218, %c7_219, %c0_220] : memref<8x8x128xf32, #tpu.memory_space<vmem>>, vector<8x1x128xf32>
    %244 = vector.shape_cast %243 : vector<8x1x128xf32> to vector<8x128xf32>
    %245 = arith.maximumf %242, %244 : vector<8x128xf32>
    %cst_221 = arith.constant dense<0.000000e+00> : vector<8x128xf32>
    %246 = tpu.matmul %245, %203, %cst_221 {dimension_numbers = #tpu.dot_dimension_numbers<[1], [0], [0], [1], [0, 0, 1, 1], [], []>} : vector<8x128xf32>, vector<128x128xf32>, vector<8x128xf32> -> vector<8x128xf32>
    %247 = arith.maximumf %245, %246 : vector<8x128xf32>
    %248 = arith.truncf %247 : vector<8x128xf32> to vector<8x128xbf16>
    %c3_222 = arith.constant 3 : index
    %c0_223 = arith.constant 0 : index
    %c0_224 = arith.constant 0 : index
    %249 = vector.load %arg8[%c3_222, %c0_223, %c0_224] : memref<4x128x120xbf16, #tpu.memory_space<vmem>>, vector<1x128x120xbf16>
    %250 = vector.shape_cast %249 : vector<1x128x120xbf16> to vector<128x120xbf16>
    %cst_225 = arith.constant dense<0.000000e+00> : vector<8x120xf32>
    %251 = tpu.matmul %248, %250, %cst_225 {dimension_numbers = #tpu.dot_dimension_numbers<[1], [0], [0], [1], [0, 0, 1, 1], [], []>} : vector<8x128xbf16>, vector<128x120xbf16>, vector<8x120xf32> -> vector<8x120xf32>
    %252 = arith.addf %240, %251 : vector<8x120xf32>
    %c0_226 = arith.constant 0 : index
    %c0_227 = arith.constant 0 : index
    %253 = vector.load %arg9[%c0_226, %c0_227] : memref<1x120xf32, #tpu.memory_space<vmem>>, vector<1x120xf32>
    %254 = vector.broadcast %253 : vector<1x120xf32> to vector<8x120xf32>
    %255 = arith.addf %252, %254 : vector<8x120xf32>
    %cst_228 = arith.constant 0.000000e+00 : f32
    %256 = vector.broadcast %cst_228 : f32 to vector<8x120xf32>
    %257 = arith.maximumf %255, %256 : vector<8x120xf32>
    %c0_229 = arith.constant 0 : index
    %c0_230 = arith.constant 0 : index
    %258 = vector.load %arg10[%c0_229, %c0_230] : memref<120x120xf32, #tpu.memory_space<vmem>>, vector<120x120xf32>
    %c0_231 = arith.constant 0 : index
    %c0_232 = arith.constant 0 : index
    %259 = vector.load %arg11[%c0_231, %c0_232] : memref<1x120xf32, #tpu.memory_space<vmem>>, vector<1x120xf32>
    %260 = vector.shape_cast %259 : vector<1x120xf32> to vector<1x120xf32>
    %261 = vector.broadcast %260 : vector<1x120xf32> to vector<8x120xf32>
    %cst_233 = arith.constant dense<0.000000e+00> : vector<8x120xf32>
    %262 = tpu.matmul %257, %258, %cst_233 {dimension_numbers = #tpu.dot_dimension_numbers<[1], [0], [0], [1], [0, 0, 1, 1], [], []>} : vector<8x120xf32>, vector<120x120xf32>, vector<8x120xf32> -> vector<8x120xf32>
    %263 = arith.addf %262, %261 : vector<8x120xf32>
    %cst_234 = arith.constant dense<0.000000e+00> : vector<8x120xf32>
    %264 = tpu.matmul %263, %258, %cst_234 {dimension_numbers = #tpu.dot_dimension_numbers<[1], [0], [0], [1], [0, 0, 1, 1], [], []>} : vector<8x120xf32>, vector<120x120xf32>, vector<8x120xf32> -> vector<8x120xf32>
    %265 = arith.addf %264, %261 : vector<8x120xf32>
    %cst_235 = arith.constant 0.000000e+00 : f32
    %266 = vector.broadcast %cst_235 : f32 to vector<8x120xf32>
    %267 = arith.maximumf %265, %266 : vector<8x120xf32>
    %c0_236 = arith.constant 0 : index
    %c0_237 = arith.constant 0 : index
    %268 = vector.load %arg12[%c0_236, %c0_237] : memref<120x10xf32, #tpu.memory_space<vmem>>, vector<120x10xf32>
    %cst_238 = arith.constant dense<0.000000e+00> : vector<8x10xf32>
    %269 = tpu.matmul %267, %268, %cst_238 {dimension_numbers = #tpu.dot_dimension_numbers<[1], [0], [0], [1], [0, 0, 1, 1], [], []>} : vector<8x120xf32>, vector<120x10xf32>, vector<8x10xf32> -> vector<8x10xf32>
    %c0_239 = arith.constant 0 : index
    %c0_240 = arith.constant 0 : index
    %270 = vector.load %arg13[%c0_239, %c0_240] : memref<1x10xf32, #tpu.memory_space<vmem>>, vector<1x10xf32>
    %271 = vector.broadcast %270 : vector<1x10xf32> to vector<8x10xf32>
    %272 = arith.addf %269, %271 : vector<8x10xf32>
    %c0_241 = arith.constant 0 : index
    %c0_242 = arith.constant 0 : index
    %273 = vector.load %arg14[%c0_241, %c0_242] : memref<8x10xf32, #tpu.memory_space<vmem>>, vector<8x10xf32>
    tpu.vector_store %arg14[%c0_241, %c0_242], %272 {strides = array<i32>} : memref<8x10xf32, #tpu.memory_space<vmem>>, vector<8x10xf32>,
    return
  }
  func.func @transform_0(%arg0: i32) -> (i32, i32, i32) {
    %c0_i32 = arith.constant 0 : i32
    %c0_i32_0 = arith.constant 0 : i32
    %c0_i32_1 = arith.constant 0 : i32
    return %arg0, %c0_i32, %c0_i32_0 : i32, i32, i32
  }
  func.func @transform_1(%arg0: i32) -> (i32, i32, i32) {
    %c0_i32 = arith.constant 0 : i32
    %c0_i32_0 = arith.constant 0 : i32
    %c0_i32_1 = arith.constant 0 : i32
    %c0_i32_2 = arith.constant 0 : i32
    return %c0_i32, %c0_i32_0, %c0_i32_1 : i32, i32, i32
  }
  func.func @transform_2(%arg0: i32) -> (i32, i32) {
    %c0_i32 = arith.constant 0 : i32
    %c0_i32_0 = arith.constant 0 : i32
    %c0_i32_1 = arith.constant 0 : i32
    return %c0_i32, %c0_i32_0 : i32, i32
  }
  func.func @transform_3(%arg0: i32) -> (i32, i32) {
    %c0_i32 = arith.constant 0 : i32
    %c0_i32_0 = arith.constant 0 : i32
    %c0_i32_1 = arith.constant 0 : i32
    return %c0_i32, %c0_i32_0 : i32, i32
  }
  func.func @transform_4(%arg0: i32) -> (i32, i32, i32) {
    %c0_i32 = arith.constant 0 : i32
    %c0_i32_0 = arith.constant 0 : i32
    %c0_i32_1 = arith.constant 0 : i32
    %c0_i32_2 = arith.constant 0 : i32
    return %c0_i32, %c0_i32_0, %c0_i32_1 : i32, i32, i32
  }
  func.func @transform_5(%arg0: i32) -> (i32, i32) {
    %c0_i32 = arith.constant 0 : i32
    %c0_i32_0 = arith.constant 0 : i32
    %c0_i32_1 = arith.constant 0 : i32
    return %c0_i32, %c0_i32_0 : i32, i32
  }
  func.func @transform_6(%arg0: i32) -> (i32, i32) {
    %c0_i32 = arith.constant 0 : i32
    %c0_i32_0 = arith.constant 0 : i32
    %c0_i32_1 = arith.constant 0 : i32
    return %c0_i32, %c0_i32_0 : i32, i32
  }
  func.func @transform_7(%arg0: i32) -> (i32, i32, i32) {
    %c0_i32 = arith.constant 0 : i32
    %c0_i32_0 = arith.constant 0 : i32
    %c0_i32_1 = arith.constant 0 : i32
    %c0_i32_2 = arith.constant 0 : i32
    return %c0_i32, %c0_i32_0, %c0_i32_1 : i32, i32, i32
  }
  func.func @transform_8(%arg0: i32) -> (i32, i32) {
    %c0_i32 = arith.constant 0 : i32
    %c0_i32_0 = arith.constant 0 : i32
    %c0_i32_1 = arith.constant 0 : i32
    return %c0_i32, %c0_i32_0 : i32, i32
  }
  func.func @transform_9(%arg0: i32) -> (i32, i32) {
    %c0_i32 = arith.constant 0 : i32
    %c0_i32_0 = arith.constant 0 : i32
    %c0_i32_1 = arith.constant 0 : i32
    return %c0_i32, %c0_i32_0 : i32, i32
  }
  func.func @transform_10(%arg0: i32) -> (i32, i32) {
    %c0_i32 = arith.constant 0 : i32
    %c0_i32_0 = arith.constant 0 : i32
    %c0_i32_1 = arith.constant 0 : i32
    return %c0_i32, %c0_i32_0 : i32, i32
  }
  func.func @transform_11(%arg0: i32) -> (i32, i32) {
    %c0_i32 = arith.constant 0 : i32
    %c0_i32_0 = arith.constant 0 : i32
    %c0_i32_1 = arith.constant 0 : i32
    return %c0_i32, %c0_i32_0 : i32, i32
  }
  func.func @transform_12(%arg0: i32) -> (i32, i32) {
    %c0_i32 = arith.constant 0 : i32
    %c0_i32_0 = arith.constant 0 : i32
    %c0_i32_1 = arith.constant 0 : i32
    return %c0_i32, %c0_i32_0 : i32, i32
  }
  func.func @transform_13(%arg0: i32) -> (i32, i32) {
    %c0_i32 = arith.constant 0 : i32
    %c0_i32_0 = arith.constant 0 : i32
    return %arg0, %c0_i32 : i32, i32
  }
}

</mosaic_0001>

<llo_original>
// kernel: tile.13
$region0: #{tile.13}
  #allocation0 [shape = 's32[1]{0}', space=sflag, size = 0x4, scoped, tag = 'scoped memory for tile.13']
  %s0 = inlined_call_operand.vmem [shape: f32[6], index: 0, kind: input, shape index: {}]
  %s1 = inlined_call_operand.vmem [shape: f32[24,6], index: 1, kind: output, shape index: {}]
  // Predicated region
  $region2: #{tile.13} parent=0 // pred_check
    _
  $region3: #{tile.13} parent=0 // pred_check_branch
    %3 = sbr.rel (0) target = $region5
  $region4: #{tile.13} parent=0 // pred_region
    _
  $region5: #{tile.13} parent=0 // pred_fallthru
    _
  %v4 = vld [vmem:[%s0] ss:$0 sm:$0xff]
  %5 = vst [vmem:[%s1] sm:$0xff] %v4
  %s6 = scalar_lea.vmem %s1, 8
  %7 = vst [vmem:[%s6] sm:$0xff] %v4
  %s8 = scalar_lea.vmem %s1, 16
  %9 = vst [vmem:[%s8] sm:$0xff] %v4

// kernel: tile.14
$region0: #{tile.14}
  %s0 = inlined_call_operand.vmem [shape: f32[24,6], index: 0, kind: input, shape index: {}]
  %s1 = inlined_call_operand.vmem [shape: f32[1,144], index: 1, kind: output, shape index: {}]
  $region1: #{tile.14} parent=0
    #allocation0 [shape = 'u8[8192]{0}', space=vmem, size = 0x2000, scoped, tag = 'scoped mem for output reshape']
    %v2 = vld [vmem:[%s0] sm:$0x1]
    %vm3 = vcmask 48128
    %4 = vst.msk [vmem:[#allocation0] sm:$0x1] %vm3, %v2
    %s5 = scalar_lea.vmem %s0, 21
    %v6 = vld [vmem:[%s5] sm:$0x1]
    %s7 = scalar_lea.vmem %s0, 21
    %v8 = vld [vmem:[%s7] sm:$0x1]
    %vm9 = vcmask 15360
    %v10 = vsel %vm9, %v8, %v6
    %11 = vrot.lane.b32.xlu0 %v10, 126
    %v12 = vpop.permute.xlu0 %11
    %vm13 = vcmask 31744
    %s14 = scalar_lea.vmem [#allocation0], 8
    %15 = vst.msk [vmem:[%s14] sm:$0x1] %vm13, %v12
    %vm16 = vcmask 1048560
    %17 = vst.msk [vmem:[#allocation0] sm:$0x1] %vm16, %v12
    %s18 = scalar_lea.vmem %s0, 20
    %v19 = vld [vmem:[%s18] sm:$0x1]
    %20 = vrot.lane.b32.xlu0 %v19, 120
    %v21 = vpop.permute.xlu0 %20
    %vm22 = vcmask 1032128
    %23 = vst.msk [vmem:[#allocation0] sm:$0x1] %vm22, %v21
    %s24 = scalar_lea.vmem %s0, 19
    %v25 = vld [vmem:[%s24] sm:$0x1]
    %26 = vrot.lane.b32.xlu0 %v25, 114
    %v27 = vpop.permute.xlu0 %26
    %vm28 = vcmask 982928
    %29 = vst.msk [vmem:[#allocation0] sm:$0x1] %vm28, %v27
    %s30 = scalar_lea.vmem %s0, 18
    %v31 = vld [vmem:[%s30] sm:$0x1]
    %32 = vrot.lane.b32.xlu0 %v31, 108
    %v33 = vpop.permute.xlu0 %32
    %vm34 = vcmask 933728
    %35 = vst.msk [vmem:[#allocation0] sm:$0x1] %vm34, %v33
    %s36 = scalar_lea.vmem %s0, 17
    %v37 = vld [vmem:[%s36] sm:$0x1]
    %38 = vrot.lane.b32.xlu0 %v37, 102
    %v39 = vpop.permute.xlu0 %38
    %vm40 = vcmask 884528
    %41 = vst.msk [vmem:[#allocation0] sm:$0x1] %vm40, %v39
    %s42 = scalar_lea.vmem %s0, 16
    %v43 = vld [vmem:[%s42] sm:$0x1]
    %44 = vrot.lane.b32.xlu0 %v43, 96
    %v45 = vpop.permute.xlu0 %44
    %vm46 = vcmask 835328
    %47 = vst.msk [vmem:[#allocation0] sm:$0x1] %vm46, %v45
    %s48 = scalar_lea.vmem %s0, 15
    %v49 = vld [vmem:[%s48] sm:$0x1]
    %50 = vrot.lane.b32.xlu0 %v49, 90
    %v51 = vpop.permute.xlu0 %50
    %vm52 = vcmask 786128
    %53 = vst.msk [vmem:[#allocation0] sm:$0x1] %vm52, %v51
    %s54 = scalar_lea.vmem %s0, 14
    %v55 = vld [vmem:[%s54] sm:$0x1]
    %56 = vrot.lane.b32.xlu0 %v55, 84
    %v57 = vpop.permute.xlu0 %56
    %vm58 = vcmask 736928
    %59 = vst.msk [vmem:[#allocation0] sm:$0x1] %vm58, %v57
    %s60 = scalar_lea.vmem %s0, 13
    %v61 = vld [vmem:[%s60] sm:$0x1]
    %62 = vrot.lane.b32.xlu0 %v61, 78
    %v63 = vpop.permute.xlu0 %62
    %vm64 = vcmask 687728
    %65 = vst.msk [vmem:[#allocation0] sm:$0x1] %vm64, %v63
    %s66 = scalar_lea.vmem %s0, 12
    %v67 = vld [vmem:[%s66] sm:$0x1]
    %68 = vrot.lane.b32.xlu0 %v67, 72
    %v69 = vpop.permute.xlu0 %68
    %vm70 = vcmask 638528
    %71 = vst.msk [vmem:[#allocation0] sm:$0x1] %vm70, %v69
    %s72 = scalar_lea.vmem %s0, 11
    %v73 = vld [vmem:[%s72] sm:$0x1]
    %74 = vrot.lane.b32.xlu0 %v73, 66
    %v75 = vpop.permute.xlu0 %74
    %vm76 = vcmask 589328
    %77 = vst.msk [vmem:[#allocation0] sm:$0x1] %vm76, %v75
    %s78 = scalar_lea.vmem %s0, 10
    %v79 = vld [vmem:[%s78] sm:$0x1]
    %80 = vrot.lane.b32.xlu0 %v79, 60
    %v81 = vpop.permute.xlu0 %80
    %vm82 = vcmask 540128
    %83 = vst.msk [vmem:[#allocation0] sm:$0x1] %vm82, %v81
    %s84 = scalar_lea.vmem %s0, 9
    %v85 = vld [vmem:[%s84] sm:$0x1]
    %86 = vrot.lane.b32.xlu0 %v85, 54
    %v87 = vpop.permute.xlu0 %86
    %vm88 = vcmask 490928
    %89 = vst.msk [vmem:[#allocation0] sm:$0x1] %vm88, %v87
    %s90 = scalar_lea.vmem %s0, 8
    %v91 = vld [vmem:[%s90] sm:$0x1]
    %92 = vrot.lane.b32.xlu0 %v91, 48
    %v93 = vpop.permute.xlu0 %92
    %vm94 = vcmask 441728
    %95 = vst.msk [vmem:[#allocation0] sm:$0x1] %vm94, %v93
    %s96 = scalar_lea.vmem %s0, 7
    %v97 = vld [vmem:[%s96] sm:$0x1]
    %98 = vrot.lane.b32.xlu0 %v97, 42
    %v99 = vpop.permute.xlu0 %98
    %vm100 = vcmask 392528
    %101 = vst.msk [vmem:[#allocation0] sm:$0x1] %vm100, %v99
    %s102 = scalar_lea.vmem %s0, 6
    %v103 = vld [vmem:[%s102] sm:$0x1]
    %104 = vrot.lane.b32.xlu0 %v103, 36
    %v105 = vpop.permute.xlu0 %104
    %vm106 = vcmask 343328
    %107 = vst.msk [vmem:[#allocation0] sm:$0x1] %vm106, %v105
    %s108 = scalar_lea.vmem %s0, 5
    %v109 = vld [vmem:[%s108] sm:$0x1]
    %110 = vrot.lane.b32.xlu0 %v109, 30
    %v111 = vpop.permute.xlu0 %110
    %vm112 = vcmask 294128
    %113 = vst.msk [vmem:[#allocation0] sm:$0x1] %vm112, %v111
    %s114 = scalar_lea.vmem %s0, 4
    %v115 = vld [vmem:[%s114] sm:$0x1]
    %116 = vrot.lane.b32.xlu0 %v115, 24
    %v117 = vpop.permute.xlu0 %116
    %vm118 = vcmask 244928
    %119 = vst.msk [vmem:[#allocation0] sm:$0x1] %vm118, %v117
    %s120 = scalar_lea.vmem %s0, 3
    %v121 = vld [vmem:[%s120] sm:$0x1]
    %122 = vrot.lane.b32.xlu0 %v121, 18
    %v123 = vpop.permute.xlu0 %122
    %vm124 = vcmask 195728
    %125 = vst.msk [vmem:[#allocation0] sm:$0x1] %vm124, %v123
    %s126 = scalar_lea.vmem %s0, 2
    %v127 = vld [vmem:[%s126] sm:$0x1]
    %128 = vrot.lane.b32.xlu0 %v127, 12
    %v129 = vpop.permute.xlu0 %128
    %vm130 = vcmask 146528
    %131 = vst.msk [vmem:[#allocation0] sm:$0x1] %vm130, %v129
    %s132 = scalar_lea.vmem %s0, 23
    %v133 = vld [vmem:[%s132] sm:$0x1]
    %134 = vrot.lane.b32.xlu0 %v133, 10
    %v135 = vpop.permute.xlu0 %134
    %vm136 = vcmask 130128
    %s137 = scalar_lea.vmem [#allocation0], 8
    %138 = vst.msk [vmem:[%s137] sm:$0x1] %vm136, %v135
    %s139 = scalar_lea.vmem %s0, 1
    %v140 = vld [vmem:[%s139] sm:$0x1]
    %141 = vrot.lane.b32.xlu0 %v140, 6
    %v142 = vpop.permute.xlu0 %141
    %vm143 = vcmask 97328
    %144 = vst.msk [vmem:[#allocation0] sm:$0x1] %vm143, %v142
    %s145 = scalar_lea.vmem %s0, 22
    %v146 = vld [vmem:[%s145] sm:$0x1]
    %147 = vrot.lane.b32.xlu0 %v146, 4
    %v148 = vpop.permute.xlu0 %147
    %vm149 = vcmask 80928
    %s150 = scalar_lea.vmem [#allocation0], 8
    %151 = vst.msk [vmem:[%s150] sm:$0x1] %vm149, %v148
    %s153 = sshll.u32 1, 1
    %s154 = ssub.s32 %s153, 1
    %v156 = vld [vmem:[#allocation0] sm:%s154]
    %s157 = sshll.u32 1, 1
    %s158 = ssub.s32 %s157, 1
    %159 = vst [vmem:[%s1] sm:%s158] %v156
    %s160 = scalar_lea.vmem [#allocation0], 8
    %v161 = vld [vmem:[%s160] sm:%s154]
    %s162 = sshll.u32 1, 1
    %s163 = ssub.s32 %s162, 1
    %s164 = scalar_lea.vmem %s1, 1
    %165 = vst [vmem:[%s164] sm:%s163] %v161

// kernel: tile.18
$region0: #{tile.18}
  #allocation0 [shape = 's32[1]{0}', space=sflag, size = 0x4, scoped, tag = 'scoped memory for tile.18']
  %s0 = inlined_call_operand.vmem [shape: f32[16], index: 0, kind: input, shape index: {}]
  %s1 = inlined_call_operand.vmem [shape: f32[8,16], index: 1, kind: output, shape index: {}]
  // Predicated region
  $region2: #{tile.18} parent=0 // pred_check
    _
  $region3: #{tile.18} parent=0 // pred_check_branch
    %3 = sbr.rel (0) target = $region5
  $region4: #{tile.18} parent=0 // pred_region
    _
  $region5: #{tile.18} parent=0 // pred_fallthru
    _
  %v4 = vld [vmem:[%s0] ss:$0 sm:$0xff]
  %5 = vst [vmem:[%s1] sm:$0xff] %v4

// kernel: tile.19
$region0: #{tile.19}
  %s0 = inlined_call_operand.vmem [shape: f32[8,16], index: 0, kind: input, shape index: {}]
  %s1 = inlined_call_operand.vmem [shape: f32[1,128], index: 1, kind: output, shape index: {}]
  $region1: #{tile.19} parent=0
    #allocation0 [shape = 'u8[4096]{0}', space=vmem, size = 0x1000, scoped, tag = 'scoped mem for output reshape']
    %v2 = vld [vmem:[%s0] sm:$0x1]
    %vm3 = vcmask 130048
    %4 = vst.msk [vmem:[#allocation0] sm:$0x1] %vm3, %v2
    %s5 = scalar_lea.vmem %s0, 7
    %v6 = vld [vmem:[%s5] sm:$0x1]
    %7 = vrot.lane.b32.xlu0 %v6, 112
    %v8 = vpop.permute.xlu0 %7
    %vm9 = vcmask 1048448
    %10 = vst.msk [vmem:[#allocation0] sm:$0x1] %vm9, %v8
    %s11 = scalar_lea.vmem %s0, 6
    %v12 = vld [vmem:[%s11] sm:$0x1]
    %13 = vrot.lane.b32.xlu0 %v12, 96
    %v14 = vpop.permute.xlu0 %13
    %vm15 = vcmask 917248
    %16 = vst.msk [vmem:[#allocation0] sm:$0x1] %vm15, %v14
    %s17 = scalar_lea.vmem %s0, 5
    %v18 = vld [vmem:[%s17] sm:$0x1]
    %19 = vrot.lane.b32.xlu0 %v18, 80
    %v20 = vpop.permute.xlu0 %19
    %vm21 = vcmask 786048
    %22 = vst.msk [vmem:[#allocation0] sm:$0x1] %vm21, %v20
    %s23 = scalar_lea.vmem %s0, 4
    %v24 = vld [vmem:[%s23] sm:$0x1]
    %25 = vrot.lane.b32.xlu0 %v24, 64
    %v26 = vpop.permute.xlu0 %25
    %vm27 = vcmask 654848
    %28 = vst.msk [vmem:[#allocation0] sm:$0x1] %vm27, %v26
    %s29 = scalar_lea.vmem %s0, 3
    %v30 = vld [vmem:[%s29] sm:$0x1]
    %31 = vrot.lane.b32.xlu0 %v30, 48
    %v32 = vpop.permute.xlu0 %31
    %vm33 = vcmask 523648
    %34 = vst.msk [vmem:[#allocation0] sm:$0x1] %vm33, %v32
    %s35 = scalar_lea.vmem %s0, 2
    %v36 = vld [vmem:[%s35] sm:$0x1]
    %37 = vrot.lane.b32.xlu0 %v36, 32
    %v38 = vpop.permute.xlu0 %37
    %vm39 = vcmask 392448
    %40 = vst.msk [vmem:[#allocation0] sm:$0x1] %vm39, %v38
    %s41 = scalar_lea.vmem %s0, 1
    %v42 = vld [vmem:[%s41] sm:$0x1]
    %43 = vrot.lane.b32.xlu0 %v42, 16
    %v44 = vpop.permute.xlu0 %43
    %vm45 = vcmask 261248
    %46 = vst.msk [vmem:[#allocation0] sm:$0x1] %vm45, %v44
    %s48 = sshll.u32 1, 1
    %s49 = ssub.s32 %s48, 1
    %v51 = vld [vmem:[#allocation0] sm:%s49]
    %s52 = sshll.u32 1, 1
    %s53 = ssub.s32 %s52, 1
    %54 = vst [vmem:[%s1] sm:%s53] %v51

// kernel: iternet_forward.1
$region0: #{iternet_forward.1}
  #allocation0 [shape = 'u32[]', space=smem, size = 0x4, offset = 0x4, fixed_abs, tag = 'smem constant byte address 0x4 - core index']
  #allocation1 [shape = 'u32[144,128]{1,0:T(1,128)}', space=vmem, size = 0x12000, scoped, tag = 'internal scratch']
  #allocation2 [shape = 'f32[8,24,144]{2,1,0:T(8,128)}', space=vmem, size = 0x30000, scoped, tag = 'scratch operand']
  #allocation3 [shape = 'f32[8,12,144]{2,1,0:T(8,128)}', space=vmem, size = 0x20000, scoped, tag = 'scratch operand']
  #allocation4 [shape = 'f32[8,8,128]{2,1,0:T(8,128)}', space=vmem, size = 0x8000, scoped, tag = 'scratch operand']
  %s0 = inlined_call_operand.vmem [shape: f32[8,28,28], index: 0, kind: input, shape index: {}]
  %s1 = inlined_call_operand.vmem [shape: bf16[5,28,144], index: 1, kind: input, shape index: {}]
  %s2 = inlined_call_operand.vmem [shape: f32[1,144], index: 2, kind: input, shape index: {}]
  %s3 = inlined_call_operand.vmem [shape: f32[144,144], index: 3, kind: input, shape index: {}]
  %s4 = inlined_call_operand.vmem [shape: bf16[5,144,128], index: 4, kind: input, shape index: {}]
  %s5 = inlined_call_operand.vmem [shape: f32[1,128], index: 5, kind: input, shape index: {}]
  %s6 = inlined_call_operand.vmem [shape: f32[128,128], index: 6, kind: input, shape index: {}]
  %s7 = inlined_call_operand.vmem [shape: bf16[4,128,120], index: 7, kind: input, shape index: {}]
  %s8 = inlined_call_operand.vmem [shape: f32[1,120], index: 8, kind: input, shape index: {}]
  %s9 = inlined_call_operand.vmem [shape: f32[120,120], index: 9, kind: input, shape index: {}]
  %s10 = inlined_call_operand.vmem [shape: f32[1,120], index: 10, kind: input, shape index: {}]
  %s11 = inlined_call_operand.vmem [shape: f32[120,10], index: 11, kind: input, shape index: {}]
  %s12 = inlined_call_operand.vmem [shape: f32[1,10], index: 12, kind: input, shape index: {}]
  %s13 = inlined_call_operand.vmem [shape: f32[8,10], index: 13, kind: output, shape index: {}]
  %s14 = sld [smem:[#allocation0]]
  $region62: #{iternet_forward.1} parent=0
    _
  %s16 = ssub.s32 1, %s14
  %s17 = scalar_select 0, %s16, %s14
  // Predicated region
  $region2: #{iternet_forward.1} parent=0 // pred_check
    _
  $region3: #{iternet_forward.1} parent=0 // pred_check_branch
    %19 = sbr.rel (0) target = $region5
  $region4: #{iternet_forward.1} parent=0 // pred_region
    _
  $region5: #{iternet_forward.1} parent=0 // pred_fallthru
    _
  // Predicated region
  $region6: #{iternet_forward.1} parent=0 // pred_check
    _
  $region7: #{iternet_forward.1} parent=0 // pred_check_branch
    %21 = sbr.rel (0) target = $region9
  $region8: #{iternet_forward.1} parent=0 // pred_region
    _
  $region9: #{iternet_forward.1} parent=0 // pred_fallthru
    _
  // Predicated region
  $region10: #{iternet_forward.1} parent=0 // pred_check
    _
  $region11: #{iternet_forward.1} parent=0 // pred_check_branch
    %23 = sbr.rel (0) target = $region13
  $region12: #{iternet_forward.1} parent=0 // pred_region
    _
  $region13: #{iternet_forward.1} parent=0 // pred_fallthru
    _
  // Predicated region
  $region14: #{iternet_forward.1} parent=0 // pred_check
    _
  $region15: #{iternet_forward.1} parent=0 // pred_check_branch
    %25 = sbr.rel (0) target = $region17
  $region16: #{iternet_forward.1} parent=0 // pred_region
    _
  $region17: #{iternet_forward.1} parent=0 // pred_fallthru
    _
  // Predicated region
  $region18: #{iternet_forward.1} parent=0 // pred_check
    _
  $region19: #{iternet_forward.1} parent=0 // pred_check_branch
    %27 = sbr.rel (0) target = $region21
  $region20: #{iternet_forward.1} parent=0 // pred_region
    _
  $region21: #{iternet_forward.1} parent=0 // pred_fallthru
    _
  // Predicated region
  $region22: #{iternet_forward.1} parent=0 // pred_check
    _
  $region23: #{iternet_forward.1} parent=0 // pred_check_branch
    %29 = sbr.rel (0) target = $region25
  $region24: #{iternet_forward.1} parent=0 // pred_region
    _
  $region25: #{iternet_forward.1} parent=0 // pred_fallthru
    _
  // Predicated region
  $region26: #{iternet_forward.1} parent=0 // pred_check
    _
  $region27: #{iternet_forward.1} parent=0 // pred_check_branch
    %31 = sbr.rel (0) target = $region29
  $region28: #{iternet_forward.1} parent=0 // pred_region
    _
  $region29: #{iternet_forward.1} parent=0 // pred_fallthru
    _
  // Predicated region
  $region30: #{iternet_forward.1} parent=0 // pred_check
    _
  $region31: #{iternet_forward.1} parent=0 // pred_check_branch
    %33 = sbr.rel (0) target = $region33
  $region32: #{iternet_forward.1} parent=0 // pred_region
    _
  $region33: #{iternet_forward.1} parent=0 // pred_fallthru
    _
  // Predicated region
  $region34: #{iternet_forward.1} parent=0 // pred_check
    _
  $region35: #{iternet_forward.1} parent=0 // pred_check_branch
    %35 = sbr.rel (0) target = $region37
  $region36: #{iternet_forward.1} parent=0 // pred_region
    _
  $region37: #{iternet_forward.1} parent=0 // pred_fallthru
    _
  // Predicated region
  $region38: #{iternet_forward.1} parent=0 // pred_check
    _
  $region39: #{iternet_forward.1} parent=0 // pred_check_branch
    %37 = sbr.rel (0) target = $region41
  $region40: #{iternet_forward.1} parent=0 // pred_region
    _
  $region41: #{iternet_forward.1} parent=0 // pred_fallthru
    _
  // Predicated region
  $region42: #{iternet_forward.1} parent=0 // pred_check
    _
  $region43: #{iternet_forward.1} parent=0 // pred_check_branch
    %39 = sbr.rel (0) target = $region45
  $region44: #{iternet_forward.1} parent=0 // pred_region
    _
  $region45: #{iternet_forward.1} parent=0 // pred_fallthru
    _
  // Predicated region
  $region46: #{iternet_forward.1} parent=0 // pred_check
    _
  $region47: #{iternet_forward.1} parent=0 // pred_check_branch
    %41 = sbr.rel (0) target = $region49
  $region48: #{iternet_forward.1} parent=0 // pred_region
    _
  $region49: #{iternet_forward.1} parent=0 // pred_fallthru
    _
  // Predicated region
  $region50: #{iternet_forward.1} parent=0 // pred_check
    _
  $region51: #{iternet_forward.1} parent=0 // pred_check_branch
    %43 = sbr.rel (0) target = $region53
  $region52: #{iternet_forward.1} parent=0 // pred_region
    _
  $region53: #{iternet_forward.1} parent=0 // pred_fallthru
    _
  %v45 = vld [vmem:[%s0] sm:$0xff]
  %v46 = vld [vmem:[%s0 + $0x8] sm:$0xff]
  %v47 = vld [vmem:[%s0 + $0x10] sm:$0xff]
  %v48 = vld [vmem:[%s0 + $0x20] sm:$0xff]
  %v49 = vld [vmem:[%s0 + $0x28] sm:$0xff]
  %v50 = vld [vmem:[%s0 + $0x30] sm:$0xff]
  %v51 = vld [vmem:[%s0 + $0x40] sm:$0xff]
  %v52 = vld [vmem:[%s0 + $0x48] sm:$0xff]
  %v53 = vld [vmem:[%s0 + $0x50] sm:$0xff]
  %v54 = vld [vmem:[%s0 + $0x60] sm:$0xff]
  %v55 = vld [vmem:[%s0 + $0x68] sm:$0xff]
  %v56 = vld [vmem:[%s0 + $0x70] sm:$0xff]
  %v57 = vld [vmem:[%s0 + $0x80] sm:$0xff]
  %v58 = vld [vmem:[%s0 + $0x88] sm:$0xff]
  %v59 = vld [vmem:[%s0 + $0x90] sm:$0xff]
  %v60 = vld [vmem:[%s0 + $0xa0] sm:$0xff]
  %v61 = vld [vmem:[%s0 + $0xa8] sm:$0xff]
  %v62 = vld [vmem:[%s0 + $0xb0] sm:$0xff]
  %v63 = vld [vmem:[%s0 + $0xc0] sm:$0xff]
  %v64 = vld [vmem:[%s0 + $0xc8] sm:$0xff]
  %v65 = vld [vmem:[%s0 + $0xd0] sm:$0xff]
  %v66 = vld [vmem:[%s0 + $0xe0] sm:$0xff]
  %v67 = vld [vmem:[%s0 + $0xe8] sm:$0xff]
  %v68 = vld [vmem:[%s0 + $0xf0] sm:$0xff]
  %v69 = vpack.c.bf16 %v46, %v45
  %v70 = vpack.c.bf16 %v48, %v47
  %v71 = vpack.c.bf16 %v50, %v49
  %v72 = vpack.c.bf16 %v52, %v51
  %v73 = vpack.c.bf16 %v54, %v53
  %v74 = vpack.c.bf16 %v56, %v55
  %v75 = vpack.c.bf16 %v58, %v57
  %v76 = vpack.c.bf16 %v60, %v59
  %v77 = vpack.c.bf16 %v62, %v61
  %v78 = vpack.c.bf16 %v64, %v63
  %v79 = vpack.c.bf16 %v66, %v65
  %v80 = vpack.c.bf16 %v68, %v67
  %v81 = vld [vmem:[%s1] sm:$0xff]
  %v82 = vld [vmem:[%s1 + $0x8] sm:$0xff]
  %v83 = vld [vmem:[%s1 + $0x10] sm:$0xff]
  %v84 = vld [vmem:[%s1 + $0x18] sm:$0x33]
  %v85 = vld [vmem:[%s0 + $0x1] sm:$0xff]
  %v86 = vld [vmem:[%s0 + $0x9] sm:$0xff]
  %v87 = vld [vmem:[%s0 + $0x11] sm:$0xff]
  %v88 = vld [vmem:[%s0 + $0x21] sm:$0xff]
  %v89 = vld [vmem:[%s0 + $0x29] sm:$0xff]
  %v90 = vld [vmem:[%s0 + $0x31] sm:$0xff]
  %v91 = vld [vmem:[%s0 + $0x41] sm:$0xff]
  %v92 = vld [vmem:[%s0 + $0x49] sm:$0xff]
  %v93 = vld [vmem:[%s0 + $0x51] sm:$0xff]
  %v94 = vld [vmem:[%s0 + $0x61] sm:$0xff]
  %v95 = vld [vmem:[%s0 + $0x69] sm:$0xff]
  %v96 = vld [vmem:[%s0 + $0x71] sm:$0xff]
  %v97 = vld [vmem:[%s0 + $0x81] sm:$0xff]
  %v98 = vld [vmem:[%s0 + $0x89] sm:$0xff]
  %v99 = vld [vmem:[%s0 + $0x91] sm:$0xff]
  %v100 = vld [vmem:[%s0 + $0xa1] sm:$0xff]
  %v101 = vld [vmem:[%s0 + $0xa9] sm:$0xff]
  %v102 = vld [vmem:[%s0 + $0xb1] sm:$0xff]
  %v103 = vld [vmem:[%s0 + $0xc1] sm:$0xff]
  %v104 = vld [vmem:[%s0 + $0xc9] sm:$0xff]
  %v105 = vld [vmem:[%s0 + $0xd1] sm:$0xff]
  %v106 = vld [vmem:[%s0 + $0xe1] sm:$0xff]
  %v107 = vld [vmem:[%s0 + $0xe9] sm:$0xff]
  %v108 = vld [vmem:[%s0 + $0xf1] sm:$0xff]
  %v109 = vpack.c.bf16 %v86, %v85
  %v110 = vpack.c.bf16 %v88, %v87
  %v111 = vpack.c.bf16 %v90, %v89
  %v112 = vpack.c.bf16 %v92, %v91
  %v113 = vpack.c.bf16 %v94, %v93
  %v114 = vpack.c.bf16 %v96, %v95
  %v115 = vpack.c.bf16 %v98, %v97
  %v116 = vpack.c.bf16 %v100, %v99
  %v117 = vpack.c.bf16 %v102, %v101
  %v118 = vpack.c.bf16 %v104, %v103
  %v119 = vpack.c.bf16 %v106, %v105
  %v120 = vpack.c.bf16 %v108, %v107
  %s121 = scalar_lea.vmem %s1, 32
  %v122 = vld [vmem:[%s121] sm:$0xff]
  %v123 = vld [vmem:[%s121 + $0x8] sm:$0xff]
  %v124 = vld [vmem:[%s121 + $0x10] sm:$0xff]
  %v125 = vld [vmem:[%s121 + $0x18] sm:$0x33]
  %v130 = vunpack.c.l.b16 %v122
  %v131 = vunpack.c.h.b16 %v122
  %v132 = vunpack.c.l.b16 %v123
  %v133 = vunpack.c.h.b16 %v123
  %v134 = vunpack.c.l.b16 %v124
  %v135 = vunpack.c.h.b16 %v124
  %v136 = vunpack.c.l.b16 %v125
  %v137 = vunpack.c.h.b16 %v125
  %v138 = vpack.c.b16 %v132, %v130
  %v139 = vpack.c.b16 %v133, %v131
  %v140 = vpack.c.b16 %v136, %v134
  %v141 = vpack.c.b16 %v137, %v135
  %vm144 = vcmask 228352
  %v146 = vsel %vm144, %v109, 0
  %v149 = vsel %vm144, %v110, 0
  %v152 = vsel %vm144, %v111, 0
  %v155 = vsel %vm144, %v112, 0
  %v158 = vsel %vm144, %v113, 0
  %v161 = vsel %vm144, %v114, 0
  %v164 = vsel %vm144, %v115, 0
  %v167 = vsel %vm144, %v116, 0
  %v170 = vsel %vm144, %v117, 0
  %v173 = vsel %vm144, %v118, 0
  %v176 = vsel %vm144, %v119, 0
  %v179 = vsel %vm144, %v120, 0
  %vm181 = vcmask 1045504
  %v183 = vsel %vm181, %v140, 0
  %v186 = vsel %vm181, %v141, 0
  %188 = vmatprep.subr.bf16.mxu0 0
  %189 = vmatpush1.bf16.msra.mxu0 0
  %190 = vmatprep.subr.bf16.mxu0 0
  %191 = vmatpush1.bf16.msra.mxu0 0
  %192 = vmatprep.subr.bf16.mxu0 0
  %193 = vmatpush1.bf16.msra.mxu0 0
  %194 = vmatprep.subr.bf16.mxu0 0
  %195 = vmatpush1.bf16.msra.mxu0 0
  %196 = vmatprep.subr.bf16.mxu0 0
  %197 = vmatpush1.bf16.msra.mxu0 0
  %198 = vmatprep.subr.bf16.mxu0 0
  %199 = vmatpush1.bf16.msra.mxu0 0
  %200 = vmatprep.subr.bf16.mxu0 %v186
  %201 = vmatpush1.bf16.msra.mxu0 %v183
  %202 = vmatprep.subr.bf16.mxu0 %v139
  %203 = vmatpush1.bf16.msra.mxu0 %v138
  %204 = vmatprep.subr.bf16.mxu0 0
  %205 = vmatpush2.bf16.msra.mxu0 0
  %206 = vmatprep.subr.bf16.mxu0 0
  %207 = vmatpush2.bf16.msra.mxu0 0
  %208 = vmatprep.subr.bf16.mxu0 0
  %209 = vmatpush2.bf16.msra.mxu0 0
  %210 = vmatprep.subr.bf16.mxu0 0
  %211 = vmatpush2.bf16.msra.mxu0 0
  %212 = vmatprep.subr.bf16.mxu0 0
  %213 = vmatpush2.bf16.msra.mxu0 0
  %214 = vmatprep.subr.bf16.mxu0 0
  %215 = vmatpush2.bf16.msra.mxu0 0
  %216 = vmatprep.subr.bf16.mxu0 0
  %217 = vmatpush2.bf16.msra.mxu0 0
  %218 = vmatprep.subr.bf16.mxu0 0
  %219 = vmatpush2.bf16.msra.mxu0 0
  %220 = vmatprep.mubr.bf16.mxu0 0
  %221 = vmatmul.mubr.bf16.gmra.mxu0 %v146
  %v222 = vpop.f32.mrf.mxu0
  %v223 = vadd.f32 0.0, %v222
  %v224 = vpop.f32.mrf.mxu0
  %v225 = vadd.f32 0.0, %v224
  %v226 = vpop.f32.mrf.mxu0
  %v227 = vadd.f32 0.0, %v226
  %v228 = vpop.f32.mrf.mxu0
  %v229 = vadd.f32 0.0, %v228
  %230 = vmatprep.mubr.bf16.mxu0 0
  %231 = vmatmul.mubr.bf16.gmra.mxu0 %v149
  %v232 = vpop.f32.mrf.mxu0
  %v233 = vadd.f32 0.0, %v232
  %v234 = vpop.f32.mrf.mxu0
  %v235 = vadd.f32 0.0, %v234
  %v236 = vpop.f32.mrf.mxu0
  %v237 = vadd.f32 0.0, %v236
  %v238 = vpop.f32.mrf.mxu0
  %v239 = vadd.f32 0.0, %v238
  %240 = vmatprep.mubr.bf16.mxu0 0
  %241 = vmatmul.mubr.bf16.gmra.mxu0 %v152
  %v242 = vpop.f32.mrf.mxu0
  %v243 = vadd.f32 0.0, %v242
  %v244 = vpop.f32.mrf.mxu0
  %v245 = vadd.f32 0.0, %v244
  %v246 = vpop.f32.mrf.mxu0
  %v247 = vadd.f32 0.0, %v246
  %v248 = vpop.f32.mrf.mxu0
  %v249 = vadd.f32 0.0, %v248
  %250 = vmatprep.mubr.bf16.mxu0 0
  %251 = vmatmul.mubr.bf16.gmra.mxu0 %v155
  %v252 = vpop.f32.mrf.mxu0
  %v253 = vadd.f32 0.0, %v252
  %v254 = vpop.f32.mrf.mxu0
  %v255 = vadd.f32 0.0, %v254
  %v256 = vpop.f32.mrf.mxu0
  %v257 = vadd.f32 0.0, %v256
  %v258 = vpop.f32.mrf.mxu0
  %v259 = vadd.f32 0.0, %v258
  %260 = vmatprep.mubr.bf16.mxu0 0
  %261 = vmatmul.mubr.bf16.gmra.mxu0 %v158
  %v262 = vpop.f32.mrf.mxu0
  %v263 = vadd.f32 0.0, %v262
  %v264 = vpop.f32.mrf.mxu0
  %v265 = vadd.f32 0.0, %v264
  %v266 = vpop.f32.mrf.mxu0
  %v267 = vadd.f32 0.0, %v266
  %v268 = vpop.f32.mrf.mxu0
  %v269 = vadd.f32 0.0, %v268
  %270 = vmatprep.mubr.bf16.mxu0 0
  %271 = vmatmul.mubr.bf16.gmra.mxu0 %v161
  %v272 = vpop.f32.mrf.mxu0
  %v273 = vadd.f32 0.0, %v272
  %v274 = vpop.f32.mrf.mxu0
  %v275 = vadd.f32 0.0, %v274
  %v276 = vpop.f32.mrf.mxu0
  %v277 = vadd.f32 0.0, %v276
  %v278 = vpop.f32.mrf.mxu0
  %v279 = vadd.f32 0.0, %v278
  %280 = vmatprep.mubr.bf16.mxu0 0
  %281 = vmatmul.mubr.bf16.gmra.mxu0 %v164
  %v282 = vpop.f32.mrf.mxu0
  %v283 = vadd.f32 0.0, %v282
  %v284 = vpop.f32.mrf.mxu0
  %v285 = vadd.f32 0.0, %v284
  %v286 = vpop.f32.mrf.mxu0
  %v287 = vadd.f32 0.0, %v286
  %v288 = vpop.f32.mrf.mxu0
  %v289 = vadd.f32 0.0, %v288
  %290 = vmatprep.mubr.bf16.mxu0 0
  %291 = vmatmul.mubr.bf16.gmra.mxu0 %v167
  %v292 = vpop.f32.mrf.mxu0
  %v293 = vadd.f32 0.0, %v292
  %v294 = vpop.f32.mrf.mxu0
  %v295 = vadd.f32 0.0, %v294
  %v296 = vpop.f32.mrf.mxu0
  %v297 = vadd.f32 0.0, %v296
  %v298 = vpop.f32.mrf.mxu0
  %v299 = vadd.f32 0.0, %v298
  %300 = vmatprep.mubr.bf16.mxu0 0
  %301 = vmatmul.mubr.bf16.gmra.mxu0 %v170
  %v302 = vpop.f32.mrf.mxu0
  %v303 = vadd.f32 0.0, %v302
  %v304 = vpop.f32.mrf.mxu0
  %v305 = vadd.f32 0.0, %v304
  %v306 = vpop.f32.mrf.mxu0
  %v307 = vadd.f32 0.0, %v306
  %v308 = vpop.f32.mrf.mxu0
  %v309 = vadd.f32 0.0, %v308
  %310 = vmatprep.mubr.bf16.mxu0 0
  %311 = vmatmul.mubr.bf16.gmra.mxu0 %v173
  %v312 = vpop.f32.mrf.mxu0
  %v313 = vadd.f32 0.0, %v312
  %v314 = vpop.f32.mrf.mxu0
  %v315 = vadd.f32 0.0, %v314
  %v316 = vpop.f32.mrf.mxu0
  %v317 = vadd.f32 0.0, %v316
  %v318 = vpop.f32.mrf.mxu0
  %v319 = vadd.f32 0.0, %v318
  %320 = vmatprep.mubr.bf16.mxu0 0
  %321 = vmatmul.mubr.bf16.gmra.mxu0 %v176
  %v322 = vpop.f32.mrf.mxu0
  %v323 = vadd.f32 0.0, %v322
  %v324 = vpop.f32.mrf.mxu0
  %v325 = vadd.f32 0.0, %v324
  %v326 = vpop.f32.mrf.mxu0
  %v327 = vadd.f32 0.0, %v326
  %v328 = vpop.f32.mrf.mxu0
  %v329 = vadd.f32 0.0, %v328
  %330 = vmatprep.mubr.bf16.mxu0 0
  %331 = vmatmul.mubr.bf16.gmra.mxu0 %v179
  %v332 = vpop.f32.mrf.mxu0
  %v333 = vadd.f32 0.0, %v332
  %v334 = vpop.f32.mrf.mxu0
  %v335 = vadd.f32 0.0, %v334
  %v336 = vpop.f32.mrf.mxu0
  %v337 = vadd.f32 0.0, %v336
  %v338 = vpop.f32.mrf.mxu0
  %v339 = vadd.f32 0.0, %v338
  %340 = vdwg.mxu0
  %v345 = vunpack.c.l.b16 %v81
  %v346 = vunpack.c.h.b16 %v81
  %v347 = vunpack.c.l.b16 %v82
  %v348 = vunpack.c.h.b16 %v82
  %v349 = vunpack.c.l.b16 %v83
  %v350 = vunpack.c.h.b16 %v83
  %v351 = vunpack.c.l.b16 %v84
  %v352 = vunpack.c.h.b16 %v84
  %v353 = vpack.c.b16 %v347, %v345
  %v354 = vpack.c.b16 %v348, %v346
  %v355 = vpack.c.b16 %v351, %v349
  %v356 = vpack.c.b16 %v352, %v350
  %v360 = vsel %vm144, %v69, 0
  %v363 = vsel %vm144, %v70, 0
  %v366 = vsel %vm144, %v71, 0
  %v369 = vsel %vm144, %v72, 0
  %v372 = vsel %vm144, %v73, 0
  %v375 = vsel %vm144, %v74, 0
  %v378 = vsel %vm144, %v75, 0
  %v381 = vsel %vm144, %v76, 0
  %v384 = vsel %vm144, %v77, 0
  %v387 = vsel %vm144, %v78, 0
  %v390 = vsel %vm144, %v79, 0
  %v393 = vsel %vm144, %v80, 0
  %v396 = vsel %vm181, %v355, 0
  %v399 = vsel %vm181, %v356, 0
  %401 = vmatprep.subr.bf16.mxu0 0
  %402 = vmatpush1.bf16.msra.mxu0 0
  %403 = vmatprep.subr.bf16.mxu0 0
  %404 = vmatpush1.bf16.msra.mxu0 0
  %405 = vmatprep.subr.bf16.mxu0 0
  %406 = vmatpush1.bf16.msra.mxu0 0
  %407 = vmatprep.subr.bf16.mxu0 0
  %408 = vmatpush1.bf16.msra.mxu0 0
  %409 = vmatprep.subr.bf16.mxu0 0
  %410 = vmatpush1.bf16.msra.mxu0 0
  %411 = vmatprep.subr.bf16.mxu0 0
  %412 = vmatpush1.bf16.msra.mxu0 0
  %413 = vmatprep.subr.bf16.mxu0 %v399
  %414 = vmatpush1.bf16.msra.mxu0 %v396
  %415 = vmatprep.subr.bf16.mxu0 %v354
  %416 = vmatpush1.bf16.msra.mxu0 %v353
  %417 = vmatprep.subr.bf16.mxu0 0
  %418 = vmatpush2.bf16.msra.mxu0 0
  %419 = vmatprep.subr.bf16.mxu0 0
  %420 = vmatpush2.bf16.msra.mxu0 0
  %421 = vmatprep.subr.bf16.mxu0 0
  %422 = vmatpush2.bf16.msra.mxu0 0
  %423 = vmatprep.subr.bf16.mxu0 0
  %424 = vmatpush2.bf16.msra.mxu0 0
  %425 = vmatprep.subr.bf16.mxu0 0
  %426 = vmatpush2.bf16.msra.mxu0 0
  %427 = vmatprep.subr.bf16.mxu0 0
  %428 = vmatpush2.bf16.msra.mxu0 0
  %429 = vmatprep.subr.bf16.mxu0 0
  %430 = vmatpush2.bf16.msra.mxu0 0
  %431 = vmatprep.subr.bf16.mxu0 0
  %432 = vmatpush2.bf16.msra.mxu0 0
  %433 = vmatprep.mubr.bf16.mxu0 0
  %434 = vmatmul.mubr.bf16.gmra.mxu0 %v360
  %v435 = vpop.f32.mrf.mxu0
  %v436 = vadd.f32 %v223, %v435
  %v437 = vpop.f32.mrf.mxu0
  %v438 = vadd.f32 %v225, %v437
  %v439 = vpop.f32.mrf.mxu0
  %v440 = vadd.f32 %v227, %v439
  %v441 = vpop.f32.mrf.mxu0
  %v442 = vadd.f32 %v229, %v441
  %443 = vmatprep.mubr.bf16.mxu0 0
  %444 = vmatmul.mubr.bf16.gmra.mxu0 %v363
  %v445 = vpop.f32.mrf.mxu0
  %v446 = vadd.f32 %v233, %v445
  %v447 = vpop.f32.mrf.mxu0
  %v448 = vadd.f32 %v235, %v447
  %v449 = vpop.f32.mrf.mxu0
  %v450 = vadd.f32 %v237, %v449
  %v451 = vpop.f32.mrf.mxu0
  %v452 = vadd.f32 %v239, %v451
  %453 = vmatprep.mubr.bf16.mxu0 0
  %454 = vmatmul.mubr.bf16.gmra.mxu0 %v366
  %v455 = vpop.f32.mrf.mxu0
  %v456 = vadd.f32 %v243, %v455
  %v457 = vpop.f32.mrf.mxu0
  %v458 = vadd.f32 %v245, %v457
  %v459 = vpop.f32.mrf.mxu0
  %v460 = vadd.f32 %v247, %v459
  %v461 = vpop.f32.mrf.mxu0
  %v462 = vadd.f32 %v249, %v461
  %463 = vmatprep.mubr.bf16.mxu0 0
  %464 = vmatmul.mubr.bf16.gmra.mxu0 %v369
  %v465 = vpop.f32.mrf.mxu0
  %v466 = vadd.f32 %v253, %v465
  %v467 = vpop.f32.mrf.mxu0
  %v468 = vadd.f32 %v255, %v467
  %v469 = vpop.f32.mrf.mxu0
  %v470 = vadd.f32 %v257, %v469
  %v471 = vpop.f32.mrf.mxu0
  %v472 = vadd.f32 %v259, %v471
  %473 = vmatprep.mubr.bf16.mxu0 0
  %474 = vmatmul.mubr.bf16.gmra.mxu0 %v372
  %v475 = vpop.f32.mrf.mxu0
  %v476 = vadd.f32 %v263, %v475
  %v477 = vpop.f32.mrf.mxu0
  %v478 = vadd.f32 %v265, %v477
  %v479 = vpop.f32.mrf.mxu0
  %v480 = vadd.f32 %v267, %v479
  %v481 = vpop.f32.mrf.mxu0
  %v482 = vadd.f32 %v269, %v481
  %483 = vmatprep.mubr.bf16.mxu0 0
  %484 = vmatmul.mubr.bf16.gmra.mxu0 %v375
  %v485 = vpop.f32.mrf.mxu0
  %v486 = vadd.f32 %v273, %v485
  %v487 = vpop.f32.mrf.mxu0
  %v488 = vadd.f32 %v275, %v487
  %v489 = vpop.f32.mrf.mxu0
  %v490 = vadd.f32 %v277, %v489
  %v491 = vpop.f32.mrf.mxu0
  %v492 = vadd.f32 %v279, %v491
  %493 = vmatprep.mubr.bf16.mxu0 0
  %494 = vmatmul.mubr.bf16.gmra.mxu0 %v378
  %v495 = vpop.f32.mrf.mxu0
  %v496 = vadd.f32 %v283, %v495
  %v497 = vpop.f32.mrf.mxu0
  %v498 = vadd.f32 %v285, %v497
  %v499 = vpop.f32.mrf.mxu0
  %v500 = vadd.f32 %v287, %v499
  %v501 = vpop.f32.mrf.mxu0
  %v502 = vadd.f32 %v289, %v501
  %503 = vmatprep.mubr.bf16.mxu0 0
  %504 = vmatmul.mubr.bf16.gmra.mxu0 %v381
  %v505 = vpop.f32.mrf.mxu0
  %v506 = vadd.f32 %v293, %v505
  %v507 = vpop.f32.mrf.mxu0
  %v508 = vadd.f32 %v295, %v507
  %v509 = vpop.f32.mrf.mxu0
  %v510 = vadd.f32 %v297, %v509
  %v511 = vpop.f32.mrf.mxu0
  %v512 = vadd.f32 %v299, %v511
  %513 = vmatprep.mubr.bf16.mxu0 0
  %514 = vmatmul.mubr.bf16.gmra.mxu0 %v384
  %v515 = vpop.f32.mrf.mxu0
  %v516 = vadd.f32 %v303, %v515
  %v517 = vpop.f32.mrf.mxu0
  %v518 = vadd.f32 %v305, %v517
  %v519 = vpop.f32.mrf.mxu0
  %v520 = vadd.f32 %v307, %v519
  %v521 = vpop.f32.mrf.mxu0
  %v522 = vadd.f32 %v309, %v521
  %523 = vmatprep.mubr.bf16.mxu0 0
  %524 = vmatmul.mubr.bf16.gmra.mxu0 %v387
  %v525 = vpop.f32.mrf.mxu0
  %v526 = vadd.f32 %v313, %v525
  %v527 = vpop.f32.mrf.mxu0
  %v528 = vadd.f32 %v315, %v527
  %v529 = vpop.f32.mrf.mxu0
  %v530 = vadd.f32 %v317, %v529
  %v531 = vpop.f32.mrf.mxu0
  %v532 = vadd.f32 %v319, %v531
  %533 = vmatprep.mubr.bf16.mxu0 0
  %534 = vmatmul.mubr.bf16.gmra.mxu0 %v390
  %v535 = vpop.f32.mrf.mxu0
  %v536 = vadd.f32 %v323, %v535
  %v537 = vpop.f32.mrf.mxu0
  %v538 = vadd.f32 %v325, %v537
  %v539 = vpop.f32.mrf.mxu0
  %v540 = vadd.f32 %v327, %v539
  %v541 = vpop.f32.mrf.mxu0
  %v542 = vadd.f32 %v329, %v541
  %543 = vmatprep.mubr.bf16.mxu0 0
  %544 = vmatmul.mubr.bf16.gmra.mxu0 %v393
  %v545 = vpop.f32.mrf.mxu0
  %v546 = vadd.f32 %v333, %v545
  %v547 = vpop.f32.mrf.mxu0
  %v548 = vadd.f32 %v335, %v547
  %v549 = vpop.f32.mrf.mxu0
  %v550 = vadd.f32 %v337, %v549
  %v551 = vpop.f32.mrf.mxu0
  %v552 = vadd.f32 %v339, %v551
  %553 = vdwg.mxu0
  %v554 = vld [vmem:[%s0 + $0x2] sm:$0xff]
  %v555 = vld [vmem:[%s0 + $0xa] sm:$0xff]
  %v556 = vld [vmem:[%s0 + $0x12] sm:$0xff]
  %v557 = vld [vmem:[%s0 + $0x22] sm:$0xff]
  %v558 = vld [vmem:[%s0 + $0x2a] sm:$0xff]
  %v559 = vld [vmem:[%s0 + $0x32] sm:$0xff]
  %v560 = vld [vmem:[%s0 + $0x42] sm:$0xff]
  %v561 = vld [vmem:[%s0 + $0x4a] sm:$0xff]
  %v562 = vld [vmem:[%s0 + $0x52] sm:$0xff]
  %v563 = vld [vmem:[%s0 + $0x62] sm:$0xff]
  %v564 = vld [vmem:[%s0 + $0x6a] sm:$0xff]
  %v565 = vld [vmem:[%s0 + $0x72] sm:$0xff]
  %v566 = vld [vmem:[%s0 + $0x82] sm:$0xff]
  %v567 = vld [vmem:[%s0 + $0x8a] sm:$0xff]
  %v568 = vld [vmem:[%s0 + $0x92] sm:$0xff]
  %v569 = vld [vmem:[%s0 + $0xa2] sm:$0xff]
  %v570 = vld [vmem:[%s0 + $0xaa] sm:$0xff]
  %v571 = vld [vmem:[%s0 + $0xb2] sm:$0xff]
  %v572 = vld [vmem:[%s0 + $0xc2] sm:$0xff]
  %v573 = vld [vmem:[%s0 + $0xca] sm:$0xff]
  %v574 = vld [vmem:[%s0 + $0xd2] sm:$0xff]
  %v575 = vld [vmem:[%s0 + $0xe2] sm:$0xff]
  %v576 = vld [vmem:[%s0 + $0xea] sm:$0xff]
  %v577 = vld [vmem:[%s0 + $0xf2] sm:$0xff]
  %v578 = vpack.c.bf16 %v555, %v554
  %v579 = vpack.c.bf16 %v557, %v556
  %v580 = vpack.c.bf16 %v559, %v558
  %v581 = vpack.c.bf16 %v561, %v560
  %v582 = vpack.c.bf16 %v563, %v562
  %v583 = vpack.c.bf16 %v565, %v564
  %v584 = vpack.c.bf16 %v567, %v566
  %v585 = vpack.c.bf16 %v569, %v568
  %v586 = vpack.c.bf16 %v571, %v570
  %v587 = vpack.c.bf16 %v573, %v572
  %v588 = vpack.c.bf16 %v575, %v574
  %v589 = vpack.c.bf16 %v577, %v576
  %s590 = scalar_lea.vmem %s1, 64
  %v591 = vld [vmem:[%s590] sm:$0xff]
  %v592 = vld [vmem:[%s590 + $0x8] sm:$0xff]
  %v593 = vld [vmem:[%s590 + $0x10] sm:$0xff]
  %v594 = vld [vmem:[%s590 + $0x18] sm:$0x33]
  %v599 = vunpack.c.l.b16 %v591
  %v600 = vunpack.c.h.b16 %v591
  %v601 = vunpack.c.l.b16 %v592
  %v602 = vunpack.c.h.b16 %v592
  %v603 = vunpack.c.l.b16 %v593
  %v604 = vunpack.c.h.b16 %v593
  %v605 = vunpack.c.l.b16 %v594
  %v606 = vunpack.c.h.b16 %v594
  %v607 = vpack.c.b16 %v601, %v599
  %v608 = vpack.c.b16 %v602, %v600
  %v609 = vpack.c.b16 %v605, %v603
  %v610 = vpack.c.b16 %v606, %v604
  %v614 = vsel %vm144, %v578, 0
  %v617 = vsel %vm144, %v579, 0
  %v620 = vsel %vm144, %v580, 0
  %v623 = vsel %vm144, %v581, 0
  %v626 = vsel %vm144, %v582, 0
  %v629 = vsel %vm144, %v583, 0
  %v632 = vsel %vm144, %v584, 0
  %v635 = vsel %vm144, %v585, 0
  %v638 = vsel %vm144, %v586, 0
  %v641 = vsel %vm144, %v587, 0
  %v644 = vsel %vm144, %v588, 0
  %v647 = vsel %vm144, %v589, 0
  %v650 = vsel %vm181, %v609, 0
  %v653 = vsel %vm181, %v610, 0
  %655 = vmatprep.subr.bf16.mxu0 0
  %656 = vmatpush1.bf16.msra.mxu0 0
  %657 = vmatprep.subr.bf16.mxu0 0
  %658 = vmatpush1.bf16.msra.mxu0 0
  %659 = vmatprep.subr.bf16.mxu0 0
  %660 = vmatpush1.bf16.msra.mxu0 0
  %661 = vmatprep.subr.bf16.mxu0 0
  %662 = vmatpush1.bf16.msra.mxu0 0
  %663 = vmatprep.subr.bf16.mxu0 0
  %664 = vmatpush1.bf16.msra.mxu0 0
  %665 = vmatprep.subr.bf16.mxu0 0
  %666 = vmatpush1.bf16.msra.mxu0 0
  %667 = vmatprep.subr.bf16.mxu0 %v653
  %668 = vmatpush1.bf16.msra.mxu0 %v650
  %669 = vmatprep.subr.bf16.mxu0 %v608
  %670 = vmatpush1.bf16.msra.mxu0 %v607
  %671 = vmatprep.subr.bf16.mxu0 0
  %672 = vmatpush2.bf16.msra.mxu0 0
  %673 = vmatprep.subr.bf16.mxu0 0
  %674 = vmatpush2.bf16.msra.mxu0 0
  %675 = vmatprep.subr.bf16.mxu0 0
  %676 = vmatpush2.bf16.msra.mxu0 0
  %677 = vmatprep.subr.bf16.mxu0 0
  %678 = vmatpush2.bf16.msra.mxu0 0
  %679 = vmatprep.subr.bf16.mxu0 0
  %680 = vmatpush2.bf16.msra.mxu0 0
  %681 = vmatprep.subr.bf16.mxu0 0
  %682 = vmatpush2.bf16.msra.mxu0 0
  %683 = vmatprep.subr.bf16.mxu0 0
  %684 = vmatpush2.bf16.msra.mxu0 0
  %685 = vmatprep.subr.bf16.mxu0 0
  %686 = vmatpush2.bf16.msra.mxu0 0
  %687 = vmatprep.mubr.bf16.mxu0 0
  %688 = vmatmul.mubr.bf16.gmra.mxu0 %v614
  %v689 = vpop.f32.mrf.mxu0
  %v690 = vadd.f32 0.0, %v689
  %v691 = vpop.f32.mrf.mxu0
  %v692 = vadd.f32 0.0, %v691
  %v693 = vpop.f32.mrf.mxu0
  %v694 = vadd.f32 0.0, %v693
  %v695 = vpop.f32.mrf.mxu0
  %v696 = vadd.f32 0.0, %v695
  %697 = vmatprep.mubr.bf16.mxu0 0
  %698 = vmatmul.mubr.bf16.gmra.mxu0 %v617
  %v699 = vpop.f32.mrf.mxu0
  %v700 = vadd.f32 0.0, %v699
  %v701 = vpop.f32.mrf.mxu0
  %v702 = vadd.f32 0.0, %v701
  %v703 = vpop.f32.mrf.mxu0
  %v704 = vadd.f32 0.0, %v703
  %v705 = vpop.f32.mrf.mxu0
  %v706 = vadd.f32 0.0, %v705
  %707 = vmatprep.mubr.bf16.mxu0 0
  %708 = vmatmul.mubr.bf16.gmra.mxu0 %v620
  %v709 = vpop.f32.mrf.mxu0
  %v710 = vadd.f32 0.0, %v709
  %v711 = vpop.f32.mrf.mxu0
  %v712 = vadd.f32 0.0, %v711
  %v713 = vpop.f32.mrf.mxu0
  %v714 = vadd.f32 0.0, %v713
  %v715 = vpop.f32.mrf.mxu0
  %v716 = vadd.f32 0.0, %v715
  %717 = vmatprep.mubr.bf16.mxu0 0
  %718 = vmatmul.mubr.bf16.gmra.mxu0 %v623
  %v719 = vpop.f32.mrf.mxu0
  %v720 = vadd.f32 0.0, %v719
  %v721 = vpop.f32.mrf.mxu0
  %v722 = vadd.f32 0.0, %v721
  %v723 = vpop.f32.mrf.mxu0
  %v724 = vadd.f32 0.0, %v723
  %v725 = vpop.f32.mrf.mxu0
  %v726 = vadd.f32 0.0, %v725
  %727 = vmatprep.mubr.bf16.mxu0 0
  %728 = vmatmul.mubr.bf16.gmra.mxu0 %v626
  %v729 = vpop.f32.mrf.mxu0
  %v730 = vadd.f32 0.0, %v729
  %v731 = vpop.f32.mrf.mxu0
  %v732 = vadd.f32 0.0, %v731
  %v733 = vpop.f32.mrf.mxu0
  %v734 = vadd.f32 0.0, %v733
  %v735 = vpop.f32.mrf.mxu0
  %v736 = vadd.f32 0.0, %v735
  %737 = vmatprep.mubr.bf16.mxu0 0
  %738 = vmatmul.mubr.bf16.gmra.mxu0 %v629
  %v739 = vpop.f32.mrf.mxu0
  %v740 = vadd.f32 0.0, %v739
  %v741 = vpop.f32.mrf.mxu0
  %v742 = vadd.f32 0.0, %v741
  %v743 = vpop.f32.mrf.mxu0
  %v744 = vadd.f32 0.0, %v743
  %v745 = vpop.f32.mrf.mxu0
  %v746 = vadd.f32 0.0, %v745
  %747 = vmatprep.mubr.bf16.mxu0 0
  %748 = vmatmul.mubr.bf16.gmra.mxu0 %v632
  %v749 = vpop.f32.mrf.mxu0
  %v750 = vadd.f32 0.0, %v749
  %v751 = vpop.f32.mrf.mxu0
  %v752 = vadd.f32 0.0, %v751
  %v753 = vpop.f32.mrf.mxu0
  %v754 = vadd.f32 0.0, %v753
  %v755 = vpop.f32.mrf.mxu0
  %v756 = vadd.f32 0.0, %v755
  %757 = vmatprep.mubr.bf16.mxu0 0
  %758 = vmatmul.mubr.bf16.gmra.mxu0 %v635
  %v759 = vpop.f32.mrf.mxu0
  %v760 = vadd.f32 0.0, %v759
  %v761 = vpop.f32.mrf.mxu0
  %v762 = vadd.f32 0.0, %v761
  %v763 = vpop.f32.mrf.mxu0
  %v764 = vadd.f32 0.0, %v763
  %v765 = vpop.f32.mrf.mxu0
  %v766 = vadd.f32 0.0, %v765
  %767 = vmatprep.mubr.bf16.mxu0 0
  %768 = vmatmul.mubr.bf16.gmra.mxu0 %v638
  %v769 = vpop.f32.mrf.mxu0
  %v770 = vadd.f32 0.0, %v769
  %v771 = vpop.f32.mrf.mxu0
  %v772 = vadd.f32 0.0, %v771
  %v773 = vpop.f32.mrf.mxu0
  %v774 = vadd.f32 0.0, %v773
  %v775 = vpop.f32.mrf.mxu0
  %v776 = vadd.f32 0.0, %v775
  %777 = vmatprep.mubr.bf16.mxu0 0
  %778 = vmatmul.mubr.bf16.gmra.mxu0 %v641
  %v779 = vpop.f32.mrf.mxu0
  %v780 = vadd.f32 0.0, %v779
  %v781 = vpop.f32.mrf.mxu0
  %v782 = vadd.f32 0.0, %v781
  %v783 = vpop.f32.mrf.mxu0
  %v784 = vadd.f32 0.0, %v783
  %v785 = vpop.f32.mrf.mxu0
  %v786 = vadd.f32 0.0, %v785
  %787 = vmatprep.mubr.bf16.mxu0 0
  %788 = vmatmul.mubr.bf16.gmra.mxu0 %v644
  %v789 = vpop.f32.mrf.mxu0
  %v790 = vadd.f32 0.0, %v789
  %v791 = vpop.f32.mrf.mxu0
  %v792 = vadd.f32 0.0, %v791
  %v793 = vpop.f32.mrf.mxu0
  %v794 = vadd.f32 0.0, %v793
  %v795 = vpop.f32.mrf.mxu0
  %v796 = vadd.f32 0.0, %v795
  %797 = vmatprep.mubr.bf16.mxu0 0
  %798 = vmatmul.mubr.bf16.gmra.mxu0 %v647
  %v799 = vpop.f32.mrf.mxu0
  %v800 = vadd.f32 0.0, %v799
  %v801 = vpop.f32.mrf.mxu0
  %v802 = vadd.f32 0.0, %v801
  %v803 = vpop.f32.mrf.mxu0
  %v804 = vadd.f32 0.0, %v803
  %v805 = vpop.f32.mrf.mxu0
  %v806 = vadd.f32 0.0, %v805
  %807 = vdwg.mxu0
  %v808 = vadd.f32 %v436, %v690
  %v809 = vadd.f32 %v438, %v692
  %v810 = vadd.f32 %v440, %v694
  %v811 = vadd.f32 %v442, %v696
  %v812 = vadd.f32 %v446, %v700
  %v813 = vadd.f32 %v448, %v702
  %v814 = vadd.f32 %v450, %v704
  %v815 = vadd.f32 %v452, %v706
  %v816 = vadd.f32 %v456, %v710
  %v817 = vadd.f32 %v458, %v712
  %v818 = vadd.f32 %v460, %v714
  %v819 = vadd.f32 %v462, %v716
  %v820 = vadd.f32 %v466, %v720
  %v821 = vadd.f32 %v468, %v722
  %v822 = vadd.f32 %v470, %v724
  %v823 = vadd.f32 %v472, %v726
  %v824 = vadd.f32 %v476, %v730
  %v825 = vadd.f32 %v478, %v732
  %v826 = vadd.f32 %v480, %v734
  %v827 = vadd.f32 %v482, %v736
  %v828 = vadd.f32 %v486, %v740
  %v829 = vadd.f32 %v488, %v742
  %v830 = vadd.f32 %v490, %v744
  %v831 = vadd.f32 %v492, %v746
  %v832 = vadd.f32 %v496, %v750
  %v833 = vadd.f32 %v498, %v752
  %v834 = vadd.f32 %v500, %v754
  %v835 = vadd.f32 %v502, %v756
  %v836 = vadd.f32 %v506, %v760
  %v837 = vadd.f32 %v508, %v762
  %v838 = vadd.f32 %v510, %v764
  %v839 = vadd.f32 %v512, %v766
  %v840 = vadd.f32 %v516, %v770
  %v841 = vadd.f32 %v518, %v772
  %v842 = vadd.f32 %v520, %v774
  %v843 = vadd.f32 %v522, %v776
  %v844 = vadd.f32 %v526, %v780
  %v845 = vadd.f32 %v528, %v782
  %v846 = vadd.f32 %v530, %v784
  %v847 = vadd.f32 %v532, %v786
  %v848 = vadd.f32 %v536, %v790
  %v849 = vadd.f32 %v538, %v792
  %v850 = vadd.f32 %v540, %v794
  %v851 = vadd.f32 %v542, %v796
  %v852 = vadd.f32 %v546, %v800
  %v853 = vadd.f32 %v548, %v802
  %v854 = vadd.f32 %v550, %v804
  %v855 = vadd.f32 %v552, %v806
  %v856 = vld [vmem:[%s0 + $0x3] sm:$0xff]
  %v857 = vld [vmem:[%s0 + $0xb] sm:$0xff]
  %v858 = vld [vmem:[%s0 + $0x13] sm:$0xff]
  %v859 = vld [vmem:[%s0 + $0x23] sm:$0xff]
  %v860 = vld [vmem:[%s0 + $0x2b] sm:$0xff]
  %v861 = vld [vmem:[%s0 + $0x33] sm:$0xff]
  %v862 = vld [vmem:[%s0 + $0x43] sm:$0xff]
  %v863 = vld [vmem:[%s0 + $0x4b] sm:$0xff]
  %v864 = vld [vmem:[%s0 + $0x53] sm:$0xff]
  %v865 = vld [vmem:[%s0 + $0x63] sm:$0xff]
  %v866 = vld [vmem:[%s0 + $0x6b] sm:$0xff]
  %v867 = vld [vmem:[%s0 + $0x73] sm:$0xff]
  %v868 = vld [vmem:[%s0 + $0x83] sm:$0xff]
  %v869 = vld [vmem:[%s0 + $0x8b] sm:$0xff]
  %v870 = vld [vmem:[%s0 + $0x93] sm:$0xff]
  %v871 = vld [vmem:[%s0 + $0xa3] sm:$0xff]
  %v872 = vld [vmem:[%s0 + $0xab] sm:$0xff]
  %v873 = vld [vmem:[%s0 + $0xb3] sm:$0xff]
  %v874 = vld [vmem:[%s0 + $0xc3] sm:$0xff]
  %v875 = vld [vmem:[%s0 + $0xcb] sm:$0xff]
  %v876 = vld [vmem:[%s0 + $0xd3] sm:$0xff]
  %v877 = vld [vmem:[%s0 + $0xe3] sm:$0xff]
  %v878 = vld [vmem:[%s0 + $0xeb] sm:$0xff]
  %v879 = vld [vmem:[%s0 + $0xf3] sm:$0xff]
  %v880 = vpack.c.bf16 %v857, %v856
  %v881 = vpack.c.bf16 %v859, %v858
  %v882 = vpack.c.bf16 %v861, %v860
  %v883 = vpack.c.bf16 %v863, %v862
  %v884 = vpack.c.bf16 %v865, %v864
  %v885 = vpack.c.bf16 %v867, %v866
  %v886 = vpack.c.bf16 %v869, %v868
  %v887 = vpack.c.bf16 %v871, %v870
  %v888 = vpack.c.bf16 %v873, %v872
  %v889 = vpack.c.bf16 %v875, %v874
  %v890 = vpack.c.bf16 %v877, %v876
  %v891 = vpack.c.bf16 %v879, %v878
  %s892 = scalar_lea.vmem %s1, 96
  %v893 = vld [vmem:[%s892] sm:$0xff]
  %v894 = vld [vmem:[%s892 + $0x8] sm:$0xff]
  %v895 = vld [vmem:[%s892 + $0x10] sm:$0xff]
  %v896 = vld [vmem:[%s892 + $0x18] sm:$0x33]
  %v901 = vunpack.c.l.b16 %v893
  %v902 = vunpack.c.h.b16 %v893
  %v903 = vunpack.c.l.b16 %v894
  %v904 = vunpack.c.h.b16 %v894
  %v905 = vunpack.c.l.b16 %v895
  %v906 = vunpack.c.h.b16 %v895
  %v907 = vunpack.c.l.b16 %v896
  %v908 = vunpack.c.h.b16 %v896
  %v909 = vpack.c.b16 %v903, %v901
  %v910 = vpack.c.b16 %v904, %v902
  %v911 = vpack.c.b16 %v907, %v905
  %v912 = vpack.c.b16 %v908, %v906
  %v916 = vsel %vm144, %v880, 0
  %v919 = vsel %vm144, %v881, 0
  %v922 = vsel %vm144, %v882, 0
  %v925 = vsel %vm144, %v883, 0
  %v928 = vsel %vm144, %v884, 0
  %v931 = vsel %vm144, %v885, 0
  %v934 = vsel %vm144, %v886, 0
  %v937 = vsel %vm144, %v887, 0
  %v940 = vsel %vm144, %v888, 0
  %v943 = vsel %vm144, %v889, 0
  %v946 = vsel %vm144, %v890, 0
  %v949 = vsel %vm144, %v891, 0
  %v952 = vsel %vm181, %v911, 0
  %v955 = vsel %vm181, %v912, 0
  %957 = vmatprep.subr.bf16.mxu0 0
  %958 = vmatpush1.bf16.msra.mxu0 0
  %959 = vmatprep.subr.bf16.mxu0 0
  %960 = vmatpush1.bf16.msra.mxu0 0
  %961 = vmatprep.subr.bf16.mxu0 0
  %962 = vmatpush1.bf16.msra.mxu0 0
  %963 = vmatprep.subr.bf16.mxu0 0
  %964 = vmatpush1.bf16.msra.mxu0 0
  %965 = vmatprep.subr.bf16.mxu0 0
  %966 = vmatpush1.bf16.msra.mxu0 0
  %967 = vmatprep.subr.bf16.mxu0 0
  %968 = vmatpush1.bf16.msra.mxu0 0
  %969 = vmatprep.subr.bf16.mxu0 %v955
  %970 = vmatpush1.bf16.msra.mxu0 %v952
  %971 = vmatprep.subr.bf16.mxu0 %v910
  %972 = vmatpush1.bf16.msra.mxu0 %v909
  %973 = vmatprep.subr.bf16.mxu0 0
  %974 = vmatpush2.bf16.msra.mxu0 0
  %975 = vmatprep.subr.bf16.mxu0 0
  %976 = vmatpush2.bf16.msra.mxu0 0
  %977 = vmatprep.subr.bf16.mxu0 0
  %978 = vmatpush2.bf16.msra.mxu0 0
  %979 = vmatprep.subr.bf16.mxu0 0
  %980 = vmatpush2.bf16.msra.mxu0 0
  %981 = vmatprep.subr.bf16.mxu0 0
  %982 = vmatpush2.bf16.msra.mxu0 0
  %983 = vmatprep.subr.bf16.mxu0 0
  %984 = vmatpush2.bf16.msra.mxu0 0
  %985 = vmatprep.subr.bf16.mxu0 0
  %986 = vmatpush2.bf16.msra.mxu0 0
  %987 = vmatprep.subr.bf16.mxu0 0
  %988 = vmatpush2.bf16.msra.mxu0 0
  %989 = vmatprep.mubr.bf16.mxu0 0
  %990 = vmatmul.mubr.bf16.gmra.mxu0 %v916
  %v991 = vpop.f32.mrf.mxu0
  %v992 = vadd.f32 0.0, %v991
  %v993 = vpop.f32.mrf.mxu0
  %v994 = vadd.f32 0.0, %v993
  %v995 = vpop.f32.mrf.mxu0
  %v996 = vadd.f32 0.0, %v995
  %v997 = vpop.f32.mrf.mxu0
  %v998 = vadd.f32 0.0, %v997
  %999 = vmatprep.mubr.bf16.mxu0 0
  %1000 = vmatmul.mubr.bf16.gmra.mxu0 %v919
  %v1001 = vpop.f32.mrf.mxu0
  %v1002 = vadd.f32 0.0, %v1001
  %v1003 = vpop.f32.mrf.mxu0
  %v1004 = vadd.f32 0.0, %v1003
  %v1005 = vpop.f32.mrf.mxu0
  %v1006 = vadd.f32 0.0, %v1005
  %v1007 = vpop.f32.mrf.mxu0
  %v1008 = vadd.f32 0.0, %v1007
  %1009 = vmatprep.mubr.bf16.mxu0 0
  %1010 = vmatmul.mubr.bf16.gmra.mxu0 %v922
  %v1011 = vpop.f32.mrf.mxu0
  %v1012 = vadd.f32 0.0, %v1011
  %v1013 = vpop.f32.mrf.mxu0
  %v1014 = vadd.f32 0.0, %v1013
  %v1015 = vpop.f32.mrf.mxu0
  %v1016 = vadd.f32 0.0, %v1015
  %v1017 = vpop.f32.mrf.mxu0
  %v1018 = vadd.f32 0.0, %v1017
  %1019 = vmatprep.mubr.bf16.mxu0 0
  %1020 = vmatmul.mubr.bf16.gmra.mxu0 %v925
  %v1021 = vpop.f32.mrf.mxu0
  %v1022 = vadd.f32 0.0, %v1021
  %v1023 = vpop.f32.mrf.mxu0
  %v1024 = vadd.f32 0.0, %v1023
  %v1025 = vpop.f32.mrf.mxu0
  %v1026 = vadd.f32 0.0, %v1025
  %v1027 = vpop.f32.mrf.mxu0
  %v1028 = vadd.f32 0.0, %v1027
  %1029 = vmatprep.mubr.bf16.mxu0 0
  %1030 = vmatmul.mubr.bf16.gmra.mxu0 %v928
  %v1031 = vpop.f32.mrf.mxu0
  %v1032 = vadd.f32 0.0, %v1031
  %v1033 = vpop.f32.mrf.mxu0
  %v1034 = vadd.f32 0.0, %v1033
  %v1035 = vpop.f32.mrf.mxu0
  %v1036 = vadd.f32 0.0, %v1035
  %v1037 = vpop.f32.mrf.mxu0
  %v1038 = vadd.f32 0.0, %v1037
  %1039 = vmatprep.mubr.bf16.mxu0 0
  %1040 = vmatmul.mubr.bf16.gmra.mxu0 %v931
  %v1041 = vpop.f32.mrf.mxu0
  %v1042 = vadd.f32 0.0, %v1041
  %v1043 = vpop.f32.mrf.mxu0
  %v1044 = vadd.f32 0.0, %v1043
  %v1045 = vpop.f32.mrf.mxu0
  %v1046 = vadd.f32 0.0, %v1045
  %v1047 = vpop.f32.mrf.mxu0
  %v1048 = vadd.f32 0.0, %v1047
  %1049 = vmatprep.mubr.bf16.mxu0 0
  %1050 = vmatmul.mubr.bf16.gmra.mxu0 %v934
  %v1051 = vpop.f32.mrf.mxu0
  %v1052 = vadd.f32 0.0, %v1051
  %v1053 = vpop.f32.mrf.mxu0
  %v1054 = vadd.f32 0.0, %v1053
  %v1055 = vpop.f32.mrf.mxu0
  %v1056 = vadd.f32 0.0, %v1055
  %v1057 = vpop.f32.mrf.mxu0
  %v1058 = vadd.f32 0.0, %v1057
  %1059 = vmatprep.mubr.bf16.mxu0 0
  %1060 = vmatmul.mubr.bf16.gmra.mxu0 %v937
  %v1061 = vpop.f32.mrf.mxu0
  %v1062 = vadd.f32 0.0, %v1061
  %v1063 = vpop.f32.mrf.mxu0
  %v1064 = vadd.f32 0.0, %v1063
  %v1065 = vpop.f32.mrf.mxu0
  %v1066 = vadd.f32 0.0, %v1065
  %v1067 = vpop.f32.mrf.mxu0
  %v1068 = vadd.f32 0.0, %v1067
  %1069 = vmatprep.mubr.bf16.mxu0 0
  %1070 = vmatmul.mubr.bf16.gmra.mxu0 %v940
  %v1071 = vpop.f32.mrf.mxu0
  %v1072 = vadd.f32 0.0, %v1071
  %v1073 = vpop.f32.mrf.mxu0
  %v1074 = vadd.f32 0.0, %v1073
  %v1075 = vpop.f32.mrf.mxu0
  %v1076 = vadd.f32 0.0, %v1075
  %v1077 = vpop.f32.mrf.mxu0
  %v1078 = vadd.f32 0.0, %v1077
  %1079 = vmatprep.mubr.bf16.mxu0 0
  %1080 = vmatmul.mubr.bf16.gmra.mxu0 %v943
  %v1081 = vpop.f32.mrf.mxu0
  %v1082 = vadd.f32 0.0, %v1081
  %v1083 = vpop.f32.mrf.mxu0
  %v1084 = vadd.f32 0.0, %v1083
  %v1085 = vpop.f32.mrf.mxu0
  %v1086 = vadd.f32 0.0, %v1085
  %v1087 = vpop.f32.mrf.mxu0
  %v1088 = vadd.f32 0.0, %v1087
  %1089 = vmatprep.mubr.bf16.mxu0 0
  %1090 = vmatmul.mubr.bf16.gmra.mxu0 %v946
  %v1091 = vpop.f32.mrf.mxu0
  %v1092 = vadd.f32 0.0, %v1091
  %v1093 = vpop.f32.mrf.mxu0
  %v1094 = vadd.f32 0.0, %v1093
  %v1095 = vpop.f32.mrf.mxu0
  %v1096 = vadd.f32 0.0, %v1095
  %v1097 = vpop.f32.mrf.mxu0
  %v1098 = vadd.f32 0.0, %v1097
  %1099 = vmatprep.mubr.bf16.mxu0 0
  %1100 = vmatmul.mubr.bf16.gmra.mxu0 %v949
  %v1101 = vpop.f32.mrf.mxu0
  %v1102 = vadd.f32 0.0, %v1101
  %v1103 = vpop.f32.mrf.mxu0
  %v1104 = vadd.f32 0.0, %v1103
  %v1105 = vpop.f32.mrf.mxu0
  %v1106 = vadd.f32 0.0, %v1105
  %v1107 = vpop.f32.mrf.mxu0
  %v1108 = vadd.f32 0.0, %v1107
  %1109 = vdwg.mxu0
  %v1110 = vadd.f32 %v808, %v992
  %v1111 = vadd.f32 %v809, %v994
  %v1112 = vadd.f32 %v810, %v996
  %v1113 = vadd.f32 %v811, %v998
  %v1114 = vadd.f32 %v812, %v1002
  %v1115 = vadd.f32 %v813, %v1004
  %v1116 = vadd.f32 %v814, %v1006
  %v1117 = vadd.f32 %v815, %v1008
  %v1118 = vadd.f32 %v816, %v1012
  %v1119 = vadd.f32 %v817, %v1014
  %v1120 = vadd.f32 %v818, %v1016
  %v1121 = vadd.f32 %v819, %v1018
  %v1122 = vadd.f32 %v820, %v1022
  %v1123 = vadd.f32 %v821, %v1024
  %v1124 = vadd.f32 %v822, %v1026
  %v1125 = vadd.f32 %v823, %v1028
  %v1126 = vadd.f32 %v824, %v1032
  %v1127 = vadd.f32 %v825, %v1034
  %v1128 = vadd.f32 %v826, %v1036
  %v1129 = vadd.f32 %v827, %v1038
  %v1130 = vadd.f32 %v828, %v1042
  %v1131 = vadd.f32 %v829, %v1044
  %v1132 = vadd.f32 %v830, %v1046
  %v1133 = vadd.f32 %v831, %v1048
  %v1134 = vadd.f32 %v832, %v1052
  %v1135 = vadd.f32 %v833, %v1054
  %v1136 = vadd.f32 %v834, %v1056
  %v1137 = vadd.f32 %v835, %v1058
  %v1138 = vadd.f32 %v836, %v1062
  %v1139 = vadd.f32 %v837, %v1064
  %v1140 = vadd.f32 %v838, %v1066
  %v1141 = vadd.f32 %v839, %v1068
  %v1142 = vadd.f32 %v840, %v1072
  %v1143 = vadd.f32 %v841, %v1074
  %v1144 = vadd.f32 %v842, %v1076
  %v1145 = vadd.f32 %v843, %v1078
  %v1146 = vadd.f32 %v844, %v1082
  %v1147 = vadd.f32 %v845, %v1084
  %v1148 = vadd.f32 %v846, %v1086
  %v1149 = vadd.f32 %v847, %v1088
  %v1150 = vadd.f32 %v848, %v1092
  %v1151 = vadd.f32 %v849, %v1094
  %v1152 = vadd.f32 %v850, %v1096
  %v1153 = vadd.f32 %v851, %v1098
  %v1154 = vadd.f32 %v852, %v1102
  %v1155 = vadd.f32 %v853, %v1104
  %v1156 = vadd.f32 %v854, %v1106
  %v1157 = vadd.f32 %v855, %v1108
  %v1158 = vld [vmem:[%s0 + $0x4] sm:$0xff]
  %v1159 = vld [vmem:[%s0 + $0xc] sm:$0xff]
  %v1160 = vld [vmem:[%s0 + $0x14] sm:$0xff]
  %v1161 = vld [vmem:[%s0 + $0x24] sm:$0xff]
  %v1162 = vld [vmem:[%s0 + $0x2c] sm:$0xff]
  %v1163 = vld [vmem:[%s0 + $0x34] sm:$0xff]
  %v1164 = vld [vmem:[%s0 + $0x44] sm:$0xff]
  %v1165 = vld [vmem:[%s0 + $0x4c] sm:$0xff]
  %v1166 = vld [vmem:[%s0 + $0x54] sm:$0xff]
  %v1167 = vld [vmem:[%s0 + $0x64] sm:$0xff]
  %v1168 = vld [vmem:[%s0 + $0x6c] sm:$0xff]
  %v1169 = vld [vmem:[%s0 + $0x74] sm:$0xff]
  %v1170 = vld [vmem:[%s0 + $0x84] sm:$0xff]
  %v1171 = vld [vmem:[%s0 + $0x8c] sm:$0xff]
  %v1172 = vld [vmem:[%s0 + $0x94] sm:$0xff]
  %v1173 = vld [vmem:[%s0 + $0xa4] sm:$0xff]
  %v1174 = vld [vmem:[%s0 + $0xac] sm:$0xff]
  %v1175 = vld [vmem:[%s0 + $0xb4] sm:$0xff]
  %v1176 = vld [vmem:[%s0 + $0xc4] sm:$0xff]
  %v1177 = vld [vmem:[%s0 + $0xcc] sm:$0xff]
  %v1178 = vld [vmem:[%s0 + $0xd4] sm:$0xff]
  %v1179 = vld [vmem:[%s0 + $0xe4] sm:$0xff]
  %v1180 = vld [vmem:[%s0 + $0xec] sm:$0xff]
  %v1181 = vld [vmem:[%s0 + $0xf4] sm:$0xff]
  %v1182 = vpack.c.bf16 %v1159, %v1158
  %v1183 = vpack.c.bf16 %v1161, %v1160
  %v1184 = vpack.c.bf16 %v1163, %v1162
  %v1185 = vpack.c.bf16 %v1165, %v1164
  %v1186 = vpack.c.bf16 %v1167, %v1166
  %v1187 = vpack.c.bf16 %v1169, %v1168
  %v1188 = vpack.c.bf16 %v1171, %v1170
  %v1189 = vpack.c.bf16 %v1173, %v1172
  %v1190 = vpack.c.bf16 %v1175, %v1174
  %v1191 = vpack.c.bf16 %v1177, %v1176
  %v1192 = vpack.c.bf16 %v1179, %v1178
  %v1193 = vpack.c.bf16 %v1181, %v1180
  %s1194 = scalar_lea.vmem %s1, 128
  %v1195 = vld [vmem:[%s1194] sm:$0xff]
  %v1196 = vld [vmem:[%s1194 + $0x8] sm:$0xff]
  %v1197 = vld [vmem:[%s1194 + $0x10] sm:$0xff]
  %v1198 = vld [vmem:[%s1194 + $0x18] sm:$0x33]
  %v1203 = vunpack.c.l.b16 %v1195
  %v1204 = vunpack.c.h.b16 %v1195
  %v1205 = vunpack.c.l.b16 %v1196
  %v1206 = vunpack.c.h.b16 %v1196
  %v1207 = vunpack.c.l.b16 %v1197
  %v1208 = vunpack.c.h.b16 %v1197
  %v1209 = vunpack.c.l.b16 %v1198
  %v1210 = vunpack.c.h.b16 %v1198
  %v1211 = vpack.c.b16 %v1205, %v1203
  %v1212 = vpack.c.b16 %v1206, %v1204
  %v1213 = vpack.c.b16 %v1209, %v1207
  %v1214 = vpack.c.b16 %v1210, %v1208
  %v1218 = vsel %vm144, %v1182, 0
  %v1221 = vsel %vm144, %v1183, 0
  %v1224 = vsel %vm144, %v1184, 0
  %v1227 = vsel %vm144, %v1185, 0
  %v1230 = vsel %vm144, %v1186, 0
  %v1233 = vsel %vm144, %v1187, 0
  %v1236 = vsel %vm144, %v1188, 0
  %v1239 = vsel %vm144, %v1189, 0
  %v1242 = vsel %vm144, %v1190, 0
  %v1245 = vsel %vm144, %v1191, 0
  %v1248 = vsel %vm144, %v1192, 0
  %v1251 = vsel %vm144, %v1193, 0
  %v1254 = vsel %vm181, %v1213, 0
  %v1257 = vsel %vm181, %v1214, 0
  %1259 = vmatprep.subr.bf16.mxu0 0
  %1260 = vmatpush1.bf16.msra.mxu0 0
  %1261 = vmatprep.subr.bf16.mxu0 0
  %1262 = vmatpush1.bf16.msra.mxu0 0
  %1263 = vmatprep.subr.bf16.mxu0 0
  %1264 = vmatpush1.bf16.msra.mxu0 0
  %1265 = vmatprep.subr.bf16.mxu0 0
  %1266 = vmatpush1.bf16.msra.mxu0 0
  %1267 = vmatprep.subr.bf16.mxu0 0
  %1268 = vmatpush1.bf16.msra.mxu0 0
  %1269 = vmatprep.subr.bf16.mxu0 0
  %1270 = vmatpush1.bf16.msra.mxu0 0
  %1271 = vmatprep.subr.bf16.mxu0 %v1257
  %1272 = vmatpush1.bf16.msra.mxu0 %v1254
  %1273 = vmatprep.subr.bf16.mxu0 %v1212
  %1274 = vmatpush1.bf16.msra.mxu0 %v1211
  %1275 = vmatprep.subr.bf16.mxu0 0
  %1276 = vmatpush2.bf16.msra.mxu0 0
  %1277 = vmatprep.subr.bf16.mxu0 0
  %1278 = vmatpush2.bf16.msra.mxu0 0
  %1279 = vmatprep.subr.bf16.mxu0 0
  %1280 = vmatpush2.bf16.msra.mxu0 0
  %1281 = vmatprep.subr.bf16.mxu0 0
  %1282 = vmatpush2.bf16.msra.mxu0 0
  %1283 = vmatprep.subr.bf16.mxu0 0
  %1284 = vmatpush2.bf16.msra.mxu0 0
  %1285 = vmatprep.subr.bf16.mxu0 0
  %1286 = vmatpush2.bf16.msra.mxu0 0
  %1287 = vmatprep.subr.bf16.mxu0 0
  %1288 = vmatpush2.bf16.msra.mxu0 0
  %1289 = vmatprep.subr.bf16.mxu0 0
  %1290 = vmatpush2.bf16.msra.mxu0 0
  %1291 = vmatprep.mubr.bf16.mxu0 0
  %1292 = vmatmul.mubr.bf16.gmra.mxu0 %v1218
  %v1293 = vpop.f32.mrf.mxu0
  %v1294 = vadd.f32 0.0, %v1293
  %v1295 = vpop.f32.mrf.mxu0
  %v1296 = vadd.f32 0.0, %v1295
  %v1297 = vpop.f32.mrf.mxu0
  %v1298 = vadd.f32 0.0, %v1297
  %v1299 = vpop.f32.mrf.mxu0
  %v1300 = vadd.f32 0.0, %v1299
  %1301 = vmatprep.mubr.bf16.mxu0 0
  %1302 = vmatmul.mubr.bf16.gmra.mxu0 %v1221
  %v1303 = vpop.f32.mrf.mxu0
  %v1304 = vadd.f32 0.0, %v1303
  %v1305 = vpop.f32.mrf.mxu0
  %v1306 = vadd.f32 0.0, %v1305
  %v1307 = vpop.f32.mrf.mxu0
  %v1308 = vadd.f32 0.0, %v1307
  %v1309 = vpop.f32.mrf.mxu0
  %v1310 = vadd.f32 0.0, %v1309
  %1311 = vmatprep.mubr.bf16.mxu0 0
  %1312 = vmatmul.mubr.bf16.gmra.mxu0 %v1224
  %v1313 = vpop.f32.mrf.mxu0
  %v1314 = vadd.f32 0.0, %v1313
  %v1315 = vpop.f32.mrf.mxu0
  %v1316 = vadd.f32 0.0, %v1315
  %v1317 = vpop.f32.mrf.mxu0
  %v1318 = vadd.f32 0.0, %v1317
  %v1319 = vpop.f32.mrf.mxu0
  %v1320 = vadd.f32 0.0, %v1319
  %1321 = vmatprep.mubr.bf16.mxu0 0
  %1322 = vmatmul.mubr.bf16.gmra.mxu0 %v1227
  %v1323 = vpop.f32.mrf.mxu0
  %v1324 = vadd.f32 0.0, %v1323
  %v1325 = vpop.f32.mrf.mxu0
  %v1326 = vadd.f32 0.0, %v1325
  %v1327 = vpop.f32.mrf.mxu0
  %v1328 = vadd.f32 0.0, %v1327
  %v1329 = vpop.f32.mrf.mxu0
  %v1330 = vadd.f32 0.0, %v1329
  %1331 = vmatprep.mubr.bf16.mxu0 0
  %1332 = vmatmul.mubr.bf16.gmra.mxu0 %v1230
  %v1333 = vpop.f32.mrf.mxu0
  %v1334 = vadd.f32 0.0, %v1333
  %v1335 = vpop.f32.mrf.mxu0
  %v1336 = vadd.f32 0.0, %v1335
  %v1337 = vpop.f32.mrf.mxu0
  %v1338 = vadd.f32 0.0, %v1337
  %v1339 = vpop.f32.mrf.mxu0
  %v1340 = vadd.f32 0.0, %v1339
  %1341 = vmatprep.mubr.bf16.mxu0 0
  %1342 = vmatmul.mubr.bf16.gmra.mxu0 %v1233
  %v1343 = vpop.f32.mrf.mxu0
  %v1344 = vadd.f32 0.0, %v1343
  %v1345 = vpop.f32.mrf.mxu0
  %v1346 = vadd.f32 0.0, %v1345
  %v1347 = vpop.f32.mrf.mxu0
  %v1348 = vadd.f32 0.0, %v1347
  %v1349 = vpop.f32.mrf.mxu0
  %v1350 = vadd.f32 0.0, %v1349
  %1351 = vmatprep.mubr.bf16.mxu0 0
  %1352 = vmatmul.mubr.bf16.gmra.mxu0 %v1236
  %v1353 = vpop.f32.mrf.mxu0
  %v1354 = vadd.f32 0.0, %v1353
  %v1355 = vpop.f32.mrf.mxu0
  %v1356 = vadd.f32 0.0, %v1355
  %v1357 = vpop.f32.mrf.mxu0
  %v1358 = vadd.f32 0.0, %v1357
  %v1359 = vpop.f32.mrf.mxu0
  %v1360 = vadd.f32 0.0, %v1359
  %1361 = vmatprep.mubr.bf16.mxu0 0
  %1362 = vmatmul.mubr.bf16.gmra.mxu0 %v1239
  %v1363 = vpop.f32.mrf.mxu0
  %v1364 = vadd.f32 0.0, %v1363
  %v1365 = vpop.f32.mrf.mxu0
  %v1366 = vadd.f32 0.0, %v1365
  %v1367 = vpop.f32.mrf.mxu0
  %v1368 = vadd.f32 0.0, %v1367
  %v1369 = vpop.f32.mrf.mxu0
  %v1370 = vadd.f32 0.0, %v1369
  %1371 = vmatprep.mubr.bf16.mxu0 0
  %1372 = vmatmul.mubr.bf16.gmra.mxu0 %v1242
  %v1373 = vpop.f32.mrf.mxu0
  %v1374 = vadd.f32 0.0, %v1373
  %v1375 = vpop.f32.mrf.mxu0
  %v1376 = vadd.f32 0.0, %v1375
  %v1377 = vpop.f32.mrf.mxu0
  %v1378 = vadd.f32 0.0, %v1377
  %v1379 = vpop.f32.mrf.mxu0
  %v1380 = vadd.f32 0.0, %v1379
  %1381 = vmatprep.mubr.bf16.mxu0 0
  %1382 = vmatmul.mubr.bf16.gmra.mxu0 %v1245
  %v1383 = vpop.f32.mrf.mxu0
  %v1384 = vadd.f32 0.0, %v1383
  %v1385 = vpop.f32.mrf.mxu0
  %v1386 = vadd.f32 0.0, %v1385
  %v1387 = vpop.f32.mrf.mxu0
  %v1388 = vadd.f32 0.0, %v1387
  %v1389 = vpop.f32.mrf.mxu0
  %v1390 = vadd.f32 0.0, %v1389
  %1391 = vmatprep.mubr.bf16.mxu0 0
  %1392 = vmatmul.mubr.bf16.gmra.mxu0 %v1248
  %v1393 = vpop.f32.mrf.mxu0
  %v1394 = vadd.f32 0.0, %v1393
  %v1395 = vpop.f32.mrf.mxu0
  %v1396 = vadd.f32 0.0, %v1395
  %v1397 = vpop.f32.mrf.mxu0
  %v1398 = vadd.f32 0.0, %v1397
  %v1399 = vpop.f32.mrf.mxu0
  %v1400 = vadd.f32 0.0, %v1399
  %1401 = vmatprep.mubr.bf16.mxu0 0
  %1402 = vmatmul.mubr.bf16.gmra.mxu0 %v1251
  %v1403 = vpop.f32.mrf.mxu0
  %v1404 = vadd.f32 0.0, %v1403
  %v1405 = vpop.f32.mrf.mxu0
  %v1406 = vadd.f32 0.0, %v1405
  %v1407 = vpop.f32.mrf.mxu0
  %v1408 = vadd.f32 0.0, %v1407
  %v1409 = vpop.f32.mrf.mxu0
  %v1410 = vadd.f32 0.0, %v1409
  %1411 = vdwg.mxu0
  %v1412 = vadd.f32 %v1110, %v1294
  %v1413 = vadd.f32 %v1111, %v1296
  %v1414 = vadd.f32 %v1112, %v1298
  %v1415 = vadd.f32 %v1113, %v1300
  %v1416 = vadd.f32 %v1114, %v1304
  %v1417 = vadd.f32 %v1115, %v1306
  %v1418 = vadd.f32 %v1116, %v1308
  %v1419 = vadd.f32 %v1117, %v1310
  %v1420 = vadd.f32 %v1118, %v1314
  %v1421 = vadd.f32 %v1119, %v1316
  %v1422 = vadd.f32 %v1120, %v1318
  %v1423 = vadd.f32 %v1121, %v1320
  %v1424 = vadd.f32 %v1122, %v1324
  %v1425 = vadd.f32 %v1123, %v1326
  %v1426 = vadd.f32 %v1124, %v1328
  %v1427 = vadd.f32 %v1125, %v1330
  %v1428 = vadd.f32 %v1126, %v1334
  %v1429 = vadd.f32 %v1127, %v1336
  %v1430 = vadd.f32 %v1128, %v1338
  %v1431 = vadd.f32 %v1129, %v1340
  %v1432 = vadd.f32 %v1130, %v1344
  %v1433 = vadd.f32 %v1131, %v1346
  %v1434 = vadd.f32 %v1132, %v1348
  %v1435 = vadd.f32 %v1133, %v1350
  %v1436 = vadd.f32 %v1134, %v1354
  %v1437 = vadd.f32 %v1135, %v1356
  %v1438 = vadd.f32 %v1136, %v1358
  %v1439 = vadd.f32 %v1137, %v1360
  %v1440 = vadd.f32 %v1138, %v1364
  %v1441 = vadd.f32 %v1139, %v1366
  %v1442 = vadd.f32 %v1140, %v1368
  %v1443 = vadd.f32 %v1141, %v1370
  %v1444 = vadd.f32 %v1142, %v1374
  %v1445 = vadd.f32 %v1143, %v1376
  %v1446 = vadd.f32 %v1144, %v1378
  %v1447 = vadd.f32 %v1145, %v1380
  %v1448 = vadd.f32 %v1146, %v1384
  %v1449 = vadd.f32 %v1147, %v1386
  %v1450 = vadd.f32 %v1148, %v1388
  %v1451 = vadd.f32 %v1149, %v1390
  %v1452 = vadd.f32 %v1150, %v1394
  %v1453 = vadd.f32 %v1151, %v1396
  %v1454 = vadd.f32 %v1152, %v1398
  %v1455 = vadd.f32 %v1153, %v1400
  %v1456 = vadd.f32 %v1154, %v1404
  %v1457 = vadd.f32 %v1155, %v1406
  %v1458 = vadd.f32 %v1156, %v1408
  %v1459 = vadd.f32 %v1157, %v1410
  %v1460 = vld [vmem:[%s2] sm:$0x3]
  %v1462 = vlaneseq
  %v1463 = vshrl.u32 %v1462, 7
  %v1464 = vsub.s32 0, %v1463
  %v1465 = vrot.slane %v1460, %v1464
  %v1466 = vlaneseq
  %v1467 = vshrl.u32 %v1466, 7
  %v1468 = vsub.s32 1, %v1467
  %v1469 = vrot.slane %v1460, %v1468
  %v1472 = vadd.f32 %v1412, %v1465
  %v1473 = vadd.f32 %v1413, %v1469
  %v1474 = vadd.f32 %v1414, %v1465
  %v1475 = vadd.f32 %v1415, %v1469
  %v1476 = vadd.f32 %v1416, %v1465
  %v1477 = vadd.f32 %v1417, %v1469
  %v1478 = vadd.f32 %v1418, %v1465
  %v1479 = vadd.f32 %v1419, %v1469
  %v1480 = vadd.f32 %v1420, %v1465
  %v1481 = vadd.f32 %v1421, %v1469
  %v1482 = vadd.f32 %v1422, %v1465
  %v1483 = vadd.f32 %v1423, %v1469
  %v1484 = vadd.f32 %v1424, %v1465
  %v1485 = vadd.f32 %v1425, %v1469
  %v1486 = vadd.f32 %v1426, %v1465
  %v1487 = vadd.f32 %v1427, %v1469
  %v1488 = vadd.f32 %v1428, %v1465
  %v1489 = vadd.f32 %v1429, %v1469
  %v1490 = vadd.f32 %v1430, %v1465
  %v1491 = vadd.f32 %v1431, %v1469
  %v1492 = vadd.f32 %v1432, %v1465
  %v1493 = vadd.f32 %v1433, %v1469
  %v1494 = vadd.f32 %v1434, %v1465
  %v1495 = vadd.f32 %v1435, %v1469
  %v1496 = vadd.f32 %v1436, %v1465
  %v1497 = vadd.f32 %v1437, %v1469
  %v1498 = vadd.f32 %v1438, %v1465
  %v1499 = vadd.f32 %v1439, %v1469
  %v1500 = vadd.f32 %v1440, %v1465
  %v1501 = vadd.f32 %v1441, %v1469
  %v1502 = vadd.f32 %v1442, %v1465
  %v1503 = vadd.f32 %v1443, %v1469
  %v1504 = vadd.f32 %v1444, %v1465
  %v1505 = vadd.f32 %v1445, %v1469
  %v1506 = vadd.f32 %v1446, %v1465
  %v1507 = vadd.f32 %v1447, %v1469
  %v1508 = vadd.f32 %v1448, %v1465
  %v1509 = vadd.f32 %v1449, %v1469
  %v1510 = vadd.f32 %v1450, %v1465
  %v1511 = vadd.f32 %v1451, %v1469
  %v1512 = vadd.f32 %v1452, %v1465
  %v1513 = vadd.f32 %v1453, %v1469
  %v1514 = vadd.f32 %v1454, %v1465
  %v1515 = vadd.f32 %v1455, %v1469
  %v1516 = vadd.f32 %v1456, %v1465
  %v1517 = vadd.f32 %v1457, %v1469
  %v1518 = vadd.f32 %v1458, %v1465
  %v1519 = vadd.f32 %v1459, %v1469
  %v1520 = vmax.f32 %v1472, 0.0
  %v1521 = vmax.f32 %v1473, 0.0
  %v1522 = vmax.f32 %v1474, 0.0
  %v1523 = vmax.f32 %v1475, 0.0
  %v1524 = vmax.f32 %v1476, 0.0
  %v1525 = vmax.f32 %v1477, 0.0
  %v1526 = vmax.f32 %v1478, 0.0
  %v1527 = vmax.f32 %v1479, 0.0
  %v1528 = vmax.f32 %v1480, 0.0
  %v1529 = vmax.f32 %v1481, 0.0
  %v1530 = vmax.f32 %v1482, 0.0
  %v1531 = vmax.f32 %v1483, 0.0
  %v1532 = vmax.f32 %v1484, 0.0
  %v1533 = vmax.f32 %v1485, 0.0
  %v1534 = vmax.f32 %v1486, 0.0
  %v1535 = vmax.f32 %v1487, 0.0
  %v1536 = vmax.f32 %v1488, 0.0
  %v1537 = vmax.f32 %v1489, 0.0
  %v1538 = vmax.f32 %v1490, 0.0
  %v1539 = vmax.f32 %v1491, 0.0
  %v1540 = vmax.f32 %v1492, 0.0
  %v1541 = vmax.f32 %v1493, 0.0
  %v1542 = vmax.f32 %v1494, 0.0
  %v1543 = vmax.f32 %v1495, 0.0
  %v1544 = vmax.f32 %v1496, 0.0
  %v1545 = vmax.f32 %v1497, 0.0
  %v1546 = vmax.f32 %v1498, 0.0
  %v1547 = vmax.f32 %v1499, 0.0
  %v1548 = vmax.f32 %v1500, 0.0
  %v1549 = vmax.f32 %v1501, 0.0
  %v1550 = vmax.f32 %v1502, 0.0
  %v1551 = vmax.f32 %v1503, 0.0
  %v1552 = vmax.f32 %v1504, 0.0
  %v1553 = vmax.f32 %v1505, 0.0
  %v1554 = vmax.f32 %v1506, 0.0
  %v1555 = vmax.f32 %v1507, 0.0
  %v1556 = vmax.f32 %v1508, 0.0
  %v1557 = vmax.f32 %v1509, 0.0
  %v1558 = vmax.f32 %v1510, 0.0
  %v1559 = vmax.f32 %v1511, 0.0
  %v1560 = vmax.f32 %v1512, 0.0
  %v1561 = vmax.f32 %v1513, 0.0
  %v1562 = vmax.f32 %v1514, 0.0
  %v1563 = vmax.f32 %v1515, 0.0
  %v1564 = vmax.f32 %v1516, 0.0
  %v1565 = vmax.f32 %v1517, 0.0
  %v1566 = vmax.f32 %v1518, 0.0
  %v1567 = vmax.f32 %v1519, 0.0
  %1568 = vst [vmem:[#allocation2] sm:$0xff] %v1520
  %vm1569 = vcmask 130048
  %1570 = vst.msk [vmem:[#allocation2 + $0x8] sm:$0xff] %vm1569, %v1521
  %1571 = vst [vmem:[#allocation2 + $0x10] sm:$0xff] %v1522
  %1572 = vst.msk [vmem:[#allocation2 + $0x18] sm:$0xff] %vm1569, %v1523
  %1573 = vst [vmem:[#allocation2 + $0x20] sm:$0xff] %v1524
  %1574 = vst.msk [vmem:[#allocation2 + $0x28] sm:$0xff] %vm1569, %v1525
  %1575 = vst [vmem:[#allocation2 + $0x30] sm:$0xff] %v1526
  %1576 = vst.msk [vmem:[#allocation2 + $0x38] sm:$0xff] %vm1569, %v1527
  %1577 = vst [vmem:[#allocation2 + $0x40] sm:$0xff] %v1528
  %1578 = vst.msk [vmem:[#allocation2 + $0x48] sm:$0xff] %vm1569, %v1529
  %1579 = vst [vmem:[#allocation2 + $0x50] sm:$0xff] %v1530
  %1580 = vst.msk [vmem:[#allocation2 + $0x58] sm:$0xff] %vm1569, %v1531
  %1581 = vst [vmem:[#allocation2 + $0x60] sm:$0xff] %v1532
  %1582 = vst.msk [vmem:[#allocation2 + $0x68] sm:$0xff] %vm1569, %v1533
  %1583 = vst [vmem:[#allocation2 + $0x70] sm:$0xff] %v1534
  %1584 = vst.msk [vmem:[#allocation2 + $0x78] sm:$0xff] %vm1569, %v1535
  %1585 = vst [vmem:[#allocation2 + $0x80] sm:$0xff] %v1536
  %1586 = vst.msk [vmem:[#allocation2 + $0x88] sm:$0xff] %vm1569, %v1537
  %1587 = vst [vmem:[#allocation2 + $0x90] sm:$0xff] %v1538
  %1588 = vst.msk [vmem:[#allocation2 + $0x98] sm:$0xff] %vm1569, %v1539
  %1589 = vst [vmem:[#allocation2 + $0xa0] sm:$0xff] %v1540
  %1590 = vst.msk [vmem:[#allocation2 + $0xa8] sm:$0xff] %vm1569, %v1541
  %1591 = vst [vmem:[#allocation2 + $0xb0] sm:$0xff] %v1542
  %1592 = vst.msk [vmem:[#allocation2 + $0xb8] sm:$0xff] %vm1569, %v1543
  %1593 = vst [vmem:[#allocation2 + $0xc0] sm:$0xff] %v1544
  %1594 = vst.msk [vmem:[#allocation2 + $0xc8] sm:$0xff] %vm1569, %v1545
  %1595 = vst [vmem:[#allocation2 + $0xd0] sm:$0xff] %v1546
  %1596 = vst.msk [vmem:[#allocation2 + $0xd8] sm:$0xff] %vm1569, %v1547
  %1597 = vst [vmem:[#allocation2 + $0xe0] sm:$0xff] %v1548
  %1598 = vst.msk [vmem:[#allocation2 + $0xe8] sm:$0xff] %vm1569, %v1549
  %1599 = vst [vmem:[#allocation2 + $0xf0] sm:$0xff] %v1550
  %1600 = vst.msk [vmem:[#allocation2 + $0xf8] sm:$0xff] %vm1569, %v1551
  %1601 = vst [vmem:[#allocation2 + $0x100] sm:$0xff] %v1552
  %1602 = vst.msk [vmem:[#allocation2 + $0x108] sm:$0xff] %vm1569, %v1553
  %1603 = vst [vmem:[#allocation2 + $0x110] sm:$0xff] %v1554
  %1604 = vst.msk [vmem:[#allocation2 + $0x118] sm:$0xff] %vm1569, %v1555
  %1605 = vst [vmem:[#allocation2 + $0x120] sm:$0xff] %v1556
  %1606 = vst.msk [vmem:[#allocation2 + $0x128] sm:$0xff] %vm1569, %v1557
  %1607 = vst [vmem:[#allocation2 + $0x130] sm:$0xff] %v1558
  %1608 = vst.msk [vmem:[#allocation2 + $0x138] sm:$0xff] %vm1569, %v1559
  %1609 = vst [vmem:[#allocation2 + $0x140] sm:$0xff] %v1560
  %1610 = vst.msk [vmem:[#allocation2 + $0x148] sm:$0xff] %vm1569, %v1561
  %1611 = vst [vmem:[#allocation2 + $0x150] sm:$0xff] %v1562
  %1612 = vst.msk [vmem:[#allocation2 + $0x158] sm:$0xff] %vm1569, %v1563
  %1613 = vst [vmem:[#allocation2 + $0x160] sm:$0xff] %v1564
  %1614 = vst.msk [vmem:[#allocation2 + $0x168] sm:$0xff] %vm1569, %v1565
  %1615 = vst [vmem:[#allocation2 + $0x170] sm:$0xff] %v1566
  %1616 = vst.msk [vmem:[#allocation2 + $0x178] sm:$0xff] %vm1569, %v1567
  %v1617 = vld [vmem:[%s3] sm:$0xff]
  %v1618 = vld [vmem:[%s3 + $0x8] sm:$0xff]
  %v1619 = vld [vmem:[%s3 + $0x10] sm:$0xff]
  %v1620 = vld [vmem:[%s3 + $0x18] sm:$0xff]
  %v1621 = vld [vmem:[%s3 + $0x20] sm:$0xff]
  %v1622 = vld [vmem:[%s3 + $0x28] sm:$0xff]
  %v1623 = vld [vmem:[%s3 + $0x30] sm:$0xff]
  %v1624 = vld [vmem:[%s3 + $0x38] sm:$0xff]
  %v1625 = vld [vmem:[%s3 + $0x40] sm:$0xff]
  %v1626 = vld [vmem:[%s3 + $0x48] sm:$0xff]
  %v1627 = vld [vmem:[%s3 + $0x50] sm:$0xff]
  %v1628 = vld [vmem:[%s3 + $0x58] sm:$0xff]
  %v1629 = vld [vmem:[%s3 + $0x60] sm:$0xff]
  %v1630 = vld [vmem:[%s3 + $0x68] sm:$0xff]
  %v1631 = vld [vmem:[%s3 + $0x70] sm:$0xff]
  %v1632 = vld [vmem:[%s3 + $0x78] sm:$0xff]
  %v1633 = vld [vmem:[%s3 + $0x80] sm:$0xff]
  %v1634 = vld [vmem:[%s3 + $0x88] sm:$0xff]
  %v1635 = vld [vmem:[%s3 + $0x90] sm:$0xff]
  %v1636 = vld [vmem:[%s3 + $0x98] sm:$0xff]
  %v1637 = vld [vmem:[%s3 + $0xa0] sm:$0xff]
  %v1638 = vld [vmem:[%s3 + $0xa8] sm:$0xff]
  %v1639 = vld [vmem:[%s3 + $0xb0] sm:$0xff]
  %v1640 = vld [vmem:[%s3 + $0xb8] sm:$0xff]
  %v1641 = vld [vmem:[%s3 + $0xc0] sm:$0xff]
  %v1642 = vld [vmem:[%s3 + $0xc8] sm:$0xff]
  %v1643 = vld [vmem:[%s3 + $0xd0] sm:$0xff]
  %v1644 = vld [vmem:[%s3 + $0xd8] sm:$0xff]
  %v1645 = vld [vmem:[%s3 + $0xe0] sm:$0xff]
  %v1646 = vld [vmem:[%s3 + $0xe8] sm:$0xff]
  %v1647 = vld [vmem:[%s3 + $0xf0] sm:$0xff]
  %v1648 = vld [vmem:[%s3 + $0xf8] sm:$0xff]
  %v1649 = vld [vmem:[%s3 + $0x100] sm:$0xff]
  %v1650 = vld [vmem:[%s3 + $0x108] sm:$0xff]
  %v1651 = vld [vmem:[%s3 + $0x110] sm:$0xff]
  %v1652 = vld [vmem:[%s3 + $0x118] sm:$0xff]
  %v1653 = vld [vmem:[#allocation2] ss:$8 sm:$0x3]
  %s1654 = scalar_lea.vmem [#allocation2], 48
  %v1655 = vld [vmem:[%s1654] ss:$8 sm:$0x3]
  %s1656 = scalar_lea.vmem [#allocation2], 96
  %v1657 = vld [vmem:[%s1656] ss:$8 sm:$0x3]
  %s1658 = scalar_lea.vmem [#allocation2], 144
  %v1659 = vld [vmem:[%s1658] ss:$8 sm:$0x3]
  %s1660 = scalar_lea.vmem [#allocation2], 192
  %v1661 = vld [vmem:[%s1660] ss:$8 sm:$0x3]
  %s1662 = scalar_lea.vmem [#allocation2], 240
  %v1663 = vld [vmem:[%s1662] ss:$8 sm:$0x3]
  %s1664 = scalar_lea.vmem [#allocation2], 288
  %v1665 = vld [vmem:[%s1664] ss:$8 sm:$0x3]
  %s1666 = scalar_lea.vmem [#allocation2], 336
  %v1667 = vld [vmem:[%s1666] ss:$8 sm:$0x3]
  %s1668 = scalar_lea.vmem [#allocation2], 1
  %v1669 = vld [vmem:[%s1668] ss:$8 sm:$0x3]
  %s1670 = scalar_lea.vmem [#allocation2], 49
  %v1671 = vld [vmem:[%s1670] ss:$8 sm:$0x3]
  %s1672 = scalar_lea.vmem [#allocation2], 97
  %v1673 = vld [vmem:[%s1672] ss:$8 sm:$0x3]
  %s1674 = scalar_lea.vmem [#allocation2], 145
  %v1675 = vld [vmem:[%s1674] ss:$8 sm:$0x3]
  %s1676 = scalar_lea.vmem [#allocation2], 193
  %v1677 = vld [vmem:[%s1676] ss:$8 sm:$0x3]
  %s1678 = scalar_lea.vmem [#allocation2], 241
  %v1679 = vld [vmem:[%s1678] ss:$8 sm:$0x3]
  %s1680 = scalar_lea.vmem [#allocation2], 289
  %v1681 = vld [vmem:[%s1680] ss:$8 sm:$0x3]
  %s1682 = scalar_lea.vmem [#allocation2], 337
  %v1683 = vld [vmem:[%s1682] ss:$8 sm:$0x3]
  %v1684 = vmax.f32 %v1653, %v1669
  %v1685 = vmax.f32 %v1655, %v1671
  %v1686 = vmax.f32 %v1657, %v1673
  %v1687 = vmax.f32 %v1659, %v1675
  %v1688 = vmax.f32 %v1661, %v1677
  %v1689 = vmax.f32 %v1663, %v1679
  %v1690 = vmax.f32 %v1665, %v1681
  %v1691 = vmax.f32 %v1667, %v1683
  %v1700 = vcombine.low %v1684, %v1685
  %v1701 = vcombine.low %v1686, %v1687
  %v1702 = vcombine.low %v1688, %v1689
  %v1703 = vcombine.low %v1690, %v1691
  %v1705 = vunpack.c.l.s4 1966171168
  %v1706 = vunpack.c.0.s8 %v1705
  %v1707 = vlaneseq
  %v1708 = vshrl.u32 %v1707, 7
  %v1709 = vsub.s32 %v1706, %v1708
  %v1710 = vrot.slane %v1700, %v1709
  %v1712 = vunpack.c.l.s4 1966171168
  %v1713 = vunpack.c.0.s8 %v1712
  %v1714 = vlaneseq
  %v1715 = vshrl.u32 %v1714, 7
  %v1716 = vsub.s32 %v1713, %v1715
  %v1717 = vrot.slane %v1701, %v1716
  %v1719 = vunpack.c.l.s4 1966171168
  %v1720 = vunpack.c.0.s8 %v1719
  %v1721 = vlaneseq
  %v1722 = vshrl.u32 %v1721, 7
  %v1723 = vsub.s32 %v1720, %v1722
  %v1724 = vrot.slane %v1702, %v1723
  %v1726 = vunpack.c.l.s4 1966171168
  %v1727 = vunpack.c.0.s8 %v1726
  %v1728 = vlaneseq
  %v1729 = vshrl.u32 %v1728, 7
  %v1730 = vsub.s32 %v1727, %v1729
  %v1731 = vrot.slane %v1703, %v1730
  %v1732 = vcombine.low %v1710, %v1717
  %v1733 = vcombine.high %v1710, %v1717
  %v1734 = vcombine.low %v1724, %v1731
  %v1735 = vcombine.high %v1724, %v1731
  %v1737 = vunpack.c.l.s4 1966171168
  %v1738 = vunpack.c.0.s8 %v1737
  %v1739 = vlaneseq
  %v1740 = vshrl.u32 %v1739, 7
  %v1741 = vsub.s32 %v1738, %v1740
  %v1742 = vrot.slane %v1732, %v1741
  %v1744 = vunpack.c.l.s4 1966171168
  %v1745 = vunpack.c.0.s8 %v1744
  %v1746 = vlaneseq
  %v1747 = vshrl.u32 %v1746, 7
  %v1748 = vsub.s32 %v1745, %v1747
  %v1749 = vrot.slane %v1733, %v1748
  %v1751 = vunpack.c.l.s4 1966171168
  %v1752 = vunpack.c.0.s8 %v1751
  %v1753 = vlaneseq
  %v1754 = vshrl.u32 %v1753, 7
  %v1755 = vsub.s32 %v1752, %v1754
  %v1756 = vrot.slane %v1734, %v1755
  %v1758 = vunpack.c.l.s4 1966171168
  %v1759 = vunpack.c.0.s8 %v1758
  %v1760 = vlaneseq
  %v1761 = vshrl.u32 %v1760, 7
  %v1762 = vsub.s32 %v1759, %v1761
  %v1763 = vrot.slane %v1735, %v1762
  %v1764 = vcombine.low %v1742, %v1756
  %v1765 = vcombine.low %v1749, %v1763
  %v1767 = vsel %vm1569, %v1765, 0
  %1769 = vmatprep.subr.mxu0 %v1648
  %1770 = vmatpush1.msra.mxu0 %v1647
  %1771 = vmatprep.subr.mxu0 %v1646
  %1772 = vmatpush1.msra.mxu0 %v1645
  %1773 = vmatprep.subr.mxu0 %v1644
  %1774 = vmatpush1.msra.mxu0 %v1643
  %1775 = vmatprep.subr.mxu0 %v1642
  %1776 = vmatpush1.msra.mxu0 %v1641
  %1777 = vmatprep.subr.mxu0 %v1640
  %1778 = vmatpush1.msra.mxu0 %v1639
  %1779 = vmatprep.subr.mxu0 %v1638
  %1780 = vmatpush1.msra.mxu0 %v1637
  %1781 = vmatprep.subr.mxu0 %v1636
  %1782 = vmatpush1.msra.mxu0 %v1635
  %1783 = vmatprep.subr.mxu0 %v1634
  %1784 = vmatpush1.msra.mxu0 %v1633
  %1785 = vmatprep.subr.mxu0 %v1632
  %1786 = vmatpush1.msra.mxu0 %v1631
  %1787 = vmatprep.subr.mxu0 %v1630
  %1788 = vmatpush1.msra.mxu0 %v1629
  %1789 = vmatprep.subr.mxu0 %v1628
  %1790 = vmatpush1.msra.mxu0 %v1627
  %1791 = vmatprep.subr.mxu0 %v1626
  %1792 = vmatpush1.msra.mxu0 %v1625
  %1793 = vmatprep.subr.mxu0 %v1624
  %1794 = vmatpush1.msra.mxu0 %v1623
  %1795 = vmatprep.subr.mxu0 %v1622
  %1796 = vmatpush1.msra.mxu0 %v1621
  %1797 = vmatprep.subr.mxu0 %v1620
  %1798 = vmatpush1.msra.mxu0 %v1619
  %1799 = vmatprep.subr.mxu0 %v1618
  %1800 = vmatpush1.msra.mxu0 %v1617
  %1801 = vmatprep.subr.mxu0 0.0
  %1802 = vmatpush2.msra.mxu0 0.0
  %1803 = vmatprep.subr.mxu0 0.0
  %1804 = vmatpush2.msra.mxu0 0.0
  %1805 = vmatprep.subr.mxu0 0.0
  %1806 = vmatpush2.msra.mxu0 0.0
  %1807 = vmatprep.subr.mxu0 0.0
  %1808 = vmatpush2.msra.mxu0 0.0
  %1809 = vmatprep.subr.mxu0 0.0
  %1810 = vmatpush2.msra.mxu0 0.0
  %1811 = vmatprep.subr.mxu0 0.0
  %1812 = vmatpush2.msra.mxu0 0.0
  %1813 = vmatprep.subr.mxu0 0.0
  %1814 = vmatpush2.msra.mxu0 0.0
  %1815 = vmatprep.subr.mxu0 0.0
  %1816 = vmatpush2.msra.mxu0 0.0
  %1817 = vmatprep.subr.mxu0 0.0
  %1818 = vmatpush2.msra.mxu0 0.0
  %1819 = vmatprep.subr.mxu0 0.0
  %1820 = vmatpush2.msra.mxu0 0.0
  %1821 = vmatprep.subr.mxu0 0.0
  %1822 = vmatpush2.msra.mxu0 0.0
  %1823 = vmatprep.subr.mxu0 0.0
  %1824 = vmatpush2.msra.mxu0 0.0
  %1825 = vmatprep.subr.mxu0 0.0
  %1826 = vmatpush2.msra.mxu0 0.0
  %1827 = vmatprep.subr.mxu0 0.0
  %1828 = vmatpush2.msra.mxu0 0.0
  %1829 = vmatprep.subr.mxu0 %v1652
  %1830 = vmatpush2.msra.mxu0 %v1651
  %1831 = vmatprep.subr.mxu0 %v1650
  %1832 = vmatpush2.msra.mxu0 %v1649
  %1833 = vmatprep.mubr.f32.mxu0 %v1767
  %1834 = vmatmul.mubr.f32.gmra.mxu0 %v1764
  %v1835 = vpop.f32.mrf.mxu0
  %v1836 = vadd.f32 0.0, %v1835
  %v1837 = vpop.f32.mrf.mxu0
  %v1838 = vadd.f32 0.0, %v1837
  %1839 = vdwg.mxu0
  %v1842 = vcombine.low %v1836, %v1838
  %v1843 = vcombine.high %v1836, %v1838
  %v1845 = vunpack.c.l.s4 1966171168
  %v1846 = vunpack.c.0.s8 %v1845
  %v1847 = vlaneseq
  %v1848 = vshrl.u32 %v1847, 7
  %v1849 = vsub.s32 %v1846, %v1848
  %v1850 = vrot.slane %v1842, %v1849
  %v1852 = vunpack.c.l.s4 1966171168
  %v1853 = vunpack.c.0.s8 %v1852
  %v1854 = vlaneseq
  %v1855 = vshrl.u32 %v1854, 7
  %v1856 = vsub.s32 %v1853, %v1855
  %v1857 = vrot.slane %v1843, %v1856
  %v1858 = vcombine.high %v1850, %v1850
  %v1859 = vcombine.high %v1857, %v1857
  %v1861 = vunpack.c.l.s4 1966171168
  %v1862 = vunpack.c.0.s8 %v1861
  %v1863 = vlaneseq
  %v1864 = vshrl.u32 %v1863, 7
  %v1865 = vsub.s32 %v1862, %v1864
  %v1866 = vrot.slane %v1850, %v1865
  %v1868 = vunpack.c.l.s4 1966171168
  %v1869 = vunpack.c.0.s8 %v1868
  %v1870 = vlaneseq
  %v1871 = vshrl.u32 %v1870, 7
  %v1872 = vsub.s32 %v1869, %v1871
  %v1873 = vrot.slane %v1857, %v1872
  %v1875 = vunpack.c.l.s4 1966171168
  %v1876 = vunpack.c.0.s8 %v1875
  %v1877 = vlaneseq
  %v1878 = vshrl.u32 %v1877, 7
  %v1879 = vsub.s32 %v1876, %v1878
  %v1880 = vrot.slane %v1858, %v1879
  %v1882 = vunpack.c.l.s4 1966171168
  %v1883 = vunpack.c.0.s8 %v1882
  %v1884 = vlaneseq
  %v1885 = vshrl.u32 %v1884, 7
  %v1886 = vsub.s32 %v1883, %v1885
  %v1887 = vrot.slane %v1859, %v1886
  %v1888 = vcombine.high %v1866, %v1866
  %v1889 = vcombine.high %v1873, %v1873
  %v1890 = vcombine.high %v1880, %v1880
  %v1891 = vcombine.high %v1887, %v1887
  %v1900 = vmax.f32 %v1684, %v1866
  %v1901 = vmax.f32 %v1685, %v1880
  %v1902 = vmax.f32 %v1686, %v1888
  %v1903 = vmax.f32 %v1687, %v1890
  %v1904 = vmax.f32 %v1688, %v1873
  %v1905 = vmax.f32 %v1689, %v1887
  %v1906 = vmax.f32 %v1690, %v1889
  %v1907 = vmax.f32 %v1691, %v1891
  %v1908 = vlaneseq
  %vm1909 = vcmp.ge.s32.totalorder %v1908, 0
  %vm1910 = vcmp.lt.s32.totalorder %v1908, 144
  %vm1911 = vmand %vm1909, %vm1910
  %1912 = vst.msk [vmem:[#allocation3] ss:$8 sm:$0x3] %vm1911, %v1900
  %1913 = vst.msk [vmem:[#allocation3] ss:$8 sm:$0x0] %vm1911, %v1900
  %s1914 = scalar_lea.vmem [#allocation3], 32
  %1915 = vst.msk [vmem:[%s1914] ss:$8 sm:$0x3] %vm1911, %v1901
  %1916 = vst.msk [vmem:[%s1914] ss:$8 sm:$0x0] %vm1911, %v1901
  %s1917 = scalar_lea.vmem [#allocation3], 64
  %1918 = vst.msk [vmem:[%s1917] ss:$8 sm:$0x3] %vm1911, %v1902
  %1919 = vst.msk [vmem:[%s1917] ss:$8 sm:$0x0] %vm1911, %v1902
  %s1920 = scalar_lea.vmem [#allocation3], 96
  %1921 = vst.msk [vmem:[%s1920] ss:$8 sm:$0x3] %vm1911, %v1903
  %1922 = vst.msk [vmem:[%s1920] ss:$8 sm:$0x0] %vm1911, %v1903
  %s1923 = scalar_lea.vmem [#allocation3], 128
  %1924 = vst.msk [vmem:[%s1923] ss:$8 sm:$0x3] %vm1911, %v1904
  %1925 = vst.msk [vmem:[%s1923] ss:$8 sm:$0x0] %vm1911, %v1904
  %s1926 = scalar_lea.vmem [#allocation3], 160
  %1927 = vst.msk [vmem:[%s1926] ss:$8 sm:$0x3] %vm1911, %v1905
  %1928 = vst.msk [vmem:[%s1926] ss:$8 sm:$0x0] %vm1911, %v1905
  %s1929 = scalar_lea.vmem [#allocation3], 192
  %1930 = vst.msk [vmem:[%s1929] ss:$8 sm:$0x3] %vm1911, %v1906
  %1931 = vst.msk [vmem:[%s1929] ss:$8 sm:$0x0] %vm1911, %v1906
  %s1932 = scalar_lea.vmem [#allocation3], 224
  %1933 = vst.msk [vmem:[%s1932] ss:$8 sm:$0x3] %vm1911, %v1907
  %1934 = vst.msk [vmem:[%s1932] ss:$8 sm:$0x0] %vm1911, %v1907
  %s1935 = scalar_lea.vmem [#allocation2], 2
  %v1936 = vld [vmem:[%s1935] ss:$8 sm:$0x3]
  %s1937 = scalar_lea.vmem [#allocation2], 50
  %v1938 = vld [vmem:[%s1937] ss:$8 sm:$0x3]
  %s1939 = scalar_lea.vmem [#allocation2], 98
  %v1940 = vld [vmem:[%s1939] ss:$8 sm:$0x3]
  %s1941 = scalar_lea.vmem [#allocation2], 146
  %v1942 = vld [vmem:[%s1941] ss:$8 sm:$0x3]
  %s1943 = scalar_lea.vmem [#allocation2], 194
  %v1944 = vld [vmem:[%s1943] ss:$8 sm:$0x3]
  %s1945 = scalar_lea.vmem [#allocation2], 242
  %v1946 = vld [vmem:[%s1945] ss:$8 sm:$0x3]
  %s1947 = scalar_lea.vmem [#allocation2], 290
  %v1948 = vld [vmem:[%s1947] ss:$8 sm:$0x3]
  %s1949 = scalar_lea.vmem [#allocation2], 338
  %v1950 = vld [vmem:[%s1949] ss:$8 sm:$0x3]
  %s1951 = scalar_lea.vmem [#allocation2], 3
  %v1952 = vld [vmem:[%s1951] ss:$8 sm:$0x3]
  %s1953 = scalar_lea.vmem [#allocation2], 51
  %v1954 = vld [vmem:[%s1953] ss:$8 sm:$0x3]
  %s1955 = scalar_lea.vmem [#allocation2], 99
  %v1956 = vld [vmem:[%s1955] ss:$8 sm:$0x3]
  %s1957 = scalar_lea.vmem [#allocation2], 147
  %v1958 = vld [vmem:[%s1957] ss:$8 sm:$0x3]
  %s1959 = scalar_lea.vmem [#allocation2], 195
  %v1960 = vld [vmem:[%s1959] ss:$8 sm:$0x3]
  %s1961 = scalar_lea.vmem [#allocation2], 243
  %v1962 = vld [vmem:[%s1961] ss:$8 sm:$0x3]
  %s1963 = scalar_lea.vmem [#allocation2], 291
  %v1964 = vld [vmem:[%s1963] ss:$8 sm:$0x3]
  %s1965 = scalar_lea.vmem [#allocation2], 339
  %v1966 = vld [vmem:[%s1965] ss:$8 sm:$0x3]
  %v1967 = vmax.f32 %v1936, %v1952
  %v1968 = vmax.f32 %v1938, %v1954
  %v1969 = vmax.f32 %v1940, %v1956
  %v1970 = vmax.f32 %v1942, %v1958
  %v1971 = vmax.f32 %v1944, %v1960
  %v1972 = vmax.f32 %v1946, %v1962
  %v1973 = vmax.f32 %v1948, %v1964
  %v1974 = vmax.f32 %v1950, %v1966
  %v1983 = vcombine.low %v1967, %v1968
  %v1984 = vcombine.low %v1969, %v1970
  %v1985 = vcombine.low %v1971, %v1972
  %v1986 = vcombine.low %v1973, %v1974
  %v1988 = vunpack.c.l.s4 1966171168
  %v1989 = vunpack.c.0.s8 %v1988
  %v1990 = vlaneseq
  %v1991 = vshrl.u32 %v1990, 7
  %v1992 = vsub.s32 %v1989, %v1991
  %v1993 = vrot.slane %v1983, %v1992
  %v1995 = vunpack.c.l.s4 1966171168
  %v1996 = vunpack.c.0.s8 %v1995
  %v1997 = vlaneseq
  %v1998 = vshrl.u32 %v1997, 7
  %v1999 = vsub.s32 %v1996, %v1998
  %v2000 = vrot.slane %v1984, %v1999
  %v2002 = vunpack.c.l.s4 1966171168
  %v2003 = vunpack.c.0.s8 %v2002
  %v2004 = vlaneseq
  %v2005 = vshrl.u32 %v2004, 7
  %v2006 = vsub.s32 %v2003, %v2005
  %v2007 = vrot.slane %v1985, %v2006
  %v2009 = vunpack.c.l.s4 1966171168
  %v2010 = vunpack.c.0.s8 %v2009
  %v2011 = vlaneseq
  %v2012 = vshrl.u32 %v2011, 7
  %v2013 = vsub.s32 %v2010, %v2012
  %v2014 = vrot.slane %v1986, %v2013
  %v2015 = vcombine.low %v1993, %v2000
  %v2016 = vcombine.high %v1993, %v2000
  %v2017 = vcombine.low %v2007, %v2014
  %v2018 = vcombine.high %v2007, %v2014
  %v2020 = vunpack.c.l.s4 1966171168
  %v2021 = vunpack.c.0.s8 %v2020
  %v2022 = vlaneseq
  %v2023 = vshrl.u32 %v2022, 7
  %v2024 = vsub.s32 %v2021, %v2023
  %v2025 = vrot.slane %v2015, %v2024
  %v2027 = vunpack.c.l.s4 1966171168
  %v2028 = vunpack.c.0.s8 %v2027
  %v2029 = vlaneseq
  %v2030 = vshrl.u32 %v2029, 7
  %v2031 = vsub.s32 %v2028, %v2030
  %v2032 = vrot.slane %v2016, %v2031
  %v2034 = vunpack.c.l.s4 1966171168
  %v2035 = vunpack.c.0.s8 %v2034
  %v2036 = vlaneseq
  %v2037 = vshrl.u32 %v2036, 7
  %v2038 = vsub.s32 %v2035, %v2037
  %v2039 = vrot.slane %v2017, %v2038
  %v2041 = vunpack.c.l.s4 1966171168
  %v2042 = vunpack.c.0.s8 %v2041
  %v2043 = vlaneseq
  %v2044 = vshrl.u32 %v2043, 7
  %v2045 = vsub.s32 %v2042, %v2044
  %v2046 = vrot.slane %v2018, %v2045
  %v2047 = vcombine.low %v2025, %v2039
  %v2048 = vcombine.low %v2032, %v2046
  %v2050 = vsel %vm1569, %v2048, 0
  %2052 = vmatprep.subr.mxu0 %v1648
  %2053 = vmatpush1.msra.mxu0 %v1647
  %2054 = vmatprep.subr.mxu0 %v1646
  %2055 = vmatpush1.msra.mxu0 %v1645
  %2056 = vmatprep.subr.mxu0 %v1644
  %2057 = vmatpush1.msra.mxu0 %v1643
  %2058 = vmatprep.subr.mxu0 %v1642
  %2059 = vmatpush1.msra.mxu0 %v1641
  %2060 = vmatprep.subr.mxu0 %v1640
  %2061 = vmatpush1.msra.mxu0 %v1639
  %2062 = vmatprep.subr.mxu0 %v1638
  %2063 = vmatpush1.msra.mxu0 %v1637
  %2064 = vmatprep.subr.mxu0 %v1636
  %2065 = vmatpush1.msra.mxu0 %v1635
  %2066 = vmatprep.subr.mxu0 %v1634
  %2067 = vmatpush1.msra.mxu0 %v1633
  %2068 = vmatprep.subr.mxu0 %v1632
  %2069 = vmatpush1.msra.mxu0 %v1631
  %2070 = vmatprep.subr.mxu0 %v1630
  %2071 = vmatpush1.msra.mxu0 %v1629
  %2072 = vmatprep.subr.mxu0 %v1628
  %2073 = vmatpush1.msra.mxu0 %v1627
  %2074 = vmatprep.subr.mxu0 %v1626
  %2075 = vmatpush1.msra.mxu0 %v1625
  %2076 = vmatprep.subr.mxu0 %v1624
  %2077 = vmatpush1.msra.mxu0 %v1623
  %2078 = vmatprep.subr.mxu0 %v1622
  %2079 = vmatpush1.msra.mxu0 %v1621
  %2080 = vmatprep.subr.mxu0 %v1620
  %2081 = vmatpush1.msra.mxu0 %v1619
  %2082 = vmatprep.subr.mxu0 %v1618
  %2083 = vmatpush1.msra.mxu0 %v1617
  %2084 = vmatprep.subr.mxu0 0.0
  %2085 = vmatpush2.msra.mxu0 0.0
  %2086 = vmatprep.subr.mxu0 0.0
  %2087 = vmatpush2.msra.mxu0 0.0
  %2088 = vmatprep.subr.mxu0 0.0
  %2089 = vmatpush2.msra.mxu0 0.0
  %2090 = vmatprep.subr.mxu0 0.0
  %2091 = vmatpush2.msra.mxu0 0.0
  %2092 = vmatprep.subr.mxu0 0.0
  %2093 = vmatpush2.msra.mxu0 0.0
  %2094 = vmatprep.subr.mxu0 0.0
  %2095 = vmatpush2.msra.mxu0 0.0
  %2096 = vmatprep.subr.mxu0 0.0
  %2097 = vmatpush2.msra.mxu0 0.0
  %2098 = vmatprep.subr.mxu0 0.0
  %2099 = vmatpush2.msra.mxu0 0.0
  %2100 = vmatprep.subr.mxu0 0.0
  %2101 = vmatpush2.msra.mxu0 0.0
  %2102 = vmatprep.subr.mxu0 0.0
  %2103 = vmatpush2.msra.mxu0 0.0
  %2104 = vmatprep.subr.mxu0 0.0
  %2105 = vmatpush2.msra.mxu0 0.0
  %2106 = vmatprep.subr.mxu0 0.0
  %2107 = vmatpush2.msra.mxu0 0.0
  %2108 = vmatprep.subr.mxu0 0.0
  %2109 = vmatpush2.msra.mxu0 0.0
  %2110 = vmatprep.subr.mxu0 0.0
  %2111 = vmatpush2.msra.mxu0 0.0
  %2112 = vmatprep.subr.mxu0 %v1652
  %2113 = vmatpush2.msra.mxu0 %v1651
  %2114 = vmatprep.subr.mxu0 %v1650
  %2115 = vmatpush2.msra.mxu0 %v1649
  %2116 = vmatprep.mubr.f32.mxu0 %v2050
  %2117 = vmatmul.mubr.f32.gmra.mxu0 %v2047
  %v2118 = vpop.f32.mrf.mxu0
  %v2119 = vadd.f32 0.0, %v2118
  %v2120 = vpop.f32.mrf.mxu0
  %v2121 = vadd.f32 0.0, %v2120
  %2122 = vdwg.mxu0
  %v2125 = vcombine.low %v2119, %v2121
  %v2126 = vcombine.high %v2119, %v2121
  %v2128 = vunpack.c.l.s4 1966171168
  %v2129 = vunpack.c.0.s8 %v2128
  %v2130 = vlaneseq
  %v2131 = vshrl.u32 %v2130, 7
  %v2132 = vsub.s32 %v2129, %v2131
  %v2133 = vrot.slane %v2125, %v2132
  %v2135 = vunpack.c.l.s4 1966171168
  %v2136 = vunpack.c.0.s8 %v2135
  %v2137 = vlaneseq
  %v2138 = vshrl.u32 %v2137, 7
  %v2139 = vsub.s32 %v2136, %v2138
  %v2140 = vrot.slane %v2126, %v2139
  %v2141 = vcombine.high %v2133, %v2133
  %v2142 = vcombine.high %v2140, %v2140
  %v2144 = vunpack.c.l.s4 1966171168
  %v2145 = vunpack.c.0.s8 %v2144
  %v2146 = vlaneseq
  %v2147 = vshrl.u32 %v2146, 7
  %v2148 = vsub.s32 %v2145, %v2147
  %v2149 = vrot.slane %v2133, %v2148
  %v2151 = vunpack.c.l.s4 1966171168
  %v2152 = vunpack.c.0.s8 %v2151
  %v2153 = vlaneseq
  %v2154 = vshrl.u32 %v2153, 7
  %v2155 = vsub.s32 %v2152, %v2154
  %v2156 = vrot.slane %v2140, %v2155
  %v2158 = vunpack.c.l.s4 1966171168
  %v2159 = vunpack.c.0.s8 %v2158
  %v2160 = vlaneseq
  %v2161 = vshrl.u32 %v2160, 7
  %v2162 = vsub.s32 %v2159, %v2161
  %v2163 = vrot.slane %v2141, %v2162
  %v2165 = vunpack.c.l.s4 1966171168
  %v2166 = vunpack.c.0.s8 %v2165
  %v2167 = vlaneseq
  %v2168 = vshrl.u32 %v2167, 7
  %v2169 = vsub.s32 %v2166, %v2168
  %v2170 = vrot.slane %v2142, %v2169
  %v2171 = vcombine.high %v2149, %v2149
  %v2172 = vcombine.high %v2156, %v2156
  %v2173 = vcombine.high %v2163, %v2163
  %v2174 = vcombine.high %v2170, %v2170
  %v2183 = vmax.f32 %v1967, %v2149
  %v2184 = vmax.f32 %v1968, %v2163
  %v2185 = vmax.f32 %v1969, %v2171
  %v2186 = vmax.f32 %v1970, %v2173
  %v2187 = vmax.f32 %v1971, %v2156
  %v2188 = vmax.f32 %v1972, %v2170
  %v2189 = vmax.f32 %v1973, %v2172
  %v2190 = vmax.f32 %v1974, %v2174
  %s2191 = scalar_lea.vmem [#allocation3], 1
  %2192 = vst.msk [vmem:[%s2191] ss:$8 sm:$0x3] %vm1911, %v2183
  %2193 = vst.msk [vmem:[%s2191] ss:$8 sm:$0x0] %vm1911, %v2183
  %s2194 = scalar_lea.vmem [#allocation3], 33
  %2195 = vst.msk [vmem:[%s2194] ss:$8 sm:$0x3] %vm1911, %v2184
  %2196 = vst.msk [vmem:[%s2194] ss:$8 sm:$0x0] %vm1911, %v2184
  %s2197 = scalar_lea.vmem [#allocation3], 65
  %2198 = vst.msk [vmem:[%s2197] ss:$8 sm:$0x3] %vm1911, %v2185
  %2199 = vst.msk [vmem:[%s2197] ss:$8 sm:$0x0] %vm1911, %v2185
  %s2200 = scalar_lea.vmem [#allocation3], 97
  %2201 = vst.msk [vmem:[%s2200] ss:$8 sm:$0x3] %vm1911, %v2186
  %2202 = vst.msk [vmem:[%s2200] ss:$8 sm:$0x0] %vm1911, %v2186
  %s2203 = scalar_lea.vmem [#allocation3], 129
  %2204 = vst.msk [vmem:[%s2203] ss:$8 sm:$0x3] %vm1911, %v2187
  %2205 = vst.msk [vmem:[%s2203] ss:$8 sm:$0x0] %vm1911, %v2187
  %s2206 = scalar_lea.vmem [#allocation3], 161
  %2207 = vst.msk [vmem:[%s2206] ss:$8 sm:$0x3] %vm1911, %v2188
  %2208 = vst.msk [vmem:[%s2206] ss:$8 sm:$0x0] %vm1911, %v2188
  %s2209 = scalar_lea.vmem [#allocation3], 193
  %2210 = vst.msk [vmem:[%s2209] ss:$8 sm:$0x3] %vm1911, %v2189
  %2211 = vst.msk [vmem:[%s2209] ss:$8 sm:$0x0] %vm1911, %v2189
  %s2212 = scalar_lea.vmem [#allocation3], 225
  %2213 = vst.msk [vmem:[%s2212] ss:$8 sm:$0x3] %vm1911, %v2190
  %2214 = vst.msk [vmem:[%s2212] ss:$8 sm:$0x0] %vm1911, %v2190
  %s2215 = scalar_lea.vmem [#allocation2], 4
  %v2216 = vld [vmem:[%s2215] ss:$8 sm:$0x3]
  %s2217 = scalar_lea.vmem [#allocation2], 52
  %v2218 = vld [vmem:[%s2217] ss:$8 sm:$0x3]
  %s2219 = scalar_lea.vmem [#allocation2], 100
  %v2220 = vld [vmem:[%s2219] ss:$8 sm:$0x3]
  %s2221 = scalar_lea.vmem [#allocation2], 148
  %v2222 = vld [vmem:[%s2221] ss:$8 sm:$0x3]
  %s2223 = scalar_lea.vmem [#allocation2], 196
  %v2224 = vld [vmem:[%s2223] ss:$8 sm:$0x3]
  %s2225 = scalar_lea.vmem [#allocation2], 244
  %v2226 = vld [vmem:[%s2225] ss:$8 sm:$0x3]
  %s2227 = scalar_lea.vmem [#allocation2], 292
  %v2228 = vld [vmem:[%s2227] ss:$8 sm:$0x3]
  %s2229 = scalar_lea.vmem [#allocation2], 340
  %v2230 = vld [vmem:[%s2229] ss:$8 sm:$0x3]
  %s2231 = scalar_lea.vmem [#allocation2], 5
  %v2232 = vld [vmem:[%s2231] ss:$8 sm:$0x3]
  %s2233 = scalar_lea.vmem [#allocation2], 53
  %v2234 = vld [vmem:[%s2233] ss:$8 sm:$0x3]
  %s2235 = scalar_lea.vmem [#allocation2], 101
  %v2236 = vld [vmem:[%s2235] ss:$8 sm:$0x3]
  %s2237 = scalar_lea.vmem [#allocation2], 149
  %v2238 = vld [vmem:[%s2237] ss:$8 sm:$0x3]
  %s2239 = scalar_lea.vmem [#allocation2], 197
  %v2240 = vld [vmem:[%s2239] ss:$8 sm:$0x3]
  %s2241 = scalar_lea.vmem [#allocation2], 245
  %v2242 = vld [vmem:[%s2241] ss:$8 sm:$0x3]
  %s2243 = scalar_lea.vmem [#allocation2], 293
  %v2244 = vld [vmem:[%s2243] ss:$8 sm:$0x3]
  %s2245 = scalar_lea.vmem [#allocation2], 341
  %v2246 = vld [vmem:[%s2245] ss:$8 sm:$0x3]
  %v2247 = vmax.f32 %v2216, %v2232
  %v2248 = vmax.f32 %v2218, %v2234
  %v2249 = vmax.f32 %v2220, %v2236
  %v2250 = vmax.f32 %v2222, %v2238
  %v2251 = vmax.f32 %v2224, %v2240
  %v2252 = vmax.f32 %v2226, %v2242
  %v2253 = vmax.f32 %v2228, %v2244
  %v2254 = vmax.f32 %v2230, %v2246
  %v2263 = vcombine.low %v2247, %v2248
  %v2264 = vcombine.low %v2249, %v2250
  %v2265 = vcombine.low %v2251, %v2252
  %v2266 = vcombine.low %v2253, %v2254
  %v2268 = vunpack.c.l.s4 1966171168
  %v2269 = vunpack.c.0.s8 %v2268
  %v2270 = vlaneseq
  %v2271 = vshrl.u32 %v2270, 7
  %v2272 = vsub.s32 %v2269, %v2271
  %v2273 = vrot.slane %v2263, %v2272
  %v2275 = vunpack.c.l.s4 1966171168
  %v2276 = vunpack.c.0.s8 %v2275
  %v2277 = vlaneseq
  %v2278 = vshrl.u32 %v2277, 7
  %v2279 = vsub.s32 %v2276, %v2278
  %v2280 = vrot.slane %v2264, %v2279
  %v2282 = vunpack.c.l.s4 1966171168
  %v2283 = vunpack.c.0.s8 %v2282
  %v2284 = vlaneseq
  %v2285 = vshrl.u32 %v2284, 7
  %v2286 = vsub.s32 %v2283, %v2285
  %v2287 = vrot.slane %v2265, %v2286
  %v2289 = vunpack.c.l.s4 1966171168
  %v2290 = vunpack.c.0.s8 %v2289
  %v2291 = vlaneseq
  %v2292 = vshrl.u32 %v2291, 7
  %v2293 = vsub.s32 %v2290, %v2292
  %v2294 = vrot.slane %v2266, %v2293
  %v2295 = vcombine.low %v2273, %v2280
  %v2296 = vcombine.high %v2273, %v2280
  %v2297 = vcombine.low %v2287, %v2294
  %v2298 = vcombine.high %v2287, %v2294
  %v2300 = vunpack.c.l.s4 1966171168
  %v2301 = vunpack.c.0.s8 %v2300
  %v2302 = vlaneseq
  %v2303 = vshrl.u32 %v2302, 7
  %v2304 = vsub.s32 %v2301, %v2303
  %v2305 = vrot.slane %v2295, %v2304
  %v2307 = vunpack.c.l.s4 1966171168
  %v2308 = vunpack.c.0.s8 %v2307
  %v2309 = vlaneseq
  %v2310 = vshrl.u32 %v2309, 7
  %v2311 = vsub.s32 %v2308, %v2310
  %v2312 = vrot.slane %v2296, %v2311
  %v2314 = vunpack.c.l.s4 1966171168
  %v2315 = vunpack.c.0.s8 %v2314
  %v2316 = vlaneseq
  %v2317 = vshrl.u32 %v2316, 7
  %v2318 = vsub.s32 %v2315, %v2317
  %v2319 = vrot.slane %v2297, %v2318
  %v2321 = vunpack.c.l.s4 1966171168
  %v2322 = vunpack.c.0.s8 %v2321
  %v2323 = vlaneseq
  %v2324 = vshrl.u32 %v2323, 7
  %v2325 = vsub.s32 %v2322, %v2324
  %v2326 = vrot.slane %v2298, %v2325
  %v2327 = vcombine.low %v2305, %v2319
  %v2328 = vcombine.low %v2312, %v2326
  %v2330 = vsel %vm1569, %v2328, 0
  %2332 = vmatprep.subr.mxu0 %v1648
  %2333 = vmatpush1.msra.mxu0 %v1647
  %2334 = vmatprep.subr.mxu0 %v1646
  %2335 = vmatpush1.msra.mxu0 %v1645
  %2336 = vmatprep.subr.mxu0 %v1644
  %2337 = vmatpush1.msra.mxu0 %v1643
  %2338 = vmatprep.subr.mxu0 %v1642
  %2339 = vmatpush1.msra.mxu0 %v1641
  %2340 = vmatprep.subr.mxu0 %v1640
  %2341 = vmatpush1.msra.mxu0 %v1639
  %2342 = vmatprep.subr.mxu0 %v1638
  %2343 = vmatpush1.msra.mxu0 %v1637
  %2344 = vmatprep.subr.mxu0 %v1636
  %2345 = vmatpush1.msra.mxu0 %v1635
  %2346 = vmatprep.subr.mxu0 %v1634
  %2347 = vmatpush1.msra.mxu0 %v1633
  %2348 = vmatprep.subr.mxu0 %v1632
  %2349 = vmatpush1.msra.mxu0 %v1631
  %2350 = vmatprep.subr.mxu0 %v1630
  %2351 = vmatpush1.msra.mxu0 %v1629
  %2352 = vmatprep.subr.mxu0 %v1628
  %2353 = vmatpush1.msra.mxu0 %v1627
  %2354 = vmatprep.subr.mxu0 %v1626
  %2355 = vmatpush1.msra.mxu0 %v1625
  %2356 = vmatprep.subr.mxu0 %v1624
  %2357 = vmatpush1.msra.mxu0 %v1623
  %2358 = vmatprep.subr.mxu0 %v1622
  %2359 = vmatpush1.msra.mxu0 %v1621
  %2360 = vmatprep.subr.mxu0 %v1620
  %2361 = vmatpush1.msra.mxu0 %v1619
  %2362 = vmatprep.subr.mxu0 %v1618
  %2363 = vmatpush1.msra.mxu0 %v1617
  %2364 = vmatprep.subr.mxu0 0.0
  %2365 = vmatpush2.msra.mxu0 0.0
  %2366 = vmatprep.subr.mxu0 0.0
  %2367 = vmatpush2.msra.mxu0 0.0
  %2368 = vmatprep.subr.mxu0 0.0
  %2369 = vmatpush2.msra.mxu0 0.0
  %2370 = vmatprep.subr.mxu0 0.0
  %2371 = vmatpush2.msra.mxu0 0.0
  %2372 = vmatprep.subr.mxu0 0.0
  %2373 = vmatpush2.msra.mxu0 0.0
  %2374 = vmatprep.subr.mxu0 0.0
  %2375 = vmatpush2.msra.mxu0 0.0
  %2376 = vmatprep.subr.mxu0 0.0
  %2377 = vmatpush2.msra.mxu0 0.0
  %2378 = vmatprep.subr.mxu0 0.0
  %2379 = vmatpush2.msra.mxu0 0.0
  %2380 = vmatprep.subr.mxu0 0.0
  %2381 = vmatpush2.msra.mxu0 0.0
  %2382 = vmatprep.subr.mxu0 0.0
  %2383 = vmatpush2.msra.mxu0 0.0
  %2384 = vmatprep.subr.mxu0 0.0
  %2385 = vmatpush2.msra.mxu0 0.0
  %2386 = vmatprep.subr.mxu0 0.0
  %2387 = vmatpush2.msra.mxu0 0.0
  %2388 = vmatprep.subr.mxu0 0.0
  %2389 = vmatpush2.msra.mxu0 0.0
  %2390 = vmatprep.subr.mxu0 0.0
  %2391 = vmatpush2.msra.mxu0 0.0
  %2392 = vmatprep.subr.mxu0 %v1652
  %2393 = vmatpush2.msra.mxu0 %v1651
  %2394 = vmatprep.subr.mxu0 %v1650
  %2395 = vmatpush2.msra.mxu0 %v1649
  %2396 = vmatprep.mubr.f32.mxu0 %v2330
  %2397 = vmatmul.mubr.f32.gmra.mxu0 %v2327
  %v2398 = vpop.f32.mrf.mxu0
  %v2399 = vadd.f32 0.0, %v2398
  %v2400 = vpop.f32.mrf.mxu0
  %v2401 = vadd.f32 0.0, %v2400
  %2402 = vdwg.mxu0
  %v2405 = vcombine.low %v2399, %v2401
  %v2406 = vcombine.high %v2399, %v2401
  %v2408 = vunpack.c.l.s4 1966171168
  %v2409 = vunpack.c.0.s8 %v2408
  %v2410 = vlaneseq
  %v2411 = vshrl.u32 %v2410, 7
  %v2412 = vsub.s32 %v2409, %v2411
  %v2413 = vrot.slane %v2405, %v2412
  %v2415 = vunpack.c.l.s4 1966171168
  %v2416 = vunpack.c.0.s8 %v2415
  %v2417 = vlaneseq
  %v2418 = vshrl.u32 %v2417, 7
  %v2419 = vsub.s32 %v2416, %v2418
  %v2420 = vrot.slane %v2406, %v2419
  %v2421 = vcombine.high %v2413, %v2413
  %v2422 = vcombine.high %v2420, %v2420
  %v2424 = vunpack.c.l.s4 1966171168
  %v2425 = vunpack.c.0.s8 %v2424
  %v2426 = vlaneseq
  %v2427 = vshrl.u32 %v2426, 7
  %v2428 = vsub.s32 %v2425, %v2427
  %v2429 = vrot.slane %v2413, %v2428
  %v2431 = vunpack.c.l.s4 1966171168
  %v2432 = vunpack.c.0.s8 %v2431
  %v2433 = vlaneseq
  %v2434 = vshrl.u32 %v2433, 7
  %v2435 = vsub.s32 %v2432, %v2434
  %v2436 = vrot.slane %v2420, %v2435
  %v2438 = vunpack.c.l.s4 1966171168
  %v2439 = vunpack.c.0.s8 %v2438
  %v2440 = vlaneseq
  %v2441 = vshrl.u32 %v2440, 7
  %v2442 = vsub.s32 %v2439, %v2441
  %v2443 = vrot.slane %v2421, %v2442
  %v2445 = vunpack.c.l.s4 1966171168
  %v2446 = vunpack.c.0.s8 %v2445
  %v2447 = vlaneseq
  %v2448 = vshrl.u32 %v2447, 7
  %v2449 = vsub.s32 %v2446, %v2448
  %v2450 = vrot.slane %v2422, %v2449
  %v2451 = vcombine.high %v2429, %v2429
  %v2452 = vcombine.high %v2436, %v2436
  %v2453 = vcombine.high %v2443, %v2443
  %v2454 = vcombine.high %v2450, %v2450
  %v2463 = vmax.f32 %v2247, %v2429
  %v2464 = vmax.f32 %v2248, %v2443
  %v2465 = vmax.f32 %v2249, %v2451
  %v2466 = vmax.f32 %v2250, %v2453
  %v2467 = vmax.f32 %v2251, %v2436
  %v2468 = vmax.f32 %v2252, %v2450
  %v2469 = vmax.f32 %v2253, %v2452
  %v2470 = vmax.f32 %v2254, %v2454
  %s2471 = scalar_lea.vmem [#allocation3], 2
  %2472 = vst.msk [vmem:[%s2471] ss:$8 sm:$0x3] %vm1911, %v2463
  %2473 = vst.msk [vmem:[%s2471] ss:$8 sm:$0x0] %vm1911, %v2463
  %s2474 = scalar_lea.vmem [#allocation3], 34
  %2475 = vst.msk [vmem:[%s2474] ss:$8 sm:$0x3] %vm1911, %v2464
  %2476 = vst.msk [vmem:[%s2474] ss:$8 sm:$0x0] %vm1911, %v2464
  %s2477 = scalar_lea.vmem [#allocation3], 66
  %2478 = vst.msk [vmem:[%s2477] ss:$8 sm:$0x3] %vm1911, %v2465
  %2479 = vst.msk [vmem:[%s2477] ss:$8 sm:$0x0] %vm1911, %v2465
  %s2480 = scalar_lea.vmem [#allocation3], 98
  %2481 = vst.msk [vmem:[%s2480] ss:$8 sm:$0x3] %vm1911, %v2466
  %2482 = vst.msk [vmem:[%s2480] ss:$8 sm:$0x0] %vm1911, %v2466
  %s2483 = scalar_lea.vmem [#allocation3], 130
  %2484 = vst.msk [vmem:[%s2483] ss:$8 sm:$0x3] %vm1911, %v2467
  %2485 = vst.msk [vmem:[%s2483] ss:$8 sm:$0x0] %vm1911, %v2467
  %s2486 = scalar_lea.vmem [#allocation3], 162
  %2487 = vst.msk [vmem:[%s2486] ss:$8 sm:$0x3] %vm1911, %v2468
  %2488 = vst.msk [vmem:[%s2486] ss:$8 sm:$0x0] %vm1911, %v2468
  %s2489 = scalar_lea.vmem [#allocation3], 194
  %2490 = vst.msk [vmem:[%s2489] ss:$8 sm:$0x3] %vm1911, %v2469
  %2491 = vst.msk [vmem:[%s2489] ss:$8 sm:$0x0] %vm1911, %v2469
  %s2492 = scalar_lea.vmem [#allocation3], 226
  %2493 = vst.msk [vmem:[%s2492] ss:$8 sm:$0x3] %vm1911, %v2470
  %2494 = vst.msk [vmem:[%s2492] ss:$8 sm:$0x0] %vm1911, %v2470
  %s2495 = scalar_lea.vmem [#allocation2], 6
  %v2496 = vld [vmem:[%s2495] ss:$8 sm:$0x3]
  %s2497 = scalar_lea.vmem [#allocation2], 54
  %v2498 = vld [vmem:[%s2497] ss:$8 sm:$0x3]
  %s2499 = scalar_lea.vmem [#allocation2], 102
  %v2500 = vld [vmem:[%s2499] ss:$8 sm:$0x3]
  %s2501 = scalar_lea.vmem [#allocation2], 150
  %v2502 = vld [vmem:[%s2501] ss:$8 sm:$0x3]
  %s2503 = scalar_lea.vmem [#allocation2], 198
  %v2504 = vld [vmem:[%s2503] ss:$8 sm:$0x3]
  %s2505 = scalar_lea.vmem [#allocation2], 246
  %v2506 = vld [vmem:[%s2505] ss:$8 sm:$0x3]
  %s2507 = scalar_lea.vmem [#allocation2], 294
  %v2508 = vld [vmem:[%s2507] ss:$8 sm:$0x3]
  %s2509 = scalar_lea.vmem [#allocation2], 342
  %v2510 = vld [vmem:[%s2509] ss:$8 sm:$0x3]
  %s2511 = scalar_lea.vmem [#allocation2], 7
  %v2512 = vld [vmem:[%s2511] ss:$8 sm:$0x3]
  %s2513 = scalar_lea.vmem [#allocation2], 55
  %v2514 = vld [vmem:[%s2513] ss:$8 sm:$0x3]
  %s2515 = scalar_lea.vmem [#allocation2], 103
  %v2516 = vld [vmem:[%s2515] ss:$8 sm:$0x3]
  %s2517 = scalar_lea.vmem [#allocation2], 151
  %v2518 = vld [vmem:[%s2517] ss:$8 sm:$0x3]
  %s2519 = scalar_lea.vmem [#allocation2], 199
  %v2520 = vld [vmem:[%s2519] ss:$8 sm:$0x3]
  %s2521 = scalar_lea.vmem [#allocation2], 247
  %v2522 = vld [vmem:[%s2521] ss:$8 sm:$0x3]
  %s2523 = scalar_lea.vmem [#allocation2], 295
  %v2524 = vld [vmem:[%s2523] ss:$8 sm:$0x3]
  %s2525 = scalar_lea.vmem [#allocation2], 343
  %v2526 = vld [vmem:[%s2525] ss:$8 sm:$0x3]
  %v2527 = vmax.f32 %v2496, %v2512
  %v2528 = vmax.f32 %v2498, %v2514
  %v2529 = vmax.f32 %v2500, %v2516
  %v2530 = vmax.f32 %v2502, %v2518
  %v2531 = vmax.f32 %v2504, %v2520
  %v2532 = vmax.f32 %v2506, %v2522
  %v2533 = vmax.f32 %v2508, %v2524
  %v2534 = vmax.f32 %v2510, %v2526
  %v2543 = vcombine.low %v2527, %v2528
  %v2544 = vcombine.low %v2529, %v2530
  %v2545 = vcombine.low %v2531, %v2532
  %v2546 = vcombine.low %v2533, %v2534
  %v2548 = vunpack.c.l.s4 1966171168
  %v2549 = vunpack.c.0.s8 %v2548
  %v2550 = vlaneseq
  %v2551 = vshrl.u32 %v2550, 7
  %v2552 = vsub.s32 %v2549, %v2551
  %v2553 = vrot.slane %v2543, %v2552
  %v2555 = vunpack.c.l.s4 1966171168
  %v2556 = vunpack.c.0.s8 %v2555
  %v2557 = vlaneseq
  %v2558 = vshrl.u32 %v2557, 7
  %v2559 = vsub.s32 %v2556, %v2558
  %v2560 = vrot.slane %v2544, %v2559
  %v2562 = vunpack.c.l.s4 1966171168
  %v2563 = vunpack.c.0.s8 %v2562
  %v2564 = vlaneseq
  %v2565 = vshrl.u32 %v2564, 7
  %v2566 = vsub.s32 %v2563, %v2565
  %v2567 = vrot.slane %v2545, %v2566
  %v2569 = vunpack.c.l.s4 1966171168
  %v2570 = vunpack.c.0.s8 %v2569
  %v2571 = vlaneseq
  %v2572 = vshrl.u32 %v2571, 7
  %v2573 = vsub.s32 %v2570, %v2572
  %v2574 = vrot.slane %v2546, %v2573
  %v2575 = vcombine.low %v2553, %v2560
  %v2576 = vcombine.high %v2553, %v2560
  %v2577 = vcombine.low %v2567, %v2574
  %v2578 = vcombine.high %v2567, %v2574
  %v2580 = vunpack.c.l.s4 1966171168
  %v2581 = vunpack.c.0.s8 %v2580
  %v2582 = vlaneseq
  %v2583 = vshrl.u32 %v2582, 7
  %v2584 = vsub.s32 %v2581, %v2583
  %v2585 = vrot.slane %v2575, %v2584
  %v2587 = vunpack.c.l.s4 1966171168
  %v2588 = vunpack.c.0.s8 %v2587
  %v2589 = vlaneseq
  %v2590 = vshrl.u32 %v2589, 7
  %v2591 = vsub.s32 %v2588, %v2590
  %v2592 = vrot.slane %v2576, %v2591
  %v2594 = vunpack.c.l.s4 1966171168
  %v2595 = vunpack.c.0.s8 %v2594
  %v2596 = vlaneseq
  %v2597 = vshrl.u32 %v2596, 7
  %v2598 = vsub.s32 %v2595, %v2597
  %v2599 = vrot.slane %v2577, %v2598
  %v2601 = vunpack.c.l.s4 1966171168
  %v2602 = vunpack.c.0.s8 %v2601
  %v2603 = vlaneseq
  %v2604 = vshrl.u32 %v2603, 7
  %v2605 = vsub.s32 %v2602, %v2604
  %v2606 = vrot.slane %v2578, %v2605
  %v2607 = vcombine.low %v2585, %v2599
  %v2608 = vcombine.low %v2592, %v2606
  %v2610 = vsel %vm1569, %v2608, 0
  %2612 = vmatprep.subr.mxu0 %v1648
  %2613 = vmatpush1.msra.mxu0 %v1647
  %2614 = vmatprep.subr.mxu0 %v1646
  %2615 = vmatpush1.msra.mxu0 %v1645
  %2616 = vmatprep.subr.mxu0 %v1644
  %2617 = vmatpush1.msra.mxu0 %v1643
  %2618 = vmatprep.subr.mxu0 %v1642
  %2619 = vmatpush1.msra.mxu0 %v1641
  %2620 = vmatprep.subr.mxu0 %v1640
  %2621 = vmatpush1.msra.mxu0 %v1639
  %2622 = vmatprep.subr.mxu0 %v1638
  %2623 = vmatpush1.msra.mxu0 %v1637
  %2624 = vmatprep.subr.mxu0 %v1636
  %2625 = vmatpush1.msra.mxu0 %v1635
  %2626 = vmatprep.subr.mxu0 %v1634
  %2627 = vmatpush1.msra.mxu0 %v1633
  %2628 = vmatprep.subr.mxu0 %v1632
  %2629 = vmatpush1.msra.mxu0 %v1631
  %2630 = vmatprep.subr.mxu0 %v1630
  %2631 = vmatpush1.msra.mxu0 %v1629
  %2632 = vmatprep.subr.mxu0 %v1628
  %2633 = vmatpush1.msra.mxu0 %v1627
  %2634 = vmatprep.subr.mxu0 %v1626
  %2635 = vmatpush1.msra.mxu0 %v1625
  %2636 = vmatprep.subr.mxu0 %v1624
  %2637 = vmatpush1.msra.mxu0 %v1623
  %2638 = vmatprep.subr.mxu0 %v1622
  %2639 = vmatpush1.msra.mxu0 %v1621
  %2640 = vmatprep.subr.mxu0 %v1620
  %2641 = vmatpush1.msra.mxu0 %v1619
  %2642 = vmatprep.subr.mxu0 %v1618
  %2643 = vmatpush1.msra.mxu0 %v1617
  %2644 = vmatprep.subr.mxu0 0.0
  %2645 = vmatpush2.msra.mxu0 0.0
  %2646 = vmatprep.subr.mxu0 0.0
  %2647 = vmatpush2.msra.mxu0 0.0
  %2648 = vmatprep.subr.mxu0 0.0
  %2649 = vmatpush2.msra.mxu0 0.0
  %2650 = vmatprep.subr.mxu0 0.0
  %2651 = vmatpush2.msra.mxu0 0.0
  %2652 = vmatprep.subr.mxu0 0.0
  %2653 = vmatpush2.msra.mxu0 0.0
  %2654 = vmatprep.subr.mxu0 0.0
  %2655 = vmatpush2.msra.mxu0 0.0
  %2656 = vmatprep.subr.mxu0 0.0
  %2657 = vmatpush2.msra.mxu0 0.0
  %2658 = vmatprep.subr.mxu0 0.0
  %2659 = vmatpush2.msra.mxu0 0.0
  %2660 = vmatprep.subr.mxu0 0.0
  %2661 = vmatpush2.msra.mxu0 0.0
  %2662 = vmatprep.subr.mxu0 0.0
  %2663 = vmatpush2.msra.mxu0 0.0
  %2664 = vmatprep.subr.mxu0 0.0
  %2665 = vmatpush2.msra.mxu0 0.0
  %2666 = vmatprep.subr.mxu0 0.0
  %2667 = vmatpush2.msra.mxu0 0.0
  %2668 = vmatprep.subr.mxu0 0.0
  %2669 = vmatpush2.msra.mxu0 0.0
  %2670 = vmatprep.subr.mxu0 0.0
  %2671 = vmatpush2.msra.mxu0 0.0
  %2672 = vmatprep.subr.mxu0 %v1652
  %2673 = vmatpush2.msra.mxu0 %v1651
  %2674 = vmatprep.subr.mxu0 %v1650
  %2675 = vmatpush2.msra.mxu0 %v1649
  %2676 = vmatprep.mubr.f32.mxu0 %v2610
  %2677 = vmatmul.mubr.f32.gmra.mxu0 %v2607
  %v2678 = vpop.f32.mrf.mxu0
  %v2679 = vadd.f32 0.0, %v2678
  %v2680 = vpop.f32.mrf.mxu0
  %v2681 = vadd.f32 0.0, %v2680
  %2682 = vdwg.mxu0
  %v2685 = vcombine.low %v2679, %v2681
  %v2686 = vcombine.high %v2679, %v2681
  %v2688 = vunpack.c.l.s4 1966171168
  %v2689 = vunpack.c.0.s8 %v2688
  %v2690 = vlaneseq
  %v2691 = vshrl.u32 %v2690, 7
  %v2692 = vsub.s32 %v2689, %v2691
  %v2693 = vrot.slane %v2685, %v2692
  %v2695 = vunpack.c.l.s4 1966171168
  %v2696 = vunpack.c.0.s8 %v2695
  %v2697 = vlaneseq
  %v2698 = vshrl.u32 %v2697, 7
  %v2699 = vsub.s32 %v2696, %v2698
  %v2700 = vrot.slane %v2686, %v2699
  %v2701 = vcombine.high %v2693, %v2693
  %v2702 = vcombine.high %v2700, %v2700
  %v2704 = vunpack.c.l.s4 1966171168
  %v2705 = vunpack.c.0.s8 %v2704
  %v2706 = vlaneseq
  %v2707 = vshrl.u32 %v2706, 7
  %v2708 = vsub.s32 %v2705, %v2707
  %v2709 = vrot.slane %v2693, %v2708
  %v2711 = vunpack.c.l.s4 1966171168
  %v2712 = vunpack.c.0.s8 %v2711
  %v2713 = vlaneseq
  %v2714 = vshrl.u32 %v2713, 7
  %v2715 = vsub.s32 %v2712, %v2714
  %v2716 = vrot.slane %v2700, %v2715
  %v2718 = vunpack.c.l.s4 1966171168
  %v2719 = vunpack.c.0.s8 %v2718
  %v2720 = vlaneseq
  %v2721 = vshrl.u32 %v2720, 7
  %v2722 = vsub.s32 %v2719, %v2721
  %v2723 = vrot.slane %v2701, %v2722
  %v2725 = vunpack.c.l.s4 1966171168
  %v2726 = vunpack.c.0.s8 %v2725
  %v2727 = vlaneseq
  %v2728 = vshrl.u32 %v2727, 7
  %v2729 = vsub.s32 %v2726, %v2728
  %v2730 = vrot.slane %v2702, %v2729
  %v2731 = vcombine.high %v2709, %v2709
  %v2732 = vcombine.high %v2716, %v2716
  %v2733 = vcombine.high %v2723, %v2723
  %v2734 = vcombine.high %v2730, %v2730
  %v2743 = vmax.f32 %v2527, %v2709
  %v2744 = vmax.f32 %v2528, %v2723
  %v2745 = vmax.f32 %v2529, %v2731
  %v2746 = vmax.f32 %v2530, %v2733
  %v2747 = vmax.f32 %v2531, %v2716
  %v2748 = vmax.f32 %v2532, %v2730
  %v2749 = vmax.f32 %v2533, %v2732
  %v2750 = vmax.f32 %v2534, %v2734
  %s2751 = scalar_lea.vmem [#allocation3], 3
  %2752 = vst.msk [vmem:[%s2751] ss:$8 sm:$0x3] %vm1911, %v2743
  %2753 = vst.msk [vmem:[%s2751] ss:$8 sm:$0x0] %vm1911, %v2743
  %s2754 = scalar_lea.vmem [#allocation3], 35
  %2755 = vst.msk [vmem:[%s2754] ss:$8 sm:$0x3] %vm1911, %v2744
  %2756 = vst.msk [vmem:[%s2754] ss:$8 sm:$0x0] %vm1911, %v2744
  %s2757 = scalar_lea.vmem [#allocation3], 67
  %2758 = vst.msk [vmem:[%s2757] ss:$8 sm:$0x3] %vm1911, %v2745
  %2759 = vst.msk [vmem:[%s2757] ss:$8 sm:$0x0] %vm1911, %v2745
  %s2760 = scalar_lea.vmem [#allocation3], 99
  %2761 = vst.msk [vmem:[%s2760] ss:$8 sm:$0x3] %vm1911, %v2746
  %2762 = vst.msk [vmem:[%s2760] ss:$8 sm:$0x0] %vm1911, %v2746
  %s2763 = scalar_lea.vmem [#allocation3], 131
  %2764 = vst.msk [vmem:[%s2763] ss:$8 sm:$0x3] %vm1911, %v2747
  %2765 = vst.msk [vmem:[%s2763] ss:$8 sm:$0x0] %vm1911, %v2747
  %s2766 = scalar_lea.vmem [#allocation3], 163
  %2767 = vst.msk [vmem:[%s2766] ss:$8 sm:$0x3] %vm1911, %v2748
  %2768 = vst.msk [vmem:[%s2766] ss:$8 sm:$0x0] %vm1911, %v2748
  %s2769 = scalar_lea.vmem [#allocation3], 195
  %2770 = vst.msk [vmem:[%s2769] ss:$8 sm:$0x3] %vm1911, %v2749
  %2771 = vst.msk [vmem:[%s2769] ss:$8 sm:$0x0] %vm1911, %v2749
  %s2772 = scalar_lea.vmem [#allocation3], 227
  %2773 = vst.msk [vmem:[%s2772] ss:$8 sm:$0x3] %vm1911, %v2750
  %2774 = vst.msk [vmem:[%s2772] ss:$8 sm:$0x0] %vm1911, %v2750
  %s2775 = scalar_lea.vmem [#allocation2], 16
  %v2776 = vld [vmem:[%s2775] ss:$8 sm:$0x3]
  %s2777 = scalar_lea.vmem [#allocation2], 64
  %v2778 = vld [vmem:[%s2777] ss:$8 sm:$0x3]
  %s2779 = scalar_lea.vmem [#allocation2], 112
  %v2780 = vld [vmem:[%s2779] ss:$8 sm:$0x3]
  %s2781 = scalar_lea.vmem [#allocation2], 160
  %v2782 = vld [vmem:[%s2781] ss:$8 sm:$0x3]
  %s2783 = scalar_lea.vmem [#allocation2], 208
  %v2784 = vld [vmem:[%s2783] ss:$8 sm:$0x3]
  %s2785 = scalar_lea.vmem [#allocation2], 256
  %v2786 = vld [vmem:[%s2785] ss:$8 sm:$0x3]
  %s2787 = scalar_lea.vmem [#allocation2], 304
  %v2788 = vld [vmem:[%s2787] ss:$8 sm:$0x3]
  %s2789 = scalar_lea.vmem [#allocation2], 352
  %v2790 = vld [vmem:[%s2789] ss:$8 sm:$0x3]
  %s2791 = scalar_lea.vmem [#allocation2], 17
  %v2792 = vld [vmem:[%s2791] ss:$8 sm:$0x3]
  %s2793 = scalar_lea.vmem [#allocation2], 65
  %v2794 = vld [vmem:[%s2793] ss:$8 sm:$0x3]
  %s2795 = scalar_lea.vmem [#allocation2], 113
  %v2796 = vld [vmem:[%s2795] ss:$8 sm:$0x3]
  %s2797 = scalar_lea.vmem [#allocation2], 161
  %v2798 = vld [vmem:[%s2797] ss:$8 sm:$0x3]
  %s2799 = scalar_lea.vmem [#allocation2], 209
  %v2800 = vld [vmem:[%s2799] ss:$8 sm:$0x3]
  %s2801 = scalar_lea.vmem [#allocation2], 257
  %v2802 = vld [vmem:[%s2801] ss:$8 sm:$0x3]
  %s2803 = scalar_lea.vmem [#allocation2], 305
  %v2804 = vld [vmem:[%s2803] ss:$8 sm:$0x3]
  %s2805 = scalar_lea.vmem [#allocation2], 353
  %v2806 = vld [vmem:[%s2805] ss:$8 sm:$0x3]
  %v2807 = vmax.f32 %v2776, %v2792
  %v2808 = vmax.f32 %v2778, %v2794
  %v2809 = vmax.f32 %v2780, %v2796
  %v2810 = vmax.f32 %v2782, %v2798
  %v2811 = vmax.f32 %v2784, %v2800
  %v2812 = vmax.f32 %v2786, %v2802
  %v2813 = vmax.f32 %v2788, %v2804
  %v2814 = vmax.f32 %v2790, %v2806
  %v2823 = vcombine.low %v2807, %v2808
  %v2824 = vcombine.low %v2809, %v2810
  %v2825 = vcombine.low %v2811, %v2812
  %v2826 = vcombine.low %v2813, %v2814
  %v2828 = vunpack.c.l.s4 1966171168
  %v2829 = vunpack.c.0.s8 %v2828
  %v2830 = vlaneseq
  %v2831 = vshrl.u32 %v2830, 7
  %v2832 = vsub.s32 %v2829, %v2831
  %v2833 = vrot.slane %v2823, %v2832
  %v2835 = vunpack.c.l.s4 1966171168
  %v2836 = vunpack.c.0.s8 %v2835
  %v2837 = vlaneseq
  %v2838 = vshrl.u32 %v2837, 7
  %v2839 = vsub.s32 %v2836, %v2838
  %v2840 = vrot.slane %v2824, %v2839
  %v2842 = vunpack.c.l.s4 1966171168
  %v2843 = vunpack.c.0.s8 %v2842
  %v2844 = vlaneseq
  %v2845 = vshrl.u32 %v2844, 7
  %v2846 = vsub.s32 %v2843, %v2845
  %v2847 = vrot.slane %v2825, %v2846
  %v2849 = vunpack.c.l.s4 1966171168
  %v2850 = vunpack.c.0.s8 %v2849
  %v2851 = vlaneseq
  %v2852 = vshrl.u32 %v2851, 7
  %v2853 = vsub.s32 %v2850, %v2852
  %v2854 = vrot.slane %v2826, %v2853
  %v2855 = vcombine.low %v2833, %v2840
  %v2856 = vcombine.high %v2833, %v2840
  %v2857 = vcombine.low %v2847, %v2854
  %v2858 = vcombine.high %v2847, %v2854
  %v2860 = vunpack.c.l.s4 1966171168
  %v2861 = vunpack.c.0.s8 %v2860
  %v2862 = vlaneseq
  %v2863 = vshrl.u32 %v2862, 7
  %v2864 = vsub.s32 %v2861, %v2863
  %v2865 = vrot.slane %v2855, %v2864
  %v2867 = vunpack.c.l.s4 1966171168
  %v2868 = vunpack.c.0.s8 %v2867
  %v2869 = vlaneseq
  %v2870 = vshrl.u32 %v2869, 7
  %v2871 = vsub.s32 %v2868, %v2870
  %v2872 = vrot.slane %v2856, %v2871
  %v2874 = vunpack.c.l.s4 1966171168
  %v2875 = vunpack.c.0.s8 %v2874
  %v2876 = vlaneseq
  %v2877 = vshrl.u32 %v2876, 7
  %v2878 = vsub.s32 %v2875, %v2877
  %v2879 = vrot.slane %v2857, %v2878
  %v2881 = vunpack.c.l.s4 1966171168
  %v2882 = vunpack.c.0.s8 %v2881
  %v2883 = vlaneseq
  %v2884 = vshrl.u32 %v2883, 7
  %v2885 = vsub.s32 %v2882, %v2884
  %v2886 = vrot.slane %v2858, %v2885
  %v2887 = vcombine.low %v2865, %v2879
  %v2888 = vcombine.low %v2872, %v2886
  %v2890 = vsel %vm1569, %v2888, 0
  %2892 = vmatprep.subr.mxu0 %v1648
  %2893 = vmatpush1.msra.mxu0 %v1647
  %2894 = vmatprep.subr.mxu0 %v1646
  %2895 = vmatpush1.msra.mxu0 %v1645
  %2896 = vmatprep.subr.mxu0 %v1644
  %2897 = vmatpush1.msra.mxu0 %v1643
  %2898 = vmatprep.subr.mxu0 %v1642
  %2899 = vmatpush1.msra.mxu0 %v1641
  %2900 = vmatprep.subr.mxu0 %v1640
  %2901 = vmatpush1.msra.mxu0 %v1639
  %2902 = vmatprep.subr.mxu0 %v1638
  %2903 = vmatpush1.msra.mxu0 %v1637
  %2904 = vmatprep.subr.mxu0 %v1636
  %2905 = vmatpush1.msra.mxu0 %v1635
  %2906 = vmatprep.subr.mxu0 %v1634
  %2907 = vmatpush1.msra.mxu0 %v1633
  %2908 = vmatprep.subr.mxu0 %v1632
  %2909 = vmatpush1.msra.mxu0 %v1631
  %2910 = vmatprep.subr.mxu0 %v1630
  %2911 = vmatpush1.msra.mxu0 %v1629
  %2912 = vmatprep.subr.mxu0 %v1628
  %2913 = vmatpush1.msra.mxu0 %v1627
  %2914 = vmatprep.subr.mxu0 %v1626
  %2915 = vmatpush1.msra.mxu0 %v1625
  %2916 = vmatprep.subr.mxu0 %v1624
  %2917 = vmatpush1.msra.mxu0 %v1623
  %2918 = vmatprep.subr.mxu0 %v1622
  %2919 = vmatpush1.msra.mxu0 %v1621
  %2920 = vmatprep.subr.mxu0 %v1620
  %2921 = vmatpush1.msra.mxu0 %v1619
  %2922 = vmatprep.subr.mxu0 %v1618
  %2923 = vmatpush1.msra.mxu0 %v1617
  %2924 = vmatprep.subr.mxu0 0.0
  %2925 = vmatpush2.msra.mxu0 0.0
  %2926 = vmatprep.subr.mxu0 0.0
  %2927 = vmatpush2.msra.mxu0 0.0
  %2928 = vmatprep.subr.mxu0 0.0
  %2929 = vmatpush2.msra.mxu0 0.0
  %2930 = vmatprep.subr.mxu0 0.0
  %2931 = vmatpush2.msra.mxu0 0.0
  %2932 = vmatprep.subr.mxu0 0.0
  %2933 = vmatpush2.msra.mxu0 0.0
  %2934 = vmatprep.subr.mxu0 0.0
  %2935 = vmatpush2.msra.mxu0 0.0
  %2936 = vmatprep.subr.mxu0 0.0
  %2937 = vmatpush2.msra.mxu0 0.0
  %2938 = vmatprep.subr.mxu0 0.0
  %2939 = vmatpush2.msra.mxu0 0.0
  %2940 = vmatprep.subr.mxu0 0.0
  %2941 = vmatpush2.msra.mxu0 0.0
  %2942 = vmatprep.subr.mxu0 0.0
  %2943 = vmatpush2.msra.mxu0 0.0
  %2944 = vmatprep.subr.mxu0 0.0
  %2945 = vmatpush2.msra.mxu0 0.0
  %2946 = vmatprep.subr.mxu0 0.0
  %2947 = vmatpush2.msra.mxu0 0.0
  %2948 = vmatprep.subr.mxu0 0.0
  %2949 = vmatpush2.msra.mxu0 0.0
  %2950 = vmatprep.subr.mxu0 0.0
  %2951 = vmatpush2.msra.mxu0 0.0
  %2952 = vmatprep.subr.mxu0 %v1652
  %2953 = vmatpush2.msra.mxu0 %v1651
  %2954 = vmatprep.subr.mxu0 %v1650
  %2955 = vmatpush2.msra.mxu0 %v1649
  %2956 = vmatprep.mubr.f32.mxu0 %v2890
  %2957 = vmatmul.mubr.f32.gmra.mxu0 %v2887
  %v2958 = vpop.f32.mrf.mxu0
  %v2959 = vadd.f32 0.0, %v2958
  %v2960 = vpop.f32.mrf.mxu0
  %v2961 = vadd.f32 0.0, %v2960
  %2962 = vdwg.mxu0
  %v2965 = vcombine.low %v2959, %v2961
  %v2966 = vcombine.high %v2959, %v2961
  %v2968 = vunpack.c.l.s4 1966171168
  %v2969 = vunpack.c.0.s8 %v2968
  %v2970 = vlaneseq
  %v2971 = vshrl.u32 %v2970, 7
  %v2972 = vsub.s32 %v2969, %v2971
  %v2973 = vrot.slane %v2965, %v2972
  %v2975 = vunpack.c.l.s4 1966171168
  %v2976 = vunpack.c.0.s8 %v2975
  %v2977 = vlaneseq
  %v2978 = vshrl.u32 %v2977, 7
  %v2979 = vsub.s32 %v2976, %v2978
  %v2980 = vrot.slane %v2966, %v2979
  %v2981 = vcombine.high %v2973, %v2973
  %v2982 = vcombine.high %v2980, %v2980
  %v2984 = vunpack.c.l.s4 1966171168
  %v2985 = vunpack.c.0.s8 %v2984
  %v2986 = vlaneseq
  %v2987 = vshrl.u32 %v2986, 7
  %v2988 = vsub.s32 %v2985, %v2987
  %v2989 = vrot.slane %v2973, %v2988
  %v2991 = vunpack.c.l.s4 1966171168
  %v2992 = vunpack.c.0.s8 %v2991
  %v2993 = vlaneseq
  %v2994 = vshrl.u32 %v2993, 7
  %v2995 = vsub.s32 %v2992, %v2994
  %v2996 = vrot.slane %v2980, %v2995
  %v2998 = vunpack.c.l.s4 1966171168
  %v2999 = vunpack.c.0.s8 %v2998
  %v3000 = vlaneseq
  %v3001 = vshrl.u32 %v3000, 7
  %v3002 = vsub.s32 %v2999, %v3001
  %v3003 = vrot.slane %v2981, %v3002
  %v3005 = vunpack.c.l.s4 1966171168
  %v3006 = vunpack.c.0.s8 %v3005
  %v3007 = vlaneseq
  %v3008 = vshrl.u32 %v3007, 7
  %v3009 = vsub.s32 %v3006, %v3008
  %v3010 = vrot.slane %v2982, %v3009
  %v3011 = vcombine.high %v2989, %v2989
  %v3012 = vcombine.high %v2996, %v2996
  %v3013 = vcombine.high %v3003, %v3003
  %v3014 = vcombine.high %v3010, %v3010
  %v3023 = vmax.f32 %v2807, %v2989
  %v3024 = vmax.f32 %v2808, %v3003
  %v3025 = vmax.f32 %v2809, %v3011
  %v3026 = vmax.f32 %v2810, %v3013
  %v3027 = vmax.f32 %v2811, %v2996
  %v3028 = vmax.f32 %v2812, %v3010
  %v3029 = vmax.f32 %v2813, %v3012
  %v3030 = vmax.f32 %v2814, %v3014
  %s3031 = scalar_lea.vmem [#allocation3], 4
  %3032 = vst.msk [vmem:[%s3031] ss:$8 sm:$0x3] %vm1911, %v3023
  %3033 = vst.msk [vmem:[%s3031] ss:$8 sm:$0x0] %vm1911, %v3023
  %s3034 = scalar_lea.vmem [#allocation3], 36
  %3035 = vst.msk [vmem:[%s3034] ss:$8 sm:$0x3] %vm1911, %v3024
  %3036 = vst.msk [vmem:[%s3034] ss:$8 sm:$0x0] %vm1911, %v3024
  %s3037 = scalar_lea.vmem [#allocation3], 68
  %3038 = vst.msk [vmem:[%s3037] ss:$8 sm:$0x3] %vm1911, %v3025
  %3039 = vst.msk [vmem:[%s3037] ss:$8 sm:$0x0] %vm1911, %v3025
  %s3040 = scalar_lea.vmem [#allocation3], 100
  %3041 = vst.msk [vmem:[%s3040] ss:$8 sm:$0x3] %vm1911, %v3026
  %3042 = vst.msk [vmem:[%s3040] ss:$8 sm:$0x0] %vm1911, %v3026
  %s3043 = scalar_lea.vmem [#allocation3], 132
  %3044 = vst.msk [vmem:[%s3043] ss:$8 sm:$0x3] %vm1911, %v3027
  %3045 = vst.msk [vmem:[%s3043] ss:$8 sm:$0x0] %vm1911, %v3027
  %s3046 = scalar_lea.vmem [#allocation3], 164
  %3047 = vst.msk [vmem:[%s3046] ss:$8 sm:$0x3] %vm1911, %v3028
  %3048 = vst.msk [vmem:[%s3046] ss:$8 sm:$0x0] %vm1911, %v3028
  %s3049 = scalar_lea.vmem [#allocation3], 196
  %3050 = vst.msk [vmem:[%s3049] ss:$8 sm:$0x3] %vm1911, %v3029
  %3051 = vst.msk [vmem:[%s3049] ss:$8 sm:$0x0] %vm1911, %v3029
  %s3052 = scalar_lea.vmem [#allocation3], 228
  %3053 = vst.msk [vmem:[%s3052] ss:$8 sm:$0x3] %vm1911, %v3030
  %3054 = vst.msk [vmem:[%s3052] ss:$8 sm:$0x0] %vm1911, %v3030
  %s3055 = scalar_lea.vmem [#allocation2], 18
  %v3056 = vld [vmem:[%s3055] ss:$8 sm:$0x3]
  %s3057 = scalar_lea.vmem [#allocation2], 66
  %v3058 = vld [vmem:[%s3057] ss:$8 sm:$0x3]
  %s3059 = scalar_lea.vmem [#allocation2], 114
  %v3060 = vld [vmem:[%s3059] ss:$8 sm:$0x3]
  %s3061 = scalar_lea.vmem [#allocation2], 162
  %v3062 = vld [vmem:[%s3061] ss:$8 sm:$0x3]
  %s3063 = scalar_lea.vmem [#allocation2], 210
  %v3064 = vld [vmem:[%s3063] ss:$8 sm:$0x3]
  %s3065 = scalar_lea.vmem [#allocation2], 258
  %v3066 = vld [vmem:[%s3065] ss:$8 sm:$0x3]
  %s3067 = scalar_lea.vmem [#allocation2], 306
  %v3068 = vld [vmem:[%s3067] ss:$8 sm:$0x3]
  %s3069 = scalar_lea.vmem [#allocation2], 354
  %v3070 = vld [vmem:[%s3069] ss:$8 sm:$0x3]
  %s3071 = scalar_lea.vmem [#allocation2], 19
  %v3072 = vld [vmem:[%s3071] ss:$8 sm:$0x3]
  %s3073 = scalar_lea.vmem [#allocation2], 67
  %v3074 = vld [vmem:[%s3073] ss:$8 sm:$0x3]
  %s3075 = scalar_lea.vmem [#allocation2], 115
  %v3076 = vld [vmem:[%s3075] ss:$8 sm:$0x3]
  %s3077 = scalar_lea.vmem [#allocation2], 163
  %v3078 = vld [vmem:[%s3077] ss:$8 sm:$0x3]
  %s3079 = scalar_lea.vmem [#allocation2], 211
  %v3080 = vld [vmem:[%s3079] ss:$8 sm:$0x3]
  %s3081 = scalar_lea.vmem [#allocation2], 259
  %v3082 = vld [vmem:[%s3081] ss:$8 sm:$0x3]
  %s3083 = scalar_lea.vmem [#allocation2], 307
  %v3084 = vld [vmem:[%s3083] ss:$8 sm:$0x3]
  %s3085 = scalar_lea.vmem [#allocation2], 355
  %v3086 = vld [vmem:[%s3085] ss:$8 sm:$0x3]
  %v3087 = vmax.f32 %v3056, %v3072
  %v3088 = vmax.f32 %v3058, %v3074
  %v3089 = vmax.f32 %v3060, %v3076
  %v3090 = vmax.f32 %v3062, %v3078
  %v3091 = vmax.f32 %v3064, %v3080
  %v3092 = vmax.f32 %v3066, %v3082
  %v3093 = vmax.f32 %v3068, %v3084
  %v3094 = vmax.f32 %v3070, %v3086
  %v3103 = vcombine.low %v3087, %v3088
  %v3104 = vcombine.low %v3089, %v3090
  %v3105 = vcombine.low %v3091, %v3092
  %v3106 = vcombine.low %v3093, %v3094
  %v3108 = vunpack.c.l.s4 1966171168
  %v3109 = vunpack.c.0.s8 %v3108
  %v3110 = vlaneseq
  %v3111 = vshrl.u32 %v3110, 7
  %v3112 = vsub.s32 %v3109, %v3111
  %v3113 = vrot.slane %v3103, %v3112
  %v3115 = vunpack.c.l.s4 1966171168
  %v3116 = vunpack.c.0.s8 %v3115
  %v3117 = vlaneseq
  %v3118 = vshrl.u32 %v3117, 7
  %v3119 = vsub.s32 %v3116, %v3118
  %v3120 = vrot.slane %v3104, %v3119
  %v3122 = vunpack.c.l.s4 1966171168
  %v3123 = vunpack.c.0.s8 %v3122
  %v3124 = vlaneseq
  %v3125 = vshrl.u32 %v3124, 7
  %v3126 = vsub.s32 %v3123, %v3125
  %v3127 = vrot.slane %v3105, %v3126
  %v3129 = vunpack.c.l.s4 1966171168
  %v3130 = vunpack.c.0.s8 %v3129
  %v3131 = vlaneseq
  %v3132 = vshrl.u32 %v3131, 7
  %v3133 = vsub.s32 %v3130, %v3132
  %v3134 = vrot.slane %v3106, %v3133
  %v3135 = vcombine.low %v3113, %v3120
  %v3136 = vcombine.high %v3113, %v3120
  %v3137 = vcombine.low %v3127, %v3134
  %v3138 = vcombine.high %v3127, %v3134
  %v3140 = vunpack.c.l.s4 1966171168
  %v3141 = vunpack.c.0.s8 %v3140
  %v3142 = vlaneseq
  %v3143 = vshrl.u32 %v3142, 7
  %v3144 = vsub.s32 %v3141, %v3143
  %v3145 = vrot.slane %v3135, %v3144
  %v3147 = vunpack.c.l.s4 1966171168
  %v3148 = vunpack.c.0.s8 %v3147
  %v3149 = vlaneseq
  %v3150 = vshrl.u32 %v3149, 7
  %v3151 = vsub.s32 %v3148, %v3150
  %v3152 = vrot.slane %v3136, %v3151
  %v3154 = vunpack.c.l.s4 1966171168
  %v3155 = vunpack.c.0.s8 %v3154
  %v3156 = vlaneseq
  %v3157 = vshrl.u32 %v3156, 7
  %v3158 = vsub.s32 %v3155, %v3157
  %v3159 = vrot.slane %v3137, %v3158
  %v3161 = vunpack.c.l.s4 1966171168
  %v3162 = vunpack.c.0.s8 %v3161
  %v3163 = vlaneseq
  %v3164 = vshrl.u32 %v3163, 7
  %v3165 = vsub.s32 %v3162, %v3164
  %v3166 = vrot.slane %v3138, %v3165
  %v3167 = vcombine.low %v3145, %v3159
  %v3168 = vcombine.low %v3152, %v3166
  %v3170 = vsel %vm1569, %v3168, 0
  %3172 = vmatprep.subr.mxu0 %v1648
  %3173 = vmatpush1.msra.mxu0 %v1647
  %3174 = vmatprep.subr.mxu0 %v1646
  %3175 = vmatpush1.msra.mxu0 %v1645
  %3176 = vmatprep.subr.mxu0 %v1644
  %3177 = vmatpush1.msra.mxu0 %v1643
  %3178 = vmatprep.subr.mxu0 %v1642
  %3179 = vmatpush1.msra.mxu0 %v1641
  %3180 = vmatprep.subr.mxu0 %v1640
  %3181 = vmatpush1.msra.mxu0 %v1639
  %3182 = vmatprep.subr.mxu0 %v1638
  %3183 = vmatpush1.msra.mxu0 %v1637
  %3184 = vmatprep.subr.mxu0 %v1636
  %3185 = vmatpush1.msra.mxu0 %v1635
  %3186 = vmatprep.subr.mxu0 %v1634
  %3187 = vmatpush1.msra.mxu0 %v1633
  %3188 = vmatprep.subr.mxu0 %v1632
  %3189 = vmatpush1.msra.mxu0 %v1631
  %3190 = vmatprep.subr.mxu0 %v1630
  %3191 = vmatpush1.msra.mxu0 %v1629
  %3192 = vmatprep.subr.mxu0 %v1628
  %3193 = vmatpush1.msra.mxu0 %v1627
  %3194 = vmatprep.subr.mxu0 %v1626
  %3195 = vmatpush1.msra.mxu0 %v1625
  %3196 = vmatprep.subr.mxu0 %v1624
  %3197 = vmatpush1.msra.mxu0 %v1623
  %3198 = vmatprep.subr.mxu0 %v1622
  %3199 = vmatpush1.msra.mxu0 %v1621
  %3200 = vmatprep.subr.mxu0 %v1620
  %3201 = vmatpush1.msra.mxu0 %v1619
  %3202 = vmatprep.subr.mxu0 %v1618
  %3203 = vmatpush1.msra.mxu0 %v1617
  %3204 = vmatprep.subr.mxu0 0.0
  %3205 = vmatpush2.msra.mxu0 0.0
  %3206 = vmatprep.subr.mxu0 0.0
  %3207 = vmatpush2.msra.mxu0 0.0
  %3208 = vmatprep.subr.mxu0 0.0
  %3209 = vmatpush2.msra.mxu0 0.0
  %3210 = vmatprep.subr.mxu0 0.0
  %3211 = vmatpush2.msra.mxu0 0.0
  %3212 = vmatprep.subr.mxu0 0.0
  %3213 = vmatpush2.msra.mxu0 0.0
  %3214 = vmatprep.subr.mxu0 0.0
  %3215 = vmatpush2.msra.mxu0 0.0
  %3216 = vmatprep.subr.mxu0 0.0
  %3217 = vmatpush2.msra.mxu0 0.0
  %3218 = vmatprep.subr.mxu0 0.0
  %3219 = vmatpush2.msra.mxu0 0.0
  %3220 = vmatprep.subr.mxu0 0.0
  %3221 = vmatpush2.msra.mxu0 0.0
  %3222 = vmatprep.subr.mxu0 0.0
  %3223 = vmatpush2.msra.mxu0 0.0
  %3224 = vmatprep.subr.mxu0 0.0
  %3225 = vmatpush2.msra.mxu0 0.0
  %3226 = vmatprep.subr.mxu0 0.0
  %3227 = vmatpush2.msra.mxu0 0.0
  %3228 = vmatprep.subr.mxu0 0.0
  %3229 = vmatpush2.msra.mxu0 0.0
  %3230 = vmatprep.subr.mxu0 0.0
  %3231 = vmatpush2.msra.mxu0 0.0
  %3232 = vmatprep.subr.mxu0 %v1652
  %3233 = vmatpush2.msra.mxu0 %v1651
  %3234 = vmatprep.subr.mxu0 %v1650
  %3235 = vmatpush2.msra.mxu0 %v1649
  %3236 = vmatprep.mubr.f32.mxu0 %v3170
  %3237 = vmatmul.mubr.f32.gmra.mxu0 %v3167
  %v3238 = vpop.f32.mrf.mxu0
  %v3239 = vadd.f32 0.0, %v3238
  %v3240 = vpop.f32.mrf.mxu0
  %v3241 = vadd.f32 0.0, %v3240
  %3242 = vdwg.mxu0
  %v3245 = vcombine.low %v3239, %v3241
  %v3246 = vcombine.high %v3239, %v3241
  %v3248 = vunpack.c.l.s4 1966171168
  %v3249 = vunpack.c.0.s8 %v3248
  %v3250 = vlaneseq
  %v3251 = vshrl.u32 %v3250, 7
  %v3252 = vsub.s32 %v3249, %v3251
  %v3253 = vrot.slane %v3245, %v3252
  %v3255 = vunpack.c.l.s4 1966171168
  %v3256 = vunpack.c.0.s8 %v3255
  %v3257 = vlaneseq
  %v3258 = vshrl.u32 %v3257, 7
  %v3259 = vsub.s32 %v3256, %v3258
  %v3260 = vrot.slane %v3246, %v3259
  %v3261 = vcombine.high %v3253, %v3253
  %v3262 = vcombine.high %v3260, %v3260
  %v3264 = vunpack.c.l.s4 1966171168
  %v3265 = vunpack.c.0.s8 %v3264
  %v3266 = vlaneseq
  %v3267 = vshrl.u32 %v3266, 7
  %v3268 = vsub.s32 %v3265, %v3267
  %v3269 = vrot.slane %v3253, %v3268
  %v3271 = vunpack.c.l.s4 1966171168
  %v3272 = vunpack.c.0.s8 %v3271
  %v3273 = vlaneseq
  %v3274 = vshrl.u32 %v3273, 7
  %v3275 = vsub.s32 %v3272, %v3274
  %v3276 = vrot.slane %v3260, %v3275
  %v3278 = vunpack.c.l.s4 1966171168
  %v3279 = vunpack.c.0.s8 %v3278
  %v3280 = vlaneseq
  %v3281 = vshrl.u32 %v3280, 7
  %v3282 = vsub.s32 %v3279, %v3281
  %v3283 = vrot.slane %v3261, %v3282
  %v3285 = vunpack.c.l.s4 1966171168
  %v3286 = vunpack.c.0.s8 %v3285
  %v3287 = vlaneseq
  %v3288 = vshrl.u32 %v3287, 7
  %v3289 = vsub.s32 %v3286, %v3288
  %v3290 = vrot.slane %v3262, %v3289
  %v3291 = vcombine.high %v3269, %v3269
  %v3292 = vcombine.high %v3276, %v3276
  %v3293 = vcombine.high %v3283, %v3283
  %v3294 = vcombine.high %v3290, %v3290
  %v3303 = vmax.f32 %v3087, %v3269
  %v3304 = vmax.f32 %v3088, %v3283
  %v3305 = vmax.f32 %v3089, %v3291
  %v3306 = vmax.f32 %v3090, %v3293
  %v3307 = vmax.f32 %v3091, %v3276
  %v3308 = vmax.f32 %v3092, %v3290
  %v3309 = vmax.f32 %v3093, %v3292
  %v3310 = vmax.f32 %v3094, %v3294
  %s3311 = scalar_lea.vmem [#allocation3], 5
  %3312 = vst.msk [vmem:[%s3311] ss:$8 sm:$0x3] %vm1911, %v3303
  %3313 = vst.msk [vmem:[%s3311] ss:$8 sm:$0x0] %vm1911, %v3303
  %s3314 = scalar_lea.vmem [#allocation3], 37
  %3315 = vst.msk [vmem:[%s3314] ss:$8 sm:$0x3] %vm1911, %v3304
  %3316 = vst.msk [vmem:[%s3314] ss:$8 sm:$0x0] %vm1911, %v3304
  %s3317 = scalar_lea.vmem [#allocation3], 69
  %3318 = vst.msk [vmem:[%s3317] ss:$8 sm:$0x3] %vm1911, %v3305
  %3319 = vst.msk [vmem:[%s3317] ss:$8 sm:$0x0] %vm1911, %v3305
  %s3320 = scalar_lea.vmem [#allocation3], 101
  %3321 = vst.msk [vmem:[%s3320] ss:$8 sm:$0x3] %vm1911, %v3306
  %3322 = vst.msk [vmem:[%s3320] ss:$8 sm:$0x0] %vm1911, %v3306
  %s3323 = scalar_lea.vmem [#allocation3], 133
  %3324 = vst.msk [vmem:[%s3323] ss:$8 sm:$0x3] %vm1911, %v3307
  %3325 = vst.msk [vmem:[%s3323] ss:$8 sm:$0x0] %vm1911, %v3307
  %s3326 = scalar_lea.vmem [#allocation3], 165
  %3327 = vst.msk [vmem:[%s3326] ss:$8 sm:$0x3] %vm1911, %v3308
  %3328 = vst.msk [vmem:[%s3326] ss:$8 sm:$0x0] %vm1911, %v3308
  %s3329 = scalar_lea.vmem [#allocation3], 197
  %3330 = vst.msk [vmem:[%s3329] ss:$8 sm:$0x3] %vm1911, %v3309
  %3331 = vst.msk [vmem:[%s3329] ss:$8 sm:$0x0] %vm1911, %v3309
  %s3332 = scalar_lea.vmem [#allocation3], 229
  %3333 = vst.msk [vmem:[%s3332] ss:$8 sm:$0x3] %vm1911, %v3310
  %3334 = vst.msk [vmem:[%s3332] ss:$8 sm:$0x0] %vm1911, %v3310
  %s3335 = scalar_lea.vmem [#allocation2], 20
  %v3336 = vld [vmem:[%s3335] ss:$8 sm:$0x3]
  %s3337 = scalar_lea.vmem [#allocation2], 68
  %v3338 = vld [vmem:[%s3337] ss:$8 sm:$0x3]
  %s3339 = scalar_lea.vmem [#allocation2], 116
  %v3340 = vld [vmem:[%s3339] ss:$8 sm:$0x3]
  %s3341 = scalar_lea.vmem [#allocation2], 164
  %v3342 = vld [vmem:[%s3341] ss:$8 sm:$0x3]
  %s3343 = scalar_lea.vmem [#allocation2], 212
  %v3344 = vld [vmem:[%s3343] ss:$8 sm:$0x3]
  %s3345 = scalar_lea.vmem [#allocation2], 260
  %v3346 = vld [vmem:[%s3345] ss:$8 sm:$0x3]
  %s3347 = scalar_lea.vmem [#allocation2], 308
  %v3348 = vld [vmem:[%s3347] ss:$8 sm:$0x3]
  %s3349 = scalar_lea.vmem [#allocation2], 356
  %v3350 = vld [vmem:[%s3349] ss:$8 sm:$0x3]
  %s3351 = scalar_lea.vmem [#allocation2], 21
  %v3352 = vld [vmem:[%s3351] ss:$8 sm:$0x3]
  %s3353 = scalar_lea.vmem [#allocation2], 69
  %v3354 = vld [vmem:[%s3353] ss:$8 sm:$0x3]
  %s3355 = scalar_lea.vmem [#allocation2], 117
  %v3356 = vld [vmem:[%s3355] ss:$8 sm:$0x3]
  %s3357 = scalar_lea.vmem [#allocation2], 165
  %v3358 = vld [vmem:[%s3357] ss:$8 sm:$0x3]
  %s3359 = scalar_lea.vmem [#allocation2], 213
  %v3360 = vld [vmem:[%s3359] ss:$8 sm:$0x3]
  %s3361 = scalar_lea.vmem [#allocation2], 261
  %v3362 = vld [vmem:[%s3361] ss:$8 sm:$0x3]
  %s3363 = scalar_lea.vmem [#allocation2], 309
  %v3364 = vld [vmem:[%s3363] ss:$8 sm:$0x3]
  %s3365 = scalar_lea.vmem [#allocation2], 357
  %v3366 = vld [vmem:[%s3365] ss:$8 sm:$0x3]
  %v3367 = vmax.f32 %v3336, %v3352
  %v3368 = vmax.f32 %v3338, %v3354
  %v3369 = vmax.f32 %v3340, %v3356
  %v3370 = vmax.f32 %v3342, %v3358
  %v3371 = vmax.f32 %v3344, %v3360
  %v3372 = vmax.f32 %v3346, %v3362
  %v3373 = vmax.f32 %v3348, %v3364
  %v3374 = vmax.f32 %v3350, %v3366
  %v3383 = vcombine.low %v3367, %v3368
  %v3384 = vcombine.low %v3369, %v3370
  %v3385 = vcombine.low %v3371, %v3372
  %v3386 = vcombine.low %v3373, %v3374
  %v3388 = vunpack.c.l.s4 1966171168
  %v3389 = vunpack.c.0.s8 %v3388
  %v3390 = vlaneseq
  %v3391 = vshrl.u32 %v3390, 7
  %v3392 = vsub.s32 %v3389, %v3391
  %v3393 = vrot.slane %v3383, %v3392
  %v3395 = vunpack.c.l.s4 1966171168
  %v3396 = vunpack.c.0.s8 %v3395
  %v3397 = vlaneseq
  %v3398 = vshrl.u32 %v3397, 7
  %v3399 = vsub.s32 %v3396, %v3398
  %v3400 = vrot.slane %v3384, %v3399
  %v3402 = vunpack.c.l.s4 1966171168
  %v3403 = vunpack.c.0.s8 %v3402
  %v3404 = vlaneseq
  %v3405 = vshrl.u32 %v3404, 7
  %v3406 = vsub.s32 %v3403, %v3405
  %v3407 = vrot.slane %v3385, %v3406
  %v3409 = vunpack.c.l.s4 1966171168
  %v3410 = vunpack.c.0.s8 %v3409
  %v3411 = vlaneseq
  %v3412 = vshrl.u32 %v3411, 7
  %v3413 = vsub.s32 %v3410, %v3412
  %v3414 = vrot.slane %v3386, %v3413
  %v3415 = vcombine.low %v3393, %v3400
  %v3416 = vcombine.high %v3393, %v3400
  %v3417 = vcombine.low %v3407, %v3414
  %v3418 = vcombine.high %v3407, %v3414
  %v3420 = vunpack.c.l.s4 1966171168
  %v3421 = vunpack.c.0.s8 %v3420
  %v3422 = vlaneseq
  %v3423 = vshrl.u32 %v3422, 7
  %v3424 = vsub.s32 %v3421, %v3423
  %v3425 = vrot.slane %v3415, %v3424
  %v3427 = vunpack.c.l.s4 1966171168
  %v3428 = vunpack.c.0.s8 %v3427
  %v3429 = vlaneseq
  %v3430 = vshrl.u32 %v3429, 7
  %v3431 = vsub.s32 %v3428, %v3430
  %v3432 = vrot.slane %v3416, %v3431
  %v3434 = vunpack.c.l.s4 1966171168
  %v3435 = vunpack.c.0.s8 %v3434
  %v3436 = vlaneseq
  %v3437 = vshrl.u32 %v3436, 7
  %v3438 = vsub.s32 %v3435, %v3437
  %v3439 = vrot.slane %v3417, %v3438
  %v3441 = vunpack.c.l.s4 1966171168
  %v3442 = vunpack.c.0.s8 %v3441
  %v3443 = vlaneseq
  %v3444 = vshrl.u32 %v3443, 7
  %v3445 = vsub.s32 %v3442, %v3444
  %v3446 = vrot.slane %v3418, %v3445
  %v3447 = vcombine.low %v3425, %v3439
  %v3448 = vcombine.low %v3432, %v3446
  %v3450 = vsel %vm1569, %v3448, 0
  %3452 = vmatprep.subr.mxu0 %v1648
  %3453 = vmatpush1.msra.mxu0 %v1647
  %3454 = vmatprep.subr.mxu0 %v1646
  %3455 = vmatpush1.msra.mxu0 %v1645
  %3456 = vmatprep.subr.mxu0 %v1644
  %3457 = vmatpush1.msra.mxu0 %v1643
  %3458 = vmatprep.subr.mxu0 %v1642
  %3459 = vmatpush1.msra.mxu0 %v1641
  %3460 = vmatprep.subr.mxu0 %v1640
  %3461 = vmatpush1.msra.mxu0 %v1639
  %3462 = vmatprep.subr.mxu0 %v1638
  %3463 = vmatpush1.msra.mxu0 %v1637
  %3464 = vmatprep.subr.mxu0 %v1636
  %3465 = vmatpush1.msra.mxu0 %v1635
  %3466 = vmatprep.subr.mxu0 %v1634
  %3467 = vmatpush1.msra.mxu0 %v1633
  %3468 = vmatprep.subr.mxu0 %v1632
  %3469 = vmatpush1.msra.mxu0 %v1631
  %3470 = vmatprep.subr.mxu0 %v1630
  %3471 = vmatpush1.msra.mxu0 %v1629
  %3472 = vmatprep.subr.mxu0 %v1628
  %3473 = vmatpush1.msra.mxu0 %v1627
  %3474 = vmatprep.subr.mxu0 %v1626
  %3475 = vmatpush1.msra.mxu0 %v1625
  %3476 = vmatprep.subr.mxu0 %v1624
  %3477 = vmatpush1.msra.mxu0 %v1623
  %3478 = vmatprep.subr.mxu0 %v1622
  %3479 = vmatpush1.msra.mxu0 %v1621
  %3480 = vmatprep.subr.mxu0 %v1620
  %3481 = vmatpush1.msra.mxu0 %v1619
  %3482 = vmatprep.subr.mxu0 %v1618
  %3483 = vmatpush1.msra.mxu0 %v1617
  %3484 = vmatprep.subr.mxu0 0.0
  %3485 = vmatpush2.msra.mxu0 0.0
  %3486 = vmatprep.subr.mxu0 0.0
  %3487 = vmatpush2.msra.mxu0 0.0
  %3488 = vmatprep.subr.mxu0 0.0
  %3489 = vmatpush2.msra.mxu0 0.0
  %3490 = vmatprep.subr.mxu0 0.0
  %3491 = vmatpush2.msra.mxu0 0.0
  %3492 = vmatprep.subr.mxu0 0.0
  %3493 = vmatpush2.msra.mxu0 0.0
  %3494 = vmatprep.subr.mxu0 0.0
  %3495 = vmatpush2.msra.mxu0 0.0
  %3496 = vmatprep.subr.mxu0 0.0
  %3497 = vmatpush2.msra.mxu0 0.0
  %3498 = vmatprep.subr.mxu0 0.0
  %3499 = vmatpush2.msra.mxu0 0.0
  %3500 = vmatprep.subr.mxu0 0.0
  %3501 = vmatpush2.msra.mxu0 0.0
  %3502 = vmatprep.subr.mxu0 0.0
  %3503 = vmatpush2.msra.mxu0 0.0
  %3504 = vmatprep.subr.mxu0 0.0
  %3505 = vmatpush2.msra.mxu0 0.0
  %3506 = vmatprep.subr.mxu0 0.0
  %3507 = vmatpush2.msra.mxu0 0.0
  %3508 = vmatprep.subr.mxu0 0.0
  %3509 = vmatpush2.msra.mxu0 0.0
  %3510 = vmatprep.subr.mxu0 0.0
  %3511 = vmatpush2.msra.mxu0 0.0
  %3512 = vmatprep.subr.mxu0 %v1652
  %3513 = vmatpush2.msra.mxu0 %v1651
  %3514 = vmatprep.subr.mxu0 %v1650
  %3515 = vmatpush2.msra.mxu0 %v1649
  %3516 = vmatprep.mubr.f32.mxu0 %v3450
  %3517 = vmatmul.mubr.f32.gmra.mxu0 %v3447
  %v3518 = vpop.f32.mrf.mxu0
  %v3519 = vadd.f32 0.0, %v3518
  %v3520 = vpop.f32.mrf.mxu0
  %v3521 = vadd.f32 0.0, %v3520
  %3522 = vdwg.mxu0
  %v3525 = vcombine.low %v3519, %v3521
  %v3526 = vcombine.high %v3519, %v3521
  %v3528 = vunpack.c.l.s4 1966171168
  %v3529 = vunpack.c.0.s8 %v3528
  %v3530 = vlaneseq
  %v3531 = vshrl.u32 %v3530, 7
  %v3532 = vsub.s32 %v3529, %v3531
  %v3533 = vrot.slane %v3525, %v3532
  %v3535 = vunpack.c.l.s4 1966171168
  %v3536 = vunpack.c.0.s8 %v3535
  %v3537 = vlaneseq
  %v3538 = vshrl.u32 %v3537, 7
  %v3539 = vsub.s32 %v3536, %v3538
  %v3540 = vrot.slane %v3526, %v3539
  %v3541 = vcombine.high %v3533, %v3533
  %v3542 = vcombine.high %v3540, %v3540
  %v3544 = vunpack.c.l.s4 1966171168
  %v3545 = vunpack.c.0.s8 %v3544
  %v3546 = vlaneseq
  %v3547 = vshrl.u32 %v3546, 7
  %v3548 = vsub.s32 %v3545, %v3547
  %v3549 = vrot.slane %v3533, %v3548
  %v3551 = vunpack.c.l.s4 1966171168
  %v3552 = vunpack.c.0.s8 %v3551
  %v3553 = vlaneseq
  %v3554 = vshrl.u32 %v3553, 7
  %v3555 = vsub.s32 %v3552, %v3554
  %v3556 = vrot.slane %v3540, %v3555
  %v3558 = vunpack.c.l.s4 1966171168
  %v3559 = vunpack.c.0.s8 %v3558
  %v3560 = vlaneseq
  %v3561 = vshrl.u32 %v3560, 7
  %v3562 = vsub.s32 %v3559, %v3561
  %v3563 = vrot.slane %v3541, %v3562
  %v3565 = vunpack.c.l.s4 1966171168
  %v3566 = vunpack.c.0.s8 %v3565
  %v3567 = vlaneseq
  %v3568 = vshrl.u32 %v3567, 7
  %v3569 = vsub.s32 %v3566, %v3568
  %v3570 = vrot.slane %v3542, %v3569
  %v3571 = vcombine.high %v3549, %v3549
  %v3572 = vcombine.high %v3556, %v3556
  %v3573 = vcombine.high %v3563, %v3563
  %v3574 = vcombine.high %v3570, %v3570
  %v3583 = vmax.f32 %v3367, %v3549
  %v3584 = vmax.f32 %v3368, %v3563
  %v3585 = vmax.f32 %v3369, %v3571
  %v3586 = vmax.f32 %v3370, %v3573
  %v3587 = vmax.f32 %v3371, %v3556
  %v3588 = vmax.f32 %v3372, %v3570
  %v3589 = vmax.f32 %v3373, %v3572
  %v3590 = vmax.f32 %v3374, %v3574
  %s3591 = scalar_lea.vmem [#allocation3], 6
  %3592 = vst.msk [vmem:[%s3591] ss:$8 sm:$0x3] %vm1911, %v3583
  %3593 = vst.msk [vmem:[%s3591] ss:$8 sm:$0x0] %vm1911, %v3583
  %s3594 = scalar_lea.vmem [#allocation3], 38
  %3595 = vst.msk [vmem:[%s3594] ss:$8 sm:$0x3] %vm1911, %v3584
  %3596 = vst.msk [vmem:[%s3594] ss:$8 sm:$0x0] %vm1911, %v3584
  %s3597 = scalar_lea.vmem [#allocation3], 70
  %3598 = vst.msk [vmem:[%s3597] ss:$8 sm:$0x3] %vm1911, %v3585
  %3599 = vst.msk [vmem:[%s3597] ss:$8 sm:$0x0] %vm1911, %v3585
  %s3600 = scalar_lea.vmem [#allocation3], 102
  %3601 = vst.msk [vmem:[%s3600] ss:$8 sm:$0x3] %vm1911, %v3586
  %3602 = vst.msk [vmem:[%s3600] ss:$8 sm:$0x0] %vm1911, %v3586
  %s3603 = scalar_lea.vmem [#allocation3], 134
  %3604 = vst.msk [vmem:[%s3603] ss:$8 sm:$0x3] %vm1911, %v3587
  %3605 = vst.msk [vmem:[%s3603] ss:$8 sm:$0x0] %vm1911, %v3587
  %s3606 = scalar_lea.vmem [#allocation3], 166
  %3607 = vst.msk [vmem:[%s3606] ss:$8 sm:$0x3] %vm1911, %v3588
  %3608 = vst.msk [vmem:[%s3606] ss:$8 sm:$0x0] %vm1911, %v3588
  %s3609 = scalar_lea.vmem [#allocation3], 198
  %3610 = vst.msk [vmem:[%s3609] ss:$8 sm:$0x3] %vm1911, %v3589
  %3611 = vst.msk [vmem:[%s3609] ss:$8 sm:$0x0] %vm1911, %v3589
  %s3612 = scalar_lea.vmem [#allocation3], 230
  %3613 = vst.msk [vmem:[%s3612] ss:$8 sm:$0x3] %vm1911, %v3590
  %3614 = vst.msk [vmem:[%s3612] ss:$8 sm:$0x0] %vm1911, %v3590
  %s3615 = scalar_lea.vmem [#allocation2], 22
  %v3616 = vld [vmem:[%s3615] ss:$8 sm:$0x3]
  %s3617 = scalar_lea.vmem [#allocation2], 70
  %v3618 = vld [vmem:[%s3617] ss:$8 sm:$0x3]
  %s3619 = scalar_lea.vmem [#allocation2], 118
  %v3620 = vld [vmem:[%s3619] ss:$8 sm:$0x3]
  %s3621 = scalar_lea.vmem [#allocation2], 166
  %v3622 = vld [vmem:[%s3621] ss:$8 sm:$0x3]
  %s3623 = scalar_lea.vmem [#allocation2], 214
  %v3624 = vld [vmem:[%s3623] ss:$8 sm:$0x3]
  %s3625 = scalar_lea.vmem [#allocation2], 262
  %v3626 = vld [vmem:[%s3625] ss:$8 sm:$0x3]
  %s3627 = scalar_lea.vmem [#allocation2], 310
  %v3628 = vld [vmem:[%s3627] ss:$8 sm:$0x3]
  %s3629 = scalar_lea.vmem [#allocation2], 358
  %v3630 = vld [vmem:[%s3629] ss:$8 sm:$0x3]
  %s3631 = scalar_lea.vmem [#allocation2], 23
  %v3632 = vld [vmem:[%s3631] ss:$8 sm:$0x3]
  %s3633 = scalar_lea.vmem [#allocation2], 71
  %v3634 = vld [vmem:[%s3633] ss:$8 sm:$0x3]
  %s3635 = scalar_lea.vmem [#allocation2], 119
  %v3636 = vld [vmem:[%s3635] ss:$8 sm:$0x3]
  %s3637 = scalar_lea.vmem [#allocation2], 167
  %v3638 = vld [vmem:[%s3637] ss:$8 sm:$0x3]
  %s3639 = scalar_lea.vmem [#allocation2], 215
  %v3640 = vld [vmem:[%s3639] ss:$8 sm:$0x3]
  %s3641 = scalar_lea.vmem [#allocation2], 263
  %v3642 = vld [vmem:[%s3641] ss:$8 sm:$0x3]
  %s3643 = scalar_lea.vmem [#allocation2], 311
  %v3644 = vld [vmem:[%s3643] ss:$8 sm:$0x3]
  %s3645 = scalar_lea.vmem [#allocation2], 359
  %v3646 = vld [vmem:[%s3645] ss:$8 sm:$0x3]
  %v3647 = vmax.f32 %v3616, %v3632
  %v3648 = vmax.f32 %v3618, %v3634
  %v3649 = vmax.f32 %v3620, %v3636
  %v3650 = vmax.f32 %v3622, %v3638
  %v3651 = vmax.f32 %v3624, %v3640
  %v3652 = vmax.f32 %v3626, %v3642
  %v3653 = vmax.f32 %v3628, %v3644
  %v3654 = vmax.f32 %v3630, %v3646
  %v3663 = vcombine.low %v3647, %v3648
  %v3664 = vcombine.low %v3649, %v3650
  %v3665 = vcombine.low %v3651, %v3652
  %v3666 = vcombine.low %v3653, %v3654
  %v3668 = vunpack.c.l.s4 1966171168
  %v3669 = vunpack.c.0.s8 %v3668
  %v3670 = vlaneseq
  %v3671 = vshrl.u32 %v3670, 7
  %v3672 = vsub.s32 %v3669, %v3671
  %v3673 = vrot.slane %v3663, %v3672
  %v3675 = vunpack.c.l.s4 1966171168
  %v3676 = vunpack.c.0.s8 %v3675
  %v3677 = vlaneseq
  %v3678 = vshrl.u32 %v3677, 7
  %v3679 = vsub.s32 %v3676, %v3678
  %v3680 = vrot.slane %v3664, %v3679
  %v3682 = vunpack.c.l.s4 1966171168
  %v3683 = vunpack.c.0.s8 %v3682
  %v3684 = vlaneseq
  %v3685 = vshrl.u32 %v3684, 7
  %v3686 = vsub.s32 %v3683, %v3685
  %v3687 = vrot.slane %v3665, %v3686
  %v3689 = vunpack.c.l.s4 1966171168
  %v3690 = vunpack.c.0.s8 %v3689
  %v3691 = vlaneseq
  %v3692 = vshrl.u32 %v3691, 7
  %v3693 = vsub.s32 %v3690, %v3692
  %v3694 = vrot.slane %v3666, %v3693
  %v3695 = vcombine.low %v3673, %v3680
  %v3696 = vcombine.high %v3673, %v3680
  %v3697 = vcombine.low %v3687, %v3694
  %v3698 = vcombine.high %v3687, %v3694
  %v3700 = vunpack.c.l.s4 1966171168
  %v3701 = vunpack.c.0.s8 %v3700
  %v3702 = vlaneseq
  %v3703 = vshrl.u32 %v3702, 7
  %v3704 = vsub.s32 %v3701, %v3703
  %v3705 = vrot.slane %v3695, %v3704
  %v3707 = vunpack.c.l.s4 1966171168
  %v3708 = vunpack.c.0.s8 %v3707
  %v3709 = vlaneseq
  %v3710 = vshrl.u32 %v3709, 7
  %v3711 = vsub.s32 %v3708, %v3710
  %v3712 = vrot.slane %v3696, %v3711
  %v3714 = vunpack.c.l.s4 1966171168
  %v3715 = vunpack.c.0.s8 %v3714
  %v3716 = vlaneseq
  %v3717 = vshrl.u32 %v3716, 7
  %v3718 = vsub.s32 %v3715, %v3717
  %v3719 = vrot.slane %v3697, %v3718
  %v3721 = vunpack.c.l.s4 1966171168
  %v3722 = vunpack.c.0.s8 %v3721
  %v3723 = vlaneseq
  %v3724 = vshrl.u32 %v3723, 7
  %v3725 = vsub.s32 %v3722, %v3724
  %v3726 = vrot.slane %v3698, %v3725
  %v3727 = vcombine.low %v3705, %v3719
  %v3728 = vcombine.low %v3712, %v3726
  %v3730 = vsel %vm1569, %v3728, 0
  %3732 = vmatprep.subr.mxu0 %v1648
  %3733 = vmatpush1.msra.mxu0 %v1647
  %3734 = vmatprep.subr.mxu0 %v1646
  %3735 = vmatpush1.msra.mxu0 %v1645
  %3736 = vmatprep.subr.mxu0 %v1644
  %3737 = vmatpush1.msra.mxu0 %v1643
  %3738 = vmatprep.subr.mxu0 %v1642
  %3739 = vmatpush1.msra.mxu0 %v1641
  %3740 = vmatprep.subr.mxu0 %v1640
  %3741 = vmatpush1.msra.mxu0 %v1639
  %3742 = vmatprep.subr.mxu0 %v1638
  %3743 = vmatpush1.msra.mxu0 %v1637
  %3744 = vmatprep.subr.mxu0 %v1636
  %3745 = vmatpush1.msra.mxu0 %v1635
  %3746 = vmatprep.subr.mxu0 %v1634
  %3747 = vmatpush1.msra.mxu0 %v1633
  %3748 = vmatprep.subr.mxu0 %v1632
  %3749 = vmatpush1.msra.mxu0 %v1631
  %3750 = vmatprep.subr.mxu0 %v1630
  %3751 = vmatpush1.msra.mxu0 %v1629
  %3752 = vmatprep.subr.mxu0 %v1628
  %3753 = vmatpush1.msra.mxu0 %v1627
  %3754 = vmatprep.subr.mxu0 %v1626
  %3755 = vmatpush1.msra.mxu0 %v1625
  %3756 = vmatprep.subr.mxu0 %v1624
  %3757 = vmatpush1.msra.mxu0 %v1623
  %3758 = vmatprep.subr.mxu0 %v1622
  %3759 = vmatpush1.msra.mxu0 %v1621
  %3760 = vmatprep.subr.mxu0 %v1620
  %3761 = vmatpush1.msra.mxu0 %v1619
  %3762 = vmatprep.subr.mxu0 %v1618
  %3763 = vmatpush1.msra.mxu0 %v1617
  %3764 = vmatprep.subr.mxu0 0.0
  %3765 = vmatpush2.msra.mxu0 0.0
  %3766 = vmatprep.subr.mxu0 0.0
  %3767 = vmatpush2.msra.mxu0 0.0
  %3768 = vmatprep.subr.mxu0 0.0
  %3769 = vmatpush2.msra.mxu0 0.0
  %3770 = vmatprep.subr.mxu0 0.0
  %3771 = vmatpush2.msra.mxu0 0.0
  %3772 = vmatprep.subr.mxu0 0.0
  %3773 = vmatpush2.msra.mxu0 0.0
  %3774 = vmatprep.subr.mxu0 0.0
  %3775 = vmatpush2.msra.mxu0 0.0
  %3776 = vmatprep.subr.mxu0 0.0
  %3777 = vmatpush2.msra.mxu0 0.0
  %3778 = vmatprep.subr.mxu0 0.0
  %3779 = vmatpush2.msra.mxu0 0.0
  %3780 = vmatprep.subr.mxu0 0.0
  %3781 = vmatpush2.msra.mxu0 0.0
  %3782 = vmatprep.subr.mxu0 0.0
  %3783 = vmatpush2.msra.mxu0 0.0
  %3784 = vmatprep.subr.mxu0 0.0
  %3785 = vmatpush2.msra.mxu0 0.0
  %3786 = vmatprep.subr.mxu0 0.0
  %3787 = vmatpush2.msra.mxu0 0.0
  %3788 = vmatprep.subr.mxu0 0.0
  %3789 = vmatpush2.msra.mxu0 0.0
  %3790 = vmatprep.subr.mxu0 0.0
  %3791 = vmatpush2.msra.mxu0 0.0
  %3792 = vmatprep.subr.mxu0 %v1652
  %3793 = vmatpush2.msra.mxu0 %v1651
  %3794 = vmatprep.subr.mxu0 %v1650
  %3795 = vmatpush2.msra.mxu0 %v1649
  %3796 = vmatprep.mubr.f32.mxu0 %v3730
  %3797 = vmatmul.mubr.f32.gmra.mxu0 %v3727
  %v3798 = vpop.f32.mrf.mxu0
  %v3799 = vadd.f32 0.0, %v3798
  %v3800 = vpop.f32.mrf.mxu0
  %v3801 = vadd.f32 0.0, %v3800
  %3802 = vdwg.mxu0
  %v3805 = vcombine.low %v3799, %v3801
  %v3806 = vcombine.high %v3799, %v3801
  %v3808 = vunpack.c.l.s4 1966171168
  %v3809 = vunpack.c.0.s8 %v3808
  %v3810 = vlaneseq
  %v3811 = vshrl.u32 %v3810, 7
  %v3812 = vsub.s32 %v3809, %v3811
  %v3813 = vrot.slane %v3805, %v3812
  %v3815 = vunpack.c.l.s4 1966171168
  %v3816 = vunpack.c.0.s8 %v3815
  %v3817 = vlaneseq
  %v3818 = vshrl.u32 %v3817, 7
  %v3819 = vsub.s32 %v3816, %v3818
  %v3820 = vrot.slane %v3806, %v3819
  %v3821 = vcombine.high %v3813, %v3813
  %v3822 = vcombine.high %v3820, %v3820
  %v3824 = vunpack.c.l.s4 1966171168
  %v3825 = vunpack.c.0.s8 %v3824
  %v3826 = vlaneseq
  %v3827 = vshrl.u32 %v3826, 7
  %v3828 = vsub.s32 %v3825, %v3827
  %v3829 = vrot.slane %v3813, %v3828
  %v3831 = vunpack.c.l.s4 1966171168
  %v3832 = vunpack.c.0.s8 %v3831
  %v3833 = vlaneseq
  %v3834 = vshrl.u32 %v3833, 7
  %v3835 = vsub.s32 %v3832, %v3834
  %v3836 = vrot.slane %v3820, %v3835
  %v3838 = vunpack.c.l.s4 1966171168
  %v3839 = vunpack.c.0.s8 %v3838
  %v3840 = vlaneseq
  %v3841 = vshrl.u32 %v3840, 7
  %v3842 = vsub.s32 %v3839, %v3841
  %v3843 = vrot.slane %v3821, %v3842
  %v3845 = vunpack.c.l.s4 1966171168
  %v3846 = vunpack.c.0.s8 %v3845
  %v3847 = vlaneseq
  %v3848 = vshrl.u32 %v3847, 7
  %v3849 = vsub.s32 %v3846, %v3848
  %v3850 = vrot.slane %v3822, %v3849
  %v3851 = vcombine.high %v3829, %v3829
  %v3852 = vcombine.high %v3836, %v3836
  %v3853 = vcombine.high %v3843, %v3843
  %v3854 = vcombine.high %v3850, %v3850
  %v3863 = vmax.f32 %v3647, %v3829
  %v3864 = vmax.f32 %v3648, %v3843
  %v3865 = vmax.f32 %v3649, %v3851
  %v3866 = vmax.f32 %v3650, %v3853
  %v3867 = vmax.f32 %v3651, %v3836
  %v3868 = vmax.f32 %v3652, %v3850
  %v3869 = vmax.f32 %v3653, %v3852
  %v3870 = vmax.f32 %v3654, %v3854
  %s3871 = scalar_lea.vmem [#allocation3], 7
  %3872 = vst.msk [vmem:[%s3871] ss:$8 sm:$0x3] %vm1911, %v3863
  %3873 = vst.msk [vmem:[%s3871] ss:$8 sm:$0x0] %vm1911, %v3863
  %s3874 = scalar_lea.vmem [#allocation3], 39
  %3875 = vst.msk [vmem:[%s3874] ss:$8 sm:$0x3] %vm1911, %v3864
  %3876 = vst.msk [vmem:[%s3874] ss:$8 sm:$0x0] %vm1911, %v3864
  %s3877 = scalar_lea.vmem [#allocation3], 71
  %3878 = vst.msk [vmem:[%s3877] ss:$8 sm:$0x3] %vm1911, %v3865
  %3879 = vst.msk [vmem:[%s3877] ss:$8 sm:$0x0] %vm1911, %v3865
  %s3880 = scalar_lea.vmem [#allocation3], 103
  %3881 = vst.msk [vmem:[%s3880] ss:$8 sm:$0x3] %vm1911, %v3866
  %3882 = vst.msk [vmem:[%s3880] ss:$8 sm:$0x0] %vm1911, %v3866
  %s3883 = scalar_lea.vmem [#allocation3], 135
  %3884 = vst.msk [vmem:[%s3883] ss:$8 sm:$0x3] %vm1911, %v3867
  %3885 = vst.msk [vmem:[%s3883] ss:$8 sm:$0x0] %vm1911, %v3867
  %s3886 = scalar_lea.vmem [#allocation3], 167
  %3887 = vst.msk [vmem:[%s3886] ss:$8 sm:$0x3] %vm1911, %v3868
  %3888 = vst.msk [vmem:[%s3886] ss:$8 sm:$0x0] %vm1911, %v3868
  %s3889 = scalar_lea.vmem [#allocation3], 199
  %3890 = vst.msk [vmem:[%s3889] ss:$8 sm:$0x3] %vm1911, %v3869
  %3891 = vst.msk [vmem:[%s3889] ss:$8 sm:$0x0] %vm1911, %v3869
  %s3892 = scalar_lea.vmem [#allocation3], 231
  %3893 = vst.msk [vmem:[%s3892] ss:$8 sm:$0x3] %vm1911, %v3870
  %3894 = vst.msk [vmem:[%s3892] ss:$8 sm:$0x0] %vm1911, %v3870
  %s3895 = scalar_lea.vmem [#allocation2], 32
  %v3896 = vld [vmem:[%s3895] ss:$8 sm:$0x3]
  %s3897 = scalar_lea.vmem [#allocation2], 80
  %v3898 = vld [vmem:[%s3897] ss:$8 sm:$0x3]
  %s3899 = scalar_lea.vmem [#allocation2], 128
  %v3900 = vld [vmem:[%s3899] ss:$8 sm:$0x3]
  %s3901 = scalar_lea.vmem [#allocation2], 176
  %v3902 = vld [vmem:[%s3901] ss:$8 sm:$0x3]
  %s3903 = scalar_lea.vmem [#allocation2], 224
  %v3904 = vld [vmem:[%s3903] ss:$8 sm:$0x3]
  %s3905 = scalar_lea.vmem [#allocation2], 272
  %v3906 = vld [vmem:[%s3905] ss:$8 sm:$0x3]
  %s3907 = scalar_lea.vmem [#allocation2], 320
  %v3908 = vld [vmem:[%s3907] ss:$8 sm:$0x3]
  %s3909 = scalar_lea.vmem [#allocation2], 368
  %v3910 = vld [vmem:[%s3909] ss:$8 sm:$0x3]
  %s3911 = scalar_lea.vmem [#allocation2], 33
  %v3912 = vld [vmem:[%s3911] ss:$8 sm:$0x3]
  %s3913 = scalar_lea.vmem [#allocation2], 81
  %v3914 = vld [vmem:[%s3913] ss:$8 sm:$0x3]
  %s3915 = scalar_lea.vmem [#allocation2], 129
  %v3916 = vld [vmem:[%s3915] ss:$8 sm:$0x3]
  %s3917 = scalar_lea.vmem [#allocation2], 177
  %v3918 = vld [vmem:[%s3917] ss:$8 sm:$0x3]
  %s3919 = scalar_lea.vmem [#allocation2], 225
  %v3920 = vld [vmem:[%s3919] ss:$8 sm:$0x3]
  %s3921 = scalar_lea.vmem [#allocation2], 273
  %v3922 = vld [vmem:[%s3921] ss:$8 sm:$0x3]
  %s3923 = scalar_lea.vmem [#allocation2], 321
  %v3924 = vld [vmem:[%s3923] ss:$8 sm:$0x3]
  %s3925 = scalar_lea.vmem [#allocation2], 369
  %v3926 = vld [vmem:[%s3925] ss:$8 sm:$0x3]
  %v3927 = vmax.f32 %v3896, %v3912
  %v3928 = vmax.f32 %v3898, %v3914
  %v3929 = vmax.f32 %v3900, %v3916
  %v3930 = vmax.f32 %v3902, %v3918
  %v3931 = vmax.f32 %v3904, %v3920
  %v3932 = vmax.f32 %v3906, %v3922
  %v3933 = vmax.f32 %v3908, %v3924
  %v3934 = vmax.f32 %v3910, %v3926
  %v3943 = vcombine.low %v3927, %v3928
  %v3944 = vcombine.low %v3929, %v3930
  %v3945 = vcombine.low %v3931, %v3932
  %v3946 = vcombine.low %v3933, %v3934
  %v3948 = vunpack.c.l.s4 1966171168
  %v3949 = vunpack.c.0.s8 %v3948
  %v3950 = vlaneseq
  %v3951 = vshrl.u32 %v3950, 7
  %v3952 = vsub.s32 %v3949, %v3951
  %v3953 = vrot.slane %v3943, %v3952
  %v3955 = vunpack.c.l.s4 1966171168
  %v3956 = vunpack.c.0.s8 %v3955
  %v3957 = vlaneseq
  %v3958 = vshrl.u32 %v3957, 7
  %v3959 = vsub.s32 %v3956, %v3958
  %v3960 = vrot.slane %v3944, %v3959
  %v3962 = vunpack.c.l.s4 1966171168
  %v3963 = vunpack.c.0.s8 %v3962
  %v3964 = vlaneseq
  %v3965 = vshrl.u32 %v3964, 7
  %v3966 = vsub.s32 %v3963, %v3965
  %v3967 = vrot.slane %v3945, %v3966
  %v3969 = vunpack.c.l.s4 1966171168
  %v3970 = vunpack.c.0.s8 %v3969
  %v3971 = vlaneseq
  %v3972 = vshrl.u32 %v3971, 7
  %v3973 = vsub.s32 %v3970, %v3972
  %v3974 = vrot.slane %v3946, %v3973
  %v3975 = vcombine.low %v3953, %v3960
  %v3976 = vcombine.high %v3953, %v3960
  %v3977 = vcombine.low %v3967, %v3974
  %v3978 = vcombine.high %v3967, %v3974
  %v3980 = vunpack.c.l.s4 1966171168
  %v3981 = vunpack.c.0.s8 %v3980
  %v3982 = vlaneseq
  %v3983 = vshrl.u32 %v3982, 7
  %v3984 = vsub.s32 %v3981, %v3983
  %v3985 = vrot.slane %v3975, %v3984
  %v3987 = vunpack.c.l.s4 1966171168
  %v3988 = vunpack.c.0.s8 %v3987
  %v3989 = vlaneseq
  %v3990 = vshrl.u32 %v3989, 7
  %v3991 = vsub.s32 %v3988, %v3990
  %v3992 = vrot.slane %v3976, %v3991
  %v3994 = vunpack.c.l.s4 1966171168
  %v3995 = vunpack.c.0.s8 %v3994
  %v3996 = vlaneseq
  %v3997 = vshrl.u32 %v3996, 7
  %v3998 = vsub.s32 %v3995, %v3997
  %v3999 = vrot.slane %v3977, %v3998
  %v4001 = vunpack.c.l.s4 1966171168
  %v4002 = vunpack.c.0.s8 %v4001
  %v4003 = vlaneseq
  %v4004 = vshrl.u32 %v4003, 7
  %v4005 = vsub.s32 %v4002, %v4004
  %v4006 = vrot.slane %v3978, %v4005
  %v4007 = vcombine.low %v3985, %v3999
  %v4008 = vcombine.low %v3992, %v4006
  %v4010 = vsel %vm1569, %v4008, 0
  %4012 = vmatprep.subr.mxu0 %v1648
  %4013 = vmatpush1.msra.mxu0 %v1647
  %4014 = vmatprep.subr.mxu0 %v1646
  %4015 = vmatpush1.msra.mxu0 %v1645
  %4016 = vmatprep.subr.mxu0 %v1644
  %4017 = vmatpush1.msra.mxu0 %v1643
  %4018 = vmatprep.subr.mxu0 %v1642
  %4019 = vmatpush1.msra.mxu0 %v1641
  %4020 = vmatprep.subr.mxu0 %v1640
  %4021 = vmatpush1.msra.mxu0 %v1639
  %4022 = vmatprep.subr.mxu0 %v1638
  %4023 = vmatpush1.msra.mxu0 %v1637
  %4024 = vmatprep.subr.mxu0 %v1636
  %4025 = vmatpush1.msra.mxu0 %v1635
  %4026 = vmatprep.subr.mxu0 %v1634
  %4027 = vmatpush1.msra.mxu0 %v1633
  %4028 = vmatprep.subr.mxu0 %v1632
  %4029 = vmatpush1.msra.mxu0 %v1631
  %4030 = vmatprep.subr.mxu0 %v1630
  %4031 = vmatpush1.msra.mxu0 %v1629
  %4032 = vmatprep.subr.mxu0 %v1628
  %4033 = vmatpush1.msra.mxu0 %v1627
  %4034 = vmatprep.subr.mxu0 %v1626
  %4035 = vmatpush1.msra.mxu0 %v1625
  %4036 = vmatprep.subr.mxu0 %v1624
  %4037 = vmatpush1.msra.mxu0 %v1623
  %4038 = vmatprep.subr.mxu0 %v1622
  %4039 = vmatpush1.msra.mxu0 %v1621
  %4040 = vmatprep.subr.mxu0 %v1620
  %4041 = vmatpush1.msra.mxu0 %v1619
  %4042 = vmatprep.subr.mxu0 %v1618
  %4043 = vmatpush1.msra.mxu0 %v1617
  %4044 = vmatprep.subr.mxu0 0.0
  %4045 = vmatpush2.msra.mxu0 0.0
  %4046 = vmatprep.subr.mxu0 0.0
  %4047 = vmatpush2.msra.mxu0 0.0
  %4048 = vmatprep.subr.mxu0 0.0
  %4049 = vmatpush2.msra.mxu0 0.0
  %4050 = vmatprep.subr.mxu0 0.0
  %4051 = vmatpush2.msra.mxu0 0.0
  %4052 = vmatprep.subr.mxu0 0.0
  %4053 = vmatpush2.msra.mxu0 0.0
  %4054 = vmatprep.subr.mxu0 0.0
  %4055 = vmatpush2.msra.mxu0 0.0
  %4056 = vmatprep.subr.mxu0 0.0
  %4057 = vmatpush2.msra.mxu0 0.0
  %4058 = vmatprep.subr.mxu0 0.0
  %4059 = vmatpush2.msra.mxu0 0.0
  %4060 = vmatprep.subr.mxu0 0.0
  %4061 = vmatpush2.msra.mxu0 0.0
  %4062 = vmatprep.subr.mxu0 0.0
  %4063 = vmatpush2.msra.mxu0 0.0
  %4064 = vmatprep.subr.mxu0 0.0
  %4065 = vmatpush2.msra.mxu0 0.0
  %4066 = vmatprep.subr.mxu0 0.0
  %4067 = vmatpush2.msra.mxu0 0.0
  %4068 = vmatprep.subr.mxu0 0.0
  %4069 = vmatpush2.msra.mxu0 0.0
  %4070 = vmatprep.subr.mxu0 0.0
  %4071 = vmatpush2.msra.mxu0 0.0
  %4072 = vmatprep.subr.mxu0 %v1652
  %4073 = vmatpush2.msra.mxu0 %v1651
  %4074 = vmatprep.subr.mxu0 %v1650
  %4075 = vmatpush2.msra.mxu0 %v1649
  %4076 = vmatprep.mubr.f32.mxu0 %v4010
  %4077 = vmatmul.mubr.f32.gmra.mxu0 %v4007
  %v4078 = vpop.f32.mrf.mxu0
  %v4079 = vadd.f32 0.0, %v4078
  %v4080 = vpop.f32.mrf.mxu0
  %v4081 = vadd.f32 0.0, %v4080
  %4082 = vdwg.mxu0
  %v4085 = vcombine.low %v4079, %v4081
  %v4086 = vcombine.high %v4079, %v4081
  %v4088 = vunpack.c.l.s4 1966171168
  %v4089 = vunpack.c.0.s8 %v4088
  %v4090 = vlaneseq
  %v4091 = vshrl.u32 %v4090, 7
  %v4092 = vsub.s32 %v4089, %v4091
  %v4093 = vrot.slane %v4085, %v4092
  %v4095 = vunpack.c.l.s4 1966171168
  %v4096 = vunpack.c.0.s8 %v4095
  %v4097 = vlaneseq
  %v4098 = vshrl.u32 %v4097, 7
  %v4099 = vsub.s32 %v4096, %v4098
  %v4100 = vrot.slane %v4086, %v4099
  %v4101 = vcombine.high %v4093, %v4093
  %v4102 = vcombine.high %v4100, %v4100
  %v4104 = vunpack.c.l.s4 1966171168
  %v4105 = vunpack.c.0.s8 %v4104
  %v4106 = vlaneseq
  %v4107 = vshrl.u32 %v4106, 7
  %v4108 = vsub.s32 %v4105, %v4107
  %v4109 = vrot.slane %v4093, %v4108
  %v4111 = vunpack.c.l.s4 1966171168
  %v4112 = vunpack.c.0.s8 %v4111
  %v4113 = vlaneseq
  %v4114 = vshrl.u32 %v4113, 7
  %v4115 = vsub.s32 %v4112, %v4114
  %v4116 = vrot.slane %v4100, %v4115
  %v4118 = vunpack.c.l.s4 1966171168
  %v4119 = vunpack.c.0.s8 %v4118
  %v4120 = vlaneseq
  %v4121 = vshrl.u32 %v4120, 7
  %v4122 = vsub.s32 %v4119, %v4121
  %v4123 = vrot.slane %v4101, %v4122
  %v4125 = vunpack.c.l.s4 1966171168
  %v4126 = vunpack.c.0.s8 %v4125
  %v4127 = vlaneseq
  %v4128 = vshrl.u32 %v4127, 7
  %v4129 = vsub.s32 %v4126, %v4128
  %v4130 = vrot.slane %v4102, %v4129
  %v4131 = vcombine.high %v4109, %v4109
  %v4132 = vcombine.high %v4116, %v4116
  %v4133 = vcombine.high %v4123, %v4123
  %v4134 = vcombine.high %v4130, %v4130
  %v4143 = vmax.f32 %v3927, %v4109
  %v4144 = vmax.f32 %v3928, %v4123
  %v4145 = vmax.f32 %v3929, %v4131
  %v4146 = vmax.f32 %v3930, %v4133
  %v4147 = vmax.f32 %v3931, %v4116
  %v4148 = vmax.f32 %v3932, %v4130
  %v4149 = vmax.f32 %v3933, %v4132
  %v4150 = vmax.f32 %v3934, %v4134
  %s4151 = scalar_lea.vmem [#allocation3], 16
  %4152 = vst.msk [vmem:[%s4151] ss:$8 sm:$0x3] %vm1911, %v4143
  %4153 = vst.msk [vmem:[%s4151] ss:$8 sm:$0x0] %vm1911, %v4143
  %s4154 = scalar_lea.vmem [#allocation3], 48
  %4155 = vst.msk [vmem:[%s4154] ss:$8 sm:$0x3] %vm1911, %v4144
  %4156 = vst.msk [vmem:[%s4154] ss:$8 sm:$0x0] %vm1911, %v4144
  %s4157 = scalar_lea.vmem [#allocation3], 80
  %4158 = vst.msk [vmem:[%s4157] ss:$8 sm:$0x3] %vm1911, %v4145
  %4159 = vst.msk [vmem:[%s4157] ss:$8 sm:$0x0] %vm1911, %v4145
  %s4160 = scalar_lea.vmem [#allocation3], 112
  %4161 = vst.msk [vmem:[%s4160] ss:$8 sm:$0x3] %vm1911, %v4146
  %4162 = vst.msk [vmem:[%s4160] ss:$8 sm:$0x0] %vm1911, %v4146
  %s4163 = scalar_lea.vmem [#allocation3], 144
  %4164 = vst.msk [vmem:[%s4163] ss:$8 sm:$0x3] %vm1911, %v4147
  %4165 = vst.msk [vmem:[%s4163] ss:$8 sm:$0x0] %vm1911, %v4147
  %s4166 = scalar_lea.vmem [#allocation3], 176
  %4167 = vst.msk [vmem:[%s4166] ss:$8 sm:$0x3] %vm1911, %v4148
  %4168 = vst.msk [vmem:[%s4166] ss:$8 sm:$0x0] %vm1911, %v4148
  %s4169 = scalar_lea.vmem [#allocation3], 208
  %4170 = vst.msk [vmem:[%s4169] ss:$8 sm:$0x3] %vm1911, %v4149
  %4171 = vst.msk [vmem:[%s4169] ss:$8 sm:$0x0] %vm1911, %v4149
  %s4172 = scalar_lea.vmem [#allocation3], 240
  %4173 = vst.msk [vmem:[%s4172] ss:$8 sm:$0x3] %vm1911, %v4150
  %4174 = vst.msk [vmem:[%s4172] ss:$8 sm:$0x0] %vm1911, %v4150
  %s4175 = scalar_lea.vmem [#allocation2], 34
  %v4176 = vld [vmem:[%s4175] ss:$8 sm:$0x3]
  %s4177 = scalar_lea.vmem [#allocation2], 82
  %v4178 = vld [vmem:[%s4177] ss:$8 sm:$0x3]
  %s4179 = scalar_lea.vmem [#allocation2], 130
  %v4180 = vld [vmem:[%s4179] ss:$8 sm:$0x3]
  %s4181 = scalar_lea.vmem [#allocation2], 178
  %v4182 = vld [vmem:[%s4181] ss:$8 sm:$0x3]
  %s4183 = scalar_lea.vmem [#allocation2], 226
  %v4184 = vld [vmem:[%s4183] ss:$8 sm:$0x3]
  %s4185 = scalar_lea.vmem [#allocation2], 274
  %v4186 = vld [vmem:[%s4185] ss:$8 sm:$0x3]
  %s4187 = scalar_lea.vmem [#allocation2], 322
  %v4188 = vld [vmem:[%s4187] ss:$8 sm:$0x3]
  %s4189 = scalar_lea.vmem [#allocation2], 370
  %v4190 = vld [vmem:[%s4189] ss:$8 sm:$0x3]
  %s4191 = scalar_lea.vmem [#allocation2], 35
  %v4192 = vld [vmem:[%s4191] ss:$8 sm:$0x3]
  %s4193 = scalar_lea.vmem [#allocation2], 83
  %v4194 = vld [vmem:[%s4193] ss:$8 sm:$0x3]
  %s4195 = scalar_lea.vmem [#allocation2], 131
  %v4196 = vld [vmem:[%s4195] ss:$8 sm:$0x3]
  %s4197 = scalar_lea.vmem [#allocation2], 179
  %v4198 = vld [vmem:[%s4197] ss:$8 sm:$0x3]
  %s4199 = scalar_lea.vmem [#allocation2], 227
  %v4200 = vld [vmem:[%s4199] ss:$8 sm:$0x3]
  %s4201 = scalar_lea.vmem [#allocation2], 275
  %v4202 = vld [vmem:[%s4201] ss:$8 sm:$0x3]
  %s4203 = scalar_lea.vmem [#allocation2], 323
  %v4204 = vld [vmem:[%s4203] ss:$8 sm:$0x3]
  %s4205 = scalar_lea.vmem [#allocation2], 371
  %v4206 = vld [vmem:[%s4205] ss:$8 sm:$0x3]
  %v4207 = vmax.f32 %v4176, %v4192
  %v4208 = vmax.f32 %v4178, %v4194
  %v4209 = vmax.f32 %v4180, %v4196
  %v4210 = vmax.f32 %v4182, %v4198
  %v4211 = vmax.f32 %v4184, %v4200
  %v4212 = vmax.f32 %v4186, %v4202
  %v4213 = vmax.f32 %v4188, %v4204
  %v4214 = vmax.f32 %v4190, %v4206
  %v4223 = vcombine.low %v4207, %v4208
  %v4224 = vcombine.low %v4209, %v4210
  %v4225 = vcombine.low %v4211, %v4212
  %v4226 = vcombine.low %v4213, %v4214
  %v4228 = vunpack.c.l.s4 1966171168
  %v4229 = vunpack.c.0.s8 %v4228
  %v4230 = vlaneseq
  %v4231 = vshrl.u32 %v4230, 7
  %v4232 = vsub.s32 %v4229, %v4231
  %v4233 = vrot.slane %v4223, %v4232
  %v4235 = vunpack.c.l.s4 1966171168
  %v4236 = vunpack.c.0.s8 %v4235
  %v4237 = vlaneseq
  %v4238 = vshrl.u32 %v4237, 7
  %v4239 = vsub.s32 %v4236, %v4238
  %v4240 = vrot.slane %v4224, %v4239
  %v4242 = vunpack.c.l.s4 1966171168
  %v4243 = vunpack.c.0.s8 %v4242
  %v4244 = vlaneseq
  %v4245 = vshrl.u32 %v4244, 7
  %v4246 = vsub.s32 %v4243, %v4245
  %v4247 = vrot.slane %v4225, %v4246
  %v4249 = vunpack.c.l.s4 1966171168
  %v4250 = vunpack.c.0.s8 %v4249
  %v4251 = vlaneseq
  %v4252 = vshrl.u32 %v4251, 7
  %v4253 = vsub.s32 %v4250, %v4252
  %v4254 = vrot.slane %v4226, %v4253
  %v4255 = vcombine.low %v4233, %v4240
  %v4256 = vcombine.high %v4233, %v4240
  %v4257 = vcombine.low %v4247, %v4254
  %v4258 = vcombine.high %v4247, %v4254
  %v4260 = vunpack.c.l.s4 1966171168
  %v4261 = vunpack.c.0.s8 %v4260
  %v4262 = vlaneseq
  %v4263 = vshrl.u32 %v4262, 7
  %v4264 = vsub.s32 %v4261, %v4263
  %v4265 = vrot.slane %v4255, %v4264
  %v4267 = vunpack.c.l.s4 1966171168
  %v4268 = vunpack.c.0.s8 %v4267
  %v4269 = vlaneseq
  %v4270 = vshrl.u32 %v4269, 7
  %v4271 = vsub.s32 %v4268, %v4270
  %v4272 = vrot.slane %v4256, %v4271
  %v4274 = vunpack.c.l.s4 1966171168
  %v4275 = vunpack.c.0.s8 %v4274
  %v4276 = vlaneseq
  %v4277 = vshrl.u32 %v4276, 7
  %v4278 = vsub.s32 %v4275, %v4277
  %v4279 = vrot.slane %v4257, %v4278
  %v4281 = vunpack.c.l.s4 1966171168
  %v4282 = vunpack.c.0.s8 %v4281
  %v4283 = vlaneseq
  %v4284 = vshrl.u32 %v4283, 7
  %v4285 = vsub.s32 %v4282, %v4284
  %v4286 = vrot.slane %v4258, %v4285
  %v4287 = vcombine.low %v4265, %v4279
  %v4288 = vcombine.low %v4272, %v4286
  %v4290 = vsel %vm1569, %v4288, 0
  %4292 = vmatprep.subr.mxu0 %v1648
  %4293 = vmatpush1.msra.mxu0 %v1647
  %4294 = vmatprep.subr.mxu0 %v1646
  %4295 = vmatpush1.msra.mxu0 %v1645
  %4296 = vmatprep.subr.mxu0 %v1644
  %4297 = vmatpush1.msra.mxu0 %v1643
  %4298 = vmatprep.subr.mxu0 %v1642
  %4299 = vmatpush1.msra.mxu0 %v1641
  %4300 = vmatprep.subr.mxu0 %v1640
  %4301 = vmatpush1.msra.mxu0 %v1639
  %4302 = vmatprep.subr.mxu0 %v1638
  %4303 = vmatpush1.msra.mxu0 %v1637
  %4304 = vmatprep.subr.mxu0 %v1636
  %4305 = vmatpush1.msra.mxu0 %v1635
  %4306 = vmatprep.subr.mxu0 %v1634
  %4307 = vmatpush1.msra.mxu0 %v1633
  %4308 = vmatprep.subr.mxu0 %v1632
  %4309 = vmatpush1.msra.mxu0 %v1631
  %4310 = vmatprep.subr.mxu0 %v1630
  %4311 = vmatpush1.msra.mxu0 %v1629
  %4312 = vmatprep.subr.mxu0 %v1628
  %4313 = vmatpush1.msra.mxu0 %v1627
  %4314 = vmatprep.subr.mxu0 %v1626
  %4315 = vmatpush1.msra.mxu0 %v1625
  %4316 = vmatprep.subr.mxu0 %v1624
  %4317 = vmatpush1.msra.mxu0 %v1623
  %4318 = vmatprep.subr.mxu0 %v1622
  %4319 = vmatpush1.msra.mxu0 %v1621
  %4320 = vmatprep.subr.mxu0 %v1620
  %4321 = vmatpush1.msra.mxu0 %v1619
  %4322 = vmatprep.subr.mxu0 %v1618
  %4323 = vmatpush1.msra.mxu0 %v1617
  %4324 = vmatprep.subr.mxu0 0.0
  %4325 = vmatpush2.msra.mxu0 0.0
  %4326 = vmatprep.subr.mxu0 0.0
  %4327 = vmatpush2.msra.mxu0 0.0
  %4328 = vmatprep.subr.mxu0 0.0
  %4329 = vmatpush2.msra.mxu0 0.0
  %4330 = vmatprep.subr.mxu0 0.0
  %4331 = vmatpush2.msra.mxu0 0.0
  %4332 = vmatprep.subr.mxu0 0.0
  %4333 = vmatpush2.msra.mxu0 0.0
  %4334 = vmatprep.subr.mxu0 0.0
  %4335 = vmatpush2.msra.mxu0 0.0
  %4336 = vmatprep.subr.mxu0 0.0
  %4337 = vmatpush2.msra.mxu0 0.0
  %4338 = vmatprep.subr.mxu0 0.0
  %4339 = vmatpush2.msra.mxu0 0.0
  %4340 = vmatprep.subr.mxu0 0.0
  %4341 = vmatpush2.msra.mxu0 0.0
  %4342 = vmatprep.subr.mxu0 0.0
  %4343 = vmatpush2.msra.mxu0 0.0
  %4344 = vmatprep.subr.mxu0 0.0
  %4345 = vmatpush2.msra.mxu0 0.0
  %4346 = vmatprep.subr.mxu0 0.0
  %4347 = vmatpush2.msra.mxu0 0.0
  %4348 = vmatprep.subr.mxu0 0.0
  %4349 = vmatpush2.msra.mxu0 0.0
  %4350 = vmatprep.subr.mxu0 0.0
  %4351 = vmatpush2.msra.mxu0 0.0
  %4352 = vmatprep.subr.mxu0 %v1652
  %4353 = vmatpush2.msra.mxu0 %v1651
  %4354 = vmatprep.subr.mxu0 %v1650
  %4355 = vmatpush2.msra.mxu0 %v1649
  %4356 = vmatprep.mubr.f32.mxu0 %v4290
  %4357 = vmatmul.mubr.f32.gmra.mxu0 %v4287
  %v4358 = vpop.f32.mrf.mxu0
  %v4359 = vadd.f32 0.0, %v4358
  %v4360 = vpop.f32.mrf.mxu0
  %v4361 = vadd.f32 0.0, %v4360
  %4362 = vdwg.mxu0
  %v4365 = vcombine.low %v4359, %v4361
  %v4366 = vcombine.high %v4359, %v4361
  %v4368 = vunpack.c.l.s4 1966171168
  %v4369 = vunpack.c.0.s8 %v4368
  %v4370 = vlaneseq
  %v4371 = vshrl.u32 %v4370, 7
  %v4372 = vsub.s32 %v4369, %v4371
  %v4373 = vrot.slane %v4365, %v4372
  %v4375 = vunpack.c.l.s4 1966171168
  %v4376 = vunpack.c.0.s8 %v4375
  %v4377 = vlaneseq
  %v4378 = vshrl.u32 %v4377, 7
  %v4379 = vsub.s32 %v4376, %v4378
  %v4380 = vrot.slane %v4366, %v4379
  %v4381 = vcombine.high %v4373, %v4373
  %v4382 = vcombine.high %v4380, %v4380
  %v4384 = vunpack.c.l.s4 1966171168
  %v4385 = vunpack.c.0.s8 %v4384
  %v4386 = vlaneseq
  %v4387 = vshrl.u32 %v4386, 7
  %v4388 = vsub.s32 %v4385, %v4387
  %v4389 = vrot.slane %v4373, %v4388
  %v4391 = vunpack.c.l.s4 1966171168
  %v4392 = vunpack.c.0.s8 %v4391
  %v4393 = vlaneseq
  %v4394 = vshrl.u32 %v4393, 7
  %v4395 = vsub.s32 %v4392, %v4394
  %v4396 = vrot.slane %v4380, %v4395
  %v4398 = vunpack.c.l.s4 1966171168
  %v4399 = vunpack.c.0.s8 %v4398
  %v4400 = vlaneseq
  %v4401 = vshrl.u32 %v4400, 7
  %v4402 = vsub.s32 %v4399, %v4401
  %v4403 = vrot.slane %v4381, %v4402
  %v4405 = vunpack.c.l.s4 1966171168
  %v4406 = vunpack.c.0.s8 %v4405
  %v4407 = vlaneseq
  %v4408 = vshrl.u32 %v4407, 7
  %v4409 = vsub.s32 %v4406, %v4408
  %v4410 = vrot.slane %v4382, %v4409
  %v4411 = vcombine.high %v4389, %v4389
  %v4412 = vcombine.high %v4396, %v4396
  %v4413 = vcombine.high %v4403, %v4403
  %v4414 = vcombine.high %v4410, %v4410
  %v4423 = vmax.f32 %v4207, %v4389
  %v4424 = vmax.f32 %v4208, %v4403
  %v4425 = vmax.f32 %v4209, %v4411
  %v4426 = vmax.f32 %v4210, %v4413
  %v4427 = vmax.f32 %v4211, %v4396
  %v4428 = vmax.f32 %v4212, %v4410
  %v4429 = vmax.f32 %v4213, %v4412
  %v4430 = vmax.f32 %v4214, %v4414
  %s4431 = scalar_lea.vmem [#allocation3], 17
  %4432 = vst.msk [vmem:[%s4431] ss:$8 sm:$0x3] %vm1911, %v4423
  %4433 = vst.msk [vmem:[%s4431] ss:$8 sm:$0x0] %vm1911, %v4423
  %s4434 = scalar_lea.vmem [#allocation3], 49
  %4435 = vst.msk [vmem:[%s4434] ss:$8 sm:$0x3] %vm1911, %v4424
  %4436 = vst.msk [vmem:[%s4434] ss:$8 sm:$0x0] %vm1911, %v4424
  %s4437 = scalar_lea.vmem [#allocation3], 81
  %4438 = vst.msk [vmem:[%s4437] ss:$8 sm:$0x3] %vm1911, %v4425
  %4439 = vst.msk [vmem:[%s4437] ss:$8 sm:$0x0] %vm1911, %v4425
  %s4440 = scalar_lea.vmem [#allocation3], 113
  %4441 = vst.msk [vmem:[%s4440] ss:$8 sm:$0x3] %vm1911, %v4426
  %4442 = vst.msk [vmem:[%s4440] ss:$8 sm:$0x0] %vm1911, %v4426
  %s4443 = scalar_lea.vmem [#allocation3], 145
  %4444 = vst.msk [vmem:[%s4443] ss:$8 sm:$0x3] %vm1911, %v4427
  %4445 = vst.msk [vmem:[%s4443] ss:$8 sm:$0x0] %vm1911, %v4427
  %s4446 = scalar_lea.vmem [#allocation3], 177
  %4447 = vst.msk [vmem:[%s4446] ss:$8 sm:$0x3] %vm1911, %v4428
  %4448 = vst.msk [vmem:[%s4446] ss:$8 sm:$0x0] %vm1911, %v4428
  %s4449 = scalar_lea.vmem [#allocation3], 209
  %4450 = vst.msk [vmem:[%s4449] ss:$8 sm:$0x3] %vm1911, %v4429
  %4451 = vst.msk [vmem:[%s4449] ss:$8 sm:$0x0] %vm1911, %v4429
  %s4452 = scalar_lea.vmem [#allocation3], 241
  %4453 = vst.msk [vmem:[%s4452] ss:$8 sm:$0x3] %vm1911, %v4430
  %4454 = vst.msk [vmem:[%s4452] ss:$8 sm:$0x0] %vm1911, %v4430
  %s4455 = scalar_lea.vmem [#allocation2], 36
  %v4456 = vld [vmem:[%s4455] ss:$8 sm:$0x3]
  %s4457 = scalar_lea.vmem [#allocation2], 84
  %v4458 = vld [vmem:[%s4457] ss:$8 sm:$0x3]
  %s4459 = scalar_lea.vmem [#allocation2], 132
  %v4460 = vld [vmem:[%s4459] ss:$8 sm:$0x3]
  %s4461 = scalar_lea.vmem [#allocation2], 180
  %v4462 = vld [vmem:[%s4461] ss:$8 sm:$0x3]
  %s4463 = scalar_lea.vmem [#allocation2], 228
  %v4464 = vld [vmem:[%s4463] ss:$8 sm:$0x3]
  %s4465 = scalar_lea.vmem [#allocation2], 276
  %v4466 = vld [vmem:[%s4465] ss:$8 sm:$0x3]
  %s4467 = scalar_lea.vmem [#allocation2], 324
  %v4468 = vld [vmem:[%s4467] ss:$8 sm:$0x3]
  %s4469 = scalar_lea.vmem [#allocation2], 372
  %v4470 = vld [vmem:[%s4469] ss:$8 sm:$0x3]
  %s4471 = scalar_lea.vmem [#allocation2], 37
  %v4472 = vld [vmem:[%s4471] ss:$8 sm:$0x3]
  %s4473 = scalar_lea.vmem [#allocation2], 85
  %v4474 = vld [vmem:[%s4473] ss:$8 sm:$0x3]
  %s4475 = scalar_lea.vmem [#allocation2], 133
  %v4476 = vld [vmem:[%s4475] ss:$8 sm:$0x3]
  %s4477 = scalar_lea.vmem [#allocation2], 181
  %v4478 = vld [vmem:[%s4477] ss:$8 sm:$0x3]
  %s4479 = scalar_lea.vmem [#allocation2], 229
  %v4480 = vld [vmem:[%s4479] ss:$8 sm:$0x3]
  %s4481 = scalar_lea.vmem [#allocation2], 277
  %v4482 = vld [vmem:[%s4481] ss:$8 sm:$0x3]
  %s4483 = scalar_lea.vmem [#allocation2], 325
  %v4484 = vld [vmem:[%s4483] ss:$8 sm:$0x3]
  %s4485 = scalar_lea.vmem [#allocation2], 373
  %v4486 = vld [vmem:[%s4485] ss:$8 sm:$0x3]
  %v4487 = vmax.f32 %v4456, %v4472
  %v4488 = vmax.f32 %v4458, %v4474
  %v4489 = vmax.f32 %v4460, %v4476
  %v4490 = vmax.f32 %v4462, %v4478
  %v4491 = vmax.f32 %v4464, %v4480
  %v4492 = vmax.f32 %v4466, %v4482
  %v4493 = vmax.f32 %v4468, %v4484
  %v4494 = vmax.f32 %v4470, %v4486
  %v4503 = vcombine.low %v4487, %v4488
  %v4504 = vcombine.low %v4489, %v4490
  %v4505 = vcombine.low %v4491, %v4492
  %v4506 = vcombine.low %v4493, %v4494
  %v4508 = vunpack.c.l.s4 1966171168
  %v4509 = vunpack.c.0.s8 %v4508
  %v4510 = vlaneseq
  %v4511 = vshrl.u32 %v4510, 7
  %v4512 = vsub.s32 %v4509, %v4511
  %v4513 = vrot.slane %v4503, %v4512
  %v4515 = vunpack.c.l.s4 1966171168
  %v4516 = vunpack.c.0.s8 %v4515
  %v4517 = vlaneseq
  %v4518 = vshrl.u32 %v4517, 7
  %v4519 = vsub.s32 %v4516, %v4518
  %v4520 = vrot.slane %v4504, %v4519
  %v4522 = vunpack.c.l.s4 1966171168
  %v4523 = vunpack.c.0.s8 %v4522
  %v4524 = vlaneseq
  %v4525 = vshrl.u32 %v4524, 7
  %v4526 = vsub.s32 %v4523, %v4525
  %v4527 = vrot.slane %v4505, %v4526
  %v4529 = vunpack.c.l.s4 1966171168
  %v4530 = vunpack.c.0.s8 %v4529
  %v4531 = vlaneseq
  %v4532 = vshrl.u32 %v4531, 7
  %v4533 = vsub.s32 %v4530, %v4532
  %v4534 = vrot.slane %v4506, %v4533
  %v4535 = vcombine.low %v4513, %v4520
  %v4536 = vcombine.high %v4513, %v4520
  %v4537 = vcombine.low %v4527, %v4534
  %v4538 = vcombine.high %v4527, %v4534
  %v4540 = vunpack.c.l.s4 1966171168
  %v4541 = vunpack.c.0.s8 %v4540
  %v4542 = vlaneseq
  %v4543 = vshrl.u32 %v4542, 7
  %v4544 = vsub.s32 %v4541, %v4543
  %v4545 = vrot.slane %v4535, %v4544
  %v4547 = vunpack.c.l.s4 1966171168
  %v4548 = vunpack.c.0.s8 %v4547
  %v4549 = vlaneseq
  %v4550 = vshrl.u32 %v4549, 7
  %v4551 = vsub.s32 %v4548, %v4550
  %v4552 = vrot.slane %v4536, %v4551
  %v4554 = vunpack.c.l.s4 1966171168
  %v4555 = vunpack.c.0.s8 %v4554
  %v4556 = vlaneseq
  %v4557 = vshrl.u32 %v4556, 7
  %v4558 = vsub.s32 %v4555, %v4557
  %v4559 = vrot.slane %v4537, %v4558
  %v4561 = vunpack.c.l.s4 1966171168
  %v4562 = vunpack.c.0.s8 %v4561
  %v4563 = vlaneseq
  %v4564 = vshrl.u32 %v4563, 7
  %v4565 = vsub.s32 %v4562, %v4564
  %v4566 = vrot.slane %v4538, %v4565
  %v4567 = vcombine.low %v4545, %v4559
  %v4568 = vcombine.low %v4552, %v4566
  %v4570 = vsel %vm1569, %v4568, 0
  %4572 = vmatprep.subr.mxu0 %v1648
  %4573 = vmatpush1.msra.mxu0 %v1647
  %4574 = vmatprep.subr.mxu0 %v1646
  %4575 = vmatpush1.msra.mxu0 %v1645
  %4576 = vmatprep.subr.mxu0 %v1644
  %4577 = vmatpush1.msra.mxu0 %v1643
  %4578 = vmatprep.subr.mxu0 %v1642
  %4579 = vmatpush1.msra.mxu0 %v1641
  %4580 = vmatprep.subr.mxu0 %v1640
  %4581 = vmatpush1.msra.mxu0 %v1639
  %4582 = vmatprep.subr.mxu0 %v1638
  %4583 = vmatpush1.msra.mxu0 %v1637
  %4584 = vmatprep.subr.mxu0 %v1636
  %4585 = vmatpush1.msra.mxu0 %v1635
  %4586 = vmatprep.subr.mxu0 %v1634
  %4587 = vmatpush1.msra.mxu0 %v1633
  %4588 = vmatprep.subr.mxu0 %v1632
  %4589 = vmatpush1.msra.mxu0 %v1631
  %4590 = vmatprep.subr.mxu0 %v1630
  %4591 = vmatpush1.msra.mxu0 %v1629
  %4592 = vmatprep.subr.mxu0 %v1628
  %4593 = vmatpush1.msra.mxu0 %v1627
  %4594 = vmatprep.subr.mxu0 %v1626
  %4595 = vmatpush1.msra.mxu0 %v1625
  %4596 = vmatprep.subr.mxu0 %v1624
  %4597 = vmatpush1.msra.mxu0 %v1623
  %4598 = vmatprep.subr.mxu0 %v1622
  %4599 = vmatpush1.msra.mxu0 %v1621
  %4600 = vmatprep.subr.mxu0 %v1620
  %4601 = vmatpush1.msra.mxu0 %v1619
  %4602 = vmatprep.subr.mxu0 %v1618
  %4603 = vmatpush1.msra.mxu0 %v1617
  %4604 = vmatprep.subr.mxu0 0.0
  %4605 = vmatpush2.msra.mxu0 0.0
  %4606 = vmatprep.subr.mxu0 0.0
  %4607 = vmatpush2.msra.mxu0 0.0
  %4608 = vmatprep.subr.mxu0 0.0
  %4609 = vmatpush2.msra.mxu0 0.0
  %4610 = vmatprep.subr.mxu0 0.0
  %4611 = vmatpush2.msra.mxu0 0.0
  %4612 = vmatprep.subr.mxu0 0.0
  %4613 = vmatpush2.msra.mxu0 0.0
  %4614 = vmatprep.subr.mxu0 0.0
  %4615 = vmatpush2.msra.mxu0 0.0
  %4616 = vmatprep.subr.mxu0 0.0
  %4617 = vmatpush2.msra.mxu0 0.0
  %4618 = vmatprep.subr.mxu0 0.0
  %4619 = vmatpush2.msra.mxu0 0.0
  %4620 = vmatprep.subr.mxu0 0.0
  %4621 = vmatpush2.msra.mxu0 0.0
  %4622 = vmatprep.subr.mxu0 0.0
  %4623 = vmatpush2.msra.mxu0 0.0
  %4624 = vmatprep.subr.mxu0 0.0
  %4625 = vmatpush2.msra.mxu0 0.0
  %4626 = vmatprep.subr.mxu0 0.0
  %4627 = vmatpush2.msra.mxu0 0.0
  %4628 = vmatprep.subr.mxu0 0.0
  %4629 = vmatpush2.msra.mxu0 0.0
  %4630 = vmatprep.subr.mxu0 0.0
  %4631 = vmatpush2.msra.mxu0 0.0
  %4632 = vmatprep.subr.mxu0 %v1652
  %4633 = vmatpush2.msra.mxu0 %v1651
  %4634 = vmatprep.subr.mxu0 %v1650
  %4635 = vmatpush2.msra.mxu0 %v1649
  %4636 = vmatprep.mubr.f32.mxu0 %v4570
  %4637 = vmatmul.mubr.f32.gmra.mxu0 %v4567
  %v4638 = vpop.f32.mrf.mxu0
  %v4639 = vadd.f32 0.0, %v4638
  %v4640 = vpop.f32.mrf.mxu0
  %v4641 = vadd.f32 0.0, %v4640
  %4642 = vdwg.mxu0
  %v4645 = vcombine.low %v4639, %v4641
  %v4646 = vcombine.high %v4639, %v4641
  %v4648 = vunpack.c.l.s4 1966171168
  %v4649 = vunpack.c.0.s8 %v4648
  %v4650 = vlaneseq
  %v4651 = vshrl.u32 %v4650, 7
  %v4652 = vsub.s32 %v4649, %v4651
  %v4653 = vrot.slane %v4645, %v4652
  %v4655 = vunpack.c.l.s4 1966171168
  %v4656 = vunpack.c.0.s8 %v4655
  %v4657 = vlaneseq
  %v4658 = vshrl.u32 %v4657, 7
  %v4659 = vsub.s32 %v4656, %v4658
  %v4660 = vrot.slane %v4646, %v4659
  %v4661 = vcombine.high %v4653, %v4653
  %v4662 = vcombine.high %v4660, %v4660
  %v4664 = vunpack.c.l.s4 1966171168
  %v4665 = vunpack.c.0.s8 %v4664
  %v4666 = vlaneseq
  %v4667 = vshrl.u32 %v4666, 7
  %v4668 = vsub.s32 %v4665, %v4667
  %v4669 = vrot.slane %v4653, %v4668
  %v4671 = vunpack.c.l.s4 1966171168
  %v4672 = vunpack.c.0.s8 %v4671
  %v4673 = vlaneseq
  %v4674 = vshrl.u32 %v4673, 7
  %v4675 = vsub.s32 %v4672, %v4674
  %v4676 = vrot.slane %v4660, %v4675
  %v4678 = vunpack.c.l.s4 1966171168
  %v4679 = vunpack.c.0.s8 %v4678
  %v4680 = vlaneseq
  %v4681 = vshrl.u32 %v4680, 7
  %v4682 = vsub.s32 %v4679, %v4681
  %v4683 = vrot.slane %v4661, %v4682
  %v4685 = vunpack.c.l.s4 1966171168
  %v4686 = vunpack.c.0.s8 %v4685
  %v4687 = vlaneseq
  %v4688 = vshrl.u32 %v4687, 7
  %v4689 = vsub.s32 %v4686, %v4688
  %v4690 = vrot.slane %v4662, %v4689
  %v4691 = vcombine.high %v4669, %v4669
  %v4692 = vcombine.high %v4676, %v4676
  %v4693 = vcombine.high %v4683, %v4683
  %v4694 = vcombine.high %v4690, %v4690
  %v4703 = vmax.f32 %v4487, %v4669
  %v4704 = vmax.f32 %v4488, %v4683
  %v4705 = vmax.f32 %v4489, %v4691
  %v4706 = vmax.f32 %v4490, %v4693
  %v4707 = vmax.f32 %v4491, %v4676
  %v4708 = vmax.f32 %v4492, %v4690
  %v4709 = vmax.f32 %v4493, %v4692
  %v4710 = vmax.f32 %v4494, %v4694
  %s4711 = scalar_lea.vmem [#allocation3], 18
  %4712 = vst.msk [vmem:[%s4711] ss:$8 sm:$0x3] %vm1911, %v4703
  %4713 = vst.msk [vmem:[%s4711] ss:$8 sm:$0x0] %vm1911, %v4703
  %s4714 = scalar_lea.vmem [#allocation3], 50
  %4715 = vst.msk [vmem:[%s4714] ss:$8 sm:$0x3] %vm1911, %v4704
  %4716 = vst.msk [vmem:[%s4714] ss:$8 sm:$0x0] %vm1911, %v4704
  %s4717 = scalar_lea.vmem [#allocation3], 82
  %4718 = vst.msk [vmem:[%s4717] ss:$8 sm:$0x3] %vm1911, %v4705
  %4719 = vst.msk [vmem:[%s4717] ss:$8 sm:$0x0] %vm1911, %v4705
  %s4720 = scalar_lea.vmem [#allocation3], 114
  %4721 = vst.msk [vmem:[%s4720] ss:$8 sm:$0x3] %vm1911, %v4706
  %4722 = vst.msk [vmem:[%s4720] ss:$8 sm:$0x0] %vm1911, %v4706
  %s4723 = scalar_lea.vmem [#allocation3], 146
  %4724 = vst.msk [vmem:[%s4723] ss:$8 sm:$0x3] %vm1911, %v4707
  %4725 = vst.msk [vmem:[%s4723] ss:$8 sm:$0x0] %vm1911, %v4707
  %s4726 = scalar_lea.vmem [#allocation3], 178
  %4727 = vst.msk [vmem:[%s4726] ss:$8 sm:$0x3] %vm1911, %v4708
  %4728 = vst.msk [vmem:[%s4726] ss:$8 sm:$0x0] %vm1911, %v4708
  %s4729 = scalar_lea.vmem [#allocation3], 210
  %4730 = vst.msk [vmem:[%s4729] ss:$8 sm:$0x3] %vm1911, %v4709
  %4731 = vst.msk [vmem:[%s4729] ss:$8 sm:$0x0] %vm1911, %v4709
  %s4732 = scalar_lea.vmem [#allocation3], 242
  %4733 = vst.msk [vmem:[%s4732] ss:$8 sm:$0x3] %vm1911, %v4710
  %4734 = vst.msk [vmem:[%s4732] ss:$8 sm:$0x0] %vm1911, %v4710
  %s4735 = scalar_lea.vmem [#allocation2], 38
  %v4736 = vld [vmem:[%s4735] ss:$8 sm:$0x3]
  %s4737 = scalar_lea.vmem [#allocation2], 86
  %v4738 = vld [vmem:[%s4737] ss:$8 sm:$0x3]
  %s4739 = scalar_lea.vmem [#allocation2], 134
  %v4740 = vld [vmem:[%s4739] ss:$8 sm:$0x3]
  %s4741 = scalar_lea.vmem [#allocation2], 182
  %v4742 = vld [vmem:[%s4741] ss:$8 sm:$0x3]
  %s4743 = scalar_lea.vmem [#allocation2], 230
  %v4744 = vld [vmem:[%s4743] ss:$8 sm:$0x3]
  %s4745 = scalar_lea.vmem [#allocation2], 278
  %v4746 = vld [vmem:[%s4745] ss:$8 sm:$0x3]
  %s4747 = scalar_lea.vmem [#allocation2], 326
  %v4748 = vld [vmem:[%s4747] ss:$8 sm:$0x3]
  %s4749 = scalar_lea.vmem [#allocation2], 374
  %v4750 = vld [vmem:[%s4749] ss:$8 sm:$0x3]
  %s4751 = scalar_lea.vmem [#allocation2], 39
  %v4752 = vld [vmem:[%s4751] ss:$8 sm:$0x3]
  %s4753 = scalar_lea.vmem [#allocation2], 87
  %v4754 = vld [vmem:[%s4753] ss:$8 sm:$0x3]
  %s4755 = scalar_lea.vmem [#allocation2], 135
  %v4756 = vld [vmem:[%s4755] ss:$8 sm:$0x3]
  %s4757 = scalar_lea.vmem [#allocation2], 183
  %v4758 = vld [vmem:[%s4757] ss:$8 sm:$0x3]
  %s4759 = scalar_lea.vmem [#allocation2], 231
  %v4760 = vld [vmem:[%s4759] ss:$8 sm:$0x3]
  %s4761 = scalar_lea.vmem [#allocation2], 279
  %v4762 = vld [vmem:[%s4761] ss:$8 sm:$0x3]
  %s4763 = scalar_lea.vmem [#allocation2], 327
  %v4764 = vld [vmem:[%s4763] ss:$8 sm:$0x3]
  %s4765 = scalar_lea.vmem [#allocation2], 375
  %v4766 = vld [vmem:[%s4765] ss:$8 sm:$0x3]
  %v4767 = vmax.f32 %v4736, %v4752
  %v4768 = vmax.f32 %v4738, %v4754
  %v4769 = vmax.f32 %v4740, %v4756
  %v4770 = vmax.f32 %v4742, %v4758
  %v4771 = vmax.f32 %v4744, %v4760
  %v4772 = vmax.f32 %v4746, %v4762
  %v4773 = vmax.f32 %v4748, %v4764
  %v4774 = vmax.f32 %v4750, %v4766
  %v4783 = vcombine.low %v4767, %v4768
  %v4784 = vcombine.low %v4769, %v4770
  %v4785 = vcombine.low %v4771, %v4772
  %v4786 = vcombine.low %v4773, %v4774
  %v4788 = vunpack.c.l.s4 1966171168
  %v4789 = vunpack.c.0.s8 %v4788
  %v4790 = vlaneseq
  %v4791 = vshrl.u32 %v4790, 7
  %v4792 = vsub.s32 %v4789, %v4791
  %v4793 = vrot.slane %v4783, %v4792
  %v4795 = vunpack.c.l.s4 1966171168
  %v4796 = vunpack.c.0.s8 %v4795
  %v4797 = vlaneseq
  %v4798 = vshrl.u32 %v4797, 7
  %v4799 = vsub.s32 %v4796, %v4798
  %v4800 = vrot.slane %v4784, %v4799
  %v4802 = vunpack.c.l.s4 1966171168
  %v4803 = vunpack.c.0.s8 %v4802
  %v4804 = vlaneseq
  %v4805 = vshrl.u32 %v4804, 7
  %v4806 = vsub.s32 %v4803, %v4805
  %v4807 = vrot.slane %v4785, %v4806
  %v4809 = vunpack.c.l.s4 1966171168
  %v4810 = vunpack.c.0.s8 %v4809
  %v4811 = vlaneseq
  %v4812 = vshrl.u32 %v4811, 7
  %v4813 = vsub.s32 %v4810, %v4812
  %v4814 = vrot.slane %v4786, %v4813
  %v4815 = vcombine.low %v4793, %v4800
  %v4816 = vcombine.high %v4793, %v4800
  %v4817 = vcombine.low %v4807, %v4814
  %v4818 = vcombine.high %v4807, %v4814
  %v4820 = vunpack.c.l.s4 1966171168
  %v4821 = vunpack.c.0.s8 %v4820
  %v4822 = vlaneseq
  %v4823 = vshrl.u32 %v4822, 7
  %v4824 = vsub.s32 %v4821, %v4823
  %v4825 = vrot.slane %v4815, %v4824
  %v4827 = vunpack.c.l.s4 1966171168
  %v4828 = vunpack.c.0.s8 %v4827
  %v4829 = vlaneseq
  %v4830 = vshrl.u32 %v4829, 7
  %v4831 = vsub.s32 %v4828, %v4830
  %v4832 = vrot.slane %v4816, %v4831
  %v4834 = vunpack.c.l.s4 1966171168
  %v4835 = vunpack.c.0.s8 %v4834
  %v4836 = vlaneseq
  %v4837 = vshrl.u32 %v4836, 7
  %v4838 = vsub.s32 %v4835, %v4837
  %v4839 = vrot.slane %v4817, %v4838
  %v4841 = vunpack.c.l.s4 1966171168
  %v4842 = vunpack.c.0.s8 %v4841
  %v4843 = vlaneseq
  %v4844 = vshrl.u32 %v4843, 7
  %v4845 = vsub.s32 %v4842, %v4844
  %v4846 = vrot.slane %v4818, %v4845
  %v4847 = vcombine.low %v4825, %v4839
  %v4848 = vcombine.low %v4832, %v4846
  %v4850 = vsel %vm1569, %v4848, 0
  %4852 = vmatprep.subr.mxu0 %v1648
  %4853 = vmatpush1.msra.mxu0 %v1647
  %4854 = vmatprep.subr.mxu0 %v1646
  %4855 = vmatpush1.msra.mxu0 %v1645
  %4856 = vmatprep.subr.mxu0 %v1644
  %4857 = vmatpush1.msra.mxu0 %v1643
  %4858 = vmatprep.subr.mxu0 %v1642
  %4859 = vmatpush1.msra.mxu0 %v1641
  %4860 = vmatprep.subr.mxu0 %v1640
  %4861 = vmatpush1.msra.mxu0 %v1639
  %4862 = vmatprep.subr.mxu0 %v1638
  %4863 = vmatpush1.msra.mxu0 %v1637
  %4864 = vmatprep.subr.mxu0 %v1636
  %4865 = vmatpush1.msra.mxu0 %v1635
  %4866 = vmatprep.subr.mxu0 %v1634
  %4867 = vmatpush1.msra.mxu0 %v1633
  %4868 = vmatprep.subr.mxu0 %v1632
  %4869 = vmatpush1.msra.mxu0 %v1631
  %4870 = vmatprep.subr.mxu0 %v1630
  %4871 = vmatpush1.msra.mxu0 %v1629
  %4872 = vmatprep.subr.mxu0 %v1628
  %4873 = vmatpush1.msra.mxu0 %v1627
  %4874 = vmatprep.subr.mxu0 %v1626
  %4875 = vmatpush1.msra.mxu0 %v1625
  %4876 = vmatprep.subr.mxu0 %v1624
  %4877 = vmatpush1.msra.mxu0 %v1623
  %4878 = vmatprep.subr.mxu0 %v1622
  %4879 = vmatpush1.msra.mxu0 %v1621
  %4880 = vmatprep.subr.mxu0 %v1620
  %4881 = vmatpush1.msra.mxu0 %v1619
  %4882 = vmatprep.subr.mxu0 %v1618
  %4883 = vmatpush1.msra.mxu0 %v1617
  %4884 = vmatprep.subr.mxu0 0.0
  %4885 = vmatpush2.msra.mxu0 0.0
  %4886 = vmatprep.subr.mxu0 0.0
  %4887 = vmatpush2.msra.mxu0 0.0
  %4888 = vmatprep.subr.mxu0 0.0
  %4889 = vmatpush2.msra.mxu0 0.0
  %4890 = vmatprep.subr.mxu0 0.0
  %4891 = vmatpush2.msra.mxu0 0.0
  %4892 = vmatprep.subr.mxu0 0.0
  %4893 = vmatpush2.msra.mxu0 0.0
  %4894 = vmatprep.subr.mxu0 0.0
  %4895 = vmatpush2.msra.mxu0 0.0
  %4896 = vmatprep.subr.mxu0 0.0
  %4897 = vmatpush2.msra.mxu0 0.0
  %4898 = vmatprep.subr.mxu0 0.0
  %4899 = vmatpush2.msra.mxu0 0.0
  %4900 = vmatprep.subr.mxu0 0.0
  %4901 = vmatpush2.msra.mxu0 0.0
  %4902 = vmatprep.subr.mxu0 0.0
  %4903 = vmatpush2.msra.mxu0 0.0
  %4904 = vmatprep.subr.mxu0 0.0
  %4905 = vmatpush2.msra.mxu0 0.0
  %4906 = vmatprep.subr.mxu0 0.0
  %4907 = vmatpush2.msra.mxu0 0.0
  %4908 = vmatprep.subr.mxu0 0.0
  %4909 = vmatpush2.msra.mxu0 0.0
  %4910 = vmatprep.subr.mxu0 0.0
  %4911 = vmatpush2.msra.mxu0 0.0
  %4912 = vmatprep.subr.mxu0 %v1652
  %4913 = vmatpush2.msra.mxu0 %v1651
  %4914 = vmatprep.subr.mxu0 %v1650
  %4915 = vmatpush2.msra.mxu0 %v1649
  %4916 = vmatprep.mubr.f32.mxu0 %v4850
  %4917 = vmatmul.mubr.f32.gmra.mxu0 %v4847
  %v4918 = vpop.f32.mrf.mxu0
  %v4919 = vadd.f32 0.0, %v4918
  %v4920 = vpop.f32.mrf.mxu0
  %v4921 = vadd.f32 0.0, %v4920
  %4922 = vdwg.mxu0
  %v4925 = vcombine.low %v4919, %v4921
  %v4926 = vcombine.high %v4919, %v4921
  %v4928 = vunpack.c.l.s4 1966171168
  %v4929 = vunpack.c.0.s8 %v4928
  %v4930 = vlaneseq
  %v4931 = vshrl.u32 %v4930, 7
  %v4932 = vsub.s32 %v4929, %v4931
  %v4933 = vrot.slane %v4925, %v4932
  %v4935 = vunpack.c.l.s4 1966171168
  %v4936 = vunpack.c.0.s8 %v4935
  %v4937 = vlaneseq
  %v4938 = vshrl.u32 %v4937, 7
  %v4939 = vsub.s32 %v4936, %v4938
  %v4940 = vrot.slane %v4926, %v4939
  %v4941 = vcombine.high %v4933, %v4933
  %v4942 = vcombine.high %v4940, %v4940
  %v4944 = vunpack.c.l.s4 1966171168
  %v4945 = vunpack.c.0.s8 %v4944
  %v4946 = vlaneseq
  %v4947 = vshrl.u32 %v4946, 7
  %v4948 = vsub.s32 %v4945, %v4947
  %v4949 = vrot.slane %v4933, %v4948
  %v4951 = vunpack.c.l.s4 1966171168
  %v4952 = vunpack.c.0.s8 %v4951
  %v4953 = vlaneseq
  %v4954 = vshrl.u32 %v4953, 7
  %v4955 = vsub.s32 %v4952, %v4954
  %v4956 = vrot.slane %v4940, %v4955
  %v4958 = vunpack.c.l.s4 1966171168
  %v4959 = vunpack.c.0.s8 %v4958
  %v4960 = vlaneseq
  %v4961 = vshrl.u32 %v4960, 7
  %v4962 = vsub.s32 %v4959, %v4961
  %v4963 = vrot.slane %v4941, %v4962
  %v4965 = vunpack.c.l.s4 1966171168
  %v4966 = vunpack.c.0.s8 %v4965
  %v4967 = vlaneseq
  %v4968 = vshrl.u32 %v4967, 7
  %v4969 = vsub.s32 %v4966, %v4968
  %v4970 = vrot.slane %v4942, %v4969
  %v4971 = vcombine.high %v4949, %v4949
  %v4972 = vcombine.high %v4956, %v4956
  %v4973 = vcombine.high %v4963, %v4963
  %v4974 = vcombine.high %v4970, %v4970
  %v4983 = vmax.f32 %v4767, %v4949
  %v4984 = vmax.f32 %v4768, %v4963
  %v4985 = vmax.f32 %v4769, %v4971
  %v4986 = vmax.f32 %v4770, %v4973
  %v4987 = vmax.f32 %v4771, %v4956
  %v4988 = vmax.f32 %v4772, %v4970
  %v4989 = vmax.f32 %v4773, %v4972
  %v4990 = vmax.f32 %v4774, %v4974
  %s4991 = scalar_lea.vmem [#allocation3], 19
  %4992 = vst.msk [vmem:[%s4991] ss:$8 sm:$0x3] %vm1911, %v4983
  %4993 = vst.msk [vmem:[%s4991] ss:$8 sm:$0x0] %vm1911, %v4983
  %s4994 = scalar_lea.vmem [#allocation3], 51
  %4995 = vst.msk [vmem:[%s4994] ss:$8 sm:$0x3] %vm1911, %v4984
  %4996 = vst.msk [vmem:[%s4994] ss:$8 sm:$0x0] %vm1911, %v4984
  %s4997 = scalar_lea.vmem [#allocation3], 83
  %4998 = vst.msk [vmem:[%s4997] ss:$8 sm:$0x3] %vm1911, %v4985
  %4999 = vst.msk [vmem:[%s4997] ss:$8 sm:$0x0] %vm1911, %v4985
  %s5000 = scalar_lea.vmem [#allocation3], 115
  %5001 = vst.msk [vmem:[%s5000] ss:$8 sm:$0x3] %vm1911, %v4986
  %5002 = vst.msk [vmem:[%s5000] ss:$8 sm:$0x0] %vm1911, %v4986
  %s5003 = scalar_lea.vmem [#allocation3], 147
  %5004 = vst.msk [vmem:[%s5003] ss:$8 sm:$0x3] %vm1911, %v4987
  %5005 = vst.msk [vmem:[%s5003] ss:$8 sm:$0x0] %vm1911, %v4987
  %s5006 = scalar_lea.vmem [#allocation3], 179
  %5007 = vst.msk [vmem:[%s5006] ss:$8 sm:$0x3] %vm1911, %v4988
  %5008 = vst.msk [vmem:[%s5006] ss:$8 sm:$0x0] %vm1911, %v4988
  %s5009 = scalar_lea.vmem [#allocation3], 211
  %5010 = vst.msk [vmem:[%s5009] ss:$8 sm:$0x3] %vm1911, %v4989
  %5011 = vst.msk [vmem:[%s5009] ss:$8 sm:$0x0] %vm1911, %v4989
  %s5012 = scalar_lea.vmem [#allocation3], 243
  %5013 = vst.msk [vmem:[%s5012] ss:$8 sm:$0x3] %vm1911, %v4990
  %5014 = vst.msk [vmem:[%s5012] ss:$8 sm:$0x0] %vm1911, %v4990
  %v5015 = vld [vmem:[#allocation3] sm:$0xff]
  %v5016 = vld [vmem:[#allocation3 + $0x8] sm:$0xff]
  %v5017 = vld [vmem:[#allocation3 + $0x20] sm:$0xff]
  %v5018 = vld [vmem:[#allocation3 + $0x28] sm:$0xff]
  %v5019 = vld [vmem:[#allocation3 + $0x40] sm:$0xff]
  %v5020 = vld [vmem:[#allocation3 + $0x48] sm:$0xff]
  %v5021 = vld [vmem:[#allocation3 + $0x60] sm:$0xff]
  %v5022 = vld [vmem:[#allocation3 + $0x68] sm:$0xff]
  %v5023 = vld [vmem:[#allocation3 + $0x80] sm:$0xff]
  %v5024 = vld [vmem:[#allocation3 + $0x88] sm:$0xff]
  %v5025 = vld [vmem:[#allocation3 + $0xa0] sm:$0xff]
  %v5026 = vld [vmem:[#allocation3 + $0xa8] sm:$0xff]
  %v5027 = vld [vmem:[#allocation3 + $0xc0] sm:$0xff]
  %v5028 = vld [vmem:[#allocation3 + $0xc8] sm:$0xff]
  %v5029 = vld [vmem:[#allocation3 + $0xe0] sm:$0xff]
  %v5030 = vld [vmem:[#allocation3 + $0xe8] sm:$0xff]
  %v5031 = vpack.c.bf16 %v5017, %v5015
  %v5032 = vpack.c.bf16 %v5018, %v5016
  %v5033 = vpack.c.bf16 %v5021, %v5019
  %v5034 = vpack.c.bf16 %v5022, %v5020
  %v5035 = vpack.c.bf16 %v5025, %v5023
  %v5036 = vpack.c.bf16 %v5026, %v5024
  %v5037 = vpack.c.bf16 %v5029, %v5027
  %v5038 = vpack.c.bf16 %v5030, %v5028
  %v5039 = vld [vmem:[%s4] sm:$0xf]
  %v5040 = vld [vmem:[%s4 + $0x4] sm:$0xf]
  %v5041 = vld [vmem:[%s4 + $0x8] sm:$0xf]
  %v5042 = vld [vmem:[%s4 + $0xc] sm:$0xf]
  %v5043 = vld [vmem:[%s4 + $0x10] sm:$0xf]
  %v5044 = vld [vmem:[%s4 + $0x14] sm:$0xf]
  %v5045 = vld [vmem:[%s4 + $0x18] sm:$0xf]
  %v5046 = vld [vmem:[%s4 + $0x1c] sm:$0xf]
  %v5047 = vld [vmem:[%s4 + $0x20] sm:$0xf]
  %v5048 = vld [vmem:[%s4 + $0x24] sm:$0xf]
  %v5049 = vld [vmem:[%s4 + $0x28] sm:$0xf]
  %v5050 = vld [vmem:[%s4 + $0x2c] sm:$0xf]
  %v5051 = vld [vmem:[%s4 + $0x30] sm:$0xf]
  %v5052 = vld [vmem:[%s4 + $0x34] sm:$0xf]
  %v5053 = vld [vmem:[%s4 + $0x38] sm:$0xf]
  %v5054 = vld [vmem:[%s4 + $0x3c] sm:$0xf]
  %v5055 = vld [vmem:[%s4 + $0x40] sm:$0xf]
  %v5056 = vld [vmem:[%s4 + $0x44] sm:$0xf]
  %v5057 = vld [vmem:[#allocation3] sm:$0xfe]
  %v5058 = vld [vmem:[#allocation3 + $0x8] sm:$0xfe]
  %v5059 = vld [vmem:[#allocation3 + $0x10] sm:$0x1]
  %v5060 = vld [vmem:[#allocation3 + $0x18] sm:$0x1]
  %v5061 = vld [vmem:[#allocation3 + $0x20] sm:$0xfe]
  %v5062 = vld [vmem:[#allocation3 + $0x28] sm:$0xfe]
  %v5063 = vld [vmem:[#allocation3 + $0x30] sm:$0x1]
  %v5064 = vld [vmem:[#allocation3 + $0x38] sm:$0x1]
  %v5065 = vld [vmem:[#allocation3 + $0x40] sm:$0xfe]
  %v5066 = vld [vmem:[#allocation3 + $0x48] sm:$0xfe]
  %v5067 = vld [vmem:[#allocation3 + $0x50] sm:$0x1]
  %v5068 = vld [vmem:[#allocation3 + $0x58] sm:$0x1]
  %v5069 = vld [vmem:[#allocation3 + $0x60] sm:$0xfe]
  %v5070 = vld [vmem:[#allocation3 + $0x68] sm:$0xfe]
  %v5071 = vld [vmem:[#allocation3 + $0x70] sm:$0x1]
  %v5072 = vld [vmem:[#allocation3 + $0x78] sm:$0x1]
  %v5073 = vld [vmem:[#allocation3 + $0x80] sm:$0xfe]
  %v5074 = vld [vmem:[#allocation3 + $0x88] sm:$0xfe]
  %v5075 = vld [vmem:[#allocation3 + $0x90] sm:$0x1]
  %v5076 = vld [vmem:[#allocation3 + $0x98] sm:$0x1]
  %v5077 = vld [vmem:[#allocation3 + $0xa0] sm:$0xfe]
  %v5078 = vld [vmem:[#allocation3 + $0xa8] sm:$0xfe]
  %v5079 = vld [vmem:[#allocation3 + $0xb0] sm:$0x1]
  %v5080 = vld [vmem:[#allocation3 + $0xb8] sm:$0x1]
  %v5081 = vld [vmem:[#allocation3 + $0xc0] sm:$0xfe]
  %v5082 = vld [vmem:[#allocation3 + $0xc8] sm:$0xfe]
  %v5083 = vld [vmem:[#allocation3 + $0xd0] sm:$0x1]
  %v5084 = vld [vmem:[#allocation3 + $0xd8] sm:$0x1]
  %v5085 = vld [vmem:[#allocation3 + $0xe0] sm:$0xfe]
  %v5086 = vld [vmem:[#allocation3 + $0xe8] sm:$0xfe]
  %v5087 = vld [vmem:[#allocation3 + $0xf0] sm:$0x1]
  %v5088 = vld [vmem:[#allocation3 + $0xf8] sm:$0x1]
  %vm5121 = vcmask 1046528
  %v5122 = vrot.slane %v5057, 1
  %v5123 = vrot.slane %v5059, 1
  %v5124 = vsel %vm5121, %v5122, %v5123
  %v5125 = vrot.slane %v5058, 1
  %v5126 = vrot.slane %v5060, 1
  %v5127 = vsel %vm5121, %v5125, %v5126
  %v5128 = vrot.slane %v5061, 1
  %v5129 = vrot.slane %v5063, 1
  %v5130 = vsel %vm5121, %v5128, %v5129
  %v5131 = vrot.slane %v5062, 1
  %v5132 = vrot.slane %v5064, 1
  %v5133 = vsel %vm5121, %v5131, %v5132
  %v5134 = vrot.slane %v5065, 1
  %v5135 = vrot.slane %v5067, 1
  %v5136 = vsel %vm5121, %v5134, %v5135
  %v5137 = vrot.slane %v5066, 1
  %v5138 = vrot.slane %v5068, 1
  %v5139 = vsel %vm5121, %v5137, %v5138
  %v5140 = vrot.slane %v5069, 1
  %v5141 = vrot.slane %v5071, 1
  %v5142 = vsel %vm5121, %v5140, %v5141
  %v5143 = vrot.slane %v5070, 1
  %v5144 = vrot.slane %v5072, 1
  %v5145 = vsel %vm5121, %v5143, %v5144
  %v5146 = vrot.slane %v5073, 1
  %v5147 = vrot.slane %v5075, 1
  %v5148 = vsel %vm5121, %v5146, %v5147
  %v5149 = vrot.slane %v5074, 1
  %v5150 = vrot.slane %v5076, 1
  %v5151 = vsel %vm5121, %v5149, %v5150
  %v5152 = vrot.slane %v5077, 1
  %v5153 = vrot.slane %v5079, 1
  %v5154 = vsel %vm5121, %v5152, %v5153
  %v5155 = vrot.slane %v5078, 1
  %v5156 = vrot.slane %v5080, 1
  %v5157 = vsel %vm5121, %v5155, %v5156
  %v5158 = vrot.slane %v5081, 1
  %v5159 = vrot.slane %v5083, 1
  %v5160 = vsel %vm5121, %v5158, %v5159
  %v5161 = vrot.slane %v5082, 1
  %v5162 = vrot.slane %v5084, 1
  %v5163 = vsel %vm5121, %v5161, %v5162
  %v5164 = vrot.slane %v5085, 1
  %v5165 = vrot.slane %v5087, 1
  %v5166 = vsel %vm5121, %v5164, %v5165
  %v5167 = vrot.slane %v5086, 1
  %v5168 = vrot.slane %v5088, 1
  %v5169 = vsel %vm5121, %v5167, %v5168
  %v5186 = vpack.c.bf16 %v5130, %v5124
  %v5187 = vpack.c.bf16 %v5133, %v5127
  %v5188 = vpack.c.bf16 %v5142, %v5136
  %v5189 = vpack.c.bf16 %v5145, %v5139
  %v5190 = vpack.c.bf16 %v5154, %v5148
  %v5191 = vpack.c.bf16 %v5157, %v5151
  %v5192 = vpack.c.bf16 %v5166, %v5160
  %v5193 = vpack.c.bf16 %v5169, %v5163
  %s5194 = scalar_lea.vmem %s4, 72
  %v5195 = vld [vmem:[%s5194] sm:$0xf]
  %v5196 = vld [vmem:[%s5194 + $0x4] sm:$0xf]
  %v5197 = vld [vmem:[%s5194 + $0x8] sm:$0xf]
  %v5198 = vld [vmem:[%s5194 + $0xc] sm:$0xf]
  %v5199 = vld [vmem:[%s5194 + $0x10] sm:$0xf]
  %v5200 = vld [vmem:[%s5194 + $0x14] sm:$0xf]
  %v5201 = vld [vmem:[%s5194 + $0x18] sm:$0xf]
  %v5202 = vld [vmem:[%s5194 + $0x1c] sm:$0xf]
  %v5203 = vld [vmem:[%s5194 + $0x20] sm:$0xf]
  %v5204 = vld [vmem:[%s5194 + $0x24] sm:$0xf]
  %v5205 = vld [vmem:[%s5194 + $0x28] sm:$0xf]
  %v5206 = vld [vmem:[%s5194 + $0x2c] sm:$0xf]
  %v5207 = vld [vmem:[%s5194 + $0x30] sm:$0xf]
  %v5208 = vld [vmem:[%s5194 + $0x34] sm:$0xf]
  %v5209 = vld [vmem:[%s5194 + $0x38] sm:$0xf]
  %v5210 = vld [vmem:[%s5194 + $0x3c] sm:$0xf]
  %v5211 = vld [vmem:[%s5194 + $0x40] sm:$0xf]
  %v5212 = vld [vmem:[%s5194 + $0x44] sm:$0xf]
  %v5231 = vunpack.c.l.b16 %v5195
  %v5232 = vunpack.c.l.b16 %v5196
  %v5233 = vunpack.c.l.b16 %v5197
  %v5234 = vunpack.c.l.b16 %v5198
  %v5235 = vunpack.c.l.b16 %v5199
  %v5236 = vunpack.c.l.b16 %v5200
  %v5237 = vunpack.c.l.b16 %v5201
  %v5238 = vunpack.c.l.b16 %v5202
  %v5239 = vunpack.c.l.b16 %v5203
  %v5240 = vunpack.c.l.b16 %v5204
  %v5241 = vunpack.c.l.b16 %v5205
  %v5242 = vunpack.c.l.b16 %v5206
  %v5243 = vunpack.c.l.b16 %v5207
  %v5244 = vunpack.c.l.b16 %v5208
  %v5245 = vunpack.c.l.b16 %v5209
  %v5246 = vunpack.c.l.b16 %v5210
  %v5247 = vunpack.c.l.b16 %v5211
  %v5248 = vunpack.c.l.b16 %v5212
  %v5249 = vpack.c.b16 %v5232, %v5231
  %v5250 = vpack.c.b16 %v5234, %v5233
  %v5251 = vpack.c.b16 %v5236, %v5235
  %v5252 = vpack.c.b16 %v5238, %v5237
  %v5253 = vpack.c.b16 %v5240, %v5239
  %v5254 = vpack.c.b16 %v5242, %v5241
  %v5255 = vpack.c.b16 %v5244, %v5243
  %v5256 = vpack.c.b16 %v5246, %v5245
  %v5257 = vpack.c.b16 %v5248, %v5247
  %v5268 = vsel %vm1569, %v5187, 0
  %v5271 = vsel %vm1569, %v5189, 0
  %v5274 = vsel %vm1569, %v5191, 0
  %v5277 = vsel %vm1569, %v5193, 0
  %5279 = vmatprep.subr.bf16.mxu0 0
  %5280 = vmatpush1.bf16.msra.mxu0 %v5256
  %5281 = vmatprep.subr.bf16.mxu0 0
  %5282 = vmatpush1.bf16.msra.mxu0 %v5255
  %5283 = vmatprep.subr.bf16.mxu0 0
  %5284 = vmatpush1.bf16.msra.mxu0 %v5254
  %5285 = vmatprep.subr.bf16.mxu0 0
  %5286 = vmatpush1.bf16.msra.mxu0 %v5253
  %5287 = vmatprep.subr.bf16.mxu0 0
  %5288 = vmatpush1.bf16.msra.mxu0 %v5252
  %5289 = vmatprep.subr.bf16.mxu0 0
  %5290 = vmatpush1.bf16.msra.mxu0 %v5251
  %5291 = vmatprep.subr.bf16.mxu0 0
  %5292 = vmatpush1.bf16.msra.mxu0 %v5250
  %5293 = vmatprep.subr.bf16.mxu0 0
  %5294 = vmatpush1.bf16.msra.mxu0 %v5249
  %5295 = vmatprep.subr.bf16.mxu0 0
  %5296 = vmatpush2.bf16.msra.mxu0 0
  %5297 = vmatprep.subr.bf16.mxu0 0
  %5298 = vmatpush2.bf16.msra.mxu0 0
  %5299 = vmatprep.subr.bf16.mxu0 0
  %5300 = vmatpush2.bf16.msra.mxu0 0
  %5301 = vmatprep.subr.bf16.mxu0 0
  %5302 = vmatpush2.bf16.msra.mxu0 0
  %5303 = vmatprep.subr.bf16.mxu0 0
  %5304 = vmatpush2.bf16.msra.mxu0 0
  %5305 = vmatprep.subr.bf16.mxu0 0
  %5306 = vmatpush2.bf16.msra.mxu0 0
  %5307 = vmatprep.subr.bf16.mxu0 0
  %5308 = vmatpush2.bf16.msra.mxu0 0
  %5309 = vmatprep.subr.bf16.mxu0 0
  %5310 = vmatpush2.bf16.msra.mxu0 %v5257
  %5311 = vmatprep.mubr.bf16.mxu0 %v5268
  %5312 = vmatmul.mubr.bf16.gmra.mxu0 %v5186
  %v5313 = vpop.f32.mrf.mxu0
  %v5314 = vadd.f32 0.0, %v5313
  %v5315 = vpop.f32.mrf.mxu0
  %v5316 = vpop.f32.mrf.mxu0
  %v5317 = vadd.f32 0.0, %v5316
  %v5318 = vpop.f32.mrf.mxu0
  %5319 = vmatprep.mubr.bf16.mxu0 %v5271
  %5320 = vmatmul.mubr.bf16.gmra.mxu0 %v5188
  %v5321 = vpop.f32.mrf.mxu0
  %v5322 = vadd.f32 0.0, %v5321
  %v5323 = vpop.f32.mrf.mxu0
  %v5324 = vpop.f32.mrf.mxu0
  %v5325 = vadd.f32 0.0, %v5324
  %v5326 = vpop.f32.mrf.mxu0
  %5327 = vmatprep.mubr.bf16.mxu0 %v5274
  %5328 = vmatmul.mubr.bf16.gmra.mxu0 %v5190
  %v5329 = vpop.f32.mrf.mxu0
  %v5330 = vadd.f32 0.0, %v5329
  %v5331 = vpop.f32.mrf.mxu0
  %v5332 = vpop.f32.mrf.mxu0
  %v5333 = vadd.f32 0.0, %v5332
  %v5334 = vpop.f32.mrf.mxu0
  %5335 = vmatprep.mubr.bf16.mxu0 %v5277
  %5336 = vmatmul.mubr.bf16.gmra.mxu0 %v5192
  %v5337 = vpop.f32.mrf.mxu0
  %v5338 = vadd.f32 0.0, %v5337
  %v5339 = vpop.f32.mrf.mxu0
  %v5340 = vpop.f32.mrf.mxu0
  %v5341 = vadd.f32 0.0, %v5340
  %v5342 = vpop.f32.mrf.mxu0
  %5343 = vdwg.mxu0
  %v5362 = vunpack.c.l.b16 %v5039
  %v5363 = vunpack.c.l.b16 %v5040
  %v5364 = vunpack.c.l.b16 %v5041
  %v5365 = vunpack.c.l.b16 %v5042
  %v5366 = vunpack.c.l.b16 %v5043
  %v5367 = vunpack.c.l.b16 %v5044
  %v5368 = vunpack.c.l.b16 %v5045
  %v5369 = vunpack.c.l.b16 %v5046
  %v5370 = vunpack.c.l.b16 %v5047
  %v5371 = vunpack.c.l.b16 %v5048
  %v5372 = vunpack.c.l.b16 %v5049
  %v5373 = vunpack.c.l.b16 %v5050
  %v5374 = vunpack.c.l.b16 %v5051
  %v5375 = vunpack.c.l.b16 %v5052
  %v5376 = vunpack.c.l.b16 %v5053
  %v5377 = vunpack.c.l.b16 %v5054
  %v5378 = vunpack.c.l.b16 %v5055
  %v5379 = vunpack.c.l.b16 %v5056
  %v5380 = vpack.c.b16 %v5363, %v5362
  %v5381 = vpack.c.b16 %v5365, %v5364
  %v5382 = vpack.c.b16 %v5367, %v5366
  %v5383 = vpack.c.b16 %v5369, %v5368
  %v5384 = vpack.c.b16 %v5371, %v5370
  %v5385 = vpack.c.b16 %v5373, %v5372
  %v5386 = vpack.c.b16 %v5375, %v5374
  %v5387 = vpack.c.b16 %v5377, %v5376
  %v5388 = vpack.c.b16 %v5379, %v5378
  %v5399 = vsel %vm1569, %v5032, 0
  %v5402 = vsel %vm1569, %v5034, 0
  %v5405 = vsel %vm1569, %v5036, 0
  %v5408 = vsel %vm1569, %v5038, 0
  %5410 = vmatprep.subr.bf16.mxu0 0
  %5411 = vmatpush1.bf16.msra.mxu0 %v5387
  %5412 = vmatprep.subr.bf16.mxu0 0
  %5413 = vmatpush1.bf16.msra.mxu0 %v5386
  %5414 = vmatprep.subr.bf16.mxu0 0
  %5415 = vmatpush1.bf16.msra.mxu0 %v5385
  %5416 = vmatprep.subr.bf16.mxu0 0
  %5417 = vmatpush1.bf16.msra.mxu0 %v5384
  %5418 = vmatprep.subr.bf16.mxu0 0
  %5419 = vmatpush1.bf16.msra.mxu0 %v5383
  %5420 = vmatprep.subr.bf16.mxu0 0
  %5421 = vmatpush1.bf16.msra.mxu0 %v5382
  %5422 = vmatprep.subr.bf16.mxu0 0
  %5423 = vmatpush1.bf16.msra.mxu0 %v5381
  %5424 = vmatprep.subr.bf16.mxu0 0
  %5425 = vmatpush1.bf16.msra.mxu0 %v5380
  %5426 = vmatprep.subr.bf16.mxu0 0
  %5427 = vmatpush2.bf16.msra.mxu0 0
  %5428 = vmatprep.subr.bf16.mxu0 0
  %5429 = vmatpush2.bf16.msra.mxu0 0
  %5430 = vmatprep.subr.bf16.mxu0 0
  %5431 = vmatpush2.bf16.msra.mxu0 0
  %5432 = vmatprep.subr.bf16.mxu0 0
  %5433 = vmatpush2.bf16.msra.mxu0 0
  %5434 = vmatprep.subr.bf16.mxu0 0
  %5435 = vmatpush2.bf16.msra.mxu0 0
  %5436 = vmatprep.subr.bf16.mxu0 0
  %5437 = vmatpush2.bf16.msra.mxu0 0
  %5438 = vmatprep.subr.bf16.mxu0 0
  %5439 = vmatpush2.bf16.msra.mxu0 0
  %5440 = vmatprep.subr.bf16.mxu0 0
  %5441 = vmatpush2.bf16.msra.mxu0 %v5388
  %5442 = vmatprep.mubr.bf16.mxu0 %v5399
  %5443 = vmatmul.mubr.bf16.gmra.mxu0 %v5031
  %v5444 = vpop.f32.mrf.mxu0
  %v5445 = vadd.f32 %v5314, %v5444
  %v5446 = vpop.f32.mrf.mxu0
  %v5447 = vpop.f32.mrf.mxu0
  %v5448 = vadd.f32 %v5317, %v5447
  %v5449 = vpop.f32.mrf.mxu0
  %5450 = vmatprep.mubr.bf16.mxu0 %v5402
  %5451 = vmatmul.mubr.bf16.gmra.mxu0 %v5033
  %v5452 = vpop.f32.mrf.mxu0
  %v5453 = vadd.f32 %v5322, %v5452
  %v5454 = vpop.f32.mrf.mxu0
  %v5455 = vpop.f32.mrf.mxu0
  %v5456 = vadd.f32 %v5325, %v5455
  %v5457 = vpop.f32.mrf.mxu0
  %5458 = vmatprep.mubr.bf16.mxu0 %v5405
  %5459 = vmatmul.mubr.bf16.gmra.mxu0 %v5035
  %v5460 = vpop.f32.mrf.mxu0
  %v5461 = vadd.f32 %v5330, %v5460
  %v5462 = vpop.f32.mrf.mxu0
  %v5463 = vpop.f32.mrf.mxu0
  %v5464 = vadd.f32 %v5333, %v5463
  %v5465 = vpop.f32.mrf.mxu0
  %5466 = vmatprep.mubr.bf16.mxu0 %v5408
  %5467 = vmatmul.mubr.bf16.gmra.mxu0 %v5037
  %v5468 = vpop.f32.mrf.mxu0
  %v5469 = vadd.f32 %v5338, %v5468
  %v5470 = vpop.f32.mrf.mxu0
  %v5471 = vpop.f32.mrf.mxu0
  %v5472 = vadd.f32 %v5341, %v5471
  %v5473 = vpop.f32.mrf.mxu0
  %5474 = vdwg.mxu0
  %v5475 = vld [vmem:[#allocation3] sm:$0xfc]
  %v5476 = vld [vmem:[#allocation3 + $0x8] sm:$0xfc]
  %v5477 = vld [vmem:[#allocation3 + $0x10] sm:$0x3]
  %v5478 = vld [vmem:[#allocation3 + $0x18] sm:$0x3]
  %v5479 = vld [vmem:[#allocation3 + $0x20] sm:$0xfc]
  %v5480 = vld [vmem:[#allocation3 + $0x28] sm:$0xfc]
  %v5481 = vld [vmem:[#allocation3 + $0x30] sm:$0x3]
  %v5482 = vld [vmem:[#allocation3 + $0x38] sm:$0x3]
  %v5483 = vld [vmem:[#allocation3 + $0x40] sm:$0xfc]
  %v5484 = vld [vmem:[#allocation3 + $0x48] sm:$0xfc]
  %v5485 = vld [vmem:[#allocation3 + $0x50] sm:$0x3]
  %v5486 = vld [vmem:[#allocation3 + $0x58] sm:$0x3]
  %v5487 = vld [vmem:[#allocation3 + $0x60] sm:$0xfc]
  %v5488 = vld [vmem:[#allocation3 + $0x68] sm:$0xfc]
  %v5489 = vld [vmem:[#allocation3 + $0x70] sm:$0x3]
  %v5490 = vld [vmem:[#allocation3 + $0x78] sm:$0x3]
  %v5491 = vld [vmem:[#allocation3 + $0x80] sm:$0xfc]
  %v5492 = vld [vmem:[#allocation3 + $0x88] sm:$0xfc]
  %v5493 = vld [vmem:[#allocation3 + $0x90] sm:$0x3]
  %v5494 = vld [vmem:[#allocation3 + $0x98] sm:$0x3]
  %v5495 = vld [vmem:[#allocation3 + $0xa0] sm:$0xfc]
  %v5496 = vld [vmem:[#allocation3 + $0xa8] sm:$0xfc]
  %v5497 = vld [vmem:[#allocation3 + $0xb0] sm:$0x3]
  %v5498 = vld [vmem:[#allocation3 + $0xb8] sm:$0x3]
  %v5499 = vld [vmem:[#allocation3 + $0xc0] sm:$0xfc]
  %v5500 = vld [vmem:[#allocation3 + $0xc8] sm:$0xfc]
  %v5501 = vld [vmem:[#allocation3 + $0xd0] sm:$0x3]
  %v5502 = vld [vmem:[#allocation3 + $0xd8] sm:$0x3]
  %v5503 = vld [vmem:[#allocation3 + $0xe0] sm:$0xfc]
  %v5504 = vld [vmem:[#allocation3 + $0xe8] sm:$0xfc]
  %v5505 = vld [vmem:[#allocation3 + $0xf0] sm:$0x3]
  %v5506 = vld [vmem:[#allocation3 + $0xf8] sm:$0x3]
  %v5539 = vrot.slane %v5475, 2
  %v5540 = vrot.slane %v5477, 2
  %v5541 = vsel %vm181, %v5539, %v5540
  %v5542 = vrot.slane %v5476, 2
  %v5543 = vrot.slane %v5478, 2
  %v5544 = vsel %vm181, %v5542, %v5543
  %v5545 = vrot.slane %v5479, 2
  %v5546 = vrot.slane %v5481, 2
  %v5547 = vsel %vm181, %v5545, %v5546
  %v5548 = vrot.slane %v5480, 2
  %v5549 = vrot.slane %v5482, 2
  %v5550 = vsel %vm181, %v5548, %v5549
  %v5551 = vrot.slane %v5483, 2
  %v5552 = vrot.slane %v5485, 2
  %v5553 = vsel %vm181, %v5551, %v5552
  %v5554 = vrot.slane %v5484, 2
  %v5555 = vrot.slane %v5486, 2
  %v5556 = vsel %vm181, %v5554, %v5555
  %v5557 = vrot.slane %v5487, 2
  %v5558 = vrot.slane %v5489, 2
  %v5559 = vsel %vm181, %v5557, %v5558
  %v5560 = vrot.slane %v5488, 2
  %v5561 = vrot.slane %v5490, 2
  %v5562 = vsel %vm181, %v5560, %v5561
  %v5563 = vrot.slane %v5491, 2
  %v5564 = vrot.slane %v5493, 2
  %v5565 = vsel %vm181, %v5563, %v5564
  %v5566 = vrot.slane %v5492, 2
  %v5567 = vrot.slane %v5494, 2
  %v5568 = vsel %vm181, %v5566, %v5567
  %v5569 = vrot.slane %v5495, 2
  %v5570 = vrot.slane %v5497, 2
  %v5571 = vsel %vm181, %v5569, %v5570
  %v5572 = vrot.slane %v5496, 2
  %v5573 = vrot.slane %v5498, 2
  %v5574 = vsel %vm181, %v5572, %v5573
  %v5575 = vrot.slane %v5499, 2
  %v5576 = vrot.slane %v5501, 2
  %v5577 = vsel %vm181, %v5575, %v5576
  %v5578 = vrot.slane %v5500, 2
  %v5579 = vrot.slane %v5502, 2
  %v5580 = vsel %vm181, %v5578, %v5579
  %v5581 = vrot.slane %v5503, 2
  %v5582 = vrot.slane %v5505, 2
  %v5583 = vsel %vm181, %v5581, %v5582
  %v5584 = vrot.slane %v5504, 2
  %v5585 = vrot.slane %v5506, 2
  %v5586 = vsel %vm181, %v5584, %v5585
  %v5603 = vpack.c.bf16 %v5547, %v5541
  %v5604 = vpack.c.bf16 %v5550, %v5544
  %v5605 = vpack.c.bf16 %v5559, %v5553
  %v5606 = vpack.c.bf16 %v5562, %v5556
  %v5607 = vpack.c.bf16 %v5571, %v5565
  %v5608 = vpack.c.bf16 %v5574, %v5568
  %v5609 = vpack.c.bf16 %v5583, %v5577
  %v5610 = vpack.c.bf16 %v5586, %v5580
  %s5611 = scalar_lea.vmem %s4, 144
  %v5612 = vld [vmem:[%s5611] sm:$0xf]
  %v5613 = vld [vmem:[%s5611 + $0x4] sm:$0xf]
  %v5614 = vld [vmem:[%s5611 + $0x8] sm:$0xf]
  %v5615 = vld [vmem:[%s5611 + $0xc] sm:$0xf]
  %v5616 = vld [vmem:[%s5611 + $0x10] sm:$0xf]
  %v5617 = vld [vmem:[%s5611 + $0x14] sm:$0xf]
  %v5618 = vld [vmem:[%s5611 + $0x18] sm:$0xf]
  %v5619 = vld [vmem:[%s5611 + $0x1c] sm:$0xf]
  %v5620 = vld [vmem:[%s5611 + $0x20] sm:$0xf]
  %v5621 = vld [vmem:[%s5611 + $0x24] sm:$0xf]
  %v5622 = vld [vmem:[%s5611 + $0x28] sm:$0xf]
  %v5623 = vld [vmem:[%s5611 + $0x2c] sm:$0xf]
  %v5624 = vld [vmem:[%s5611 + $0x30] sm:$0xf]
  %v5625 = vld [vmem:[%s5611 + $0x34] sm:$0xf]
  %v5626 = vld [vmem:[%s5611 + $0x38] sm:$0xf]
  %v5627 = vld [vmem:[%s5611 + $0x3c] sm:$0xf]
  %v5628 = vld [vmem:[%s5611 + $0x40] sm:$0xf]
  %v5629 = vld [vmem:[%s5611 + $0x44] sm:$0xf]
  %v5648 = vunpack.c.l.b16 %v5612
  %v5649 = vunpack.c.l.b16 %v5613
  %v5650 = vunpack.c.l.b16 %v5614
  %v5651 = vunpack.c.l.b16 %v5615
  %v5652 = vunpack.c.l.b16 %v5616
  %v5653 = vunpack.c.l.b16 %v5617
  %v5654 = vunpack.c.l.b16 %v5618
  %v5655 = vunpack.c.l.b16 %v5619
  %v5656 = vunpack.c.l.b16 %v5620
  %v5657 = vunpack.c.l.b16 %v5621
  %v5658 = vunpack.c.l.b16 %v5622
  %v5659 = vunpack.c.l.b16 %v5623
  %v5660 = vunpack.c.l.b16 %v5624
  %v5661 = vunpack.c.l.b16 %v5625
  %v5662 = vunpack.c.l.b16 %v5626
  %v5663 = vunpack.c.l.b16 %v5627
  %v5664 = vunpack.c.l.b16 %v5628
  %v5665 = vunpack.c.l.b16 %v5629
  %v5666 = vpack.c.b16 %v5649, %v5648
  %v5667 = vpack.c.b16 %v5651, %v5650
  %v5668 = vpack.c.b16 %v5653, %v5652
  %v5669 = vpack.c.b16 %v5655, %v5654
  %v5670 = vpack.c.b16 %v5657, %v5656
  %v5671 = vpack.c.b16 %v5659, %v5658
  %v5672 = vpack.c.b16 %v5661, %v5660
  %v5673 = vpack.c.b16 %v5663, %v5662
  %v5674 = vpack.c.b16 %v5665, %v5664
  %v5685 = vsel %vm1569, %v5604, 0
  %v5688 = vsel %vm1569, %v5606, 0
  %v5691 = vsel %vm1569, %v5608, 0
  %v5694 = vsel %vm1569, %v5610, 0
  %5696 = vmatprep.subr.bf16.mxu0 0
  %5697 = vmatpush1.bf16.msra.mxu0 %v5673
  %5698 = vmatprep.subr.bf16.mxu0 0
  %5699 = vmatpush1.bf16.msra.mxu0 %v5672
  %5700 = vmatprep.subr.bf16.mxu0 0
  %5701 = vmatpush1.bf16.msra.mxu0 %v5671
  %5702 = vmatprep.subr.bf16.mxu0 0
  %5703 = vmatpush1.bf16.msra.mxu0 %v5670
  %5704 = vmatprep.subr.bf16.mxu0 0
  %5705 = vmatpush1.bf16.msra.mxu0 %v5669
  %5706 = vmatprep.subr.bf16.mxu0 0
  %5707 = vmatpush1.bf16.msra.mxu0 %v5668
  %5708 = vmatprep.subr.bf16.mxu0 0
  %5709 = vmatpush1.bf16.msra.mxu0 %v5667
  %5710 = vmatprep.subr.bf16.mxu0 0
  %5711 = vmatpush1.bf16.msra.mxu0 %v5666
  %5712 = vmatprep.subr.bf16.mxu0 0
  %5713 = vmatpush2.bf16.msra.mxu0 0
  %5714 = vmatprep.subr.bf16.mxu0 0
  %5715 = vmatpush2.bf16.msra.mxu0 0
  %5716 = vmatprep.subr.bf16.mxu0 0
  %5717 = vmatpush2.bf16.msra.mxu0 0
  %5718 = vmatprep.subr.bf16.mxu0 0
  %5719 = vmatpush2.bf16.msra.mxu0 0
  %5720 = vmatprep.subr.bf16.mxu0 0
  %5721 = vmatpush2.bf16.msra.mxu0 0
  %5722 = vmatprep.subr.bf16.mxu0 0
  %5723 = vmatpush2.bf16.msra.mxu0 0
  %5724 = vmatprep.subr.bf16.mxu0 0
  %5725 = vmatpush2.bf16.msra.mxu0 0
  %5726 = vmatprep.subr.bf16.mxu0 0
  %5727 = vmatpush2.bf16.msra.mxu0 %v5674
  %5728 = vmatprep.mubr.bf16.mxu0 %v5685
  %5729 = vmatmul.mubr.bf16.gmra.mxu0 %v5603
  %v5730 = vpop.f32.mrf.mxu0
  %v5731 = vadd.f32 0.0, %v5730
  %v5732 = vpop.f32.mrf.mxu0
  %v5733 = vpop.f32.mrf.mxu0
  %v5734 = vadd.f32 0.0, %v5733
  %v5735 = vpop.f32.mrf.mxu0
  %5736 = vmatprep.mubr.bf16.mxu0 %v5688
  %5737 = vmatmul.mubr.bf16.gmra.mxu0 %v5605
  %v5738 = vpop.f32.mrf.mxu0
  %v5739 = vadd.f32 0.0, %v5738
  %v5740 = vpop.f32.mrf.mxu0
  %v5741 = vpop.f32.mrf.mxu0
  %v5742 = vadd.f32 0.0, %v5741
  %v5743 = vpop.f32.mrf.mxu0
  %5744 = vmatprep.mubr.bf16.mxu0 %v5691
  %5745 = vmatmul.mubr.bf16.gmra.mxu0 %v5607
  %v5746 = vpop.f32.mrf.mxu0
  %v5747 = vadd.f32 0.0, %v5746
  %v5748 = vpop.f32.mrf.mxu0
  %v5749 = vpop.f32.mrf.mxu0
  %v5750 = vadd.f32 0.0, %v5749
  %v5751 = vpop.f32.mrf.mxu0
  %5752 = vmatprep.mubr.bf16.mxu0 %v5694
  %5753 = vmatmul.mubr.bf16.gmra.mxu0 %v5609
  %v5754 = vpop.f32.mrf.mxu0
  %v5755 = vadd.f32 0.0, %v5754
  %v5756 = vpop.f32.mrf.mxu0
  %v5757 = vpop.f32.mrf.mxu0
  %v5758 = vadd.f32 0.0, %v5757
  %v5759 = vpop.f32.mrf.mxu0
  %5760 = vdwg.mxu0
  %v5761 = vadd.f32 %v5445, %v5731
  %v5762 = vadd.f32 %v5448, %v5734
  %v5763 = vadd.f32 %v5453, %v5739
  %v5764 = vadd.f32 %v5456, %v5742
  %v5765 = vadd.f32 %v5461, %v5747
  %v5766 = vadd.f32 %v5464, %v5750
  %v5767 = vadd.f32 %v5469, %v5755
  %v5768 = vadd.f32 %v5472, %v5758
  %v5769 = vld [vmem:[#allocation3] sm:$0xf8]
  %v5770 = vld [vmem:[#allocation3 + $0x8] sm:$0xf8]
  %v5771 = vld [vmem:[#allocation3 + $0x10] sm:$0x7]
  %v5772 = vld [vmem:[#allocation3 + $0x18] sm:$0x7]
  %v5773 = vld [vmem:[#allocation3 + $0x20] sm:$0xf8]
  %v5774 = vld [vmem:[#allocation3 + $0x28] sm:$0xf8]
  %v5775 = vld [vmem:[#allocation3 + $0x30] sm:$0x7]
  %v5776 = vld [vmem:[#allocation3 + $0x38] sm:$0x7]
  %v5777 = vld [vmem:[#allocation3 + $0x40] sm:$0xf8]
  %v5778 = vld [vmem:[#allocation3 + $0x48] sm:$0xf8]
  %v5779 = vld [vmem:[#allocation3 + $0x50] sm:$0x7]
  %v5780 = vld [vmem:[#allocation3 + $0x58] sm:$0x7]
  %v5781 = vld [vmem:[#allocation3 + $0x60] sm:$0xf8]
  %v5782 = vld [vmem:[#allocation3 + $0x68] sm:$0xf8]
  %v5783 = vld [vmem:[#allocation3 + $0x70] sm:$0x7]
  %v5784 = vld [vmem:[#allocation3 + $0x78] sm:$0x7]
  %v5785 = vld [vmem:[#allocation3 + $0x80] sm:$0xf8]
  %v5786 = vld [vmem:[#allocation3 + $0x88] sm:$0xf8]
  %v5787 = vld [vmem:[#allocation3 + $0x90] sm:$0x7]
  %v5788 = vld [vmem:[#allocation3 + $0x98] sm:$0x7]
  %v5789 = vld [vmem:[#allocation3 + $0xa0] sm:$0xf8]
  %v5790 = vld [vmem:[#allocation3 + $0xa8] sm:$0xf8]
  %v5791 = vld [vmem:[#allocation3 + $0xb0] sm:$0x7]
  %v5792 = vld [vmem:[#allocation3 + $0xb8] sm:$0x7]
  %v5793 = vld [vmem:[#allocation3 + $0xc0] sm:$0xf8]
  %v5794 = vld [vmem:[#allocation3 + $0xc8] sm:$0xf8]
  %v5795 = vld [vmem:[#allocation3 + $0xd0] sm:$0x7]
  %v5796 = vld [vmem:[#allocation3 + $0xd8] sm:$0x7]
  %v5797 = vld [vmem:[#allocation3 + $0xe0] sm:$0xf8]
  %v5798 = vld [vmem:[#allocation3 + $0xe8] sm:$0xf8]
  %v5799 = vld [vmem:[#allocation3 + $0xf0] sm:$0x7]
  %v5800 = vld [vmem:[#allocation3 + $0xf8] sm:$0x7]
  %vm5833 = vcmask 1044480
  %v5834 = vrot.slane %v5769, 3
  %v5835 = vrot.slane %v5771, 3
  %v5836 = vsel %vm5833, %v5834, %v5835
  %v5837 = vrot.slane %v5770, 3
  %v5838 = vrot.slane %v5772, 3
  %v5839 = vsel %vm5833, %v5837, %v5838
  %v5840 = vrot.slane %v5773, 3
  %v5841 = vrot.slane %v5775, 3
  %v5842 = vsel %vm5833, %v5840, %v5841
  %v5843 = vrot.slane %v5774, 3
  %v5844 = vrot.slane %v5776, 3
  %v5845 = vsel %vm5833, %v5843, %v5844
  %v5846 = vrot.slane %v5777, 3
  %v5847 = vrot.slane %v5779, 3
  %v5848 = vsel %vm5833, %v5846, %v5847
  %v5849 = vrot.slane %v5778, 3
  %v5850 = vrot.slane %v5780, 3
  %v5851 = vsel %vm5833, %v5849, %v5850
  %v5852 = vrot.slane %v5781, 3
  %v5853 = vrot.slane %v5783, 3
  %v5854 = vsel %vm5833, %v5852, %v5853
  %v5855 = vrot.slane %v5782, 3
  %v5856 = vrot.slane %v5784, 3
  %v5857 = vsel %vm5833, %v5855, %v5856
  %v5858 = vrot.slane %v5785, 3
  %v5859 = vrot.slane %v5787, 3
  %v5860 = vsel %vm5833, %v5858, %v5859
  %v5861 = vrot.slane %v5786, 3
  %v5862 = vrot.slane %v5788, 3
  %v5863 = vsel %vm5833, %v5861, %v5862
  %v5864 = vrot.slane %v5789, 3
  %v5865 = vrot.slane %v5791, 3
  %v5866 = vsel %vm5833, %v5864, %v5865
  %v5867 = vrot.slane %v5790, 3
  %v5868 = vrot.slane %v5792, 3
  %v5869 = vsel %vm5833, %v5867, %v5868
  %v5870 = vrot.slane %v5793, 3
  %v5871 = vrot.slane %v5795, 3
  %v5872 = vsel %vm5833, %v5870, %v5871
  %v5873 = vrot.slane %v5794, 3
  %v5874 = vrot.slane %v5796, 3
  %v5875 = vsel %vm5833, %v5873, %v5874
  %v5876 = vrot.slane %v5797, 3
  %v5877 = vrot.slane %v5799, 3
  %v5878 = vsel %vm5833, %v5876, %v5877
  %v5879 = vrot.slane %v5798, 3
  %v5880 = vrot.slane %v5800, 3
  %v5881 = vsel %vm5833, %v5879, %v5880
  %v5898 = vpack.c.bf16 %v5842, %v5836
  %v5899 = vpack.c.bf16 %v5845, %v5839
  %v5900 = vpack.c.bf16 %v5854, %v5848
  %v5901 = vpack.c.bf16 %v5857, %v5851
  %v5902 = vpack.c.bf16 %v5866, %v5860
  %v5903 = vpack.c.bf16 %v5869, %v5863
  %v5904 = vpack.c.bf16 %v5878, %v5872
  %v5905 = vpack.c.bf16 %v5881, %v5875
  %s5906 = scalar_lea.vmem %s4, 216
  %v5907 = vld [vmem:[%s5906] sm:$0xf]
  %v5908 = vld [vmem:[%s5906 + $0x4] sm:$0xf]
  %v5909 = vld [vmem:[%s5906 + $0x8] sm:$0xf]
  %v5910 = vld [vmem:[%s5906 + $0xc] sm:$0xf]
  %v5911 = vld [vmem:[%s5906 + $0x10] sm:$0xf]
  %v5912 = vld [vmem:[%s5906 + $0x14] sm:$0xf]
  %v5913 = vld [vmem:[%s5906 + $0x18] sm:$0xf]
  %v5914 = vld [vmem:[%s5906 + $0x1c] sm:$0xf]
  %v5915 = vld [vmem:[%s5906 + $0x20] sm:$0xf]
  %v5916 = vld [vmem:[%s5906 + $0x24] sm:$0xf]
  %v5917 = vld [vmem:[%s5906 + $0x28] sm:$0xf]
  %v5918 = vld [vmem:[%s5906 + $0x2c] sm:$0xf]
  %v5919 = vld [vmem:[%s5906 + $0x30] sm:$0xf]
  %v5920 = vld [vmem:[%s5906 + $0x34] sm:$0xf]
  %v5921 = vld [vmem:[%s5906 + $0x38] sm:$0xf]
  %v5922 = vld [vmem:[%s5906 + $0x3c] sm:$0xf]
  %v5923 = vld [vmem:[%s5906 + $0x40] sm:$0xf]
  %v5924 = vld [vmem:[%s5906 + $0x44] sm:$0xf]
  %v5943 = vunpack.c.l.b16 %v5907
  %v5944 = vunpack.c.l.b16 %v5908
  %v5945 = vunpack.c.l.b16 %v5909
  %v5946 = vunpack.c.l.b16 %v5910
  %v5947 = vunpack.c.l.b16 %v5911
  %v5948 = vunpack.c.l.b16 %v5912
  %v5949 = vunpack.c.l.b16 %v5913
  %v5950 = vunpack.c.l.b16 %v5914
  %v5951 = vunpack.c.l.b16 %v5915
  %v5952 = vunpack.c.l.b16 %v5916
  %v5953 = vunpack.c.l.b16 %v5917
  %v5954 = vunpack.c.l.b16 %v5918
  %v5955 = vunpack.c.l.b16 %v5919
  %v5956 = vunpack.c.l.b16 %v5920
  %v5957 = vunpack.c.l.b16 %v5921
  %v5958 = vunpack.c.l.b16 %v5922
  %v5959 = vunpack.c.l.b16 %v5923
  %v5960 = vunpack.c.l.b16 %v5924
  %v5961 = vpack.c.b16 %v5944, %v5943
  %v5962 = vpack.c.b16 %v5946, %v5945
  %v5963 = vpack.c.b16 %v5948, %v5947
  %v5964 = vpack.c.b16 %v5950, %v5949
  %v5965 = vpack.c.b16 %v5952, %v5951
  %v5966 = vpack.c.b16 %v5954, %v5953
  %v5967 = vpack.c.b16 %v5956, %v5955
  %v5968 = vpack.c.b16 %v5958, %v5957
  %v5969 = vpack.c.b16 %v5960, %v5959
  %v5980 = vsel %vm1569, %v5899, 0
  %v5983 = vsel %vm1569, %v5901, 0
  %v5986 = vsel %vm1569, %v5903, 0
  %v5989 = vsel %vm1569, %v5905, 0
  %5991 = vmatprep.subr.bf16.mxu0 0
  %5992 = vmatpush1.bf16.msra.mxu0 %v5968
  %5993 = vmatprep.subr.bf16.mxu0 0
  %5994 = vmatpush1.bf16.msra.mxu0 %v5967
  %5995 = vmatprep.subr.bf16.mxu0 0
  %5996 = vmatpush1.bf16.msra.mxu0 %v5966
  %5997 = vmatprep.subr.bf16.mxu0 0
  %5998 = vmatpush1.bf16.msra.mxu0 %v5965
  %5999 = vmatprep.subr.bf16.mxu0 0
  %6000 = vmatpush1.bf16.msra.mxu0 %v5964
  %6001 = vmatprep.subr.bf16.mxu0 0
  %6002 = vmatpush1.bf16.msra.mxu0 %v5963
  %6003 = vmatprep.subr.bf16.mxu0 0
  %6004 = vmatpush1.bf16.msra.mxu0 %v5962
  %6005 = vmatprep.subr.bf16.mxu0 0
  %6006 = vmatpush1.bf16.msra.mxu0 %v5961
  %6007 = vmatprep.subr.bf16.mxu0 0
  %6008 = vmatpush2.bf16.msra.mxu0 0
  %6009 = vmatprep.subr.bf16.mxu0 0
  %6010 = vmatpush2.bf16.msra.mxu0 0
  %6011 = vmatprep.subr.bf16.mxu0 0
  %6012 = vmatpush2.bf16.msra.mxu0 0
  %6013 = vmatprep.subr.bf16.mxu0 0
  %6014 = vmatpush2.bf16.msra.mxu0 0
  %6015 = vmatprep.subr.bf16.mxu0 0
  %6016 = vmatpush2.bf16.msra.mxu0 0
  %6017 = vmatprep.subr.bf16.mxu0 0
  %6018 = vmatpush2.bf16.msra.mxu0 0
  %6019 = vmatprep.subr.bf16.mxu0 0
  %6020 = vmatpush2.bf16.msra.mxu0 0
  %6021 = vmatprep.subr.bf16.mxu0 0
  %6022 = vmatpush2.bf16.msra.mxu0 %v5969
  %6023 = vmatprep.mubr.bf16.mxu0 %v5980
  %6024 = vmatmul.mubr.bf16.gmra.mxu0 %v5898
  %v6025 = vpop.f32.mrf.mxu0
  %v6026 = vadd.f32 0.0, %v6025
  %v6027 = vpop.f32.mrf.mxu0
  %v6028 = vpop.f32.mrf.mxu0
  %v6029 = vadd.f32 0.0, %v6028
  %v6030 = vpop.f32.mrf.mxu0
  %6031 = vmatprep.mubr.bf16.mxu0 %v5983
  %6032 = vmatmul.mubr.bf16.gmra.mxu0 %v5900
  %v6033 = vpop.f32.mrf.mxu0
  %v6034 = vadd.f32 0.0, %v6033
  %v6035 = vpop.f32.mrf.mxu0
  %v6036 = vpop.f32.mrf.mxu0
  %v6037 = vadd.f32 0.0, %v6036
  %v6038 = vpop.f32.mrf.mxu0
  %6039 = vmatprep.mubr.bf16.mxu0 %v5986
  %6040 = vmatmul.mubr.bf16.gmra.mxu0 %v5902
  %v6041 = vpop.f32.mrf.mxu0
  %v6042 = vadd.f32 0.0, %v6041
  %v6043 = vpop.f32.mrf.mxu0
  %v6044 = vpop.f32.mrf.mxu0
  %v6045 = vadd.f32 0.0, %v6044
  %v6046 = vpop.f32.mrf.mxu0
  %6047 = vmatprep.mubr.bf16.mxu0 %v5989
  %6048 = vmatmul.mubr.bf16.gmra.mxu0 %v5904
  %v6049 = vpop.f32.mrf.mxu0
  %v6050 = vadd.f32 0.0, %v6049
  %v6051 = vpop.f32.mrf.mxu0
  %v6052 = vpop.f32.mrf.mxu0
  %v6053 = vadd.f32 0.0, %v6052
  %v6054 = vpop.f32.mrf.mxu0
  %6055 = vdwg.mxu0
  %v6056 = vadd.f32 %v5761, %v6026
  %v6057 = vadd.f32 %v5762, %v6029
  %v6058 = vadd.f32 %v5763, %v6034
  %v6059 = vadd.f32 %v5764, %v6037
  %v6060 = vadd.f32 %v5765, %v6042
  %v6061 = vadd.f32 %v5766, %v6045
  %v6062 = vadd.f32 %v5767, %v6050
  %v6063 = vadd.f32 %v5768, %v6053
  %v6064 = vld [vmem:[#allocation3] sm:$0xf0]
  %v6065 = vld [vmem:[#allocation3 + $0x8] sm:$0xf0]
  %v6066 = vld [vmem:[#allocation3 + $0x10] sm:$0xf]
  %v6067 = vld [vmem:[#allocation3 + $0x18] sm:$0xf]
  %v6068 = vld [vmem:[#allocation3 + $0x20] sm:$0xf0]
  %v6069 = vld [vmem:[#allocation3 + $0x28] sm:$0xf0]
  %v6070 = vld [vmem:[#allocation3 + $0x30] sm:$0xf]
  %v6071 = vld [vmem:[#allocation3 + $0x38] sm:$0xf]
  %v6072 = vld [vmem:[#allocation3 + $0x40] sm:$0xf0]
  %v6073 = vld [vmem:[#allocation3 + $0x48] sm:$0xf0]
  %v6074 = vld [vmem:[#allocation3 + $0x50] sm:$0xf]
  %v6075 = vld [vmem:[#allocation3 + $0x58] sm:$0xf]
  %v6076 = vld [vmem:[#allocation3 + $0x60] sm:$0xf0]
  %v6077 = vld [vmem:[#allocation3 + $0x68] sm:$0xf0]
  %v6078 = vld [vmem:[#allocation3 + $0x70] sm:$0xf]
  %v6079 = vld [vmem:[#allocation3 + $0x78] sm:$0xf]
  %v6080 = vld [vmem:[#allocation3 + $0x80] sm:$0xf0]
  %v6081 = vld [vmem:[#allocation3 + $0x88] sm:$0xf0]
  %v6082 = vld [vmem:[#allocation3 + $0x90] sm:$0xf]
  %v6083 = vld [vmem:[#allocation3 + $0x98] sm:$0xf]
  %v6084 = vld [vmem:[#allocation3 + $0xa0] sm:$0xf0]
  %v6085 = vld [vmem:[#allocation3 + $0xa8] sm:$0xf0]
  %v6086 = vld [vmem:[#allocation3 + $0xb0] sm:$0xf]
  %v6087 = vld [vmem:[#allocation3 + $0xb8] sm:$0xf]
  %v6088 = vld [vmem:[#allocation3 + $0xc0] sm:$0xf0]
  %v6089 = vld [vmem:[#allocation3 + $0xc8] sm:$0xf0]
  %v6090 = vld [vmem:[#allocation3 + $0xd0] sm:$0xf]
  %v6091 = vld [vmem:[#allocation3 + $0xd8] sm:$0xf]
  %v6092 = vld [vmem:[#allocation3 + $0xe0] sm:$0xf0]
  %v6093 = vld [vmem:[#allocation3 + $0xe8] sm:$0xf0]
  %v6094 = vld [vmem:[#allocation3 + $0xf0] sm:$0xf]
  %v6095 = vld [vmem:[#allocation3 + $0xf8] sm:$0xf]
  %vm6128 = vcmask 1043456
  %v6129 = vrot.slane %v6064, 4
  %v6130 = vrot.slane %v6066, 4
  %v6131 = vsel %vm6128, %v6129, %v6130
  %v6132 = vrot.slane %v6065, 4
  %v6133 = vrot.slane %v6067, 4
  %v6134 = vsel %vm6128, %v6132, %v6133
  %v6135 = vrot.slane %v6068, 4
  %v6136 = vrot.slane %v6070, 4
  %v6137 = vsel %vm6128, %v6135, %v6136
  %v6138 = vrot.slane %v6069, 4
  %v6139 = vrot.slane %v6071, 4
  %v6140 = vsel %vm6128, %v6138, %v6139
  %v6141 = vrot.slane %v6072, 4
  %v6142 = vrot.slane %v6074, 4
  %v6143 = vsel %vm6128, %v6141, %v6142
  %v6144 = vrot.slane %v6073, 4
  %v6145 = vrot.slane %v6075, 4
  %v6146 = vsel %vm6128, %v6144, %v6145
  %v6147 = vrot.slane %v6076, 4
  %v6148 = vrot.slane %v6078, 4
  %v6149 = vsel %vm6128, %v6147, %v6148
  %v6150 = vrot.slane %v6077, 4
  %v6151 = vrot.slane %v6079, 4
  %v6152 = vsel %vm6128, %v6150, %v6151
  %v6153 = vrot.slane %v6080, 4
  %v6154 = vrot.slane %v6082, 4
  %v6155 = vsel %vm6128, %v6153, %v6154
  %v6156 = vrot.slane %v6081, 4
  %v6157 = vrot.slane %v6083, 4
  %v6158 = vsel %vm6128, %v6156, %v6157
  %v6159 = vrot.slane %v6084, 4
  %v6160 = vrot.slane %v6086, 4
  %v6161 = vsel %vm6128, %v6159, %v6160
  %v6162 = vrot.slane %v6085, 4
  %v6163 = vrot.slane %v6087, 4
  %v6164 = vsel %vm6128, %v6162, %v6163
  %v6165 = vrot.slane %v6088, 4
  %v6166 = vrot.slane %v6090, 4
  %v6167 = vsel %vm6128, %v6165, %v6166
  %v6168 = vrot.slane %v6089, 4
  %v6169 = vrot.slane %v6091, 4
  %v6170 = vsel %vm6128, %v6168, %v6169
  %v6171 = vrot.slane %v6092, 4
  %v6172 = vrot.slane %v6094, 4
  %v6173 = vsel %vm6128, %v6171, %v6172
  %v6174 = vrot.slane %v6093, 4
  %v6175 = vrot.slane %v6095, 4
  %v6176 = vsel %vm6128, %v6174, %v6175
  %v6193 = vpack.c.bf16 %v6137, %v6131
  %v6194 = vpack.c.bf16 %v6140, %v6134
  %v6195 = vpack.c.bf16 %v6149, %v6143
  %v6196 = vpack.c.bf16 %v6152, %v6146
  %v6197 = vpack.c.bf16 %v6161, %v6155
  %v6198 = vpack.c.bf16 %v6164, %v6158
  %v6199 = vpack.c.bf16 %v6173, %v6167
  %v6200 = vpack.c.bf16 %v6176, %v6170
  %s6201 = scalar_lea.vmem %s4, 288
  %v6202 = vld [vmem:[%s6201] sm:$0xf]
  %v6203 = vld [vmem:[%s6201 + $0x4] sm:$0xf]
  %v6204 = vld [vmem:[%s6201 + $0x8] sm:$0xf]
  %v6205 = vld [vmem:[%s6201 + $0xc] sm:$0xf]
  %v6206 = vld [vmem:[%s6201 + $0x10] sm:$0xf]
  %v6207 = vld [vmem:[%s6201 + $0x14] sm:$0xf]
  %v6208 = vld [vmem:[%s6201 + $0x18] sm:$0xf]
  %v6209 = vld [vmem:[%s6201 + $0x1c] sm:$0xf]
  %v6210 = vld [vmem:[%s6201 + $0x20] sm:$0xf]
  %v6211 = vld [vmem:[%s6201 + $0x24] sm:$0xf]
  %v6212 = vld [vmem:[%s6201 + $0x28] sm:$0xf]
  %v6213 = vld [vmem:[%s6201 + $0x2c] sm:$0xf]
  %v6214 = vld [vmem:[%s6201 + $0x30] sm:$0xf]
  %v6215 = vld [vmem:[%s6201 + $0x34] sm:$0xf]
  %v6216 = vld [vmem:[%s6201 + $0x38] sm:$0xf]
  %v6217 = vld [vmem:[%s6201 + $0x3c] sm:$0xf]
  %v6218 = vld [vmem:[%s6201 + $0x40] sm:$0xf]
  %v6219 = vld [vmem:[%s6201 + $0x44] sm:$0xf]
  %v6238 = vunpack.c.l.b16 %v6202
  %v6239 = vunpack.c.l.b16 %v6203
  %v6240 = vunpack.c.l.b16 %v6204
  %v6241 = vunpack.c.l.b16 %v6205
  %v6242 = vunpack.c.l.b16 %v6206
  %v6243 = vunpack.c.l.b16 %v6207
  %v6244 = vunpack.c.l.b16 %v6208
  %v6245 = vunpack.c.l.b16 %v6209
  %v6246 = vunpack.c.l.b16 %v6210
  %v6247 = vunpack.c.l.b16 %v6211
  %v6248 = vunpack.c.l.b16 %v6212
  %v6249 = vunpack.c.l.b16 %v6213
  %v6250 = vunpack.c.l.b16 %v6214
  %v6251 = vunpack.c.l.b16 %v6215
  %v6252 = vunpack.c.l.b16 %v6216
  %v6253 = vunpack.c.l.b16 %v6217
  %v6254 = vunpack.c.l.b16 %v6218
  %v6255 = vunpack.c.l.b16 %v6219
  %v6256 = vpack.c.b16 %v6239, %v6238
  %v6257 = vpack.c.b16 %v6241, %v6240
  %v6258 = vpack.c.b16 %v6243, %v6242
  %v6259 = vpack.c.b16 %v6245, %v6244
  %v6260 = vpack.c.b16 %v6247, %v6246
  %v6261 = vpack.c.b16 %v6249, %v6248
  %v6262 = vpack.c.b16 %v6251, %v6250
  %v6263 = vpack.c.b16 %v6253, %v6252
  %v6264 = vpack.c.b16 %v6255, %v6254
  %v6275 = vsel %vm1569, %v6194, 0
  %v6278 = vsel %vm1569, %v6196, 0
  %v6281 = vsel %vm1569, %v6198, 0
  %v6284 = vsel %vm1569, %v6200, 0
  %6286 = vmatprep.subr.bf16.mxu0 0
  %6287 = vmatpush1.bf16.msra.mxu0 %v6263
  %6288 = vmatprep.subr.bf16.mxu0 0
  %6289 = vmatpush1.bf16.msra.mxu0 %v6262
  %6290 = vmatprep.subr.bf16.mxu0 0
  %6291 = vmatpush1.bf16.msra.mxu0 %v6261
  %6292 = vmatprep.subr.bf16.mxu0 0
  %6293 = vmatpush1.bf16.msra.mxu0 %v6260
  %6294 = vmatprep.subr.bf16.mxu0 0
  %6295 = vmatpush1.bf16.msra.mxu0 %v6259
  %6296 = vmatprep.subr.bf16.mxu0 0
  %6297 = vmatpush1.bf16.msra.mxu0 %v6258
  %6298 = vmatprep.subr.bf16.mxu0 0
  %6299 = vmatpush1.bf16.msra.mxu0 %v6257
  %6300 = vmatprep.subr.bf16.mxu0 0
  %6301 = vmatpush1.bf16.msra.mxu0 %v6256
  %6302 = vmatprep.subr.bf16.mxu0 0
  %6303 = vmatpush2.bf16.msra.mxu0 0
  %6304 = vmatprep.subr.bf16.mxu0 0
  %6305 = vmatpush2.bf16.msra.mxu0 0
  %6306 = vmatprep.subr.bf16.mxu0 0
  %6307 = vmatpush2.bf16.msra.mxu0 0
  %6308 = vmatprep.subr.bf16.mxu0 0
  %6309 = vmatpush2.bf16.msra.mxu0 0
  %6310 = vmatprep.subr.bf16.mxu0 0
  %6311 = vmatpush2.bf16.msra.mxu0 0
  %6312 = vmatprep.subr.bf16.mxu0 0
  %6313 = vmatpush2.bf16.msra.mxu0 0
  %6314 = vmatprep.subr.bf16.mxu0 0
  %6315 = vmatpush2.bf16.msra.mxu0 0
  %6316 = vmatprep.subr.bf16.mxu0 0
  %6317 = vmatpush2.bf16.msra.mxu0 %v6264
  %6318 = vmatprep.mubr.bf16.mxu0 %v6275
  %6319 = vmatmul.mubr.bf16.gmra.mxu0 %v6193
  %v6320 = vpop.f32.mrf.mxu0
  %v6321 = vadd.f32 0.0, %v6320
  %v6322 = vpop.f32.mrf.mxu0
  %v6323 = vpop.f32.mrf.mxu0
  %v6324 = vadd.f32 0.0, %v6323
  %v6325 = vpop.f32.mrf.mxu0
  %6326 = vmatprep.mubr.bf16.mxu0 %v6278
  %6327 = vmatmul.mubr.bf16.gmra.mxu0 %v6195
  %v6328 = vpop.f32.mrf.mxu0
  %v6329 = vadd.f32 0.0, %v6328
  %v6330 = vpop.f32.mrf.mxu0
  %v6331 = vpop.f32.mrf.mxu0
  %v6332 = vadd.f32 0.0, %v6331
  %v6333 = vpop.f32.mrf.mxu0
  %6334 = vmatprep.mubr.bf16.mxu0 %v6281
  %6335 = vmatmul.mubr.bf16.gmra.mxu0 %v6197
  %v6336 = vpop.f32.mrf.mxu0
  %v6337 = vadd.f32 0.0, %v6336
  %v6338 = vpop.f32.mrf.mxu0
  %v6339 = vpop.f32.mrf.mxu0
  %v6340 = vadd.f32 0.0, %v6339
  %v6341 = vpop.f32.mrf.mxu0
  %6342 = vmatprep.mubr.bf16.mxu0 %v6284
  %6343 = vmatmul.mubr.bf16.gmra.mxu0 %v6199
  %v6344 = vpop.f32.mrf.mxu0
  %v6345 = vadd.f32 0.0, %v6344
  %v6346 = vpop.f32.mrf.mxu0
  %v6347 = vpop.f32.mrf.mxu0
  %v6348 = vadd.f32 0.0, %v6347
  %v6349 = vpop.f32.mrf.mxu0
  %6350 = vdwg.mxu0
  %v6351 = vadd.f32 %v6056, %v6321
  %v6352 = vadd.f32 %v6057, %v6324
  %v6353 = vadd.f32 %v6058, %v6329
  %v6354 = vadd.f32 %v6059, %v6332
  %v6355 = vadd.f32 %v6060, %v6337
  %v6356 = vadd.f32 %v6061, %v6340
  %v6357 = vadd.f32 %v6062, %v6345
  %v6358 = vadd.f32 %v6063, %v6348
  %v6359 = vld [vmem:[%s5] sm:$0x1]
  %v6361 = vlaneseq
  %v6362 = vshrl.u32 %v6361, 7
  %v6363 = vsub.s32 0, %v6362
  %v6364 = vrot.slane %v6359, %v6363
  %v6366 = vadd.f32 %v6351, %v6364
  %v6367 = vadd.f32 %v6352, %v6364
  %v6368 = vadd.f32 %v6353, %v6364
  %v6369 = vadd.f32 %v6354, %v6364
  %v6370 = vadd.f32 %v6355, %v6364
  %v6371 = vadd.f32 %v6356, %v6364
  %v6372 = vadd.f32 %v6357, %v6364
  %v6373 = vadd.f32 %v6358, %v6364
  %v6374 = vmax.f32 %v6366, 0.0
  %v6375 = vmax.f32 %v6367, 0.0
  %v6376 = vmax.f32 %v6368, 0.0
  %v6377 = vmax.f32 %v6369, 0.0
  %v6378 = vmax.f32 %v6370, 0.0
  %v6379 = vmax.f32 %v6371, 0.0
  %v6380 = vmax.f32 %v6372, 0.0
  %v6381 = vmax.f32 %v6373, 0.0
  %6382 = vst [vmem:[#allocation4] sm:$0xff] %v6374
  %6383 = vst [vmem:[#allocation4 + $0x8] sm:$0xff] %v6375
  %6384 = vst [vmem:[#allocation4 + $0x10] sm:$0xff] %v6376
  %6385 = vst [vmem:[#allocation4 + $0x18] sm:$0xff] %v6377
  %6386 = vst [vmem:[#allocation4 + $0x20] sm:$0xff] %v6378
  %6387 = vst [vmem:[#allocation4 + $0x28] sm:$0xff] %v6379
  %6388 = vst [vmem:[#allocation4 + $0x30] sm:$0xff] %v6380
  %6389 = vst [vmem:[#allocation4 + $0x38] sm:$0xff] %v6381
  %v6390 = vld [vmem:[%s6] sm:$0xff]
  %v6391 = vld [vmem:[%s6 + $0x8] sm:$0xff]
  %v6392 = vld [vmem:[%s6 + $0x10] sm:$0xff]
  %v6393 = vld [vmem:[%s6 + $0x18] sm:$0xff]
  %v6394 = vld [vmem:[%s6 + $0x20] sm:$0xff]
  %v6395 = vld [vmem:[%s6 + $0x28] sm:$0xff]
  %v6396 = vld [vmem:[%s6 + $0x30] sm:$0xff]
  %v6397 = vld [vmem:[%s6 + $0x38] sm:$0xff]
  %v6398 = vld [vmem:[%s6 + $0x40] sm:$0xff]
  %v6399 = vld [vmem:[%s6 + $0x48] sm:$0xff]
  %v6400 = vld [vmem:[%s6 + $0x50] sm:$0xff]
  %v6401 = vld [vmem:[%s6 + $0x58] sm:$0xff]
  %v6402 = vld [vmem:[%s6 + $0x60] sm:$0xff]
  %v6403 = vld [vmem:[%s6 + $0x68] sm:$0xff]
  %v6404 = vld [vmem:[%s6 + $0x70] sm:$0xff]
  %v6405 = vld [vmem:[%s6 + $0x78] sm:$0xff]
  %v6406 = vld [vmem:[#allocation4] sm:$0x1]
  %v6407 = vld [vmem:[#allocation4 + $0x8] sm:$0x1]
  %v6408 = vld [vmem:[#allocation4 + $0x10] sm:$0x1]
  %v6409 = vld [vmem:[#allocation4 + $0x18] sm:$0x1]
  %v6410 = vld [vmem:[#allocation4 + $0x20] sm:$0x1]
  %v6411 = vld [vmem:[#allocation4 + $0x28] sm:$0x1]
  %v6412 = vld [vmem:[#allocation4 + $0x30] sm:$0x1]
  %v6413 = vld [vmem:[#allocation4 + $0x38] sm:$0x1]
  %v6414 = vld [vmem:[#allocation4 + $0x1] sm:$0x1]
  %v6415 = vld [vmem:[#allocation4 + $0x9] sm:$0x1]
  %v6416 = vld [vmem:[#allocation4 + $0x11] sm:$0x1]
  %v6417 = vld [vmem:[#allocation4 + $0x19] sm:$0x1]
  %v6418 = vld [vmem:[#allocation4 + $0x21] sm:$0x1]
  %v6419 = vld [vmem:[#allocation4 + $0x29] sm:$0x1]
  %v6420 = vld [vmem:[#allocation4 + $0x31] sm:$0x1]
  %v6421 = vld [vmem:[#allocation4 + $0x39] sm:$0x1]
  %v6422 = vmax.f32 %v6406, %v6414
  %v6423 = vmax.f32 %v6407, %v6415
  %v6424 = vmax.f32 %v6408, %v6416
  %v6425 = vmax.f32 %v6409, %v6417
  %v6426 = vmax.f32 %v6410, %v6418
  %v6427 = vmax.f32 %v6411, %v6419
  %v6428 = vmax.f32 %v6412, %v6420
  %v6429 = vmax.f32 %v6413, %v6421
  %v6438 = vrot.slane %v6423, 7
  %vm6439 = vcmask 1041409
  %v6440 = vsel %vm6439, %v6438, %v6422
  %v6441 = vrot.slane %v6424, 6
  %vm6442 = vcmask 1042434
  %v6443 = vsel %vm6442, %v6441, %v6440
  %v6444 = vrot.slane %v6425, 5
  %vm6445 = vcmask 1043459
  %v6446 = vsel %vm6445, %v6444, %v6443
  %v6447 = vrot.slane %v6426, 4
  %vm6448 = vcmask 1044484
  %v6449 = vsel %vm6448, %v6447, %v6446
  %v6450 = vrot.slane %v6427, 3
  %vm6451 = vcmask 1045509
  %v6452 = vsel %vm6451, %v6450, %v6449
  %v6453 = vrot.slane %v6428, 2
  %vm6454 = vcmask 1046534
  %v6455 = vsel %vm6454, %v6453, %v6452
  %v6456 = vrot.slane %v6429, 1
  %vm6457 = vcmask 1047559
  %v6458 = vsel %vm6457, %v6456, %v6455
  %6460 = vmatprep.subr.mxu0 0.0
  %6461 = vmatpush1.msra.mxu0 %v6405
  %6462 = vmatprep.subr.mxu0 0.0
  %6463 = vmatpush1.msra.mxu0 %v6404
  %6464 = vmatprep.subr.mxu0 0.0
  %6465 = vmatpush1.msra.mxu0 %v6403
  %6466 = vmatprep.subr.mxu0 0.0
  %6467 = vmatpush1.msra.mxu0 %v6402
  %6468 = vmatprep.subr.mxu0 0.0
  %6469 = vmatpush1.msra.mxu0 %v6401
  %6470 = vmatprep.subr.mxu0 0.0
  %6471 = vmatpush1.msra.mxu0 %v6400
  %6472 = vmatprep.subr.mxu0 0.0
  %6473 = vmatpush1.msra.mxu0 %v6399
  %6474 = vmatprep.subr.mxu0 0.0
  %6475 = vmatpush1.msra.mxu0 %v6398
  %6476 = vmatprep.subr.mxu0 0.0
  %6477 = vmatpush1.msra.mxu0 %v6397
  %6478 = vmatprep.subr.mxu0 0.0
  %6479 = vmatpush1.msra.mxu0 %v6396
  %6480 = vmatprep.subr.mxu0 0.0
  %6481 = vmatpush1.msra.mxu0 %v6395
  %6482 = vmatprep.subr.mxu0 0.0
  %6483 = vmatpush1.msra.mxu0 %v6394
  %6484 = vmatprep.subr.mxu0 0.0
  %6485 = vmatpush1.msra.mxu0 %v6393
  %6486 = vmatprep.subr.mxu0 0.0
  %6487 = vmatpush1.msra.mxu0 %v6392
  %6488 = vmatprep.subr.mxu0 0.0
  %6489 = vmatpush1.msra.mxu0 %v6391
  %6490 = vmatprep.subr.mxu0 0.0
  %6491 = vmatpush1.msra.mxu0 %v6390
  %6492 = vmatprep.subr.mxu0 0.0
  %6493 = vmatpush2.msra.mxu0 0.0
  %6494 = vmatprep.subr.mxu0 0.0
  %6495 = vmatpush2.msra.mxu0 0.0
  %6496 = vmatprep.subr.mxu0 0.0
  %6497 = vmatpush2.msra.mxu0 0.0
  %6498 = vmatprep.subr.mxu0 0.0
  %6499 = vmatpush2.msra.mxu0 0.0
  %6500 = vmatprep.subr.mxu0 0.0
  %6501 = vmatpush2.msra.mxu0 0.0
  %6502 = vmatprep.subr.mxu0 0.0
  %6503 = vmatpush2.msra.mxu0 0.0
  %6504 = vmatprep.subr.mxu0 0.0
  %6505 = vmatpush2.msra.mxu0 0.0
  %6506 = vmatprep.subr.mxu0 0.0
  %6507 = vmatpush2.msra.mxu0 0.0
  %6508 = vmatprep.subr.mxu0 0.0
  %6509 = vmatpush2.msra.mxu0 0.0
  %6510 = vmatprep.subr.mxu0 0.0
  %6511 = vmatpush2.msra.mxu0 0.0
  %6512 = vmatprep.subr.mxu0 0.0
  %6513 = vmatpush2.msra.mxu0 0.0
  %6514 = vmatprep.subr.mxu0 0.0
  %6515 = vmatpush2.msra.mxu0 0.0
  %6516 = vmatprep.subr.mxu0 0.0
  %6517 = vmatpush2.msra.mxu0 0.0
  %6518 = vmatprep.subr.mxu0 0.0
  %6519 = vmatpush2.msra.mxu0 0.0
  %6520 = vmatprep.subr.mxu0 0.0
  %6521 = vmatpush2.msra.mxu0 0.0
  %6522 = vmatprep.subr.mxu0 0.0
  %6523 = vmatpush2.msra.mxu0 0.0
  %6524 = vmatprep.mubr.f32.mxu0 0.0
  %6525 = vmatmul.mubr.f32.gmra.mxu0 %v6458
  %v6526 = vpop.f32.mrf.mxu0
  %v6527 = vadd.f32 0.0, %v6526
  %v6528 = vpop.f32.mrf.mxu0
  %6529 = vdwg.mxu0
  %v6531 = vrot.slane %v6527, 1
  %v6532 = vrot.slane %v6527, 2
  %v6533 = vrot.slane %v6527, 3
  %v6534 = vrot.slane %v6527, 4
  %v6535 = vrot.slane %v6527, 5
  %v6536 = vrot.slane %v6527, 6
  %v6537 = vrot.slane %v6527, 7
  %v6546 = vmax.f32 %v6422, %v6527
  %v6547 = vmax.f32 %v6423, %v6531
  %v6548 = vmax.f32 %v6424, %v6532
  %v6549 = vmax.f32 %v6425, %v6533
  %v6550 = vmax.f32 %v6426, %v6534
  %v6551 = vmax.f32 %v6427, %v6535
  %v6552 = vmax.f32 %v6428, %v6536
  %v6553 = vmax.f32 %v6429, %v6537
  %v6554 = vpack.c.bf16 %v6546, %v6546
  %v6555 = vpack.c.bf16 %v6547, %v6547
  %v6556 = vpack.c.bf16 %v6548, %v6548
  %v6557 = vpack.c.bf16 %v6549, %v6549
  %v6558 = vpack.c.bf16 %v6550, %v6550
  %v6559 = vpack.c.bf16 %v6551, %v6551
  %v6560 = vpack.c.bf16 %v6552, %v6552
  %v6561 = vpack.c.bf16 %v6553, %v6553
  %v6562 = vld [vmem:[%s7] sm:$0xf]
  %v6563 = vld [vmem:[%s7 + $0x4] sm:$0xf]
  %v6564 = vld [vmem:[%s7 + $0x8] sm:$0xf]
  %v6565 = vld [vmem:[%s7 + $0xc] sm:$0xf]
  %v6566 = vld [vmem:[%s7 + $0x10] sm:$0xf]
  %v6567 = vld [vmem:[%s7 + $0x14] sm:$0xf]
  %v6568 = vld [vmem:[%s7 + $0x18] sm:$0xf]
  %v6569 = vld [vmem:[%s7 + $0x1c] sm:$0xf]
  %v6570 = vld [vmem:[%s7 + $0x20] sm:$0xf]
  %v6571 = vld [vmem:[%s7 + $0x24] sm:$0xf]
  %v6572 = vld [vmem:[%s7 + $0x28] sm:$0xf]
  %v6573 = vld [vmem:[%s7 + $0x2c] sm:$0xf]
  %v6574 = vld [vmem:[%s7 + $0x30] sm:$0xf]
  %v6575 = vld [vmem:[%s7 + $0x34] sm:$0xf]
  %v6576 = vld [vmem:[%s7 + $0x38] sm:$0xf]
  %v6577 = vld [vmem:[%s7 + $0x3c] sm:$0xf]
  %v6578 = vld [vmem:[#allocation4 + $0x2] sm:$0x1]
  %v6579 = vld [vmem:[#allocation4 + $0xa] sm:$0x1]
  %v6580 = vld [vmem:[#allocation4 + $0x12] sm:$0x1]
  %v6581 = vld [vmem:[#allocation4 + $0x1a] sm:$0x1]
  %v6582 = vld [vmem:[#allocation4 + $0x22] sm:$0x1]
  %v6583 = vld [vmem:[#allocation4 + $0x2a] sm:$0x1]
  %v6584 = vld [vmem:[#allocation4 + $0x32] sm:$0x1]
  %v6585 = vld [vmem:[#allocation4 + $0x3a] sm:$0x1]
  %v6586 = vld [vmem:[#allocation4 + $0x3] sm:$0x1]
  %v6587 = vld [vmem:[#allocation4 + $0xb] sm:$0x1]
  %v6588 = vld [vmem:[#allocation4 + $0x13] sm:$0x1]
  %v6589 = vld [vmem:[#allocation4 + $0x1b] sm:$0x1]
  %v6590 = vld [vmem:[#allocation4 + $0x23] sm:$0x1]
  %v6591 = vld [vmem:[#allocation4 + $0x2b] sm:$0x1]
  %v6592 = vld [vmem:[#allocation4 + $0x33] sm:$0x1]
  %v6593 = vld [vmem:[#allocation4 + $0x3b] sm:$0x1]
  %v6594 = vmax.f32 %v6578, %v6586
  %v6595 = vmax.f32 %v6579, %v6587
  %v6596 = vmax.f32 %v6580, %v6588
  %v6597 = vmax.f32 %v6581, %v6589
  %v6598 = vmax.f32 %v6582, %v6590
  %v6599 = vmax.f32 %v6583, %v6591
  %v6600 = vmax.f32 %v6584, %v6592
  %v6601 = vmax.f32 %v6585, %v6593
  %v6610 = vrot.slane %v6595, 7
  %v6611 = vsel %vm6439, %v6610, %v6594
  %v6612 = vrot.slane %v6596, 6
  %v6613 = vsel %vm6442, %v6612, %v6611
  %v6614 = vrot.slane %v6597, 5
  %v6615 = vsel %vm6445, %v6614, %v6613
  %v6616 = vrot.slane %v6598, 4
  %v6617 = vsel %vm6448, %v6616, %v6615
  %v6618 = vrot.slane %v6599, 3
  %v6619 = vsel %vm6451, %v6618, %v6617
  %v6620 = vrot.slane %v6600, 2
  %v6621 = vsel %vm6454, %v6620, %v6619
  %v6622 = vrot.slane %v6601, 1
  %v6623 = vsel %vm6457, %v6622, %v6621
  %6625 = vmatprep.subr.mxu0 0.0
  %6626 = vmatpush1.msra.mxu0 %v6405
  %6627 = vmatprep.subr.mxu0 0.0
  %6628 = vmatpush1.msra.mxu0 %v6404
  %6629 = vmatprep.subr.mxu0 0.0
  %6630 = vmatpush1.msra.mxu0 %v6403
  %6631 = vmatprep.subr.mxu0 0.0
  %6632 = vmatpush1.msra.mxu0 %v6402
  %6633 = vmatprep.subr.mxu0 0.0
  %6634 = vmatpush1.msra.mxu0 %v6401
  %6635 = vmatprep.subr.mxu0 0.0
  %6636 = vmatpush1.msra.mxu0 %v6400
  %6637 = vmatprep.subr.mxu0 0.0
  %6638 = vmatpush1.msra.mxu0 %v6399
  %6639 = vmatprep.subr.mxu0 0.0
  %6640 = vmatpush1.msra.mxu0 %v6398
  %6641 = vmatprep.subr.mxu0 0.0
  %6642 = vmatpush1.msra.mxu0 %v6397
  %6643 = vmatprep.subr.mxu0 0.0
  %6644 = vmatpush1.msra.mxu0 %v6396
  %6645 = vmatprep.subr.mxu0 0.0
  %6646 = vmatpush1.msra.mxu0 %v6395
  %6647 = vmatprep.subr.mxu0 0.0
  %6648 = vmatpush1.msra.mxu0 %v6394
  %6649 = vmatprep.subr.mxu0 0.0
  %6650 = vmatpush1.msra.mxu0 %v6393
  %6651 = vmatprep.subr.mxu0 0.0
  %6652 = vmatpush1.msra.mxu0 %v6392
  %6653 = vmatprep.subr.mxu0 0.0
  %6654 = vmatpush1.msra.mxu0 %v6391
  %6655 = vmatprep.subr.mxu0 0.0
  %6656 = vmatpush1.msra.mxu0 %v6390
  %6657 = vmatprep.subr.mxu0 0.0
  %6658 = vmatpush2.msra.mxu0 0.0
  %6659 = vmatprep.subr.mxu0 0.0
  %6660 = vmatpush2.msra.mxu0 0.0
  %6661 = vmatprep.subr.mxu0 0.0
  %6662 = vmatpush2.msra.mxu0 0.0
  %6663 = vmatprep.subr.mxu0 0.0
  %6664 = vmatpush2.msra.mxu0 0.0
  %6665 = vmatprep.subr.mxu0 0.0
  %6666 = vmatpush2.msra.mxu0 0.0
  %6667 = vmatprep.subr.mxu0 0.0
  %6668 = vmatpush2.msra.mxu0 0.0
  %6669 = vmatprep.subr.mxu0 0.0
  %6670 = vmatpush2.msra.mxu0 0.0
  %6671 = vmatprep.subr.mxu0 0.0
  %6672 = vmatpush2.msra.mxu0 0.0
  %6673 = vmatprep.subr.mxu0 0.0
  %6674 = vmatpush2.msra.mxu0 0.0
  %6675 = vmatprep.subr.mxu0 0.0
  %6676 = vmatpush2.msra.mxu0 0.0
  %6677 = vmatprep.subr.mxu0 0.0
  %6678 = vmatpush2.msra.mxu0 0.0
  %6679 = vmatprep.subr.mxu0 0.0
  %6680 = vmatpush2.msra.mxu0 0.0
  %6681 = vmatprep.subr.mxu0 0.0
  %6682 = vmatpush2.msra.mxu0 0.0
  %6683 = vmatprep.subr.mxu0 0.0
  %6684 = vmatpush2.msra.mxu0 0.0
  %6685 = vmatprep.subr.mxu0 0.0
  %6686 = vmatpush2.msra.mxu0 0.0
  %6687 = vmatprep.subr.mxu0 0.0
  %6688 = vmatpush2.msra.mxu0 0.0
  %6689 = vmatprep.mubr.f32.mxu0 0.0
  %6690 = vmatmul.mubr.f32.gmra.mxu0 %v6623
  %v6691 = vpop.f32.mrf.mxu0
  %v6692 = vadd.f32 0.0, %v6691
  %v6693 = vpop.f32.mrf.mxu0
  %6694 = vdwg.mxu0
  %v6696 = vrot.slane %v6692, 1
  %v6697 = vrot.slane %v6692, 2
  %v6698 = vrot.slane %v6692, 3
  %v6699 = vrot.slane %v6692, 4
  %v6700 = vrot.slane %v6692, 5
  %v6701 = vrot.slane %v6692, 6
  %v6702 = vrot.slane %v6692, 7
  %v6711 = vmax.f32 %v6594, %v6692
  %v6712 = vmax.f32 %v6595, %v6696
  %v6713 = vmax.f32 %v6596, %v6697
  %v6714 = vmax.f32 %v6597, %v6698
  %v6715 = vmax.f32 %v6598, %v6699
  %v6716 = vmax.f32 %v6599, %v6700
  %v6717 = vmax.f32 %v6600, %v6701
  %v6718 = vmax.f32 %v6601, %v6702
  %v6719 = vpack.c.bf16 %v6711, %v6711
  %v6720 = vpack.c.bf16 %v6712, %v6712
  %v6721 = vpack.c.bf16 %v6713, %v6713
  %v6722 = vpack.c.bf16 %v6714, %v6714
  %v6723 = vpack.c.bf16 %v6715, %v6715
  %v6724 = vpack.c.bf16 %v6716, %v6716
  %v6725 = vpack.c.bf16 %v6717, %v6717
  %v6726 = vpack.c.bf16 %v6718, %v6718
  %s6727 = scalar_lea.vmem %s7, 64
  %v6728 = vld [vmem:[%s6727] sm:$0xf]
  %v6729 = vld [vmem:[%s6727 + $0x4] sm:$0xf]
  %v6730 = vld [vmem:[%s6727 + $0x8] sm:$0xf]
  %v6731 = vld [vmem:[%s6727 + $0xc] sm:$0xf]
  %v6732 = vld [vmem:[%s6727 + $0x10] sm:$0xf]
  %v6733 = vld [vmem:[%s6727 + $0x14] sm:$0xf]
  %v6734 = vld [vmem:[%s6727 + $0x18] sm:$0xf]
  %v6735 = vld [vmem:[%s6727 + $0x1c] sm:$0xf]
  %v6736 = vld [vmem:[%s6727 + $0x20] sm:$0xf]
  %v6737 = vld [vmem:[%s6727 + $0x24] sm:$0xf]
  %v6738 = vld [vmem:[%s6727 + $0x28] sm:$0xf]
  %v6739 = vld [vmem:[%s6727 + $0x2c] sm:$0xf]
  %v6740 = vld [vmem:[%s6727 + $0x30] sm:$0xf]
  %v6741 = vld [vmem:[%s6727 + $0x34] sm:$0xf]
  %v6742 = vld [vmem:[%s6727 + $0x38] sm:$0xf]
  %v6743 = vld [vmem:[%s6727 + $0x3c] sm:$0xf]
  %v6752 = vunpack.c.l.b16 %v6719
  %v6753 = vunpack.c.l.b16 %v6720
  %v6754 = vunpack.c.l.b16 %v6721
  %v6755 = vunpack.c.l.b16 %v6722
  %v6756 = vunpack.c.l.b16 %v6723
  %v6757 = vunpack.c.l.b16 %v6724
  %v6758 = vunpack.c.l.b16 %v6725
  %v6759 = vunpack.c.l.b16 %v6726
  %v6760 = vrot.slane %v6753, 7
  %v6761 = vsel %vm6439, %v6760, %v6752
  %v6762 = vrot.slane %v6754, 6
  %v6763 = vsel %vm6442, %v6762, %v6761
  %v6764 = vrot.slane %v6755, 5
  %v6765 = vsel %vm6445, %v6764, %v6763
  %v6766 = vrot.slane %v6756, 4
  %v6767 = vsel %vm6448, %v6766, %v6765
  %v6768 = vrot.slane %v6757, 3
  %v6769 = vsel %vm6451, %v6768, %v6767
  %v6770 = vrot.slane %v6758, 2
  %v6771 = vsel %vm6454, %v6770, %v6769
  %v6772 = vrot.slane %v6759, 1
  %v6773 = vsel %vm6457, %v6772, %v6771
  %v6774 = vpack.c.b16 %v6773, %v6773
  %v6792 = vunpack.c.l.b16 %v6728
  %v6793 = vunpack.c.l.b16 %v6729
  %v6794 = vunpack.c.l.b16 %v6730
  %v6795 = vunpack.c.l.b16 %v6731
  %v6796 = vunpack.c.l.b16 %v6732
  %v6797 = vunpack.c.l.b16 %v6733
  %v6798 = vunpack.c.l.b16 %v6734
  %v6799 = vunpack.c.l.b16 %v6735
  %v6800 = vunpack.c.l.b16 %v6736
  %v6801 = vunpack.c.l.b16 %v6737
  %v6802 = vunpack.c.l.b16 %v6738
  %v6803 = vunpack.c.l.b16 %v6739
  %v6804 = vunpack.c.l.b16 %v6740
  %v6805 = vunpack.c.l.b16 %v6741
  %v6806 = vunpack.c.l.b16 %v6742
  %v6807 = vunpack.c.l.b16 %v6743
  %v6808 = vpack.c.b16 %v6793, %v6792
  %v6809 = vpack.c.b16 %v6795, %v6794
  %v6810 = vpack.c.b16 %v6797, %v6796
  %v6811 = vpack.c.b16 %v6799, %v6798
  %v6812 = vpack.c.b16 %v6801, %v6800
  %v6813 = vpack.c.b16 %v6803, %v6802
  %v6814 = vpack.c.b16 %v6805, %v6804
  %v6815 = vpack.c.b16 %v6807, %v6806
  %6824 = vmatprep.subr.bf16.mxu0 0
  %6825 = vmatpush1.bf16.msra.mxu0 %v6815
  %6826 = vmatprep.subr.bf16.mxu0 0
  %6827 = vmatpush1.bf16.msra.mxu0 %v6814
  %6828 = vmatprep.subr.bf16.mxu0 0
  %6829 = vmatpush1.bf16.msra.mxu0 %v6813
  %6830 = vmatprep.subr.bf16.mxu0 0
  %6831 = vmatpush1.bf16.msra.mxu0 %v6812
  %6832 = vmatprep.subr.bf16.mxu0 0
  %6833 = vmatpush1.bf16.msra.mxu0 %v6811
  %6834 = vmatprep.subr.bf16.mxu0 0
  %6835 = vmatpush1.bf16.msra.mxu0 %v6810
  %6836 = vmatprep.subr.bf16.mxu0 0
  %6837 = vmatpush1.bf16.msra.mxu0 %v6809
  %6838 = vmatprep.subr.bf16.mxu0 0
  %6839 = vmatpush1.bf16.msra.mxu0 %v6808
  %6840 = vmatprep.subr.bf16.mxu0 0
  %6841 = vmatpush2.bf16.msra.mxu0 0
  %6842 = vmatprep.subr.bf16.mxu0 0
  %6843 = vmatpush2.bf16.msra.mxu0 0
  %6844 = vmatprep.subr.bf16.mxu0 0
  %6845 = vmatpush2.bf16.msra.mxu0 0
  %6846 = vmatprep.subr.bf16.mxu0 0
  %6847 = vmatpush2.bf16.msra.mxu0 0
  %6848 = vmatprep.subr.bf16.mxu0 0
  %6849 = vmatpush2.bf16.msra.mxu0 0
  %6850 = vmatprep.subr.bf16.mxu0 0
  %6851 = vmatpush2.bf16.msra.mxu0 0
  %6852 = vmatprep.subr.bf16.mxu0 0
  %6853 = vmatpush2.bf16.msra.mxu0 0
  %6854 = vmatprep.subr.bf16.mxu0 0
  %6855 = vmatpush2.bf16.msra.mxu0 0
  %6856 = vmatprep.mubr.bf16.mxu0 0
  %6857 = vmatmul.mubr.bf16.gmra.mxu0 %v6774
  %v6858 = vpop.f32.mrf.mxu0
  %v6859 = vadd.f32 0.0, %v6858
  %v6860 = vpop.f32.mrf.mxu0
  %v6861 = vpop.f32.mrf.mxu0
  %v6862 = vpop.f32.mrf.mxu0
  %6863 = vdwg.mxu0
  %v6872 = vunpack.c.l.b16 %v6554
  %v6873 = vunpack.c.l.b16 %v6555
  %v6874 = vunpack.c.l.b16 %v6556
  %v6875 = vunpack.c.l.b16 %v6557
  %v6876 = vunpack.c.l.b16 %v6558
  %v6877 = vunpack.c.l.b16 %v6559
  %v6878 = vunpack.c.l.b16 %v6560
  %v6879 = vunpack.c.l.b16 %v6561
  %v6880 = vrot.slane %v6873, 7
  %v6881 = vsel %vm6439, %v6880, %v6872
  %v6882 = vrot.slane %v6874, 6
  %v6883 = vsel %vm6442, %v6882, %v6881
  %v6884 = vrot.slane %v6875, 5
  %v6885 = vsel %vm6445, %v6884, %v6883
  %v6886 = vrot.slane %v6876, 4
  %v6887 = vsel %vm6448, %v6886, %v6885
  %v6888 = vrot.slane %v6877, 3
  %v6889 = vsel %vm6451, %v6888, %v6887
  %v6890 = vrot.slane %v6878, 2
  %v6891 = vsel %vm6454, %v6890, %v6889
  %v6892 = vrot.slane %v6879, 1
  %v6893 = vsel %vm6457, %v6892, %v6891
  %v6894 = vpack.c.b16 %v6893, %v6893
  %v6912 = vunpack.c.l.b16 %v6562
  %v6913 = vunpack.c.l.b16 %v6563
  %v6914 = vunpack.c.l.b16 %v6564
  %v6915 = vunpack.c.l.b16 %v6565
  %v6916 = vunpack.c.l.b16 %v6566
  %v6917 = vunpack.c.l.b16 %v6567
  %v6918 = vunpack.c.l.b16 %v6568
  %v6919 = vunpack.c.l.b16 %v6569
  %v6920 = vunpack.c.l.b16 %v6570
  %v6921 = vunpack.c.l.b16 %v6571
  %v6922 = vunpack.c.l.b16 %v6572
  %v6923 = vunpack.c.l.b16 %v6573
  %v6924 = vunpack.c.l.b16 %v6574
  %v6925 = vunpack.c.l.b16 %v6575
  %v6926 = vunpack.c.l.b16 %v6576
  %v6927 = vunpack.c.l.b16 %v6577
  %v6928 = vpack.c.b16 %v6913, %v6912
  %v6929 = vpack.c.b16 %v6915, %v6914
  %v6930 = vpack.c.b16 %v6917, %v6916
  %v6931 = vpack.c.b16 %v6919, %v6918
  %v6932 = vpack.c.b16 %v6921, %v6920
  %v6933 = vpack.c.b16 %v6923, %v6922
  %v6934 = vpack.c.b16 %v6925, %v6924
  %v6935 = vpack.c.b16 %v6927, %v6926
  %6944 = vmatprep.subr.bf16.mxu0 0
  %6945 = vmatpush1.bf16.msra.mxu0 %v6935
  %6946 = vmatprep.subr.bf16.mxu0 0
  %6947 = vmatpush1.bf16.msra.mxu0 %v6934
  %6948 = vmatprep.subr.bf16.mxu0 0
  %6949 = vmatpush1.bf16.msra.mxu0 %v6933
  %6950 = vmatprep.subr.bf16.mxu0 0
  %6951 = vmatpush1.bf16.msra.mxu0 %v6932
  %6952 = vmatprep.subr.bf16.mxu0 0
  %6953 = vmatpush1.bf16.msra.mxu0 %v6931
  %6954 = vmatprep.subr.bf16.mxu0 0
  %6955 = vmatpush1.bf16.msra.mxu0 %v6930
  %6956 = vmatprep.subr.bf16.mxu0 0
  %6957 = vmatpush1.bf16.msra.mxu0 %v6929
  %6958 = vmatprep.subr.bf16.mxu0 0
  %6959 = vmatpush1.bf16.msra.mxu0 %v6928
  %6960 = vmatprep.subr.bf16.mxu0 0
  %6961 = vmatpush2.bf16.msra.mxu0 0
  %6962 = vmatprep.subr.bf16.mxu0 0
  %6963 = vmatpush2.bf16.msra.mxu0 0
  %6964 = vmatprep.subr.bf16.mxu0 0
  %6965 = vmatpush2.bf16.msra.mxu0 0
  %6966 = vmatprep.subr.bf16.mxu0 0
  %6967 = vmatpush2.bf16.msra.mxu0 0
  %6968 = vmatprep.subr.bf16.mxu0 0
  %6969 = vmatpush2.bf16.msra.mxu0 0
  %6970 = vmatprep.subr.bf16.mxu0 0
  %6971 = vmatpush2.bf16.msra.mxu0 0
  %6972 = vmatprep.subr.bf16.mxu0 0
  %6973 = vmatpush2.bf16.msra.mxu0 0
  %6974 = vmatprep.subr.bf16.mxu0 0
  %6975 = vmatpush2.bf16.msra.mxu0 0
  %6976 = vmatprep.mubr.bf16.mxu0 0
  %6977 = vmatmul.mubr.bf16.gmra.mxu0 %v6894
  %v6978 = vpop.f32.mrf.mxu0
  %v6979 = vadd.f32 %v6859, %v6978
  %v6980 = vpop.f32.mrf.mxu0
  %v6981 = vpop.f32.mrf.mxu0
  %v6982 = vpop.f32.mrf.mxu0
  %6983 = vdwg.mxu0
  %v6984 = vld [vmem:[#allocation4 + $0x4] sm:$0x1]
  %v6985 = vld [vmem:[#allocation4 + $0xc] sm:$0x1]
  %v6986 = vld [vmem:[#allocation4 + $0x14] sm:$0x1]
  %v6987 = vld [vmem:[#allocation4 + $0x1c] sm:$0x1]
  %v6988 = vld [vmem:[#allocation4 + $0x24] sm:$0x1]
  %v6989 = vld [vmem:[#allocation4 + $0x2c] sm:$0x1]
  %v6990 = vld [vmem:[#allocation4 + $0x34] sm:$0x1]
  %v6991 = vld [vmem:[#allocation4 + $0x3c] sm:$0x1]
  %v6992 = vld [vmem:[#allocation4 + $0x5] sm:$0x1]
  %v6993 = vld [vmem:[#allocation4 + $0xd] sm:$0x1]
  %v6994 = vld [vmem:[#allocation4 + $0x15] sm:$0x1]
  %v6995 = vld [vmem:[#allocation4 + $0x1d] sm:$0x1]
  %v6996 = vld [vmem:[#allocation4 + $0x25] sm:$0x1]
  %v6997 = vld [vmem:[#allocation4 + $0x2d] sm:$0x1]
  %v6998 = vld [vmem:[#allocation4 + $0x35] sm:$0x1]
  %v6999 = vld [vmem:[#allocation4 + $0x3d] sm:$0x1]
  %v7000 = vmax.f32 %v6984, %v6992
  %v7001 = vmax.f32 %v6985, %v6993
  %v7002 = vmax.f32 %v6986, %v6994
  %v7003 = vmax.f32 %v6987, %v6995
  %v7004 = vmax.f32 %v6988, %v6996
  %v7005 = vmax.f32 %v6989, %v6997
  %v7006 = vmax.f32 %v6990, %v6998
  %v7007 = vmax.f32 %v6991, %v6999
  %v7016 = vrot.slane %v7001, 7
  %v7017 = vsel %vm6439, %v7016, %v7000
  %v7018 = vrot.slane %v7002, 6
  %v7019 = vsel %vm6442, %v7018, %v7017
  %v7020 = vrot.slane %v7003, 5
  %v7021 = vsel %vm6445, %v7020, %v7019
  %v7022 = vrot.slane %v7004, 4
  %v7023 = vsel %vm6448, %v7022, %v7021
  %v7024 = vrot.slane %v7005, 3
  %v7025 = vsel %vm6451, %v7024, %v7023
  %v7026 = vrot.slane %v7006, 2
  %v7027 = vsel %vm6454, %v7026, %v7025
  %v7028 = vrot.slane %v7007, 1
  %v7029 = vsel %vm6457, %v7028, %v7027
  %7031 = vmatprep.subr.mxu0 0.0
  %7032 = vmatpush1.msra.mxu0 %v6405
  %7033 = vmatprep.subr.mxu0 0.0
  %7034 = vmatpush1.msra.mxu0 %v6404
  %7035 = vmatprep.subr.mxu0 0.0
  %7036 = vmatpush1.msra.mxu0 %v6403
  %7037 = vmatprep.subr.mxu0 0.0
  %7038 = vmatpush1.msra.mxu0 %v6402
  %7039 = vmatprep.subr.mxu0 0.0
  %7040 = vmatpush1.msra.mxu0 %v6401
  %7041 = vmatprep.subr.mxu0 0.0
  %7042 = vmatpush1.msra.mxu0 %v6400
  %7043 = vmatprep.subr.mxu0 0.0
  %7044 = vmatpush1.msra.mxu0 %v6399
  %7045 = vmatprep.subr.mxu0 0.0
  %7046 = vmatpush1.msra.mxu0 %v6398
  %7047 = vmatprep.subr.mxu0 0.0
  %7048 = vmatpush1.msra.mxu0 %v6397
  %7049 = vmatprep.subr.mxu0 0.0
  %7050 = vmatpush1.msra.mxu0 %v6396
  %7051 = vmatprep.subr.mxu0 0.0
  %7052 = vmatpush1.msra.mxu0 %v6395
  %7053 = vmatprep.subr.mxu0 0.0
  %7054 = vmatpush1.msra.mxu0 %v6394
  %7055 = vmatprep.subr.mxu0 0.0
  %7056 = vmatpush1.msra.mxu0 %v6393
  %7057 = vmatprep.subr.mxu0 0.0
  %7058 = vmatpush1.msra.mxu0 %v6392
  %7059 = vmatprep.subr.mxu0 0.0
  %7060 = vmatpush1.msra.mxu0 %v6391
  %7061 = vmatprep.subr.mxu0 0.0
  %7062 = vmatpush1.msra.mxu0 %v6390
  %7063 = vmatprep.subr.mxu0 0.0
  %7064 = vmatpush2.msra.mxu0 0.0
  %7065 = vmatprep.subr.mxu0 0.0
  %7066 = vmatpush2.msra.mxu0 0.0
  %7067 = vmatprep.subr.mxu0 0.0
  %7068 = vmatpush2.msra.mxu0 0.0
  %7069 = vmatprep.subr.mxu0 0.0
  %7070 = vmatpush2.msra.mxu0 0.0
  %7071 = vmatprep.subr.mxu0 0.0
  %7072 = vmatpush2.msra.mxu0 0.0
  %7073 = vmatprep.subr.mxu0 0.0
  %7074 = vmatpush2.msra.mxu0 0.0
  %7075 = vmatprep.subr.mxu0 0.0
  %7076 = vmatpush2.msra.mxu0 0.0
  %7077 = vmatprep.subr.mxu0 0.0
  %7078 = vmatpush2.msra.mxu0 0.0
  %7079 = vmatprep.subr.mxu0 0.0
  %7080 = vmatpush2.msra.mxu0 0.0
  %7081 = vmatprep.subr.mxu0 0.0
  %7082 = vmatpush2.msra.mxu0 0.0
  %7083 = vmatprep.subr.mxu0 0.0
  %7084 = vmatpush2.msra.mxu0 0.0
  %7085 = vmatprep.subr.mxu0 0.0
  %7086 = vmatpush2.msra.mxu0 0.0
  %7087 = vmatprep.subr.mxu0 0.0
  %7088 = vmatpush2.msra.mxu0 0.0
  %7089 = vmatprep.subr.mxu0 0.0
  %7090 = vmatpush2.msra.mxu0 0.0
  %7091 = vmatprep.subr.mxu0 0.0
  %7092 = vmatpush2.msra.mxu0 0.0
  %7093 = vmatprep.subr.mxu0 0.0
  %7094 = vmatpush2.msra.mxu0 0.0
  %7095 = vmatprep.mubr.f32.mxu0 0.0
  %7096 = vmatmul.mubr.f32.gmra.mxu0 %v7029
  %v7097 = vpop.f32.mrf.mxu0
  %v7098 = vadd.f32 0.0, %v7097
  %v7099 = vpop.f32.mrf.mxu0
  %7100 = vdwg.mxu0
  %v7102 = vrot.slane %v7098, 1
  %v7103 = vrot.slane %v7098, 2
  %v7104 = vrot.slane %v7098, 3
  %v7105 = vrot.slane %v7098, 4
  %v7106 = vrot.slane %v7098, 5
  %v7107 = vrot.slane %v7098, 6
  %v7108 = vrot.slane %v7098, 7
  %v7117 = vmax.f32 %v7000, %v7098
  %v7118 = vmax.f32 %v7001, %v7102
  %v7119 = vmax.f32 %v7002, %v7103
  %v7120 = vmax.f32 %v7003, %v7104
  %v7121 = vmax.f32 %v7004, %v7105
  %v7122 = vmax.f32 %v7005, %v7106
  %v7123 = vmax.f32 %v7006, %v7107
  %v7124 = vmax.f32 %v7007, %v7108
  %v7125 = vpack.c.bf16 %v7117, %v7117
  %v7126 = vpack.c.bf16 %v7118, %v7118
  %v7127 = vpack.c.bf16 %v7119, %v7119
  %v7128 = vpack.c.bf16 %v7120, %v7120
  %v7129 = vpack.c.bf16 %v7121, %v7121
  %v7130 = vpack.c.bf16 %v7122, %v7122
  %v7131 = vpack.c.bf16 %v7123, %v7123
  %v7132 = vpack.c.bf16 %v7124, %v7124
  %s7133 = scalar_lea.vmem %s7, 128
  %v7134 = vld [vmem:[%s7133] sm:$0xf]
  %v7135 = vld [vmem:[%s7133 + $0x4] sm:$0xf]
  %v7136 = vld [vmem:[%s7133 + $0x8] sm:$0xf]
  %v7137 = vld [vmem:[%s7133 + $0xc] sm:$0xf]
  %v7138 = vld [vmem:[%s7133 + $0x10] sm:$0xf]
  %v7139 = vld [vmem:[%s7133 + $0x14] sm:$0xf]
  %v7140 = vld [vmem:[%s7133 + $0x18] sm:$0xf]
  %v7141 = vld [vmem:[%s7133 + $0x1c] sm:$0xf]
  %v7142 = vld [vmem:[%s7133 + $0x20] sm:$0xf]
  %v7143 = vld [vmem:[%s7133 + $0x24] sm:$0xf]
  %v7144 = vld [vmem:[%s7133 + $0x28] sm:$0xf]
  %v7145 = vld [vmem:[%s7133 + $0x2c] sm:$0xf]
  %v7146 = vld [vmem:[%s7133 + $0x30] sm:$0xf]
  %v7147 = vld [vmem:[%s7133 + $0x34] sm:$0xf]
  %v7148 = vld [vmem:[%s7133 + $0x38] sm:$0xf]
  %v7149 = vld [vmem:[%s7133 + $0x3c] sm:$0xf]
  %v7158 = vunpack.c.l.b16 %v7125
  %v7159 = vunpack.c.l.b16 %v7126
  %v7160 = vunpack.c.l.b16 %v7127
  %v7161 = vunpack.c.l.b16 %v7128
  %v7162 = vunpack.c.l.b16 %v7129
  %v7163 = vunpack.c.l.b16 %v7130
  %v7164 = vunpack.c.l.b16 %v7131
  %v7165 = vunpack.c.l.b16 %v7132
  %v7166 = vrot.slane %v7159, 7
  %v7167 = vsel %vm6439, %v7166, %v7158
  %v7168 = vrot.slane %v7160, 6
  %v7169 = vsel %vm6442, %v7168, %v7167
  %v7170 = vrot.slane %v7161, 5
  %v7171 = vsel %vm6445, %v7170, %v7169
  %v7172 = vrot.slane %v7162, 4
  %v7173 = vsel %vm6448, %v7172, %v7171
  %v7174 = vrot.slane %v7163, 3
  %v7175 = vsel %vm6451, %v7174, %v7173
  %v7176 = vrot.slane %v7164, 2
  %v7177 = vsel %vm6454, %v7176, %v7175
  %v7178 = vrot.slane %v7165, 1
  %v7179 = vsel %vm6457, %v7178, %v7177
  %v7180 = vpack.c.b16 %v7179, %v7179
  %v7198 = vunpack.c.l.b16 %v7134
  %v7199 = vunpack.c.l.b16 %v7135
  %v7200 = vunpack.c.l.b16 %v7136
  %v7201 = vunpack.c.l.b16 %v7137
  %v7202 = vunpack.c.l.b16 %v7138
  %v7203 = vunpack.c.l.b16 %v7139
  %v7204 = vunpack.c.l.b16 %v7140
  %v7205 = vunpack.c.l.b16 %v7141
  %v7206 = vunpack.c.l.b16 %v7142
  %v7207 = vunpack.c.l.b16 %v7143
  %v7208 = vunpack.c.l.b16 %v7144
  %v7209 = vunpack.c.l.b16 %v7145
  %v7210 = vunpack.c.l.b16 %v7146
  %v7211 = vunpack.c.l.b16 %v7147
  %v7212 = vunpack.c.l.b16 %v7148
  %v7213 = vunpack.c.l.b16 %v7149
  %v7214 = vpack.c.b16 %v7199, %v7198
  %v7215 = vpack.c.b16 %v7201, %v7200
  %v7216 = vpack.c.b16 %v7203, %v7202
  %v7217 = vpack.c.b16 %v7205, %v7204
  %v7218 = vpack.c.b16 %v7207, %v7206
  %v7219 = vpack.c.b16 %v7209, %v7208
  %v7220 = vpack.c.b16 %v7211, %v7210
  %v7221 = vpack.c.b16 %v7213, %v7212
  %7230 = vmatprep.subr.bf16.mxu0 0
  %7231 = vmatpush1.bf16.msra.mxu0 %v7221
  %7232 = vmatprep.subr.bf16.mxu0 0
  %7233 = vmatpush1.bf16.msra.mxu0 %v7220
  %7234 = vmatprep.subr.bf16.mxu0 0
  %7235 = vmatpush1.bf16.msra.mxu0 %v7219
  %7236 = vmatprep.subr.bf16.mxu0 0
  %7237 = vmatpush1.bf16.msra.mxu0 %v7218
  %7238 = vmatprep.subr.bf16.mxu0 0
  %7239 = vmatpush1.bf16.msra.mxu0 %v7217
  %7240 = vmatprep.subr.bf16.mxu0 0
  %7241 = vmatpush1.bf16.msra.mxu0 %v7216
  %7242 = vmatprep.subr.bf16.mxu0 0
  %7243 = vmatpush1.bf16.msra.mxu0 %v7215
  %7244 = vmatprep.subr.bf16.mxu0 0
  %7245 = vmatpush1.bf16.msra.mxu0 %v7214
  %7246 = vmatprep.subr.bf16.mxu0 0
  %7247 = vmatpush2.bf16.msra.mxu0 0
  %7248 = vmatprep.subr.bf16.mxu0 0
  %7249 = vmatpush2.bf16.msra.mxu0 0
  %7250 = vmatprep.subr.bf16.mxu0 0
  %7251 = vmatpush2.bf16.msra.mxu0 0
  %7252 = vmatprep.subr.bf16.mxu0 0
  %7253 = vmatpush2.bf16.msra.mxu0 0
  %7254 = vmatprep.subr.bf16.mxu0 0
  %7255 = vmatpush2.bf16.msra.mxu0 0
  %7256 = vmatprep.subr.bf16.mxu0 0
  %7257 = vmatpush2.bf16.msra.mxu0 0
  %7258 = vmatprep.subr.bf16.mxu0 0
  %7259 = vmatpush2.bf16.msra.mxu0 0
  %7260 = vmatprep.subr.bf16.mxu0 0
  %7261 = vmatpush2.bf16.msra.mxu0 0
  %7262 = vmatprep.mubr.bf16.mxu0 0
  %7263 = vmatmul.mubr.bf16.gmra.mxu0 %v7180
  %v7264 = vpop.f32.mrf.mxu0
  %v7265 = vadd.f32 0.0, %v7264
  %v7266 = vpop.f32.mrf.mxu0
  %v7267 = vpop.f32.mrf.mxu0
  %v7268 = vpop.f32.mrf.mxu0
  %7269 = vdwg.mxu0
  %v7270 = vadd.f32 %v6979, %v7265
  %v7271 = vld [vmem:[#allocation4 + $0x6] sm:$0x1]
  %v7272 = vld [vmem:[#allocation4 + $0xe] sm:$0x1]
  %v7273 = vld [vmem:[#allocation4 + $0x16] sm:$0x1]
  %v7274 = vld [vmem:[#allocation4 + $0x1e] sm:$0x1]
  %v7275 = vld [vmem:[#allocation4 + $0x26] sm:$0x1]
  %v7276 = vld [vmem:[#allocation4 + $0x2e] sm:$0x1]
  %v7277 = vld [vmem:[#allocation4 + $0x36] sm:$0x1]
  %v7278 = vld [vmem:[#allocation4 + $0x3e] sm:$0x1]
  %v7279 = vld [vmem:[#allocation4 + $0x7] sm:$0x1]
  %v7280 = vld [vmem:[#allocation4 + $0xf] sm:$0x1]
  %v7281 = vld [vmem:[#allocation4 + $0x17] sm:$0x1]
  %v7282 = vld [vmem:[#allocation4 + $0x1f] sm:$0x1]
  %v7283 = vld [vmem:[#allocation4 + $0x27] sm:$0x1]
  %v7284 = vld [vmem:[#allocation4 + $0x2f] sm:$0x1]
  %v7285 = vld [vmem:[#allocation4 + $0x37] sm:$0x1]
  %v7286 = vld [vmem:[#allocation4 + $0x3f] sm:$0x1]
  %v7287 = vmax.f32 %v7271, %v7279
  %v7288 = vmax.f32 %v7272, %v7280
  %v7289 = vmax.f32 %v7273, %v7281
  %v7290 = vmax.f32 %v7274, %v7282
  %v7291 = vmax.f32 %v7275, %v7283
  %v7292 = vmax.f32 %v7276, %v7284
  %v7293 = vmax.f32 %v7277, %v7285
  %v7294 = vmax.f32 %v7278, %v7286
  %v7303 = vrot.slane %v7288, 7
  %v7304 = vsel %vm6439, %v7303, %v7287
  %v7305 = vrot.slane %v7289, 6
  %v7306 = vsel %vm6442, %v7305, %v7304
  %v7307 = vrot.slane %v7290, 5
  %v7308 = vsel %vm6445, %v7307, %v7306
  %v7309 = vrot.slane %v7291, 4
  %v7310 = vsel %vm6448, %v7309, %v7308
  %v7311 = vrot.slane %v7292, 3
  %v7312 = vsel %vm6451, %v7311, %v7310
  %v7313 = vrot.slane %v7293, 2
  %v7314 = vsel %vm6454, %v7313, %v7312
  %v7315 = vrot.slane %v7294, 1
  %v7316 = vsel %vm6457, %v7315, %v7314
  %7318 = vmatprep.subr.mxu0 0.0
  %7319 = vmatpush1.msra.mxu0 %v6405
  %7320 = vmatprep.subr.mxu0 0.0
  %7321 = vmatpush1.msra.mxu0 %v6404
  %7322 = vmatprep.subr.mxu0 0.0
  %7323 = vmatpush1.msra.mxu0 %v6403
  %7324 = vmatprep.subr.mxu0 0.0
  %7325 = vmatpush1.msra.mxu0 %v6402
  %7326 = vmatprep.subr.mxu0 0.0
  %7327 = vmatpush1.msra.mxu0 %v6401
  %7328 = vmatprep.subr.mxu0 0.0
  %7329 = vmatpush1.msra.mxu0 %v6400
  %7330 = vmatprep.subr.mxu0 0.0
  %7331 = vmatpush1.msra.mxu0 %v6399
  %7332 = vmatprep.subr.mxu0 0.0
  %7333 = vmatpush1.msra.mxu0 %v6398
  %7334 = vmatprep.subr.mxu0 0.0
  %7335 = vmatpush1.msra.mxu0 %v6397
  %7336 = vmatprep.subr.mxu0 0.0
  %7337 = vmatpush1.msra.mxu0 %v6396
  %7338 = vmatprep.subr.mxu0 0.0
  %7339 = vmatpush1.msra.mxu0 %v6395
  %7340 = vmatprep.subr.mxu0 0.0
  %7341 = vmatpush1.msra.mxu0 %v6394
  %7342 = vmatprep.subr.mxu0 0.0
  %7343 = vmatpush1.msra.mxu0 %v6393
  %7344 = vmatprep.subr.mxu0 0.0
  %7345 = vmatpush1.msra.mxu0 %v6392
  %7346 = vmatprep.subr.mxu0 0.0
  %7347 = vmatpush1.msra.mxu0 %v6391
  %7348 = vmatprep.subr.mxu0 0.0
  %7349 = vmatpush1.msra.mxu0 %v6390
  %7350 = vmatprep.subr.mxu0 0.0
  %7351 = vmatpush2.msra.mxu0 0.0
  %7352 = vmatprep.subr.mxu0 0.0
  %7353 = vmatpush2.msra.mxu0 0.0
  %7354 = vmatprep.subr.mxu0 0.0
  %7355 = vmatpush2.msra.mxu0 0.0
  %7356 = vmatprep.subr.mxu0 0.0
  %7357 = vmatpush2.msra.mxu0 0.0
  %7358 = vmatprep.subr.mxu0 0.0
  %7359 = vmatpush2.msra.mxu0 0.0
  %7360 = vmatprep.subr.mxu0 0.0
  %7361 = vmatpush2.msra.mxu0 0.0
  %7362 = vmatprep.subr.mxu0 0.0
  %7363 = vmatpush2.msra.mxu0 0.0
  %7364 = vmatprep.subr.mxu0 0.0
  %7365 = vmatpush2.msra.mxu0 0.0
  %7366 = vmatprep.subr.mxu0 0.0
  %7367 = vmatpush2.msra.mxu0 0.0
  %7368 = vmatprep.subr.mxu0 0.0
  %7369 = vmatpush2.msra.mxu0 0.0
  %7370 = vmatprep.subr.mxu0 0.0
  %7371 = vmatpush2.msra.mxu0 0.0
  %7372 = vmatprep.subr.mxu0 0.0
  %7373 = vmatpush2.msra.mxu0 0.0
  %7374 = vmatprep.subr.mxu0 0.0
  %7375 = vmatpush2.msra.mxu0 0.0
  %7376 = vmatprep.subr.mxu0 0.0
  %7377 = vmatpush2.msra.mxu0 0.0
  %7378 = vmatprep.subr.mxu0 0.0
  %7379 = vmatpush2.msra.mxu0 0.0
  %7380 = vmatprep.subr.mxu0 0.0
  %7381 = vmatpush2.msra.mxu0 0.0
  %7382 = vmatprep.mubr.f32.mxu0 0.0
  %7383 = vmatmul.mubr.f32.gmra.mxu0 %v7316
  %v7384 = vpop.f32.mrf.mxu0
  %v7385 = vadd.f32 0.0, %v7384
  %v7386 = vpop.f32.mrf.mxu0
  %7387 = vdwg.mxu0
  %v7389 = vrot.slane %v7385, 1
  %v7390 = vrot.slane %v7385, 2
  %v7391 = vrot.slane %v7385, 3
  %v7392 = vrot.slane %v7385, 4
  %v7393 = vrot.slane %v7385, 5
  %v7394 = vrot.slane %v7385, 6
  %v7395 = vrot.slane %v7385, 7
  %v7404 = vmax.f32 %v7287, %v7385
  %v7405 = vmax.f32 %v7288, %v7389
  %v7406 = vmax.f32 %v7289, %v7390
  %v7407 = vmax.f32 %v7290, %v7391
  %v7408 = vmax.f32 %v7291, %v7392
  %v7409 = vmax.f32 %v7292, %v7393
  %v7410 = vmax.f32 %v7293, %v7394
  %v7411 = vmax.f32 %v7294, %v7395
  %v7412 = vpack.c.bf16 %v7404, %v7404
  %v7413 = vpack.c.bf16 %v7405, %v7405
  %v7414 = vpack.c.bf16 %v7406, %v7406
  %v7415 = vpack.c.bf16 %v7407, %v7407
  %v7416 = vpack.c.bf16 %v7408, %v7408
  %v7417 = vpack.c.bf16 %v7409, %v7409
  %v7418 = vpack.c.bf16 %v7410, %v7410
  %v7419 = vpack.c.bf16 %v7411, %v7411
  %s7420 = scalar_lea.vmem %s7, 192
  %v7421 = vld [vmem:[%s7420] sm:$0xf]
  %v7422 = vld [vmem:[%s7420 + $0x4] sm:$0xf]
  %v7423 = vld [vmem:[%s7420 + $0x8] sm:$0xf]
  %v7424 = vld [vmem:[%s7420 + $0xc] sm:$0xf]
  %v7425 = vld [vmem:[%s7420 + $0x10] sm:$0xf]
  %v7426 = vld [vmem:[%s7420 + $0x14] sm:$0xf]
  %v7427 = vld [vmem:[%s7420 + $0x18] sm:$0xf]
  %v7428 = vld [vmem:[%s7420 + $0x1c] sm:$0xf]
  %v7429 = vld [vmem:[%s7420 + $0x20] sm:$0xf]
  %v7430 = vld [vmem:[%s7420 + $0x24] sm:$0xf]
  %v7431 = vld [vmem:[%s7420 + $0x28] sm:$0xf]
  %v7432 = vld [vmem:[%s7420 + $0x2c] sm:$0xf]
  %v7433 = vld [vmem:[%s7420 + $0x30] sm:$0xf]
  %v7434 = vld [vmem:[%s7420 + $0x34] sm:$0xf]
  %v7435 = vld [vmem:[%s7420 + $0x38] sm:$0xf]
  %v7436 = vld [vmem:[%s7420 + $0x3c] sm:$0xf]
  %v7445 = vunpack.c.l.b16 %v7412
  %v7446 = vunpack.c.l.b16 %v7413
  %v7447 = vunpack.c.l.b16 %v7414
  %v7448 = vunpack.c.l.b16 %v7415
  %v7449 = vunpack.c.l.b16 %v7416
  %v7450 = vunpack.c.l.b16 %v7417
  %v7451 = vunpack.c.l.b16 %v7418
  %v7452 = vunpack.c.l.b16 %v7419
  %v7453 = vrot.slane %v7446, 7
  %v7454 = vsel %vm6439, %v7453, %v7445
  %v7455 = vrot.slane %v7447, 6
  %v7456 = vsel %vm6442, %v7455, %v7454
  %v7457 = vrot.slane %v7448, 5
  %v7458 = vsel %vm6445, %v7457, %v7456
  %v7459 = vrot.slane %v7449, 4
  %v7460 = vsel %vm6448, %v7459, %v7458
  %v7461 = vrot.slane %v7450, 3
  %v7462 = vsel %vm6451, %v7461, %v7460
  %v7463 = vrot.slane %v7451, 2
  %v7464 = vsel %vm6454, %v7463, %v7462
  %v7465 = vrot.slane %v7452, 1
  %v7466 = vsel %vm6457, %v7465, %v7464
  %v7467 = vpack.c.b16 %v7466, %v7466
  %v7485 = vunpack.c.l.b16 %v7421
  %v7486 = vunpack.c.l.b16 %v7422
  %v7487 = vunpack.c.l.b16 %v7423
  %v7488 = vunpack.c.l.b16 %v7424
  %v7489 = vunpack.c.l.b16 %v7425
  %v7490 = vunpack.c.l.b16 %v7426
  %v7491 = vunpack.c.l.b16 %v7427
  %v7492 = vunpack.c.l.b16 %v7428
  %v7493 = vunpack.c.l.b16 %v7429
  %v7494 = vunpack.c.l.b16 %v7430
  %v7495 = vunpack.c.l.b16 %v7431
  %v7496 = vunpack.c.l.b16 %v7432
  %v7497 = vunpack.c.l.b16 %v7433
  %v7498 = vunpack.c.l.b16 %v7434
  %v7499 = vunpack.c.l.b16 %v7435
  %v7500 = vunpack.c.l.b16 %v7436
  %v7501 = vpack.c.b16 %v7486, %v7485
  %v7502 = vpack.c.b16 %v7488, %v7487
  %v7503 = vpack.c.b16 %v7490, %v7489
  %v7504 = vpack.c.b16 %v7492, %v7491
  %v7505 = vpack.c.b16 %v7494, %v7493
  %v7506 = vpack.c.b16 %v7496, %v7495
  %v7507 = vpack.c.b16 %v7498, %v7497
  %v7508 = vpack.c.b16 %v7500, %v7499
  %7517 = vmatprep.subr.bf16.mxu0 0
  %7518 = vmatpush1.bf16.msra.mxu0 %v7508
  %7519 = vmatprep.subr.bf16.mxu0 0
  %7520 = vmatpush1.bf16.msra.mxu0 %v7507
  %7521 = vmatprep.subr.bf16.mxu0 0
  %7522 = vmatpush1.bf16.msra.mxu0 %v7506
  %7523 = vmatprep.subr.bf16.mxu0 0
  %7524 = vmatpush1.bf16.msra.mxu0 %v7505
  %7525 = vmatprep.subr.bf16.mxu0 0
  %7526 = vmatpush1.bf16.msra.mxu0 %v7504
  %7527 = vmatprep.subr.bf16.mxu0 0
  %7528 = vmatpush1.bf16.msra.mxu0 %v7503
  %7529 = vmatprep.subr.bf16.mxu0 0
  %7530 = vmatpush1.bf16.msra.mxu0 %v7502
  %7531 = vmatprep.subr.bf16.mxu0 0
  %7532 = vmatpush1.bf16.msra.mxu0 %v7501
  %7533 = vmatprep.subr.bf16.mxu0 0
  %7534 = vmatpush2.bf16.msra.mxu0 0
  %7535 = vmatprep.subr.bf16.mxu0 0
  %7536 = vmatpush2.bf16.msra.mxu0 0
  %7537 = vmatprep.subr.bf16.mxu0 0
  %7538 = vmatpush2.bf16.msra.mxu0 0
  %7539 = vmatprep.subr.bf16.mxu0 0
  %7540 = vmatpush2.bf16.msra.mxu0 0
  %7541 = vmatprep.subr.bf16.mxu0 0
  %7542 = vmatpush2.bf16.msra.mxu0 0
  %7543 = vmatprep.subr.bf16.mxu0 0
  %7544 = vmatpush2.bf16.msra.mxu0 0
  %7545 = vmatprep.subr.bf16.mxu0 0
  %7546 = vmatpush2.bf16.msra.mxu0 0
  %7547 = vmatprep.subr.bf16.mxu0 0
  %7548 = vmatpush2.bf16.msra.mxu0 0
  %7549 = vmatprep.mubr.bf16.mxu0 0
  %7550 = vmatmul.mubr.bf16.gmra.mxu0 %v7467
  %v7551 = vpop.f32.mrf.mxu0
  %v7552 = vadd.f32 0.0, %v7551
  %v7553 = vpop.f32.mrf.mxu0
  %v7554 = vpop.f32.mrf.mxu0
  %v7555 = vpop.f32.mrf.mxu0
  %7556 = vdwg.mxu0
  %v7557 = vadd.f32 %v7270, %v7552
  %v7558 = vld [vmem:[%s8] sm:$0x1]
  %v7560 = vlaneseq
  %v7561 = vshrl.u32 %v7560, 7
  %v7562 = vsub.s32 0, %v7561
  %v7563 = vrot.slane %v7558, %v7562
  %v7565 = vadd.f32 %v7557, %v7563
  %v7566 = vmax.f32 %v7565, 0.0
  %v7567 = vld [vmem:[%s9] sm:$0xff]
  %v7568 = vld [vmem:[%s9 + $0x8] sm:$0xff]
  %v7569 = vld [vmem:[%s9 + $0x10] sm:$0xff]
  %v7570 = vld [vmem:[%s9 + $0x18] sm:$0xff]
  %v7571 = vld [vmem:[%s9 + $0x20] sm:$0xff]
  %v7572 = vld [vmem:[%s9 + $0x28] sm:$0xff]
  %v7573 = vld [vmem:[%s9 + $0x30] sm:$0xff]
  %v7574 = vld [vmem:[%s9 + $0x38] sm:$0xff]
  %v7575 = vld [vmem:[%s9 + $0x40] sm:$0xff]
  %v7576 = vld [vmem:[%s9 + $0x48] sm:$0xff]
  %v7577 = vld [vmem:[%s9 + $0x50] sm:$0xff]
  %v7578 = vld [vmem:[%s9 + $0x58] sm:$0xff]
  %v7579 = vld [vmem:[%s9 + $0x60] sm:$0xff]
  %v7580 = vld [vmem:[%s9 + $0x68] sm:$0xff]
  %v7581 = vld [vmem:[%s9 + $0x70] sm:$0xff]
  %v7582 = vld [vmem:[%s10] sm:$0x1]
  %v7584 = vlaneseq
  %v7585 = vshrl.u32 %v7584, 7
  %v7586 = vsub.s32 0, %v7585
  %v7587 = vrot.slane %v7582, %v7586
  %vm7589 = vcmask 982016
  %v7591 = vsel %vm7589, %v7566, 0
  %7593 = vmatprep.subr.mxu0 0.0
  %7594 = vmatpush1.msra.mxu0 0.0
  %7595 = vmatprep.subr.mxu0 0.0
  %7596 = vmatpush1.msra.mxu0 %v7581
  %7597 = vmatprep.subr.mxu0 0.0
  %7598 = vmatpush1.msra.mxu0 %v7580
  %7599 = vmatprep.subr.mxu0 0.0
  %7600 = vmatpush1.msra.mxu0 %v7579
  %7601 = vmatprep.subr.mxu0 0.0
  %7602 = vmatpush1.msra.mxu0 %v7578
  %7603 = vmatprep.subr.mxu0 0.0
  %7604 = vmatpush1.msra.mxu0 %v7577
  %7605 = vmatprep.subr.mxu0 0.0
  %7606 = vmatpush1.msra.mxu0 %v7576
  %7607 = vmatprep.subr.mxu0 0.0
  %7608 = vmatpush1.msra.mxu0 %v7575
  %7609 = vmatprep.subr.mxu0 0.0
  %7610 = vmatpush1.msra.mxu0 %v7574
  %7611 = vmatprep.subr.mxu0 0.0
  %7612 = vmatpush1.msra.mxu0 %v7573
  %7613 = vmatprep.subr.mxu0 0.0
  %7614 = vmatpush1.msra.mxu0 %v7572
  %7615 = vmatprep.subr.mxu0 0.0
  %7616 = vmatpush1.msra.mxu0 %v7571
  %7617 = vmatprep.subr.mxu0 0.0
  %7618 = vmatpush1.msra.mxu0 %v7570
  %7619 = vmatprep.subr.mxu0 0.0
  %7620 = vmatpush1.msra.mxu0 %v7569
  %7621 = vmatprep.subr.mxu0 0.0
  %7622 = vmatpush1.msra.mxu0 %v7568
  %7623 = vmatprep.subr.mxu0 0.0
  %7624 = vmatpush1.msra.mxu0 %v7567
  %7625 = vmatprep.subr.mxu0 0.0
  %7626 = vmatpush2.msra.mxu0 0.0
  %7627 = vmatprep.subr.mxu0 0.0
  %7628 = vmatpush2.msra.mxu0 0.0
  %7629 = vmatprep.subr.mxu0 0.0
  %7630 = vmatpush2.msra.mxu0 0.0
  %7631 = vmatprep.subr.mxu0 0.0
  %7632 = vmatpush2.msra.mxu0 0.0
  %7633 = vmatprep.subr.mxu0 0.0
  %7634 = vmatpush2.msra.mxu0 0.0
  %7635 = vmatprep.subr.mxu0 0.0
  %7636 = vmatpush2.msra.mxu0 0.0
  %7637 = vmatprep.subr.mxu0 0.0
  %7638 = vmatpush2.msra.mxu0 0.0
  %7639 = vmatprep.subr.mxu0 0.0
  %7640 = vmatpush2.msra.mxu0 0.0
  %7641 = vmatprep.subr.mxu0 0.0
  %7642 = vmatpush2.msra.mxu0 0.0
  %7643 = vmatprep.subr.mxu0 0.0
  %7644 = vmatpush2.msra.mxu0 0.0
  %7645 = vmatprep.subr.mxu0 0.0
  %7646 = vmatpush2.msra.mxu0 0.0
  %7647 = vmatprep.subr.mxu0 0.0
  %7648 = vmatpush2.msra.mxu0 0.0
  %7649 = vmatprep.subr.mxu0 0.0
  %7650 = vmatpush2.msra.mxu0 0.0
  %7651 = vmatprep.subr.mxu0 0.0
  %7652 = vmatpush2.msra.mxu0 0.0
  %7653 = vmatprep.subr.mxu0 0.0
  %7654 = vmatpush2.msra.mxu0 0.0
  %7655 = vmatprep.subr.mxu0 0.0
  %7656 = vmatpush2.msra.mxu0 0.0
  %7657 = vmatprep.mubr.f32.mxu0 0.0
  %7658 = vmatmul.mubr.f32.gmra.mxu0 %v7591
  %v7659 = vpop.f32.mrf.mxu0
  %v7660 = vadd.f32 %v7587, %v7659
  %v7661 = vpop.f32.mrf.mxu0
  %7662 = vdwg.mxu0
  %v7664 = vsel %vm7589, %v7660, 0
  %7666 = vmatprep.subr.mxu0 0.0
  %7667 = vmatpush1.msra.mxu0 0.0
  %7668 = vmatprep.subr.mxu0 0.0
  %7669 = vmatpush1.msra.mxu0 %v7581
  %7670 = vmatprep.subr.mxu0 0.0
  %7671 = vmatpush1.msra.mxu0 %v7580
  %7672 = vmatprep.subr.mxu0 0.0
  %7673 = vmatpush1.msra.mxu0 %v7579
  %7674 = vmatprep.subr.mxu0 0.0
  %7675 = vmatpush1.msra.mxu0 %v7578
  %7676 = vmatprep.subr.mxu0 0.0
  %7677 = vmatpush1.msra.mxu0 %v7577
  %7678 = vmatprep.subr.mxu0 0.0
  %7679 = vmatpush1.msra.mxu0 %v7576
  %7680 = vmatprep.subr.mxu0 0.0
  %7681 = vmatpush1.msra.mxu0 %v7575
  %7682 = vmatprep.subr.mxu0 0.0
  %7683 = vmatpush1.msra.mxu0 %v7574
  %7684 = vmatprep.subr.mxu0 0.0
  %7685 = vmatpush1.msra.mxu0 %v7573
  %7686 = vmatprep.subr.mxu0 0.0
  %7687 = vmatpush1.msra.mxu0 %v7572
  %7688 = vmatprep.subr.mxu0 0.0
  %7689 = vmatpush1.msra.mxu0 %v7571
  %7690 = vmatprep.subr.mxu0 0.0
  %7691 = vmatpush1.msra.mxu0 %v7570
  %7692 = vmatprep.subr.mxu0 0.0
  %7693 = vmatpush1.msra.mxu0 %v7569
  %7694 = vmatprep.subr.mxu0 0.0
  %7695 = vmatpush1.msra.mxu0 %v7568
  %7696 = vmatprep.subr.mxu0 0.0
  %7697 = vmatpush1.msra.mxu0 %v7567
  %7698 = vmatprep.subr.mxu0 0.0
  %7699 = vmatpush2.msra.mxu0 0.0
  %7700 = vmatprep.subr.mxu0 0.0
  %7701 = vmatpush2.msra.mxu0 0.0
  %7702 = vmatprep.subr.mxu0 0.0
  %7703 = vmatpush2.msra.mxu0 0.0
  %7704 = vmatprep.subr.mxu0 0.0
  %7705 = vmatpush2.msra.mxu0 0.0
  %7706 = vmatprep.subr.mxu0 0.0
  %7707 = vmatpush2.msra.mxu0 0.0
  %7708 = vmatprep.subr.mxu0 0.0
  %7709 = vmatpush2.msra.mxu0 0.0
  %7710 = vmatprep.subr.mxu0 0.0
  %7711 = vmatpush2.msra.mxu0 0.0
  %7712 = vmatprep.subr.mxu0 0.0
  %7713 = vmatpush2.msra.mxu0 0.0
  %7714 = vmatprep.subr.mxu0 0.0
  %7715 = vmatpush2.msra.mxu0 0.0
  %7716 = vmatprep.subr.mxu0 0.0
  %7717 = vmatpush2.msra.mxu0 0.0
  %7718 = vmatprep.subr.mxu0 0.0
  %7719 = vmatpush2.msra.mxu0 0.0
  %7720 = vmatprep.subr.mxu0 0.0
  %7721 = vmatpush2.msra.mxu0 0.0
  %7722 = vmatprep.subr.mxu0 0.0
  %7723 = vmatpush2.msra.mxu0 0.0
  %7724 = vmatprep.subr.mxu0 0.0
  %7725 = vmatpush2.msra.mxu0 0.0
  %7726 = vmatprep.subr.mxu0 0.0
  %7727 = vmatpush2.msra.mxu0 0.0
  %7728 = vmatprep.subr.mxu0 0.0
  %7729 = vmatpush2.msra.mxu0 0.0
  %7730 = vmatprep.mubr.f32.mxu0 0.0
  %7731 = vmatmul.mubr.f32.gmra.mxu0 %v7664
  %v7732 = vpop.f32.mrf.mxu0
  %v7733 = vadd.f32 %v7587, %v7732
  %v7734 = vpop.f32.mrf.mxu0
  %7735 = vdwg.mxu0
  %v7736 = vmax.f32 %v7733, 0.0
  %v7737 = vld [vmem:[%s11] sm:$0xff]
  %v7738 = vld [vmem:[%s11 + $0x8] sm:$0xff]
  %v7739 = vld [vmem:[%s11 + $0x10] sm:$0xff]
  %v7740 = vld [vmem:[%s11 + $0x18] sm:$0xff]
  %v7741 = vld [vmem:[%s11 + $0x20] sm:$0xff]
  %v7742 = vld [vmem:[%s11 + $0x28] sm:$0xff]
  %v7743 = vld [vmem:[%s11 + $0x30] sm:$0xff]
  %v7744 = vld [vmem:[%s11 + $0x38] sm:$0xff]
  %v7745 = vld [vmem:[%s11 + $0x40] sm:$0xff]
  %v7746 = vld [vmem:[%s11 + $0x48] sm:$0xff]
  %v7747 = vld [vmem:[%s11 + $0x50] sm:$0xff]
  %v7748 = vld [vmem:[%s11 + $0x58] sm:$0xff]
  %v7749 = vld [vmem:[%s11 + $0x60] sm:$0xff]
  %v7750 = vld [vmem:[%s11 + $0x68] sm:$0xff]
  %v7751 = vld [vmem:[%s11 + $0x70] sm:$0xff]
  %v7752 = vld [vmem:[%s12] sm:$0x1]
  %v7754 = vlaneseq
  %v7755 = vshrl.u32 %v7754, 7
  %v7756 = vsub.s32 0, %v7755
  %v7757 = vrot.slane %v7752, %v7756
  %v7760 = vsel %vm7589, %v7736, 0
  %7762 = vmatprep.subr.mxu0 0.0
  %7763 = vmatpush1.msra.mxu0 0.0
  %7764 = vmatprep.subr.mxu0 0.0
  %7765 = vmatpush1.msra.mxu0 %v7751
  %7766 = vmatprep.subr.mxu0 0.0
  %7767 = vmatpush1.msra.mxu0 %v7750
  %7768 = vmatprep.subr.mxu0 0.0
  %7769 = vmatpush1.msra.mxu0 %v7749
  %7770 = vmatprep.subr.mxu0 0.0
  %7771 = vmatpush1.msra.mxu0 %v7748
  %7772 = vmatprep.subr.mxu0 0.0
  %7773 = vmatpush1.msra.mxu0 %v7747
  %7774 = vmatprep.subr.mxu0 0.0
  %7775 = vmatpush1.msra.mxu0 %v7746
  %7776 = vmatprep.subr.mxu0 0.0
  %7777 = vmatpush1.msra.mxu0 %v7745
  %7778 = vmatprep.subr.mxu0 0.0
  %7779 = vmatpush1.msra.mxu0 %v7744
  %7780 = vmatprep.subr.mxu0 0.0
  %7781 = vmatpush1.msra.mxu0 %v7743
  %7782 = vmatprep.subr.mxu0 0.0
  %7783 = vmatpush1.msra.mxu0 %v7742
  %7784 = vmatprep.subr.mxu0 0.0
  %7785 = vmatpush1.msra.mxu0 %v7741
  %7786 = vmatprep.subr.mxu0 0.0
  %7787 = vmatpush1.msra.mxu0 %v7740
  %7788 = vmatprep.subr.mxu0 0.0
  %7789 = vmatpush1.msra.mxu0 %v7739
  %7790 = vmatprep.subr.mxu0 0.0
  %7791 = vmatpush1.msra.mxu0 %v7738
  %7792 = vmatprep.subr.mxu0 0.0
  %7793 = vmatpush1.msra.mxu0 %v7737
  %7794 = vmatprep.subr.mxu0 0.0
  %7795 = vmatpush2.msra.mxu0 0.0
  %7796 = vmatprep.subr.mxu0 0.0
  %7797 = vmatpush2.msra.mxu0 0.0
  %7798 = vmatprep.subr.mxu0 0.0
  %7799 = vmatpush2.msra.mxu0 0.0
  %7800 = vmatprep.subr.mxu0 0.0
  %7801 = vmatpush2.msra.mxu0 0.0
  %7802 = vmatprep.subr.mxu0 0.0
  %7803 = vmatpush2.msra.mxu0 0.0
  %7804 = vmatprep.subr.mxu0 0.0
  %7805 = vmatpush2.msra.mxu0 0.0
  %7806 = vmatprep.subr.mxu0 0.0
  %7807 = vmatpush2.msra.mxu0 0.0
  %7808 = vmatprep.subr.mxu0 0.0
  %7809 = vmatpush2.msra.mxu0 0.0
  %7810 = vmatprep.subr.mxu0 0.0
  %7811 = vmatpush2.msra.mxu0 0.0
  %7812 = vmatprep.subr.mxu0 0.0
  %7813 = vmatpush2.msra.mxu0 0.0
  %7814 = vmatprep.subr.mxu0 0.0
  %7815 = vmatpush2.msra.mxu0 0.0
  %7816 = vmatprep.subr.mxu0 0.0
  %7817 = vmatpush2.msra.mxu0 0.0
  %7818 = vmatprep.subr.mxu0 0.0
  %7819 = vmatpush2.msra.mxu0 0.0
  %7820 = vmatprep.subr.mxu0 0.0
  %7821 = vmatpush2.msra.mxu0 0.0
  %7822 = vmatprep.subr.mxu0 0.0
  %7823 = vmatpush2.msra.mxu0 0.0
  %7824 = vmatprep.subr.mxu0 0.0
  %7825 = vmatpush2.msra.mxu0 0.0
  %7826 = vmatprep.mubr.f32.mxu0 0.0
  %7827 = vmatmul.mubr.f32.gmra.mxu0 %v7760
  %v7828 = vpop.f32.mrf.mxu0
  %v7829 = vadd.f32 %v7757, %v7828
  %v7830 = vpop.f32.mrf.mxu0
  %7831 = vdwg.mxu0
  %vm7832 = vcmask 80896
  %7833 = vst.msk [vmem:[%s13] sm:$0xff] %vm7832, %v7829
  // Predicated region
  $region54: #{iternet_forward.1} parent=0 // pred_check
    _
  $region55: #{iternet_forward.1} parent=0 // pred_check_branch
    %7835 = sbr.rel (0) target = $region57
  $region56: #{iternet_forward.1} parent=0 // pred_region
    _
  $region57: #{iternet_forward.1} parent=0 // pred_fallthru
    _
  // Predicated region
  $region58: #{iternet_forward.1} parent=0 // pred_check
    _
  $region59: #{iternet_forward.1} parent=0 // pred_check_branch
    %7837 = sbr.rel (0) target = $region61
  $region60: #{iternet_forward.1} parent=0 // pred_region
    _
  $region61: #{iternet_forward.1} parent=0 // pred_fallthru
    _

</llo_original>
